<compile_context>
chip_gen: v5e
topology: v5e:2x2
jax: 0.10.0
libtpu: 0.0.40
codegen_flags: <defaults>
</compile_context>

<pallas_src>
import jax
import jax.numpy as jnp
from jax.experimental import pallas as pl
from jax.experimental.pallas import tpu as pltpu

EPS = 1e-5
LANES = 128  # TPU lane width; channel / contraction dims are padded to this.


# ----------------------------- kernel helpers ------------------------------
def _im2col_pad(x, k, kpad):
    """x: (H, W, C) bf16 -> lane-dense patches (Ho*Wo, kpad) bf16.

    Rows are ordered (kh, kw, ci) to match w.reshape(k*k*ci, cout); the
    contraction dim is zero-padded up to `kpad` (a multiple of 128) so the MXU
    operand is full-lane.  x is already bf16 (cast before expansion).
    """
    h, w, c = x.shape
    ho, wo = h - k + 1, w - k + 1
    cols = [x[kh:kh + ho, kw:kw + wo, :] for kh in range(k) for kw in range(k)]
    p = jnp.concatenate(cols, axis=-1).reshape(ho * wo, k * k * c)
    if k * k * c < kpad:
        p = jnp.concatenate(
            [p, jnp.zeros((ho * wo, kpad - k * k * c), p.dtype)], axis=-1)
    return p


# -------------------------------- kernels -----------------------------------
def _conv1_stats_kernel(x_ref, w1_ref, y_ref, s_ref):
    """conv1 (one K=128 MXU matmul) + per-channel sum / sum^2 partials."""
    kpad = w1_ref.shape[0]
    p = _im2col_pad(x_ref[0], 3, kpad)                           # (M1,128) bf16
    y = jnp.dot(p, w1_ref[...], preferred_element_type=jnp.float32)
    y_ref[...] = y.reshape(y_ref.shape)                          # lane-dense
    s_ref[...] = jnp.concatenate(
        [jnp.sum(y, axis=0, keepdims=True),
         jnp.sum(y * y, axis=0, keepdims=True)], axis=0).reshape(s_ref.shape)


def _bn1_conv2_stats_kernel(y1_ref, v1_ref, w2_ref, y2_ref, s_ref):
    """Apply folded bn1 scale/shift + relu, conv2 as 9 per-tap K=128 matmuls
    (no 9*128-wide im2col buffer), emit per-channel sum / sum^2 partials."""
    scale = v1_ref[0:1, :].reshape(1, 1, LANES)
    shift = v1_ref[1:2, :].reshape(1, 1, LANES)
    # f32 scale+shift sweep, cast to bf16 once (before the tap slicing).
    a = jnp.maximum(y1_ref[0] * scale + shift, 0.0).astype(jnp.bfloat16)
    ho1, wo1, _ = a.shape
    ho2, wo2 = ho1 - 2, wo1 - 2
    acc = jnp.zeros((ho2 * wo2, LANES), jnp.float32)
    t = 0
    for kh in range(3):
        for kw in range(3):
            tap = a[kh:kh + ho2, kw:kw + wo2, :].reshape(ho2 * wo2, LANES)
            acc = acc + jnp.dot(tap, w2_ref[t],
                                preferred_element_type=jnp.float32)
            t += 1
    y2_ref[...] = acc.reshape(y2_ref.shape)
    s_ref[...] = jnp.concatenate(
        [jnp.sum(acc, axis=0, keepdims=True),
         jnp.sum(acc * acc, axis=0, keepdims=True)], axis=0).reshape(s_ref.shape)


def _bn2_residual_kernel(x_ref, y2_ref, wd_ref, v2_ref, o_ref):
    """Apply folded bn2, add downsample(x) (5x5 valid conv, K padded to 128),
    relu, lane-dense store."""
    kpad = wd_ref.shape[0]
    p = _im2col_pad(x_ref[0], 5, kpad)                           # (M2,128) bf16
    res = jnp.dot(p, wd_ref[...], preferred_element_type=jnp.float32)
    res = res + v2_ref[2:3, :]                                   # downsample bias
    m2 = res.shape[0]
    y2 = y2_ref[0].reshape(m2, LANES)
    out = jnp.maximum(y2 * v2_ref[0:1, :] + v2_ref[1:2, :] + res, 0.0)
    o_ref[...] = out.reshape(o_ref.shape)                        # lane-dense


# -------------------------------- wrapper -----------------------------------
def _pad2(a, rows, cols):
    return jnp.pad(a, ((0, rows - a.shape[0]), (0, cols - a.shape[1])))


def _pad_vec(v):
    return jnp.pad(v.astype(jnp.float32), (0, LANES - v.shape[0]))


def _fold_bn(partials, count, gamma_p, beta_p):
    """partials: (N, 2, 128) per-grid-step [sum; sum^2] -> per-channel
    scale/shift implementing training-mode BatchNorm (biased variance)."""
    s = jnp.sum(partials, axis=0)                                # (2, 128)
    mean = s[0] / count
    var = jnp.maximum(s[1] / count - mean * mean, 0.0)
    scale = gamma_p * jax.lax.rsqrt(var + EPS)
    shift = beta_p - mean * scale
    return scale, shift


def _vmem_limit_bytes():
    """Per-generation scoped-VMEM cap: ~96 MiB on v5e/v6e, ~48 MiB on v7x."""
    try:
        cap = pltpu.get_tpu_info().vmem_capacity_bytes
    except Exception:  # non-TPU / interpret fallback
        cap = 64 * 1024 * 1024
    return int(min(96 * 1024 * 1024, (cap * 3) // 4))


def residual_block_forward(x, params, *, data_format="NCHW"):
    """ResidualBlock forward.  Weights are HWIO; vectors are per-channel.

    params["b1"]/["b2"] (conv biases) are accepted but never fed to the
    kernels: a constant per-channel bias cancels exactly under training-mode
    BatchNorm.  With data_format="NHWC" no activation transposes are needed.
    """
    if data_format == "NCHW":
        x = jnp.transpose(x, (0, 2, 3, 1))
    n, h, w, ci = x.shape
    cout = params["w1"].shape[-1]
    if cout > LANES:
        raise NotImplementedError("cout > 128 needs output-lane tiling")
    ho1, wo1 = h - 2, w - 2
    ho2, wo2 = h - 4, w - 4
    m1, m2 = ho1 * wo1, ho2 * wo2

    # Cast the im2col SOURCE to bf16 once (before the 9x/25x patch expansion).
    x_bf = x.astype(jnp.bfloat16)

    # Weights as lane-dense im2col matrices, K and output lanes padded to 128.
    k1 = LANES * pl.cdiv(9 * ci, LANES)
    kd = LANES * pl.cdiv(25 * ci, LANES)
    w1_mat = _pad2(params["w1"].reshape(9 * ci, cout), k1, LANES
                   ).astype(jnp.bfloat16)
    wd_mat = _pad2(params["wd"].reshape(25 * ci, cout), kd, LANES
                   ).astype(jnp.bfloat16)
    w2_taps = jnp.pad(params["w2"].reshape(9, cout, cout),
                      ((0, 0), (0, LANES - cout), (0, LANES - cout))
                      ).astype(jnp.bfloat16)                     # (9,128,128)

    g1, be1 = _pad_vec(params["g1"]), _pad_vec(params["be1"])
    g2, be2 = _pad_vec(params["g2"]), _pad_vec(params["be2"])
    bd = _pad_vec(params["bd"])

    cparams = pltpu.CompilerParams(dimension_semantics=("parallel",),
                                   vmem_limit_bytes=_vmem_limit_bytes())

    # ---- stage 1: conv1 + per-batch-element channel sum / sum^2 ----
    y1_raw, s1 = pl.pallas_call(
        _conv1_stats_kernel,
        grid=(n,),
        in_specs=[pl.BlockSpec((1, h, w, ci), lambda b: (b, 0, 0, 0)),
                  pl.BlockSpec((k1, LANES), lambda b: (0, 0))],
        out_specs=[pl.BlockSpec((1, ho1, wo1, LANES), lambda b: (b, 0, 0, 0)),
                   pl.BlockSpec((1, 2, LANES), lambda b: (b, 0, 0))],
        out_shape=(jax.ShapeDtypeStruct((n, ho1, wo1, LANES), jnp.float32),
                   jax.ShapeDtypeStruct((n, 2, LANES), jnp.float32)),
        compiler_params=cparams,
        cost_estimate=pl.CostEstimate(
            flops=2 * n * m1 * k1 * LANES, transcendentals=0,
            bytes_accessed=(x_bf.size * 2 + w1_mat.size * 2
                            + n * m1 * LANES * 4 + n * 2 * LANES * 4)),
    )(x_bf, w1_mat)

    scale1, shift1 = _fold_bn(s1, n * m1, g1, be1)
    v1 = jnp.zeros((8, LANES), jnp.float32).at[0].set(scale1).at[1].set(shift1)

    # ---- stage 2: folded bn1 + relu -> conv2 (per-tap MXU) + stats ----
    y2_raw, s2 = pl.pallas_call(
        _bn1_conv2_stats_kernel,
        grid=(n,),
        in_specs=[pl.BlockSpec((1, ho1, wo1, LANES), lambda b: (b, 0, 0, 0)),
                  pl.BlockSpec((8, LANES), lambda b: (0, 0)),
                  pl.BlockSpec((9, LANES, LANES), lambda b: (0, 0, 0))],
        out_specs=[pl.BlockSpec((1, ho2, wo2, LANES), lambda b: (b, 0, 0, 0)),
                   pl.BlockSpec((1, 2, LANES), lambda b: (b, 0, 0))],
        out_shape=(jax.ShapeDtypeStruct((n, ho2, wo2, LANES), jnp.float32),
                   jax.ShapeDtypeStruct((n, 2, LANES), jnp.float32)),
        compiler_params=cparams,
        cost_estimate=pl.CostEstimate(
            flops=2 * n * m2 * 9 * LANES * LANES, transcendentals=0,
            bytes_accessed=(n * m1 * LANES * 4 + w2_taps.size * 2
                            + 8 * LANES * 4 + n * m2 * LANES * 4
                            + n * 2 * LANES * 4)),
    )(y1_raw, v1, w2_taps)

    scale2, shift2 = _fold_bn(s2, n * m2, g2, be2)
    v2 = (jnp.zeros((8, LANES), jnp.float32)
          .at[0].set(scale2).at[1].set(shift2).at[2].set(bd))

    # ---- stage 3: folded bn2 + downsample(5x5 conv) + add + relu ----
    out = pl.pallas_call(
        _bn2_residual_kernel,
        grid=(n,),
        in_specs=[pl.BlockSpec((1, h, w, ci), lambda b: (b, 0, 0, 0)),
                  pl.BlockSpec((1, ho2, wo2, LANES), lambda b: (b, 0, 0, 0)),
                  pl.BlockSpec((kd, LANES), lambda b: (0, 0)),
                  pl.BlockSpec((8, LANES), lambda b: (0, 0))],
        out_specs=pl.BlockSpec((1, ho2, wo2, LANES), lambda b: (b, 0, 0, 0)),
        out_shape=jax.ShapeDtypeStruct((n, ho2, wo2, LANES), jnp.float32),
        compiler_params=cparams,
        cost_estimate=pl.CostEstimate(
            flops=2 * n * m2 * kd * LANES, transcendentals=0,
            bytes_accessed=(x_bf.size * 2 + 2 * n * m2 * LANES * 4
                            + wd_mat.size * 2 + 8 * LANES * 4)),
    )(x_bf, y2_raw, wd_mat, v2)

    out = out[..., :cout]                                 # drop lane padding
    if data_format == "NCHW":
        out = jnp.transpose(out, (0, 3, 1, 2))
    return out


# ------------------------- plain-JAX reference ------------------------------
def _reference(x_nchw, p):
    x = jnp.transpose(x_nchw, (0, 2, 3, 1))

    def conv(v, w, b):
        y = jax.lax.conv_general_dilated(
            v, w, (1, 1), "VALID",
            dimension_numbers=("NHWC", "HWIO", "NHWC"))
        return y + b.reshape(1, 1, 1, -1)

    def bn(v, g, be):
        m = v.mean(axis=(0, 1, 2), keepdims=True)
        var = ((v - m) ** 2).mean(axis=(0, 1, 2), keepdims=True)
        return ((v - m) / jnp.sqrt(var + EPS) * g.reshape(1, 1, 1, -1)
                + be.reshape(1, 1, 1, -1))

    y = jnp.maximum(bn(conv(x, p["w1"], p["b1"]), p["g1"], p["be1"]), 0.0)
    y = bn(conv(y, p["w2"], p["b2"]), p["g2"], p["be2"])
    r = conv(x, p["wd"], p["bd"])
    return jnp.transpose(jnp.maximum(y + r, 0.0), (0, 3, 1, 2))


# ---------------------------------- main ------------------------------------
if __name__ == "__main__":
    N, CIN, COUT, H, W = 2, 4, 8, 16, 16

    key = jax.random.PRNGKey(0)
    keys = jax.random.split(key, 12)

    params = {
        # conv1: Conv2d(CIN, COUT, 3)  (HWIO)
        "w1": 0.1 * jax.random.normal(keys[0], (3, 3, CIN, COUT), jnp.float32),
        "b1": 0.1 * jax.random.normal(keys[1], (COUT,), jnp.float32),
        # bn1
        "g1": 1.0 + 0.05 * jax.random.normal(keys[2], (COUT,), jnp.float32),
        "be1": 0.05 * jax.random.normal(keys[3], (COUT,), jnp.float32),
        # conv2: Conv2d(COUT, COUT, 3)
        "w2": 0.1 * jax.random.normal(keys[4], (3, 3, COUT, COUT), jnp.float32),
        "b2": 0.1 * jax.random.normal(keys[5], (COUT,), jnp.float32),
        # bn2
        "g2": 1.0 + 0.05 * jax.random.normal(keys[6], (COUT,), jnp.float32),
        "be2": 0.05 * jax.random.normal(keys[7], (COUT,), jnp.float32),
        # downsample: Conv2d(CIN, COUT, 5) valid, so residual matches H-4,W-4
        "wd": 0.1 * jax.random.normal(keys[8], (5, 5, CIN, COUT), jnp.float32),
        "bd": 0.1 * jax.random.normal(keys[9], (COUT,), jnp.float32),
    }

    x = jax.random.normal(keys[10], (N, CIN, H, W), jnp.float32)  # NCHW input

    out = jax.block_until_ready(jax.jit(residual_block_forward)(x, params))
    ref = jax.block_until_ready(_reference(x, params))

    assert out.shape == (N, COUT, H - 4, W - 4), out.shape
    max_err = float(jnp.max(jnp.abs(out - ref)))
    assert jnp.allclose(out, ref, rtol=5e-2, atol=5e-2), max_err

    print("KERNEL_OK")
</pallas_src>

<mosaic_0001>
module attributes {stable_mosaic.version = 11 : i64} {
  func.func @_conv1_stats_kernel(%arg0: i32, %arg1: memref<1x16x16x4xbf16, #tpu.memory_space<vmem>>, %arg2: memref<128x128xbf16, #tpu.memory_space<vmem>>, %arg3: memref<1x14x14x128xf32, #tpu.memory_space<vmem>>, %arg4: memref<1x2x128xf32, #tpu.memory_space<vmem>>) attributes {dimension_semantics = [#tpu.dimension_semantics<parallel>], iteration_bounds = array<i64: 2>, scalar_prefetch = 0 : i64, scratch_operands = 0 : i64, tpu.core_type = #tpu.core_type<tc>, window_params = [{transform_indices = @transform_0, window_bounds = array<i64: 1, 16, 16, 4>}, {pipeline_mode = #tpu.pipeline_mode<synchronous>, transform_indices = @transform_1, window_bounds = array<i64: 128, 128>}, {transform_indices = @transform_2, window_bounds = array<i64: 1, 14, 14, 128>}, {transform_indices = @transform_3, window_bounds = array<i64: 1, 2, 128>}]} {
    %c0 = arith.constant 0 : index
    %c0_0 = arith.constant 0 : index
    %c0_1 = arith.constant 0 : index
    %c0_2 = arith.constant 0 : index
    %0 = vector.load %arg1[%c0, %c0_0, %c0_1, %c0_2] : memref<1x16x16x4xbf16, #tpu.memory_space<vmem>>, vector<1x16x16x4xbf16>
    %1 = vector.shape_cast %0 : vector<1x16x16x4xbf16> to vector<16x16x4xbf16>
    %2 = vector.extract_strided_slice %1 {offsets = [0, 0, 0], sizes = [14, 14, 4], strides = [1, 1, 1]} : vector<16x16x4xbf16> to vector<14x14x4xbf16>
    %3 = vector.extract_strided_slice %1 {offsets = [0, 1, 0], sizes = [14, 14, 4], strides = [1, 1, 1]} : vector<16x16x4xbf16> to vector<14x14x4xbf16>
    %4 = vector.extract_strided_slice %1 {offsets = [0, 2, 0], sizes = [14, 14, 4], strides = [1, 1, 1]} : vector<16x16x4xbf16> to vector<14x14x4xbf16>
    %5 = vector.extract_strided_slice %1 {offsets = [1, 0, 0], sizes = [14, 14, 4], strides = [1, 1, 1]} : vector<16x16x4xbf16> to vector<14x14x4xbf16>
    %6 = vector.extract_strided_slice %1 {offsets = [1, 1, 0], sizes = [14, 14, 4], strides = [1, 1, 1]} : vector<16x16x4xbf16> to vector<14x14x4xbf16>
    %7 = vector.extract_strided_slice %1 {offsets = [1, 2, 0], sizes = [14, 14, 4], strides = [1, 1, 1]} : vector<16x16x4xbf16> to vector<14x14x4xbf16>
    %8 = vector.extract_strided_slice %1 {offsets = [2, 0, 0], sizes = [14, 14, 4], strides = [1, 1, 1]} : vector<16x16x4xbf16> to vector<14x14x4xbf16>
    %9 = vector.extract_strided_slice %1 {offsets = [2, 1, 0], sizes = [14, 14, 4], strides = [1, 1, 1]} : vector<16x16x4xbf16> to vector<14x14x4xbf16>
    %10 = vector.extract_strided_slice %1 {offsets = [2, 2, 0], sizes = [14, 14, 4], strides = [1, 1, 1]} : vector<16x16x4xbf16> to vector<14x14x4xbf16>
    %11 = tpu.concatenate %2, %3, %4, %5, %6, %7, %8, %9, %10 in 2 : vector<14x14x4xbf16>, vector<14x14x4xbf16>, vector<14x14x4xbf16>, vector<14x14x4xbf16>, vector<14x14x4xbf16>, vector<14x14x4xbf16>, vector<14x14x4xbf16>, vector<14x14x4xbf16>, vector<14x14x4xbf16> -> vector<14x14x36xbf16>
    %12 = vector.shape_cast %11 : vector<14x14x36xbf16> to vector<196x36xbf16>
    %cst = arith.constant 0.000000e+00 : bf16
    %13 = vector.broadcast %cst : bf16 to vector<196x92xbf16>
    %14 = tpu.concatenate %12, %13 in 1 : vector<196x36xbf16>, vector<196x92xbf16> -> vector<196x128xbf16>
    %c0_3 = arith.constant 0 : index
    %c0_4 = arith.constant 0 : index
    %15 = vector.load %arg2[%c0_3, %c0_4] : memref<128x128xbf16, #tpu.memory_space<vmem>>, vector<128x128xbf16>
    %cst_5 = arith.constant dense<0.000000e+00> : vector<196x128xf32>
    %16 = tpu.matmul %14, %15, %cst_5 {dimension_numbers = #tpu.dot_dimension_numbers<[1], [0], [0], [1], [0, 0, 1, 1], [], []>} : vector<196x128xbf16>, vector<128x128xbf16>, vector<196x128xf32> -> vector<196x128xf32>
    %17 = vector.shape_cast %16 : vector<196x128xf32> to vector<1x14x14x128xf32>
    %c0_6 = arith.constant 0 : index
    %c0_7 = arith.constant 0 : index
    %c0_8 = arith.constant 0 : index
    %c0_9 = arith.constant 0 : index
    %18 = vector.load %arg3[%c0_6, %c0_7, %c0_8, %c0_9] : memref<1x14x14x128xf32, #tpu.memory_space<vmem>>, vector<1x14x14x128xf32>
    tpu.vector_store %arg3[%c0_6, %c0_7, %c0_8, %c0_9], %17 {strides = array<i32>} : memref<1x14x14x128xf32, #tpu.memory_space<vmem>>, vector<1x14x14x128xf32>,
    %cst_10 = arith.constant dense<0.000000e+00> : vector<128xf32>
    %19 = vector.multi_reduction <add>, %16, %cst_10 [0] : vector<196x128xf32> to vector<128xf32>
    %20 = vector.shape_cast %19 : vector<128xf32> to vector<1x128xf32>
    %21 = arith.mulf %16, %16 : vector<196x128xf32>
    %cst_11 = arith.constant dense<0.000000e+00> : vector<128xf32>
    %22 = vector.multi_reduction <add>, %21, %cst_11 [0] : vector<196x128xf32> to vector<128xf32>
    %23 = vector.shape_cast %22 : vector<128xf32> to vector<1x128xf32>
    %24 = tpu.concatenate %20, %23 in 0 : vector<1x128xf32>, vector<1x128xf32> -> vector<2x128xf32>
    %25 = vector.shape_cast %24 : vector<2x128xf32> to vector<1x2x128xf32>
    %c0_12 = arith.constant 0 : index
    %c0_13 = arith.constant 0 : index
    %c0_14 = arith.constant 0 : index
    %26 = vector.load %arg4[%c0_12, %c0_13, %c0_14] : memref<1x2x128xf32, #tpu.memory_space<vmem>>, vector<1x2x128xf32>
    tpu.vector_store %arg4[%c0_12, %c0_13, %c0_14], %25 {strides = array<i32>} : memref<1x2x128xf32, #tpu.memory_space<vmem>>, vector<1x2x128xf32>,
    return
  }
  func.func @transform_0(%arg0: i32) -> (i32, i32, i32, i32) {
    %c0_i32 = arith.constant 0 : i32
    %c0_i32_0 = arith.constant 0 : i32
    %c0_i32_1 = arith.constant 0 : i32
    %c0_i32_2 = arith.constant 0 : i32
    return %arg0, %c0_i32, %c0_i32_0, %c0_i32_1 : i32, i32, i32, i32
  }
  func.func @transform_1(%arg0: i32) -> (i32, i32) {
    %c0_i32 = arith.constant 0 : i32
    %c0_i32_0 = arith.constant 0 : i32
    %c0_i32_1 = arith.constant 0 : i32
    return %c0_i32, %c0_i32_0 : i32, i32
  }
  func.func @transform_2(%arg0: i32) -> (i32, i32, i32, i32) {
    %c0_i32 = arith.constant 0 : i32
    %c0_i32_0 = arith.constant 0 : i32
    %c0_i32_1 = arith.constant 0 : i32
    %c0_i32_2 = arith.constant 0 : i32
    return %arg0, %c0_i32, %c0_i32_0, %c0_i32_1 : i32, i32, i32, i32
  }
  func.func @transform_3(%arg0: i32) -> (i32, i32, i32) {
    %c0_i32 = arith.constant 0 : i32
    %c0_i32_0 = arith.constant 0 : i32
    %c0_i32_1 = arith.constant 0 : i32
    return %arg0, %c0_i32, %c0_i32_0 : i32, i32, i32
  }
}

module attributes {stable_mosaic.version = 11 : i64} {
  func.func @_bn1_conv2_stats_kernel(%arg0: i32, %arg1: memref<1x14x14x128xf32, #tpu.memory_space<vmem>>, %arg2: memref<8x128xf32, #tpu.memory_space<vmem>>, %arg3: memref<9x128x128xbf16, #tpu.memory_space<vmem>>, %arg4: memref<1x12x12x128xf32, #tpu.memory_space<vmem>>, %arg5: memref<1x2x128xf32, #tpu.memory_space<vmem>>) attributes {dimension_semantics = [#tpu.dimension_semantics<parallel>], iteration_bounds = array<i64: 2>, scalar_prefetch = 0 : i64, scratch_operands = 0 : i64, tpu.core_type = #tpu.core_type<tc>, window_params = [{transform_indices = @transform_0, window_bounds = array<i64: 1, 14, 14, 128>}, {pipeline_mode = #tpu.pipeline_mode<synchronous>, transform_indices = @transform_1, window_bounds = array<i64: 8, 128>}, {pipeline_mode = #tpu.pipeline_mode<synchronous>, transform_indices = @transform_2, window_bounds = array<i64: 9, 128, 128>}, {transform_indices = @transform_3, window_bounds = array<i64: 1, 12, 12, 128>}, {transform_indices = @transform_4, window_bounds = array<i64: 1, 2, 128>}]} {
    %c0 = arith.constant 0 : index
    %c0_0 = arith.constant 0 : index
    %0 = vector.load %arg2[%c0, %c0_0] : memref<8x128xf32, #tpu.memory_space<vmem>>, vector<1x128xf32>
    %1 = vector.shape_cast %0 : vector<1x128xf32> to vector<1x1x128xf32>
    %c1 = arith.constant 1 : index
    %c0_1 = arith.constant 0 : index
    %2 = vector.load %arg2[%c1, %c0_1] : memref<8x128xf32, #tpu.memory_space<vmem>>, vector<1x128xf32>
    %3 = vector.shape_cast %2 : vector<1x128xf32> to vector<1x1x128xf32>
    %c0_2 = arith.constant 0 : index
    %c0_3 = arith.constant 0 : index
    %c0_4 = arith.constant 0 : index
    %c0_5 = arith.constant 0 : index
    %4 = vector.load %arg1[%c0_2, %c0_3, %c0_4, %c0_5] : memref<1x14x14x128xf32, #tpu.memory_space<vmem>>, vector<1x14x14x128xf32>
    %5 = vector.shape_cast %4 : vector<1x14x14x128xf32> to vector<14x14x128xf32>
    %6 = vector.broadcast %1 : vector<1x1x128xf32> to vector<14x14x128xf32>
    %7 = arith.mulf %5, %6 : vector<14x14x128xf32>
    %8 = vector.broadcast %3 : vector<1x1x128xf32> to vector<14x14x128xf32>
    %9 = arith.addf %7, %8 : vector<14x14x128xf32>
    %cst = arith.constant 0.000000e+00 : f32
    %10 = vector.broadcast %cst : f32 to vector<14x14x128xf32>
    %11 = arith.maximumf %9, %10 : vector<14x14x128xf32>
    %12 = arith.truncf %11 : vector<14x14x128xf32> to vector<14x14x128xbf16>
    %cst_6 = arith.constant 0.000000e+00 : f32
    %13 = vector.broadcast %cst_6 : f32 to vector<144x128xf32>
    %14 = vector.extract_strided_slice %12 {offsets = [0, 0, 0], sizes = [12, 12, 128], strides = [1, 1, 1]} : vector<14x14x128xbf16> to vector<12x12x128xbf16>
    %15 = vector.shape_cast %14 : vector<12x12x128xbf16> to vector<144x128xbf16>
    %c0_7 = arith.constant 0 : index
    %c0_8 = arith.constant 0 : index
    %c0_9 = arith.constant 0 : index
    %16 = vector.load %arg3[%c0_7, %c0_8, %c0_9] : memref<9x128x128xbf16, #tpu.memory_space<vmem>>, vector<1x128x128xbf16>
    %17 = vector.shape_cast %16 : vector<1x128x128xbf16> to vector<128x128xbf16>
    %cst_10 = arith.constant dense<0.000000e+00> : vector<144x128xf32>
    %18 = tpu.matmul %15, %17, %cst_10 {dimension_numbers = #tpu.dot_dimension_numbers<[1], [0], [0], [1], [0, 0, 1, 1], [], []>} : vector<144x128xbf16>, vector<128x128xbf16>, vector<144x128xf32> -> vector<144x128xf32>
    %19 = arith.addf %13, %18 : vector<144x128xf32>
    %20 = vector.extract_strided_slice %12 {offsets = [0, 1, 0], sizes = [12, 12, 128], strides = [1, 1, 1]} : vector<14x14x128xbf16> to vector<12x12x128xbf16>
    %21 = vector.shape_cast %20 : vector<12x12x128xbf16> to vector<144x128xbf16>
    %c1_11 = arith.constant 1 : index
    %c0_12 = arith.constant 0 : index
    %c0_13 = arith.constant 0 : index
    %22 = vector.load %arg3[%c1_11, %c0_12, %c0_13] : memref<9x128x128xbf16, #tpu.memory_space<vmem>>, vector<1x128x128xbf16>
    %23 = vector.shape_cast %22 : vector<1x128x128xbf16> to vector<128x128xbf16>
    %cst_14 = arith.constant dense<0.000000e+00> : vector<144x128xf32>
    %24 = tpu.matmul %21, %23, %cst_14 {dimension_numbers = #tpu.dot_dimension_numbers<[1], [0], [0], [1], [0, 0, 1, 1], [], []>} : vector<144x128xbf16>, vector<128x128xbf16>, vector<144x128xf32> -> vector<144x128xf32>
    %25 = arith.addf %19, %24 : vector<144x128xf32>
    %26 = vector.extract_strided_slice %12 {offsets = [0, 2, 0], sizes = [12, 12, 128], strides = [1, 1, 1]} : vector<14x14x128xbf16> to vector<12x12x128xbf16>
    %27 = vector.shape_cast %26 : vector<12x12x128xbf16> to vector<144x128xbf16>
    %c2 = arith.constant 2 : index
    %c0_15 = arith.constant 0 : index
    %c0_16 = arith.constant 0 : index
    %28 = vector.load %arg3[%c2, %c0_15, %c0_16] : memref<9x128x128xbf16, #tpu.memory_space<vmem>>, vector<1x128x128xbf16>
    %29 = vector.shape_cast %28 : vector<1x128x128xbf16> to vector<128x128xbf16>
    %cst_17 = arith.constant dense<0.000000e+00> : vector<144x128xf32>
    %30 = tpu.matmul %27, %29, %cst_17 {dimension_numbers = #tpu.dot_dimension_numbers<[1], [0], [0], [1], [0, 0, 1, 1], [], []>} : vector<144x128xbf16>, vector<128x128xbf16>, vector<144x128xf32> -> vector<144x128xf32>
    %31 = arith.addf %25, %30 : vector<144x128xf32>
    %32 = vector.extract_strided_slice %12 {offsets = [1, 0, 0], sizes = [12, 12, 128], strides = [1, 1, 1]} : vector<14x14x128xbf16> to vector<12x12x128xbf16>
    %33 = vector.shape_cast %32 : vector<12x12x128xbf16> to vector<144x128xbf16>
    %c3 = arith.constant 3 : index
    %c0_18 = arith.constant 0 : index
    %c0_19 = arith.constant 0 : index
    %34 = vector.load %arg3[%c3, %c0_18, %c0_19] : memref<9x128x128xbf16, #tpu.memory_space<vmem>>, vector<1x128x128xbf16>
    %35 = vector.shape_cast %34 : vector<1x128x128xbf16> to vector<128x128xbf16>
    %cst_20 = arith.constant dense<0.000000e+00> : vector<144x128xf32>
    %36 = tpu.matmul %33, %35, %cst_20 {dimension_numbers = #tpu.dot_dimension_numbers<[1], [0], [0], [1], [0, 0, 1, 1], [], []>} : vector<144x128xbf16>, vector<128x128xbf16>, vector<144x128xf32> -> vector<144x128xf32>
    %37 = arith.addf %31, %36 : vector<144x128xf32>
    %38 = vector.extract_strided_slice %12 {offsets = [1, 1, 0], sizes = [12, 12, 128], strides = [1, 1, 1]} : vector<14x14x128xbf16> to vector<12x12x128xbf16>
    %39 = vector.shape_cast %38 : vector<12x12x128xbf16> to vector<144x128xbf16>
    %c4 = arith.constant 4 : index
    %c0_21 = arith.constant 0 : index
    %c0_22 = arith.constant 0 : index
    %40 = vector.load %arg3[%c4, %c0_21, %c0_22] : memref<9x128x128xbf16, #tpu.memory_space<vmem>>, vector<1x128x128xbf16>
    %41 = vector.shape_cast %40 : vector<1x128x128xbf16> to vector<128x128xbf16>
    %cst_23 = arith.constant dense<0.000000e+00> : vector<144x128xf32>
    %42 = tpu.matmul %39, %41, %cst_23 {dimension_numbers = #tpu.dot_dimension_numbers<[1], [0], [0], [1], [0, 0, 1, 1], [], []>} : vector<144x128xbf16>, vector<128x128xbf16>, vector<144x128xf32> -> vector<144x128xf32>
    %43 = arith.addf %37, %42 : vector<144x128xf32>
    %44 = vector.extract_strided_slice %12 {offsets = [1, 2, 0], sizes = [12, 12, 128], strides = [1, 1, 1]} : vector<14x14x128xbf16> to vector<12x12x128xbf16>
    %45 = vector.shape_cast %44 : vector<12x12x128xbf16> to vector<144x128xbf16>
    %c5 = arith.constant 5 : index
    %c0_24 = arith.constant 0 : index
    %c0_25 = arith.constant 0 : index
    %46 = vector.load %arg3[%c5, %c0_24, %c0_25] : memref<9x128x128xbf16, #tpu.memory_space<vmem>>, vector<1x128x128xbf16>
    %47 = vector.shape_cast %46 : vector<1x128x128xbf16> to vector<128x128xbf16>
    %cst_26 = arith.constant dense<0.000000e+00> : vector<144x128xf32>
    %48 = tpu.matmul %45, %47, %cst_26 {dimension_numbers = #tpu.dot_dimension_numbers<[1], [0], [0], [1], [0, 0, 1, 1], [], []>} : vector<144x128xbf16>, vector<128x128xbf16>, vector<144x128xf32> -> vector<144x128xf32>
    %49 = arith.addf %43, %48 : vector<144x128xf32>
    %50 = vector.extract_strided_slice %12 {offsets = [2, 0, 0], sizes = [12, 12, 128], strides = [1, 1, 1]} : vector<14x14x128xbf16> to vector<12x12x128xbf16>
    %51 = vector.shape_cast %50 : vector<12x12x128xbf16> to vector<144x128xbf16>
    %c6 = arith.constant 6 : index
    %c0_27 = arith.constant 0 : index
    %c0_28 = arith.constant 0 : index
    %52 = vector.load %arg3[%c6, %c0_27, %c0_28] : memref<9x128x128xbf16, #tpu.memory_space<vmem>>, vector<1x128x128xbf16>
    %53 = vector.shape_cast %52 : vector<1x128x128xbf16> to vector<128x128xbf16>
    %cst_29 = arith.constant dense<0.000000e+00> : vector<144x128xf32>
    %54 = tpu.matmul %51, %53, %cst_29 {dimension_numbers = #tpu.dot_dimension_numbers<[1], [0], [0], [1], [0, 0, 1, 1], [], []>} : vector<144x128xbf16>, vector<128x128xbf16>, vector<144x128xf32> -> vector<144x128xf32>
    %55 = arith.addf %49, %54 : vector<144x128xf32>
    %56 = vector.extract_strided_slice %12 {offsets = [2, 1, 0], sizes = [12, 12, 128], strides = [1, 1, 1]} : vector<14x14x128xbf16> to vector<12x12x128xbf16>
    %57 = vector.shape_cast %56 : vector<12x12x128xbf16> to vector<144x128xbf16>
    %c7 = arith.constant 7 : index
    %c0_30 = arith.constant 0 : index
    %c0_31 = arith.constant 0 : index
    %58 = vector.load %arg3[%c7, %c0_30, %c0_31] : memref<9x128x128xbf16, #tpu.memory_space<vmem>>, vector<1x128x128xbf16>
    %59 = vector.shape_cast %58 : vector<1x128x128xbf16> to vector<128x128xbf16>
    %cst_32 = arith.constant dense<0.000000e+00> : vector<144x128xf32>
    %60 = tpu.matmul %57, %59, %cst_32 {dimension_numbers = #tpu.dot_dimension_numbers<[1], [0], [0], [1], [0, 0, 1, 1], [], []>} : vector<144x128xbf16>, vector<128x128xbf16>, vector<144x128xf32> -> vector<144x128xf32>
    %61 = arith.addf %55, %60 : vector<144x128xf32>
    %62 = vector.extract_strided_slice %12 {offsets = [2, 2, 0], sizes = [12, 12, 128], strides = [1, 1, 1]} : vector<14x14x128xbf16> to vector<12x12x128xbf16>
    %63 = vector.shape_cast %62 : vector<12x12x128xbf16> to vector<144x128xbf16>
    %c8 = arith.constant 8 : index
    %c0_33 = arith.constant 0 : index
    %c0_34 = arith.constant 0 : index
    %64 = vector.load %arg3[%c8, %c0_33, %c0_34] : memref<9x128x128xbf16, #tpu.memory_space<vmem>>, vector<1x128x128xbf16>
    %65 = vector.shape_cast %64 : vector<1x128x128xbf16> to vector<128x128xbf16>
    %cst_35 = arith.constant dense<0.000000e+00> : vector<144x128xf32>
    %66 = tpu.matmul %63, %65, %cst_35 {dimension_numbers = #tpu.dot_dimension_numbers<[1], [0], [0], [1], [0, 0, 1, 1], [], []>} : vector<144x128xbf16>, vector<128x128xbf16>, vector<144x128xf32> -> vector<144x128xf32>
    %67 = arith.addf %61, %66 : vector<144x128xf32>
    %68 = vector.shape_cast %67 : vector<144x128xf32> to vector<1x12x12x128xf32>
    %c0_36 = arith.constant 0 : index
    %c0_37 = arith.constant 0 : index
    %c0_38 = arith.constant 0 : index
    %c0_39 = arith.constant 0 : index
    %69 = vector.load %arg4[%c0_36, %c0_37, %c0_38, %c0_39] : memref<1x12x12x128xf32, #tpu.memory_space<vmem>>, vector<1x12x12x128xf32>
    tpu.vector_store %arg4[%c0_36, %c0_37, %c0_38, %c0_39], %68 {strides = array<i32>} : memref<1x12x12x128xf32, #tpu.memory_space<vmem>>, vector<1x12x12x128xf32>,
    %cst_40 = arith.constant dense<0.000000e+00> : vector<128xf32>
    %70 = vector.multi_reduction <add>, %67, %cst_40 [0] : vector<144x128xf32> to vector<128xf32>
    %71 = vector.shape_cast %70 : vector<128xf32> to vector<1x128xf32>
    %72 = arith.mulf %67, %67 : vector<144x128xf32>
    %cst_41 = arith.constant dense<0.000000e+00> : vector<128xf32>
    %73 = vector.multi_reduction <add>, %72, %cst_41 [0] : vector<144x128xf32> to vector<128xf32>
    %74 = vector.shape_cast %73 : vector<128xf32> to vector<1x128xf32>
    %75 = tpu.concatenate %71, %74 in 0 : vector<1x128xf32>, vector<1x128xf32> -> vector<2x128xf32>
    %76 = vector.shape_cast %75 : vector<2x128xf32> to vector<1x2x128xf32>
    %c0_42 = arith.constant 0 : index
    %c0_43 = arith.constant 0 : index
    %c0_44 = arith.constant 0 : index
    %77 = vector.load %arg5[%c0_42, %c0_43, %c0_44] : memref<1x2x128xf32, #tpu.memory_space<vmem>>, vector<1x2x128xf32>
    tpu.vector_store %arg5[%c0_42, %c0_43, %c0_44], %76 {strides = array<i32>} : memref<1x2x128xf32, #tpu.memory_space<vmem>>, vector<1x2x128xf32>,
    return
  }
  func.func @transform_0(%arg0: i32) -> (i32, i32, i32, i32) {
    %c0_i32 = arith.constant 0 : i32
    %c0_i32_0 = arith.constant 0 : i32
    %c0_i32_1 = arith.constant 0 : i32
    %c0_i32_2 = arith.constant 0 : i32
    return %arg0, %c0_i32, %c0_i32_0, %c0_i32_1 : i32, i32, i32, i32
  }
  func.func @transform_1(%arg0: i32) -> (i32, i32) {
    %c0_i32 = arith.constant 0 : i32
    %c0_i32_0 = arith.constant 0 : i32
    %c0_i32_1 = arith.constant 0 : i32
    return %c0_i32, %c0_i32_0 : i32, i32
  }
  func.func @transform_2(%arg0: i32) -> (i32, i32, i32) {
    %c0_i32 = arith.constant 0 : i32
    %c0_i32_0 = arith.constant 0 : i32
    %c0_i32_1 = arith.constant 0 : i32
    %c0_i32_2 = arith.constant 0 : i32
    return %c0_i32, %c0_i32_0, %c0_i32_1 : i32, i32, i32
  }
  func.func @transform_3(%arg0: i32) -> (i32, i32, i32, i32) {
    %c0_i32 = arith.constant 0 : i32
    %c0_i32_0 = arith.constant 0 : i32
    %c0_i32_1 = arith.constant 0 : i32
    %c0_i32_2 = arith.constant 0 : i32
    return %arg0, %c0_i32, %c0_i32_0, %c0_i32_1 : i32, i32, i32, i32
  }
  func.func @transform_4(%arg0: i32) -> (i32, i32, i32) {
    %c0_i32 = arith.constant 0 : i32
    %c0_i32_0 = arith.constant 0 : i32
    %c0_i32_1 = arith.constant 0 : i32
    return %arg0, %c0_i32, %c0_i32_0 : i32, i32, i32
  }
}

module attributes {stable_mosaic.version = 11 : i64} {
  func.func @_bn2_residual_kernel(%arg0: i32, %arg1: memref<1x16x16x4xbf16, #tpu.memory_space<vmem>>, %arg2: memref<1x12x12x128xf32, #tpu.memory_space<vmem>>, %arg3: memref<128x128xbf16, #tpu.memory_space<vmem>>, %arg4: memref<8x128xf32, #tpu.memory_space<vmem>>, %arg5: memref<1x12x12x128xf32, #tpu.memory_space<vmem>>) attributes {dimension_semantics = [#tpu.dimension_semantics<parallel>], iteration_bounds = array<i64: 2>, scalar_prefetch = 0 : i64, scratch_operands = 0 : i64, tpu.core_type = #tpu.core_type<tc>, window_params = [{transform_indices = @transform_0, window_bounds = array<i64: 1, 16, 16, 4>}, {transform_indices = @transform_1, window_bounds = array<i64: 1, 12, 12, 128>}, {pipeline_mode = #tpu.pipeline_mode<synchronous>, transform_indices = @transform_2, window_bounds = array<i64: 128, 128>}, {pipeline_mode = #tpu.pipeline_mode<synchronous>, transform_indices = @transform_3, window_bounds = array<i64: 8, 128>}, {transform_indices = @transform_4, window_bounds = array<i64: 1, 12, 12, 128>}]} {
    %c0 = arith.constant 0 : index
    %c0_0 = arith.constant 0 : index
    %c0_1 = arith.constant 0 : index
    %c0_2 = arith.constant 0 : index
    %0 = vector.load %arg1[%c0, %c0_0, %c0_1, %c0_2] : memref<1x16x16x4xbf16, #tpu.memory_space<vmem>>, vector<1x16x16x4xbf16>
    %1 = vector.shape_cast %0 : vector<1x16x16x4xbf16> to vector<16x16x4xbf16>
    %2 = vector.extract_strided_slice %1 {offsets = [0, 0, 0], sizes = [12, 12, 4], strides = [1, 1, 1]} : vector<16x16x4xbf16> to vector<12x12x4xbf16>
    %3 = vector.extract_strided_slice %1 {offsets = [0, 1, 0], sizes = [12, 12, 4], strides = [1, 1, 1]} : vector<16x16x4xbf16> to vector<12x12x4xbf16>
    %4 = vector.extract_strided_slice %1 {offsets = [0, 2, 0], sizes = [12, 12, 4], strides = [1, 1, 1]} : vector<16x16x4xbf16> to vector<12x12x4xbf16>
    %5 = vector.extract_strided_slice %1 {offsets = [0, 3, 0], sizes = [12, 12, 4], strides = [1, 1, 1]} : vector<16x16x4xbf16> to vector<12x12x4xbf16>
    %6 = vector.extract_strided_slice %1 {offsets = [0, 4, 0], sizes = [12, 12, 4], strides = [1, 1, 1]} : vector<16x16x4xbf16> to vector<12x12x4xbf16>
    %7 = vector.extract_strided_slice %1 {offsets = [1, 0, 0], sizes = [12, 12, 4], strides = [1, 1, 1]} : vector<16x16x4xbf16> to vector<12x12x4xbf16>
    %8 = vector.extract_strided_slice %1 {offsets = [1, 1, 0], sizes = [12, 12, 4], strides = [1, 1, 1]} : vector<16x16x4xbf16> to vector<12x12x4xbf16>
    %9 = vector.extract_strided_slice %1 {offsets = [1, 2, 0], sizes = [12, 12, 4], strides = [1, 1, 1]} : vector<16x16x4xbf16> to vector<12x12x4xbf16>
    %10 = vector.extract_strided_slice %1 {offsets = [1, 3, 0], sizes = [12, 12, 4], strides = [1, 1, 1]} : vector<16x16x4xbf16> to vector<12x12x4xbf16>
    %11 = vector.extract_strided_slice %1 {offsets = [1, 4, 0], sizes = [12, 12, 4], strides = [1, 1, 1]} : vector<16x16x4xbf16> to vector<12x12x4xbf16>
    %12 = vector.extract_strided_slice %1 {offsets = [2, 0, 0], sizes = [12, 12, 4], strides = [1, 1, 1]} : vector<16x16x4xbf16> to vector<12x12x4xbf16>
    %13 = vector.extract_strided_slice %1 {offsets = [2, 1, 0], sizes = [12, 12, 4], strides = [1, 1, 1]} : vector<16x16x4xbf16> to vector<12x12x4xbf16>
    %14 = vector.extract_strided_slice %1 {offsets = [2, 2, 0], sizes = [12, 12, 4], strides = [1, 1, 1]} : vector<16x16x4xbf16> to vector<12x12x4xbf16>
    %15 = vector.extract_strided_slice %1 {offsets = [2, 3, 0], sizes = [12, 12, 4], strides = [1, 1, 1]} : vector<16x16x4xbf16> to vector<12x12x4xbf16>
    %16 = vector.extract_strided_slice %1 {offsets = [2, 4, 0], sizes = [12, 12, 4], strides = [1, 1, 1]} : vector<16x16x4xbf16> to vector<12x12x4xbf16>
    %17 = vector.extract_strided_slice %1 {offsets = [3, 0, 0], sizes = [12, 12, 4], strides = [1, 1, 1]} : vector<16x16x4xbf16> to vector<12x12x4xbf16>
    %18 = vector.extract_strided_slice %1 {offsets = [3, 1, 0], sizes = [12, 12, 4], strides = [1, 1, 1]} : vector<16x16x4xbf16> to vector<12x12x4xbf16>
    %19 = vector.extract_strided_slice %1 {offsets = [3, 2, 0], sizes = [12, 12, 4], strides = [1, 1, 1]} : vector<16x16x4xbf16> to vector<12x12x4xbf16>
    %20 = vector.extract_strided_slice %1 {offsets = [3, 3, 0], sizes = [12, 12, 4], strides = [1, 1, 1]} : vector<16x16x4xbf16> to vector<12x12x4xbf16>
    %21 = vector.extract_strided_slice %1 {offsets = [3, 4, 0], sizes = [12, 12, 4], strides = [1, 1, 1]} : vector<16x16x4xbf16> to vector<12x12x4xbf16>
    %22 = vector.extract_strided_slice %1 {offsets = [4, 0, 0], sizes = [12, 12, 4], strides = [1, 1, 1]} : vector<16x16x4xbf16> to vector<12x12x4xbf16>
    %23 = vector.extract_strided_slice %1 {offsets = [4, 1, 0], sizes = [12, 12, 4], strides = [1, 1, 1]} : vector<16x16x4xbf16> to vector<12x12x4xbf16>
    %24 = vector.extract_strided_slice %1 {offsets = [4, 2, 0], sizes = [12, 12, 4], strides = [1, 1, 1]} : vector<16x16x4xbf16> to vector<12x12x4xbf16>
    %25 = vector.extract_strided_slice %1 {offsets = [4, 3, 0], sizes = [12, 12, 4], strides = [1, 1, 1]} : vector<16x16x4xbf16> to vector<12x12x4xbf16>
    %26 = vector.extract_strided_slice %1 {offsets = [4, 4, 0], sizes = [12, 12, 4], strides = [1, 1, 1]} : vector<16x16x4xbf16> to vector<12x12x4xbf16>
    %27 = tpu.concatenate %2, %3, %4, %5, %6, %7, %8, %9, %10, %11, %12, %13, %14, %15, %16, %17 in 2 : vector<12x12x4xbf16>, vector<12x12x4xbf16>, vector<12x12x4xbf16>, vector<12x12x4xbf16>, vector<12x12x4xbf16>, vector<12x12x4xbf16>, vector<12x12x4xbf16>, vector<12x12x4xbf16>, vector<12x12x4xbf16>, vector<12x12x4xbf16>, vector<12x12x4xbf16>, vector<12x12x4xbf16>, vector<12x12x4xbf16>, vector<12x12x4xbf16>, vector<12x12x4xbf16>, vector<12x12x4xbf16> -> vector<12x12x64xbf16>
    %28 = tpu.concatenate %18, %19, %20, %21, %22, %23, %24, %25, %26 in 2 : vector<12x12x4xbf16>, vector<12x12x4xbf16>, vector<12x12x4xbf16>, vector<12x12x4xbf16>, vector<12x12x4xbf16>, vector<12x12x4xbf16>, vector<12x12x4xbf16>, vector<12x12x4xbf16>, vector<12x12x4xbf16> -> vector<12x12x36xbf16>
    %29 = tpu.concatenate %27, %28 in 2 : vector<12x12x64xbf16>, vector<12x12x36xbf16> -> vector<12x12x100xbf16>
    %30 = vector.shape_cast %29 : vector<12x12x100xbf16> to vector<144x100xbf16>
    %cst = arith.constant 0.000000e+00 : bf16
    %31 = vector.broadcast %cst : bf16 to vector<144x28xbf16>
    %32 = tpu.concatenate %30, %31 in 1 : vector<144x100xbf16>, vector<144x28xbf16> -> vector<144x128xbf16>
    %c0_3 = arith.constant 0 : index
    %c0_4 = arith.constant 0 : index
    %33 = vector.load %arg3[%c0_3, %c0_4] : memref<128x128xbf16, #tpu.memory_space<vmem>>, vector<128x128xbf16>
    %cst_5 = arith.constant dense<0.000000e+00> : vector<144x128xf32>
    %34 = tpu.matmul %32, %33, %cst_5 {dimension_numbers = #tpu.dot_dimension_numbers<[1], [0], [0], [1], [0, 0, 1, 1], [], []>} : vector<144x128xbf16>, vector<128x128xbf16>, vector<144x128xf32> -> vector<144x128xf32>
    %c2 = arith.constant 2 : index
    %c0_6 = arith.constant 0 : index
    %35 = vector.load %arg4[%c2, %c0_6] : memref<8x128xf32, #tpu.memory_space<vmem>>, vector<1x128xf32>
    %36 = vector.broadcast %35 : vector<1x128xf32> to vector<144x128xf32>
    %37 = arith.addf %34, %36 : vector<144x128xf32>
    %c0_7 = arith.constant 0 : index
    %c0_8 = arith.constant 0 : index
    %c0_9 = arith.constant 0 : index
    %c0_10 = arith.constant 0 : index
    %38 = vector.load %arg2[%c0_7, %c0_8, %c0_9, %c0_10] : memref<1x12x12x128xf32, #tpu.memory_space<vmem>>, vector<1x12x12x128xf32>
    %39 = vector.shape_cast %38 : vector<1x12x12x128xf32> to vector<12x12x128xf32>
    %40 = vector.shape_cast %39 : vector<12x12x128xf32> to vector<144x128xf32>
    %c0_11 = arith.constant 0 : index
    %c0_12 = arith.constant 0 : index
    %41 = vector.load %arg4[%c0_11, %c0_12] : memref<8x128xf32, #tpu.memory_space<vmem>>, vector<1x128xf32>
    %42 = vector.broadcast %41 : vector<1x128xf32> to vector<144x128xf32>
    %43 = arith.mulf %40, %42 : vector<144x128xf32>
    %c1 = arith.constant 1 : index
    %c0_13 = arith.constant 0 : index
    %44 = vector.load %arg4[%c1, %c0_13] : memref<8x128xf32, #tpu.memory_space<vmem>>, vector<1x128xf32>
    %45 = vector.broadcast %44 : vector<1x128xf32> to vector<144x128xf32>
    %46 = arith.addf %43, %45 : vector<144x128xf32>
    %47 = arith.addf %46, %37 : vector<144x128xf32>
    %cst_14 = arith.constant 0.000000e+00 : f32
    %48 = vector.broadcast %cst_14 : f32 to vector<144x128xf32>
    %49 = arith.maximumf %47, %48 : vector<144x128xf32>
    %50 = vector.shape_cast %49 : vector<144x128xf32> to vector<1x12x12x128xf32>
    %c0_15 = arith.constant 0 : index
    %c0_16 = arith.constant 0 : index
    %c0_17 = arith.constant 0 : index
    %c0_18 = arith.constant 0 : index
    %51 = vector.load %arg5[%c0_15, %c0_16, %c0_17, %c0_18] : memref<1x12x12x128xf32, #tpu.memory_space<vmem>>, vector<1x12x12x128xf32>
    tpu.vector_store %arg5[%c0_15, %c0_16, %c0_17, %c0_18], %50 {strides = array<i32>} : memref<1x12x12x128xf32, #tpu.memory_space<vmem>>, vector<1x12x12x128xf32>,
    return
  }
  func.func @transform_0(%arg0: i32) -> (i32, i32, i32, i32) {
    %c0_i32 = arith.constant 0 : i32
    %c0_i32_0 = arith.constant 0 : i32
    %c0_i32_1 = arith.constant 0 : i32
    %c0_i32_2 = arith.constant 0 : i32
    return %arg0, %c0_i32, %c0_i32_0, %c0_i32_1 : i32, i32, i32, i32
  }
  func.func @transform_1(%arg0: i32) -> (i32, i32, i32, i32) {
    %c0_i32 = arith.constant 0 : i32
    %c0_i32_0 = arith.constant 0 : i32
    %c0_i32_1 = arith.constant 0 : i32
    %c0_i32_2 = arith.constant 0 : i32
    return %arg0, %c0_i32, %c0_i32_0, %c0_i32_1 : i32, i32, i32, i32
  }
  func.func @transform_2(%arg0: i32) -> (i32, i32) {
    %c0_i32 = arith.constant 0 : i32
    %c0_i32_0 = arith.constant 0 : i32
    %c0_i32_1 = arith.constant 0 : i32
    return %c0_i32, %c0_i32_0 : i32, i32
  }
  func.func @transform_3(%arg0: i32) -> (i32, i32) {
    %c0_i32 = arith.constant 0 : i32
    %c0_i32_0 = arith.constant 0 : i32
    %c0_i32_1 = arith.constant 0 : i32
    return %c0_i32, %c0_i32_0 : i32, i32
  }
  func.func @transform_4(%arg0: i32) -> (i32, i32, i32, i32) {
    %c0_i32 = arith.constant 0 : i32
    %c0_i32_0 = arith.constant 0 : i32
    %c0_i32_1 = arith.constant 0 : i32
    %c0_i32_2 = arith.constant 0 : i32
    return %arg0, %c0_i32, %c0_i32_0, %c0_i32_1 : i32, i32, i32, i32
  }
}

</mosaic_0001>

<llo_original>
// kernel: residual_block_forward.3
$region0: #{residual_block_forward.3}
  #allocation0 [shape = 'u32[]', space=smem, size = 0x4, offset = 0x4, fixed_abs, tag = 'smem constant byte address 0x4 - core index']
  #allocation1 [shape = 'u32[72,128]{1,0:T(1,128)}', space=vmem, size = 0x9000, scoped, tag = 'internal scratch']
  %s0 = inlined_call_operand.vmem [shape: bf16[2,16,16,4], index: 0, kind: input, shape index: {}]
  %s1 = inlined_call_operand.vmem [shape: bf16[128,128], index: 1, kind: input, shape index: {}]
  %s2 = inlined_call_operand.vmem [shape: f32[2,14,14,128], index: 2, kind: output, shape index: {0}]
  %s3 = inlined_call_operand.vmem [shape: f32[2,2,128], index: 3, kind: output, shape index: {1}]
  %4 = xla_tuple %s2, %s3
  %s5 = sld [smem:[#allocation0]]
  $region49: #{residual_block_forward.3} parent=0
    _
  %s7 = ssub.s32 1, %s5
  %s8 = scalar_select 0, %s7, %s5
  loop: start=0, step=1, limit=4
  $region2: #{residual_block_forward.3} parent=0 // loop_pre_header
    _
  $region3: #{residual_block_forward.3} parent=0 // loop_header
    %s10 = sphi 0, %s14
    %p11 = scmp.ge.s32.totalorder %s10, 4
    %s20 = sphi 0, %s22
    %s23 = sphi 0, %s20
    %s24 = sphi 0, %s23
    %s40 = sphi 0, %s24
    %s44 = sphi 0, %s44
    %s46 = sphi 0, %s44
    %s47 = sphi 0, %s46
    %s61 = sphi 0, %s47
    %s67 = sphi 0, %s69
    %s70 = sphi 0, %s67
    %s71 = sphi 0, %s70
    %s87 = sphi 0, %s71
    %s93 = sphi 0, %s95
    %s96 = sphi 0, %s93
    %s97 = sphi 0, %s96
    %s113 = sphi 0, %s97
  $region4: #{residual_block_forward.3} parent=0 // loop_header_branch
    %13 = sbr.rel (%p11) target = $region8
  $region5: #{residual_block_forward.3} parent=0 // loop_body
    %s15 = ssub.s32 %s10, 1
    %s16 = ssub.s32 %s10, 2
    %s17 = sadd.s32 %s10, 1
    %s18 = ssub.s32 %s10, %s17
    %p19 = scmp.eq.s32.totalorder %s18, 0
    %s21 = sadd.s32 %s20, 1
    %s22 = scalar_select %p19, %s20, %s21
    %p25 = pneg %p19
    %p26 = scmp.eq.s32.totalorder %s10, 1
    %p27 = por %p25, %p26
    %p28 = scmp.ne.s32.totalorder %s20, %s23
    %p29 = scmp.eq.s32.totalorder %s10, 0
    %p30 = por %p28, %p29
    %p31 = scmp.ne.s32.totalorder %s20, %s23
    %p32 = scmp.eq.s32.totalorder %s15, 1
    %p33 = por %p31, %p32
    %p34 = scmp.ne.s32.totalorder %s23, %s24
    %p35 = scmp.eq.s32.totalorder %s15, 0
    %p36 = por %p34, %p35
    %p37 = scmp.ne.s32.totalorder %s23, %s24
    %p38 = scmp.eq.s32.totalorder %s16, 1
    %p39 = por %p37, %p38
    %p41 = scmp.ne.s32.totalorder %s24, %s40
    %p42 = scmp.eq.s32.totalorder %s16, 0
    %p43 = por %p41, %p42
    %s45 = sadd.s32 %s44, 1
    %p48 = scmp.eq.s32.totalorder %s10, 1
    %p49 = scmp.ne.s32.totalorder %s44, %s46
    %p50 = scmp.eq.s32.totalorder %s10, 0
    %p51 = por %p49, %p50
    %p52 = scmp.ne.s32.totalorder %s44, %s46
    %p53 = scmp.eq.s32.totalorder %s15, 1
    %p54 = por %p52, %p53
    %p55 = scmp.ne.s32.totalorder %s46, %s47
    %p56 = scmp.eq.s32.totalorder %s15, 0
    %p57 = por %p55, %p56
    %p58 = scmp.ne.s32.totalorder %s46, %s47
    %p59 = scmp.eq.s32.totalorder %s16, 1
    %p60 = por %p58, %p59
    %p62 = scmp.ne.s32.totalorder %s47, %s61
    %p63 = scmp.eq.s32.totalorder %s16, 0
    %p64 = por %p62, %p63
    %s65 = ssub.s32 %s10, %s17
    %p66 = scmp.eq.s32.totalorder %s65, 0
    %s68 = sadd.s32 %s67, 1
    %s69 = scalar_select %p66, %s67, %s68
    %p72 = pneg %p66
    %p73 = scmp.eq.s32.totalorder %s10, 1
    %p74 = por %p72, %p73
    %p75 = scmp.ne.s32.totalorder %s67, %s70
    %p76 = scmp.eq.s32.totalorder %s10, 0
    %p77 = por %p75, %p76
    %p78 = scmp.ne.s32.totalorder %s67, %s70
    %p79 = scmp.eq.s32.totalorder %s15, 1
    %p80 = por %p78, %p79
    %p81 = scmp.ne.s32.totalorder %s70, %s71
    %p82 = scmp.eq.s32.totalorder %s15, 0
    %p83 = por %p81, %p82
    %p84 = scmp.ne.s32.totalorder %s70, %s71
    %p85 = scmp.eq.s32.totalorder %s16, 1
    %p86 = por %p84, %p85
    %p88 = scmp.ne.s32.totalorder %s71, %s87
    %p89 = scmp.eq.s32.totalorder %s16, 0
    %p90 = por %p88, %p89
    %s91 = ssub.s32 %s10, %s17
    %p92 = scmp.eq.s32.totalorder %s91, 0
    %s94 = sadd.s32 %s93, 1
    %s95 = scalar_select %p92, %s93, %s94
    %p98 = pneg %p92
    %p99 = scmp.eq.s32.totalorder %s10, 1
    %p100 = por %p98, %p99
    %p101 = scmp.ne.s32.totalorder %s93, %s96
    %p102 = scmp.eq.s32.totalorder %s10, 0
    %p103 = por %p101, %p102
    %p104 = scmp.ne.s32.totalorder %s93, %s96
    %p105 = scmp.eq.s32.totalorder %s15, 1
    %p106 = por %p104, %p105
    %p107 = scmp.ne.s32.totalorder %s96, %s97
    %p108 = scmp.eq.s32.totalorder %s15, 0
    %p109 = por %p107, %p108
    %p110 = scmp.ne.s32.totalorder %s96, %s97
    %p111 = scmp.eq.s32.totalorder %s16, 1
    %p112 = por %p110, %p111
    %p114 = scmp.ne.s32.totalorder %s97, %s113
    %p115 = scmp.eq.s32.totalorder %s16, 0
    %p116 = por %p114, %p115
    %p117 = scmp.le.s32.totalorder 1, %s10
    %p118 = scmp.lt.s32.totalorder %s10, 3
    %p119 = pnand %p117, %p118
    %p120 = pneg %p119
    // Predicated region
    $region9: #{residual_block_forward.3} parent=5 // pred_check
      _
    $region10: #{residual_block_forward.3} parent=5 // pred_check_branch
      %122 = sbr.rel (%p119) target = $region12
    $region11: #{residual_block_forward.3} parent=5 // pred_region
      %s123 = ssub.s32 %s10, 1
      // Predicated region
      $region13: #{residual_block_forward.3} parent=11 // pred_check
        %p124 = pneg %p57
      $region14: #{residual_block_forward.3} parent=11 // pred_check_branch
        %126 = sbr.rel (%p124) target = $region16
      $region15: #{residual_block_forward.3} parent=11 // pred_region
        _
      $region16: #{residual_block_forward.3} parent=11 // pred_fallthru
        _
    $region12: #{residual_block_forward.3} parent=5 // pred_fallthru
      _
    %p127 = scmp.lt.s32.totalorder %s10, 2
    // Predicated region
    $region17: #{residual_block_forward.3} parent=5 // pred_check
      %p128 = pneg %p127
    $region18: #{residual_block_forward.3} parent=5 // pred_check_branch
      %130 = sbr.rel (%p128) target = $region20
    $region19: #{residual_block_forward.3} parent=5 // pred_region
      // Predicated region
      $region21: #{residual_block_forward.3} parent=19 // pred_check
        %p131 = pneg %p30
      $region22: #{residual_block_forward.3} parent=19 // pred_check_branch
        %133 = sbr.rel (%p131) target = $region24
      $region23: #{residual_block_forward.3} parent=19 // pred_region
        %p134 = scmp.lt.s32.totalorder %s10, 1
        %s135 = scalar_select %p134, %s10, 1
        %s136 = smul.addr %s135, 32
        %s137 = smul.addr %s136, 4
        %s138 = scalar_lea.vmem %s0, %s137
      $region24: #{residual_block_forward.3} parent=19 // pred_fallthru
        _
    $region20: #{residual_block_forward.3} parent=5 // pred_fallthru
      _
    %p139 = scmp.le.s32.totalorder 1, %s10
    %p140 = scmp.lt.s32.totalorder %s10, 3
    %p141 = pnand %p139, %p140
    %p142 = pneg %p141
    // Predicated region
    $region25: #{residual_block_forward.3} parent=5 // pred_check
      _
    $region26: #{residual_block_forward.3} parent=5 // pred_check_branch
      %144 = sbr.rel (%p141) target = $region28
    $region27: #{residual_block_forward.3} parent=5 // pred_region
      %s145 = ssub.s32 %s10, 1
      %p146 = scmp.lt.s32.totalorder %s15, 1
      %s147 = scalar_select %p146, %s15, 1
      %s148 = smul.addr %s147, 32
      %s149 = smul.addr %s148, 4
      %s150 = scalar_lea.vmem %s0, %s149
      %p151 = pneg %p36
      %p152 = pneg %p33
      %p153 = pneg %p57
      %p154 = pneg %p54
      %p155 = pneg %p83
      %p156 = pneg %p80
      %p157 = scmp.lt.s32.totalorder %s15, 1
      %s158 = scalar_select %p157, %s15, 1
      %s159 = smul.addr %s158, 28
      %s160 = smul.addr %s159, 8
      %s161 = scalar_lea.vmem %s2, %s160
      %p162 = pneg %p109
      %p163 = pneg %p106
      %p164 = scmp.lt.s32.totalorder %s15, 1
      %s165 = scalar_select %p164, %s15, 1
      %s166 = smul.addr %s165, 2
      %s167 = scalar_lea.vmem %s3, %s166
      %p168 = scmp.lt.s32.totalorder %s15, 1
      %s169 = scalar_select %p168, %s15, 1
      %s170 = smul.addr %s169, 32
      %s171 = smul.addr %s170, 4
      %s172 = scalar_lea.vmem %s0, %s171
      %p173 = scmp.lt.s32.totalorder %s15, 1
      %s174 = scalar_select %p173, %s15, 1
      %s175 = smul.addr %s174, 28
      %s176 = smul.addr %s175, 8
      %s177 = scalar_lea.vmem %s2, %s176
      %p178 = scmp.lt.s32.totalorder %s15, 1
      %s179 = scalar_select %p178, %s15, 1
      %s180 = smul.addr %s179, 2
      %s181 = scalar_lea.vmem %s3, %s180
      %v183 = vld [vmem:[%s172] sm:$0xf]
      %v184 = vld [vmem:[%s172 + $0x4] sm:$0xf]
      %v185 = vld [vmem:[%s172 + $0x8] sm:$0xf]
      %v186 = vld [vmem:[%s172 + $0xc] sm:$0xf]
      %v187 = vld [vmem:[%s172 + $0x10] sm:$0xf]
      %v188 = vld [vmem:[%s172 + $0x14] sm:$0xf]
      %v189 = vld [vmem:[%s172 + $0x18] sm:$0xf]
      %v190 = vld [vmem:[%s172 + $0x1c] sm:$0xf]
      %v191 = vld [vmem:[%s172 + $0x20] sm:$0xf]
      %v192 = vld [vmem:[%s172 + $0x24] sm:$0xf]
      %v193 = vld [vmem:[%s172 + $0x28] sm:$0xf]
      %v194 = vld [vmem:[%s172 + $0x2c] sm:$0xf]
      %v195 = vld [vmem:[%s172 + $0x30] sm:$0xf]
      %v196 = vld [vmem:[%s172 + $0x34] sm:$0xf]
      %v197 = vld [vmem:[%s172 + $0x38] sm:$0xf]
      %v198 = vld [vmem:[%s172 + $0x3c] sm:$0xf]
      %v199 = vld [vmem:[%s172 + $0x40] sm:$0xf]
      %v200 = vld [vmem:[%s172 + $0x44] sm:$0xf]
      %v201 = vld [vmem:[%s172 + $0x48] sm:$0xf]
      %v202 = vld [vmem:[%s172 + $0x4c] sm:$0xf]
      %v203 = vld [vmem:[%s172 + $0x50] sm:$0xf]
      %v204 = vld [vmem:[%s172 + $0x54] sm:$0xf]
      %v205 = vld [vmem:[%s172 + $0x58] sm:$0xf]
      %v206 = vld [vmem:[%s172 + $0x5c] sm:$0xf]
      %v207 = vld [vmem:[%s172 + $0x60] sm:$0xf]
      %v208 = vld [vmem:[%s172 + $0x64] sm:$0xf]
      %v209 = vld [vmem:[%s172 + $0x68] sm:$0xf]
      %v210 = vld [vmem:[%s172 + $0x6c] sm:$0xf]
      %v211 = vld [vmem:[%s172 + $0x70] sm:$0xf]
      %v212 = vld [vmem:[%s172 + $0x74] sm:$0xf]
      %v213 = vld [vmem:[%s172 + $0x78] sm:$0xf]
      %v214 = vld [vmem:[%s172 + $0x7c] sm:$0xf]
      %v243 = vunpack.c.l.b16 %v183
      %v244 = vunpack.c.l.b16 %v184
      %v245 = vunpack.c.l.b16 %v185
      %v246 = vunpack.c.l.b16 %v186
      %v247 = vunpack.c.l.b16 %v187
      %v248 = vunpack.c.l.b16 %v188
      %v249 = vunpack.c.l.b16 %v189
      %v250 = vunpack.c.l.b16 %v190
      %v251 = vunpack.c.l.b16 %v191
      %v252 = vunpack.c.l.b16 %v192
      %v253 = vunpack.c.l.b16 %v193
      %v254 = vunpack.c.l.b16 %v194
      %v255 = vunpack.c.l.b16 %v195
      %v256 = vunpack.c.l.b16 %v196
      %v257 = vunpack.c.l.b16 %v197
      %v258 = vunpack.c.l.b16 %v198
      %v259 = vunpack.c.l.b16 %v199
      %v260 = vunpack.c.l.b16 %v200
      %v261 = vunpack.c.l.b16 %v201
      %v262 = vunpack.c.l.b16 %v202
      %v263 = vunpack.c.l.b16 %v203
      %v264 = vunpack.c.l.b16 %v204
      %v265 = vunpack.c.l.b16 %v205
      %v266 = vunpack.c.l.b16 %v206
      %v267 = vunpack.c.l.b16 %v207
      %v268 = vunpack.c.l.b16 %v208
      %v269 = vunpack.c.l.b16 %v209
      %v270 = vunpack.c.l.b16 %v210
      %v271 = vpack.c.b16 %v244, %v243
      %v272 = vpack.c.b16 %v246, %v245
      %v273 = vpack.c.b16 %v248, %v247
      %v274 = vpack.c.b16 %v250, %v249
      %v275 = vpack.c.b16 %v252, %v251
      %v276 = vpack.c.b16 %v254, %v253
      %v277 = vpack.c.b16 %v256, %v255
      %v278 = vpack.c.b16 %v258, %v257
      %v279 = vpack.c.b16 %v260, %v259
      %v280 = vpack.c.b16 %v262, %v261
      %v281 = vpack.c.b16 %v264, %v263
      %v282 = vpack.c.b16 %v266, %v265
      %v283 = vpack.c.b16 %v268, %v267
      %v284 = vpack.c.b16 %v270, %v269
      %v286 = vshrl.u32 %v271, 16
      %v288 = vshll.u32 %v271, 16
      %v290 = vrot.slane %v288, 1
      %v291 = vor.u32 %v286, %v290
      %v293 = vshrl.u32 %v272, 16
      %v295 = vshll.u32 %v272, 16
      %v297 = vrot.slane %v295, 1
      %v298 = vor.u32 %v293, %v297
      %v300 = vshrl.u32 %v273, 16
      %v302 = vshll.u32 %v273, 16
      %v304 = vrot.slane %v302, 1
      %v305 = vor.u32 %v300, %v304
      %v307 = vshrl.u32 %v274, 16
      %v309 = vshll.u32 %v274, 16
      %v311 = vrot.slane %v309, 1
      %v312 = vor.u32 %v307, %v311
      %v314 = vshrl.u32 %v275, 16
      %v316 = vshll.u32 %v275, 16
      %v318 = vrot.slane %v316, 1
      %v319 = vor.u32 %v314, %v318
      %v321 = vshrl.u32 %v276, 16
      %v323 = vshll.u32 %v276, 16
      %v325 = vrot.slane %v323, 1
      %v326 = vor.u32 %v321, %v325
      %v328 = vshrl.u32 %v277, 16
      %v330 = vshll.u32 %v277, 16
      %v332 = vrot.slane %v330, 1
      %v333 = vor.u32 %v328, %v332
      %v335 = vshrl.u32 %v278, 16
      %v337 = vshll.u32 %v278, 16
      %v339 = vrot.slane %v337, 1
      %v340 = vor.u32 %v335, %v339
      %v342 = vshrl.u32 %v279, 16
      %v344 = vshll.u32 %v279, 16
      %v346 = vrot.slane %v344, 1
      %v347 = vor.u32 %v342, %v346
      %v349 = vshrl.u32 %v280, 16
      %v351 = vshll.u32 %v280, 16
      %v353 = vrot.slane %v351, 1
      %v354 = vor.u32 %v349, %v353
      %v356 = vshrl.u32 %v281, 16
      %v358 = vshll.u32 %v281, 16
      %v360 = vrot.slane %v358, 1
      %v361 = vor.u32 %v356, %v360
      %v363 = vshrl.u32 %v282, 16
      %v365 = vshll.u32 %v282, 16
      %v367 = vrot.slane %v365, 1
      %v368 = vor.u32 %v363, %v367
      %v370 = vshrl.u32 %v283, 16
      %v372 = vshll.u32 %v283, 16
      %v374 = vrot.slane %v372, 1
      %v375 = vor.u32 %v370, %v374
      %v377 = vshrl.u32 %v284, 16
      %v379 = vshll.u32 %v284, 16
      %v381 = vrot.slane %v379, 1
      %v382 = vor.u32 %v377, %v381
      %383 = vrot.lane.b32.xlu0 %v291, 4
      %v384 = vpop.permute.xlu0 %383
      %385 = vrot.lane.b32.xlu0 %v298, 4
      %v386 = vpop.permute.xlu0 %385
      %387 = vrot.lane.b32.xlu0 %v305, 4
      %v388 = vpop.permute.xlu0 %387
      %389 = vrot.lane.b32.xlu0 %v312, 4
      %v390 = vpop.permute.xlu0 %389
      %391 = vrot.lane.b32.xlu0 %v319, 4
      %v392 = vpop.permute.xlu0 %391
      %393 = vrot.lane.b32.xlu0 %v326, 4
      %v394 = vpop.permute.xlu0 %393
      %395 = vrot.lane.b32.xlu0 %v333, 4
      %v396 = vpop.permute.xlu0 %395
      %397 = vrot.lane.b32.xlu0 %v340, 4
      %v398 = vpop.permute.xlu0 %397
      %399 = vrot.lane.b32.xlu0 %v347, 4
      %v400 = vpop.permute.xlu0 %399
      %401 = vrot.lane.b32.xlu0 %v354, 4
      %v402 = vpop.permute.xlu0 %401
      %403 = vrot.lane.b32.xlu0 %v361, 4
      %v404 = vpop.permute.xlu0 %403
      %405 = vrot.lane.b32.xlu0 %v368, 4
      %v406 = vpop.permute.xlu0 %405
      %407 = vrot.lane.b32.xlu0 %v375, 4
      %v408 = vpop.permute.xlu0 %407
      %409 = vrot.lane.b32.xlu0 %v382, 4
      %v410 = vpop.permute.xlu0 %409
      %v411 = vrot.slane %v271, 1
      %v412 = vrot.slane %v272, 1
      %v413 = vrot.slane %v273, 1
      %v414 = vrot.slane %v274, 1
      %v415 = vrot.slane %v275, 1
      %v416 = vrot.slane %v276, 1
      %v417 = vrot.slane %v277, 1
      %v418 = vrot.slane %v278, 1
      %v419 = vrot.slane %v279, 1
      %v420 = vrot.slane %v280, 1
      %v421 = vrot.slane %v281, 1
      %v422 = vrot.slane %v282, 1
      %v423 = vrot.slane %v283, 1
      %v424 = vrot.slane %v284, 1
      %425 = vrot.lane.b32.xlu0 %v411, 8
      %v426 = vpop.permute.xlu0 %425
      %427 = vrot.lane.b32.xlu0 %v412, 8
      %v428 = vpop.permute.xlu0 %427
      %429 = vrot.lane.b32.xlu0 %v413, 8
      %v430 = vpop.permute.xlu0 %429
      %431 = vrot.lane.b32.xlu0 %v414, 8
      %v432 = vpop.permute.xlu0 %431
      %433 = vrot.lane.b32.xlu0 %v415, 8
      %v434 = vpop.permute.xlu0 %433
      %435 = vrot.lane.b32.xlu0 %v416, 8
      %v436 = vpop.permute.xlu0 %435
      %437 = vrot.lane.b32.xlu0 %v417, 8
      %v438 = vpop.permute.xlu0 %437
      %439 = vrot.lane.b32.xlu0 %v418, 8
      %v440 = vpop.permute.xlu0 %439
      %441 = vrot.lane.b32.xlu0 %v419, 8
      %v442 = vpop.permute.xlu0 %441
      %443 = vrot.lane.b32.xlu0 %v420, 8
      %v444 = vpop.permute.xlu0 %443
      %445 = vrot.lane.b32.xlu0 %v421, 8
      %v446 = vpop.permute.xlu0 %445
      %447 = vrot.lane.b32.xlu0 %v422, 8
      %v448 = vpop.permute.xlu0 %447
      %449 = vrot.lane.b32.xlu0 %v423, 8
      %v450 = vpop.permute.xlu0 %449
      %451 = vrot.lane.b32.xlu0 %v424, 8
      %v452 = vpop.permute.xlu0 %451
      %v455 = vunpack.c.l.b16 %v211
      %v456 = vunpack.c.l.b16 %v212
      %v457 = vpack.c.b16 %v456, %v455
      %458 = vrot.lane.b32.xlu0 %v272, 12
      %v459 = vpop.permute.xlu0 %458
      %460 = vrot.lane.b32.xlu0 %v273, 12
      %v461 = vpop.permute.xlu0 %460
      %462 = vrot.lane.b32.xlu0 %v274, 12
      %v463 = vpop.permute.xlu0 %462
      %464 = vrot.lane.b32.xlu0 %v275, 12
      %v465 = vpop.permute.xlu0 %464
      %466 = vrot.lane.b32.xlu0 %v276, 12
      %v467 = vpop.permute.xlu0 %466
      %468 = vrot.lane.b32.xlu0 %v277, 12
      %v469 = vpop.permute.xlu0 %468
      %470 = vrot.lane.b32.xlu0 %v278, 12
      %v471 = vpop.permute.xlu0 %470
      %472 = vrot.lane.b32.xlu0 %v279, 12
      %v473 = vpop.permute.xlu0 %472
      %474 = vrot.lane.b32.xlu0 %v280, 12
      %v475 = vpop.permute.xlu0 %474
      %476 = vrot.lane.b32.xlu0 %v281, 12
      %v477 = vpop.permute.xlu0 %476
      %478 = vrot.lane.b32.xlu0 %v282, 12
      %v479 = vpop.permute.xlu0 %478
      %480 = vrot.lane.b32.xlu0 %v283, 12
      %v481 = vpop.permute.xlu0 %480
      %482 = vrot.lane.b32.xlu0 %v284, 12
      %v483 = vpop.permute.xlu0 %482
      %484 = vrot.lane.b32.xlu0 %v457, 12
      %v485 = vpop.permute.xlu0 %484
      %v487 = vshrl.u32 %v457, 16
      %v489 = vshll.u32 %v457, 16
      %v491 = vrot.slane %v489, 1
      %v492 = vor.u32 %v487, %v491
      %493 = vrot.lane.b32.xlu0 %v298, 16
      %v494 = vpop.permute.xlu0 %493
      %495 = vrot.lane.b32.xlu0 %v305, 16
      %v496 = vpop.permute.xlu0 %495
      %497 = vrot.lane.b32.xlu0 %v312, 16
      %v498 = vpop.permute.xlu0 %497
      %499 = vrot.lane.b32.xlu0 %v319, 16
      %v500 = vpop.permute.xlu0 %499
      %501 = vrot.lane.b32.xlu0 %v326, 16
      %v502 = vpop.permute.xlu0 %501
      %503 = vrot.lane.b32.xlu0 %v333, 16
      %v504 = vpop.permute.xlu0 %503
      %505 = vrot.lane.b32.xlu0 %v340, 16
      %v506 = vpop.permute.xlu0 %505
      %507 = vrot.lane.b32.xlu0 %v347, 16
      %v508 = vpop.permute.xlu0 %507
      %509 = vrot.lane.b32.xlu0 %v354, 16
      %v510 = vpop.permute.xlu0 %509
      %511 = vrot.lane.b32.xlu0 %v361, 16
      %v512 = vpop.permute.xlu0 %511
      %513 = vrot.lane.b32.xlu0 %v368, 16
      %v514 = vpop.permute.xlu0 %513
      %515 = vrot.lane.b32.xlu0 %v375, 16
      %v516 = vpop.permute.xlu0 %515
      %517 = vrot.lane.b32.xlu0 %v382, 16
      %v518 = vpop.permute.xlu0 %517
      %519 = vrot.lane.b32.xlu0 %v492, 16
      %v520 = vpop.permute.xlu0 %519
      %v521 = vrot.slane %v457, 1
      %522 = vrot.lane.b32.xlu0 %v412, 20
      %v523 = vpop.permute.xlu0 %522
      %524 = vrot.lane.b32.xlu0 %v413, 20
      %v525 = vpop.permute.xlu0 %524
      %526 = vrot.lane.b32.xlu0 %v414, 20
      %v527 = vpop.permute.xlu0 %526
      %528 = vrot.lane.b32.xlu0 %v415, 20
      %v529 = vpop.permute.xlu0 %528
      %530 = vrot.lane.b32.xlu0 %v416, 20
      %v531 = vpop.permute.xlu0 %530
      %532 = vrot.lane.b32.xlu0 %v417, 20
      %v533 = vpop.permute.xlu0 %532
      %534 = vrot.lane.b32.xlu0 %v418, 20
      %v535 = vpop.permute.xlu0 %534
      %536 = vrot.lane.b32.xlu0 %v419, 20
      %v537 = vpop.permute.xlu0 %536
      %538 = vrot.lane.b32.xlu0 %v420, 20
      %v539 = vpop.permute.xlu0 %538
      %540 = vrot.lane.b32.xlu0 %v421, 20
      %v541 = vpop.permute.xlu0 %540
      %542 = vrot.lane.b32.xlu0 %v422, 20
      %v543 = vpop.permute.xlu0 %542
      %544 = vrot.lane.b32.xlu0 %v423, 20
      %v545 = vpop.permute.xlu0 %544
      %546 = vrot.lane.b32.xlu0 %v424, 20
      %v547 = vpop.permute.xlu0 %546
      %548 = vrot.lane.b32.xlu0 %v521, 20
      %v549 = vpop.permute.xlu0 %548
      %v552 = vunpack.c.l.b16 %v213
      %v553 = vunpack.c.l.b16 %v214
      %v554 = vpack.c.b16 %v553, %v552
      %555 = vrot.lane.b32.xlu0 %v273, 24
      %v556 = vpop.permute.xlu0 %555
      %557 = vrot.lane.b32.xlu0 %v274, 24
      %v558 = vpop.permute.xlu0 %557
      %559 = vrot.lane.b32.xlu0 %v275, 24
      %v560 = vpop.permute.xlu0 %559
      %561 = vrot.lane.b32.xlu0 %v276, 24
      %v562 = vpop.permute.xlu0 %561
      %563 = vrot.lane.b32.xlu0 %v277, 24
      %v564 = vpop.permute.xlu0 %563
      %565 = vrot.lane.b32.xlu0 %v278, 24
      %v566 = vpop.permute.xlu0 %565
      %567 = vrot.lane.b32.xlu0 %v279, 24
      %v568 = vpop.permute.xlu0 %567
      %569 = vrot.lane.b32.xlu0 %v280, 24
      %v570 = vpop.permute.xlu0 %569
      %571 = vrot.lane.b32.xlu0 %v281, 24
      %v572 = vpop.permute.xlu0 %571
      %573 = vrot.lane.b32.xlu0 %v282, 24
      %v574 = vpop.permute.xlu0 %573
      %575 = vrot.lane.b32.xlu0 %v283, 24
      %v576 = vpop.permute.xlu0 %575
      %577 = vrot.lane.b32.xlu0 %v284, 24
      %v578 = vpop.permute.xlu0 %577
      %579 = vrot.lane.b32.xlu0 %v457, 24
      %v580 = vpop.permute.xlu0 %579
      %581 = vrot.lane.b32.xlu0 %v554, 24
      %v582 = vpop.permute.xlu0 %581
      %v584 = vshrl.u32 %v554, 16
      %v586 = vshll.u32 %v554, 16
      %v588 = vrot.slane %v586, 1
      %v589 = vor.u32 %v584, %v588
      %590 = vrot.lane.b32.xlu0 %v305, 28
      %v591 = vpop.permute.xlu0 %590
      %592 = vrot.lane.b32.xlu0 %v312, 28
      %v593 = vpop.permute.xlu0 %592
      %594 = vrot.lane.b32.xlu0 %v319, 28
      %v595 = vpop.permute.xlu0 %594
      %596 = vrot.lane.b32.xlu0 %v326, 28
      %v597 = vpop.permute.xlu0 %596
      %598 = vrot.lane.b32.xlu0 %v333, 28
      %v599 = vpop.permute.xlu0 %598
      %600 = vrot.lane.b32.xlu0 %v340, 28
      %v601 = vpop.permute.xlu0 %600
      %602 = vrot.lane.b32.xlu0 %v347, 28
      %v603 = vpop.permute.xlu0 %602
      %604 = vrot.lane.b32.xlu0 %v354, 28
      %v605 = vpop.permute.xlu0 %604
      %606 = vrot.lane.b32.xlu0 %v361, 28
      %v607 = vpop.permute.xlu0 %606
      %608 = vrot.lane.b32.xlu0 %v368, 28
      %v609 = vpop.permute.xlu0 %608
      %610 = vrot.lane.b32.xlu0 %v375, 28
      %v611 = vpop.permute.xlu0 %610
      %612 = vrot.lane.b32.xlu0 %v382, 28
      %v613 = vpop.permute.xlu0 %612
      %614 = vrot.lane.b32.xlu0 %v492, 28
      %v615 = vpop.permute.xlu0 %614
      %616 = vrot.lane.b32.xlu0 %v589, 28
      %v617 = vpop.permute.xlu0 %616
      %v618 = vrot.slane %v554, 1
      %619 = vrot.lane.b32.xlu0 %v413, 32
      %v620 = vpop.permute.xlu0 %619
      %621 = vrot.lane.b32.xlu0 %v414, 32
      %v622 = vpop.permute.xlu0 %621
      %623 = vrot.lane.b32.xlu0 %v415, 32
      %v624 = vpop.permute.xlu0 %623
      %625 = vrot.lane.b32.xlu0 %v416, 32
      %v626 = vpop.permute.xlu0 %625
      %627 = vrot.lane.b32.xlu0 %v417, 32
      %v628 = vpop.permute.xlu0 %627
      %629 = vrot.lane.b32.xlu0 %v418, 32
      %v630 = vpop.permute.xlu0 %629
      %631 = vrot.lane.b32.xlu0 %v419, 32
      %v632 = vpop.permute.xlu0 %631
      %633 = vrot.lane.b32.xlu0 %v420, 32
      %v634 = vpop.permute.xlu0 %633
      %635 = vrot.lane.b32.xlu0 %v421, 32
      %v636 = vpop.permute.xlu0 %635
      %637 = vrot.lane.b32.xlu0 %v422, 32
      %v638 = vpop.permute.xlu0 %637
      %639 = vrot.lane.b32.xlu0 %v423, 32
      %v640 = vpop.permute.xlu0 %639
      %641 = vrot.lane.b32.xlu0 %v424, 32
      %v642 = vpop.permute.xlu0 %641
      %643 = vrot.lane.b32.xlu0 %v521, 32
      %v644 = vpop.permute.xlu0 %643
      %645 = vrot.lane.b32.xlu0 %v618, 32
      %v646 = vpop.permute.xlu0 %645
      %vm647 = vcmask 31744
      %v649 = vsel %vm647, %v271, %v384
      %v651 = vsel %vm647, %v272, %v386
      %v653 = vsel %vm647, %v273, %v388
      %v655 = vsel %vm647, %v274, %v390
      %v657 = vsel %vm647, %v275, %v392
      %v659 = vsel %vm647, %v276, %v394
      %v661 = vsel %vm647, %v277, %v396
      %v663 = vsel %vm647, %v278, %v398
      %v665 = vsel %vm647, %v279, %v400
      %v667 = vsel %vm647, %v280, %v402
      %v669 = vsel %vm647, %v281, %v404
      %v671 = vsel %vm647, %v282, %v406
      %v673 = vsel %vm647, %v283, %v408
      %v675 = vsel %vm647, %v284, %v410
      %vm676 = vcmask 64512
      %v678 = vsel %vm676, %v649, %v426
      %v680 = vsel %vm676, %v651, %v428
      %v682 = vsel %vm676, %v653, %v430
      %v684 = vsel %vm676, %v655, %v432
      %v686 = vsel %vm676, %v657, %v434
      %v688 = vsel %vm676, %v659, %v436
      %v690 = vsel %vm676, %v661, %v438
      %v692 = vsel %vm676, %v663, %v440
      %v694 = vsel %vm676, %v665, %v442
      %v696 = vsel %vm676, %v667, %v444
      %v698 = vsel %vm676, %v669, %v446
      %v700 = vsel %vm676, %v671, %v448
      %v702 = vsel %vm676, %v673, %v450
      %v704 = vsel %vm676, %v675, %v452
      %vm705 = vcmask 97280
      %v707 = vsel %vm705, %v678, %v459
      %v709 = vsel %vm705, %v680, %v461
      %v711 = vsel %vm705, %v682, %v463
      %v713 = vsel %vm705, %v684, %v465
      %v715 = vsel %vm705, %v686, %v467
      %v717 = vsel %vm705, %v688, %v469
      %v719 = vsel %vm705, %v690, %v471
      %v721 = vsel %vm705, %v692, %v473
      %v723 = vsel %vm705, %v694, %v475
      %v725 = vsel %vm705, %v696, %v477
      %v727 = vsel %vm705, %v698, %v479
      %v729 = vsel %vm705, %v700, %v481
      %v731 = vsel %vm705, %v702, %v483
      %v733 = vsel %vm705, %v704, %v485
      %vm734 = vcmask 130048
      %v736 = vsel %vm734, %v707, %v494
      %v738 = vsel %vm734, %v709, %v496
      %v740 = vsel %vm734, %v711, %v498
      %v742 = vsel %vm734, %v713, %v500
      %v744 = vsel %vm734, %v715, %v502
      %v746 = vsel %vm734, %v717, %v504
      %v748 = vsel %vm734, %v719, %v506
      %v750 = vsel %vm734, %v721, %v508
      %v752 = vsel %vm734, %v723, %v510
      %v754 = vsel %vm734, %v725, %v512
      %v756 = vsel %vm734, %v727, %v514
      %v758 = vsel %vm734, %v729, %v516
      %v760 = vsel %vm734, %v731, %v518
      %v762 = vsel %vm734, %v733, %v520
      %vm763 = vcmask 162816
      %v765 = vsel %vm763, %v736, %v523
      %v767 = vsel %vm763, %v738, %v525
      %v769 = vsel %vm763, %v740, %v527
      %v771 = vsel %vm763, %v742, %v529
      %v773 = vsel %vm763, %v744, %v531
      %v775 = vsel %vm763, %v746, %v533
      %v777 = vsel %vm763, %v748, %v535
      %v779 = vsel %vm763, %v750, %v537
      %v781 = vsel %vm763, %v752, %v539
      %v783 = vsel %vm763, %v754, %v541
      %v785 = vsel %vm763, %v756, %v543
      %v787 = vsel %vm763, %v758, %v545
      %v789 = vsel %vm763, %v760, %v547
      %v791 = vsel %vm763, %v762, %v549
      %vm792 = vcmask 195584
      %v794 = vsel %vm792, %v765, %v556
      %v796 = vsel %vm792, %v767, %v558
      %v798 = vsel %vm792, %v769, %v560
      %v800 = vsel %vm792, %v771, %v562
      %v802 = vsel %vm792, %v773, %v564
      %v804 = vsel %vm792, %v775, %v566
      %v806 = vsel %vm792, %v777, %v568
      %v808 = vsel %vm792, %v779, %v570
      %v810 = vsel %vm792, %v781, %v572
      %v812 = vsel %vm792, %v783, %v574
      %v814 = vsel %vm792, %v785, %v576
      %v816 = vsel %vm792, %v787, %v578
      %v818 = vsel %vm792, %v789, %v580
      %v820 = vsel %vm792, %v791, %v582
      %vm821 = vcmask 228352
      %v823 = vsel %vm821, %v794, %v591
      %v825 = vsel %vm821, %v796, %v593
      %v827 = vsel %vm821, %v798, %v595
      %v829 = vsel %vm821, %v800, %v597
      %v831 = vsel %vm821, %v802, %v599
      %v833 = vsel %vm821, %v804, %v601
      %v835 = vsel %vm821, %v806, %v603
      %v837 = vsel %vm821, %v808, %v605
      %v839 = vsel %vm821, %v810, %v607
      %v841 = vsel %vm821, %v812, %v609
      %v843 = vsel %vm821, %v814, %v611
      %v845 = vsel %vm821, %v816, %v613
      %v847 = vsel %vm821, %v818, %v615
      %v849 = vsel %vm821, %v820, %v617
      %vm850 = vcmask 261120
      %v852 = vsel %vm850, %v823, %v620
      %v854 = vsel %vm850, %v825, %v622
      %v856 = vsel %vm850, %v827, %v624
      %v858 = vsel %vm850, %v829, %v626
      %v860 = vsel %vm850, %v831, %v628
      %v862 = vsel %vm850, %v833, %v630
      %v864 = vsel %vm850, %v835, %v632
      %v866 = vsel %vm850, %v837, %v634
      %v868 = vsel %vm850, %v839, %v636
      %v870 = vsel %vm850, %v841, %v638
      %v872 = vsel %vm850, %v843, %v640
      %v874 = vsel %vm850, %v845, %v642
      %v876 = vsel %vm850, %v847, %v644
      %v878 = vsel %vm850, %v849, %v646
      %v893 = vrot.slane %v852, 1
      %v894 = vrot.slane %v852, 2
      %v895 = vrot.slane %v852, 3
      %v896 = vrot.slane %v852, 4
      %v897 = vrot.slane %v852, 5
      %v898 = vrot.slane %v852, 6
      %v899 = vrot.slane %v854, 1
      %v900 = vrot.slane %v854, 2
      %v901 = vrot.slane %v854, 3
      %v902 = vrot.slane %v854, 4
      %v903 = vrot.slane %v854, 5
      %v904 = vrot.slane %v854, 6
      %v905 = vrot.slane %v856, 1
      %v906 = vrot.slane %v856, 2
      %v907 = vrot.slane %v856, 3
      %v908 = vrot.slane %v856, 4
      %v909 = vrot.slane %v856, 5
      %v910 = vrot.slane %v856, 6
      %v911 = vrot.slane %v858, 1
      %v912 = vrot.slane %v858, 2
      %v913 = vrot.slane %v858, 3
      %v914 = vrot.slane %v858, 4
      %v915 = vrot.slane %v858, 5
      %v916 = vrot.slane %v858, 6
      %v917 = vrot.slane %v860, 1
      %v918 = vrot.slane %v860, 2
      %v919 = vrot.slane %v860, 3
      %v920 = vrot.slane %v860, 4
      %v921 = vrot.slane %v860, 5
      %v922 = vrot.slane %v860, 6
      %v923 = vrot.slane %v862, 1
      %v924 = vrot.slane %v862, 2
      %v925 = vrot.slane %v862, 3
      %v926 = vrot.slane %v862, 4
      %v927 = vrot.slane %v862, 5
      %v928 = vrot.slane %v862, 6
      %v929 = vrot.slane %v864, 1
      %v930 = vrot.slane %v864, 2
      %v931 = vrot.slane %v864, 3
      %v932 = vrot.slane %v864, 4
      %v933 = vrot.slane %v864, 5
      %v934 = vrot.slane %v864, 6
      %v935 = vrot.slane %v866, 1
      %v936 = vrot.slane %v866, 2
      %v937 = vrot.slane %v866, 3
      %v938 = vrot.slane %v866, 4
      %v939 = vrot.slane %v866, 5
      %v940 = vrot.slane %v866, 6
      %v941 = vrot.slane %v868, 1
      %v942 = vrot.slane %v868, 2
      %v943 = vrot.slane %v868, 3
      %v944 = vrot.slane %v868, 4
      %v945 = vrot.slane %v868, 5
      %v946 = vrot.slane %v868, 6
      %v947 = vrot.slane %v870, 1
      %v948 = vrot.slane %v870, 2
      %v949 = vrot.slane %v870, 3
      %v950 = vrot.slane %v870, 4
      %v951 = vrot.slane %v870, 5
      %v952 = vrot.slane %v870, 6
      %v953 = vrot.slane %v872, 1
      %v954 = vrot.slane %v872, 2
      %v955 = vrot.slane %v872, 3
      %v956 = vrot.slane %v872, 4
      %v957 = vrot.slane %v872, 5
      %v958 = vrot.slane %v872, 6
      %v959 = vrot.slane %v874, 1
      %v960 = vrot.slane %v874, 2
      %v961 = vrot.slane %v874, 3
      %v962 = vrot.slane %v874, 4
      %v963 = vrot.slane %v874, 5
      %v964 = vrot.slane %v874, 6
      %v965 = vrot.slane %v876, 1
      %v966 = vrot.slane %v876, 2
      %v967 = vrot.slane %v876, 3
      %v968 = vrot.slane %v876, 4
      %v969 = vrot.slane %v876, 5
      %v970 = vrot.slane %v876, 6
      %v971 = vrot.slane %v878, 1
      %v972 = vrot.slane %v878, 2
      %v973 = vrot.slane %v878, 3
      %v974 = vrot.slane %v878, 4
      %v975 = vrot.slane %v878, 5
      %v976 = vrot.slane %v878, 6
      %977 = vst [vmem:[#allocation1] ss:$9 sm:$0xff] %v852
      %s979 = scalar_lea.vmem [#allocation1], 1
      %980 = vst [vmem:[%s979] ss:$9 sm:$0xff] %v893
      %s982 = scalar_lea.vmem [#allocation1], 2
      %983 = vst [vmem:[%s982] ss:$9 sm:$0xff] %v894
      %s985 = scalar_lea.vmem [#allocation1], 3
      %986 = vst [vmem:[%s985] ss:$9 sm:$0xff] %v895
      %s988 = scalar_lea.vmem [#allocation1], 4
      %989 = vst [vmem:[%s988] ss:$9 sm:$0xff] %v896
      %s991 = scalar_lea.vmem [#allocation1], 5
      %992 = vst [vmem:[%s991] ss:$9 sm:$0xff] %v897
      %s994 = scalar_lea.vmem [#allocation1], 6
      %995 = vst [vmem:[%s994] ss:$9 sm:$0xff] %v898
      %s996 = scalar_lea.vmem [#allocation1], 7
      %997 = vst [vmem:[%s996] ss:$9 sm:$0xff] %v854
      %v998 = vld [vmem:[#allocation1] sm:$0xff]
      %1000 = vst [vmem:[#allocation1] ss:$9 sm:$0xff] %v899
      %1002 = vst [vmem:[%s979] ss:$9 sm:$0xff] %v900
      %1004 = vst [vmem:[%s982] ss:$9 sm:$0xff] %v901
      %1006 = vst [vmem:[%s985] ss:$9 sm:$0xff] %v902
      %1008 = vst [vmem:[%s988] ss:$9 sm:$0xff] %v903
      %1010 = vst [vmem:[%s991] ss:$9 sm:$0xff] %v904
      %1011 = vst [vmem:[%s994] ss:$9 sm:$0xff] %v856
      %1013 = vst [vmem:[%s996] ss:$9 sm:$0xff] %v905
      %v1014 = vld [vmem:[#allocation1] sm:$0xff]
      %1016 = vst [vmem:[#allocation1] ss:$9 sm:$0xff] %v906
      %1018 = vst [vmem:[%s979] ss:$9 sm:$0xff] %v907
      %1020 = vst [vmem:[%s982] ss:$9 sm:$0xff] %v908
      %1022 = vst [vmem:[%s985] ss:$9 sm:$0xff] %v909
      %1024 = vst [vmem:[%s988] ss:$9 sm:$0xff] %v910
      %1025 = vst [vmem:[%s991] ss:$9 sm:$0xff] %v858
      %1027 = vst [vmem:[%s994] ss:$9 sm:$0xff] %v911
      %1029 = vst [vmem:[%s996] ss:$9 sm:$0xff] %v912
      %v1030 = vld [vmem:[#allocation1] sm:$0xff]
      %1032 = vst [vmem:[#allocation1] ss:$9 sm:$0xff] %v913
      %1034 = vst [vmem:[%s979] ss:$9 sm:$0xff] %v914
      %1036 = vst [vmem:[%s982] ss:$9 sm:$0xff] %v915
      %1038 = vst [vmem:[%s985] ss:$9 sm:$0xff] %v916
      %1039 = vst [vmem:[%s988] ss:$9 sm:$0xff] %v860
      %1041 = vst [vmem:[%s991] ss:$9 sm:$0xff] %v917
      %1043 = vst [vmem:[%s994] ss:$9 sm:$0xff] %v918
      %1045 = vst [vmem:[%s996] ss:$9 sm:$0xff] %v919
      %v1046 = vld [vmem:[#allocation1] sm:$0xff]
      %1048 = vst [vmem:[#allocation1] ss:$9 sm:$0xff] %v920
      %1050 = vst [vmem:[%s979] ss:$9 sm:$0xff] %v921
      %1052 = vst [vmem:[%s982] ss:$9 sm:$0xff] %v922
      %1053 = vst [vmem:[%s985] ss:$9 sm:$0xff] %v862
      %1055 = vst [vmem:[%s988] ss:$9 sm:$0xff] %v923
      %1057 = vst [vmem:[%s991] ss:$9 sm:$0xff] %v924
      %1059 = vst [vmem:[%s994] ss:$9 sm:$0xff] %v925
      %1061 = vst [vmem:[%s996] ss:$9 sm:$0xff] %v926
      %v1062 = vld [vmem:[#allocation1] sm:$0xff]
      %1064 = vst [vmem:[#allocation1] ss:$9 sm:$0xff] %v927
      %1066 = vst [vmem:[%s979] ss:$9 sm:$0xff] %v928
      %1067 = vst [vmem:[%s982] ss:$9 sm:$0xff] %v864
      %1069 = vst [vmem:[%s985] ss:$9 sm:$0xff] %v929
      %1071 = vst [vmem:[%s988] ss:$9 sm:$0xff] %v930
      %1073 = vst [vmem:[%s991] ss:$9 sm:$0xff] %v931
      %1075 = vst [vmem:[%s994] ss:$9 sm:$0xff] %v932
      %1077 = vst [vmem:[%s996] ss:$9 sm:$0xff] %v933
      %v1078 = vld [vmem:[#allocation1] sm:$0xff]
      %1080 = vst [vmem:[#allocation1] ss:$9 sm:$0xff] %v934
      %1081 = vst [vmem:[%s979] ss:$9 sm:$0xff] %v866
      %1083 = vst [vmem:[%s982] ss:$9 sm:$0xff] %v935
      %1085 = vst [vmem:[%s985] ss:$9 sm:$0xff] %v936
      %1087 = vst [vmem:[%s988] ss:$9 sm:$0xff] %v937
      %1089 = vst [vmem:[%s991] ss:$9 sm:$0xff] %v938
      %1091 = vst [vmem:[%s994] ss:$9 sm:$0xff] %v939
      %1093 = vst [vmem:[%s996] ss:$9 sm:$0xff] %v940
      %v1094 = vld [vmem:[#allocation1] sm:$0xff]
      %1095 = vst [vmem:[#allocation1] ss:$9 sm:$0xff] %v868
      %1097 = vst [vmem:[%s979] ss:$9 sm:$0xff] %v941
      %1099 = vst [vmem:[%s982] ss:$9 sm:$0xff] %v942
      %1101 = vst [vmem:[%s985] ss:$9 sm:$0xff] %v943
      %1103 = vst [vmem:[%s988] ss:$9 sm:$0xff] %v944
      %1105 = vst [vmem:[%s991] ss:$9 sm:$0xff] %v945
      %1107 = vst [vmem:[%s994] ss:$9 sm:$0xff] %v946
      %1108 = vst [vmem:[%s996] ss:$9 sm:$0xff] %v870
      %v1109 = vld [vmem:[#allocation1] sm:$0xff]
      %1111 = vst [vmem:[#allocation1] ss:$9 sm:$0xff] %v947
      %1113 = vst [vmem:[%s979] ss:$9 sm:$0xff] %v948
      %1115 = vst [vmem:[%s982] ss:$9 sm:$0xff] %v949
      %1117 = vst [vmem:[%s985] ss:$9 sm:$0xff] %v950
      %1119 = vst [vmem:[%s988] ss:$9 sm:$0xff] %v951
      %1121 = vst [vmem:[%s991] ss:$9 sm:$0xff] %v952
      %1122 = vst [vmem:[%s994] ss:$9 sm:$0xff] %v872
      %1124 = vst [vmem:[%s996] ss:$9 sm:$0xff] %v953
      %v1125 = vld [vmem:[#allocation1] sm:$0xff]
      %1127 = vst [vmem:[#allocation1] ss:$9 sm:$0xff] %v954
      %1129 = vst [vmem:[%s979] ss:$9 sm:$0xff] %v955
      %1131 = vst [vmem:[%s982] ss:$9 sm:$0xff] %v956
      %1133 = vst [vmem:[%s985] ss:$9 sm:$0xff] %v957
      %1135 = vst [vmem:[%s988] ss:$9 sm:$0xff] %v958
      %1136 = vst [vmem:[%s991] ss:$9 sm:$0xff] %v874
      %1138 = vst [vmem:[%s994] ss:$9 sm:$0xff] %v959
      %1140 = vst [vmem:[%s996] ss:$9 sm:$0xff] %v960
      %v1141 = vld [vmem:[#allocation1] sm:$0xff]
      %1143 = vst [vmem:[#allocation1] ss:$9 sm:$0xff] %v961
      %1145 = vst [vmem:[%s979] ss:$9 sm:$0xff] %v962
      %1147 = vst [vmem:[%s982] ss:$9 sm:$0xff] %v963
      %1149 = vst [vmem:[%s985] ss:$9 sm:$0xff] %v964
      %1150 = vst [vmem:[%s988] ss:$9 sm:$0xff] %v876
      %1152 = vst [vmem:[%s991] ss:$9 sm:$0xff] %v965
      %1154 = vst [vmem:[%s994] ss:$9 sm:$0xff] %v966
      %1156 = vst [vmem:[%s996] ss:$9 sm:$0xff] %v967
      %v1157 = vld [vmem:[#allocation1] sm:$0xff]
      %1159 = vst [vmem:[#allocation1] ss:$9 sm:$0xff] %v968
      %1161 = vst [vmem:[%s979] ss:$9 sm:$0xff] %v969
      %1163 = vst [vmem:[%s982] ss:$9 sm:$0xff] %v970
      %1164 = vst [vmem:[%s985] ss:$9 sm:$0xff] %v878
      %1166 = vst [vmem:[%s988] ss:$9 sm:$0xff] %v971
      %1168 = vst [vmem:[%s991] ss:$9 sm:$0xff] %v972
      %1170 = vst [vmem:[%s994] ss:$9 sm:$0xff] %v973
      %1172 = vst [vmem:[%s996] ss:$9 sm:$0xff] %v974
      %v1173 = vld [vmem:[#allocation1] sm:$0xff]
      %1175 = vst [vmem:[#allocation1] ss:$9 sm:$0xff] %v975
      %1177 = vst [vmem:[%s979] ss:$9 sm:$0xff] %v976
      %v1178 = vld [vmem:[#allocation1] sm:$0xff]
      %vm1179 = vcmask 293888
      %v1181 = vsel %vm1179, %v998, 0
      %v1183 = vsel %vm1179, %v1014, 0
      %v1185 = vsel %vm1179, %v1030, 0
      %v1187 = vsel %vm1179, %v1046, 0
      %v1189 = vsel %vm1179, %v1062, 0
      %v1191 = vsel %vm1179, %v1078, 0
      %v1193 = vsel %vm1179, %v1094, 0
      %v1195 = vsel %vm1179, %v1109, 0
      %v1197 = vsel %vm1179, %v1125, 0
      %v1199 = vsel %vm1179, %v1141, 0
      %v1201 = vsel %vm1179, %v1157, 0
      %v1203 = vsel %vm1179, %v1173, 0
      %v1205 = vsel %vm1179, %v1178, 0
      %v1207 = vld [vmem:[%s1] sm:$0xf]
      %v1208 = vld [vmem:[%s1 + $0x4] sm:$0xf]
      %v1209 = vld [vmem:[%s1 + $0x8] sm:$0xf]
      %v1210 = vld [vmem:[%s1 + $0xc] sm:$0xf]
      %v1211 = vld [vmem:[%s1 + $0x10] sm:$0xf]
      %v1212 = vld [vmem:[%s1 + $0x14] sm:$0xf]
      %v1213 = vld [vmem:[%s1 + $0x18] sm:$0xf]
      %v1214 = vld [vmem:[%s1 + $0x1c] sm:$0xf]
      %v1215 = vld [vmem:[%s1 + $0x20] sm:$0xf]
      %v1216 = vld [vmem:[%s1 + $0x24] sm:$0xf]
      %v1217 = vld [vmem:[%s1 + $0x28] sm:$0xf]
      %v1218 = vld [vmem:[%s1 + $0x2c] sm:$0xf]
      %v1219 = vld [vmem:[%s1 + $0x30] sm:$0xf]
      %v1220 = vld [vmem:[%s1 + $0x34] sm:$0xf]
      %v1221 = vld [vmem:[%s1 + $0x38] sm:$0xf]
      %v1222 = vld [vmem:[%s1 + $0x3c] sm:$0xf]
      %v1239 = vunpack.c.l.b16 %v1207
      %v1240 = vunpack.c.l.b16 %v1208
      %v1241 = vunpack.c.l.b16 %v1209
      %v1242 = vunpack.c.l.b16 %v1210
      %v1243 = vunpack.c.l.b16 %v1211
      %v1244 = vunpack.c.l.b16 %v1212
      %v1245 = vunpack.c.l.b16 %v1213
      %v1246 = vunpack.c.l.b16 %v1214
      %v1247 = vunpack.c.l.b16 %v1215
      %v1248 = vunpack.c.l.b16 %v1216
      %v1249 = vunpack.c.l.b16 %v1217
      %v1250 = vunpack.c.l.b16 %v1218
      %v1251 = vunpack.c.l.b16 %v1219
      %v1252 = vunpack.c.l.b16 %v1220
      %v1253 = vunpack.c.l.b16 %v1221
      %v1254 = vunpack.c.l.b16 %v1222
      %v1255 = vpack.c.b16 %v1240, %v1239
      %v1256 = vpack.c.b16 %v1242, %v1241
      %v1257 = vpack.c.b16 %v1244, %v1243
      %v1258 = vpack.c.b16 %v1246, %v1245
      %v1259 = vpack.c.b16 %v1248, %v1247
      %v1260 = vpack.c.b16 %v1250, %v1249
      %v1261 = vpack.c.b16 %v1252, %v1251
      %v1262 = vpack.c.b16 %v1254, %v1253
      %1271 = vmatpush.bf16.msra.mxu0 %v1262
      %1272 = vmatpush.bf16.msra.mxu0 %v1261
      %1273 = vmatpush.bf16.msra.mxu0 %v1260
      %1274 = vmatpush.bf16.msra.mxu0 %v1259
      %1275 = vmatpush.bf16.msra.mxu0 %v1258
      %1276 = vmatpush.bf16.msra.mxu0 %v1257
      %1277 = vmatpush.bf16.msra.mxu0 %v1256
      %1278 = vmatpush.bf16.msra.mxu0 %v1255
      %1279 = vmatmul.bf16.gmra.mxu0 %v1181
      %v1280 = vpop.f32.mrf.mxu0
      %v1281 = vadd.f32 0.0, %v1280
      %v1282 = vpop.f32.mrf.mxu0
      %v1283 = vadd.f32 0.0, %v1282
      %1284 = vmatmul.bf16.gmra.mxu0 %v1183
      %v1285 = vpop.f32.mrf.mxu0
      %v1286 = vadd.f32 0.0, %v1285
      %v1287 = vpop.f32.mrf.mxu0
      %v1288 = vadd.f32 0.0, %v1287
      %1289 = vmatmul.bf16.gmra.mxu0 %v1185
      %v1290 = vpop.f32.mrf.mxu0
      %v1291 = vadd.f32 0.0, %v1290
      %v1292 = vpop.f32.mrf.mxu0
      %v1293 = vadd.f32 0.0, %v1292
      %1294 = vmatmul.bf16.gmra.mxu0 %v1187
      %v1295 = vpop.f32.mrf.mxu0
      %v1296 = vadd.f32 0.0, %v1295
      %v1297 = vpop.f32.mrf.mxu0
      %v1298 = vadd.f32 0.0, %v1297
      %1299 = vmatmul.bf16.gmra.mxu0 %v1189
      %v1300 = vpop.f32.mrf.mxu0
      %v1301 = vadd.f32 0.0, %v1300
      %v1302 = vpop.f32.mrf.mxu0
      %v1303 = vadd.f32 0.0, %v1302
      %1304 = vmatmul.bf16.gmra.mxu0 %v1191
      %v1305 = vpop.f32.mrf.mxu0
      %v1306 = vadd.f32 0.0, %v1305
      %v1307 = vpop.f32.mrf.mxu0
      %v1308 = vadd.f32 0.0, %v1307
      %1309 = vmatmul.bf16.gmra.mxu0 %v1193
      %v1310 = vpop.f32.mrf.mxu0
      %v1311 = vadd.f32 0.0, %v1310
      %v1312 = vpop.f32.mrf.mxu0
      %v1313 = vadd.f32 0.0, %v1312
      %1314 = vmatmul.bf16.gmra.mxu0 %v1195
      %v1315 = vpop.f32.mrf.mxu0
      %v1316 = vadd.f32 0.0, %v1315
      %v1317 = vpop.f32.mrf.mxu0
      %v1318 = vadd.f32 0.0, %v1317
      %1319 = vmatmul.bf16.gmra.mxu0 %v1197
      %v1320 = vpop.f32.mrf.mxu0
      %v1321 = vadd.f32 0.0, %v1320
      %v1322 = vpop.f32.mrf.mxu0
      %v1323 = vadd.f32 0.0, %v1322
      %1324 = vmatmul.bf16.gmra.mxu0 %v1199
      %v1325 = vpop.f32.mrf.mxu0
      %v1326 = vadd.f32 0.0, %v1325
      %v1327 = vpop.f32.mrf.mxu0
      %v1328 = vadd.f32 0.0, %v1327
      %1329 = vmatmul.bf16.gmra.mxu0 %v1201
      %v1330 = vpop.f32.mrf.mxu0
      %v1331 = vadd.f32 0.0, %v1330
      %v1332 = vpop.f32.mrf.mxu0
      %v1333 = vadd.f32 0.0, %v1332
      %1334 = vmatmul.bf16.gmra.mxu0 %v1203
      %v1335 = vpop.f32.mrf.mxu0
      %v1336 = vadd.f32 0.0, %v1335
      %v1337 = vpop.f32.mrf.mxu0
      %v1338 = vadd.f32 0.0, %v1337
      %1339 = vmatmul.bf16.gmra.mxu0 %v1205
      %v1340 = vpop.f32.mrf.mxu0
      %v1341 = vadd.f32 0.0, %v1340
      %v1342 = vpop.f32.mrf.mxu0
      %1343 = vdwg.mxu0
      %v1369 = vrot.slane %v1281, 2
      %v1370 = vrot.slane %v1281, 4
      %v1371 = vrot.slane %v1281, 6
      %v1372 = vrot.slane %v1283, 2
      %v1373 = vrot.slane %v1283, 4
      %v1374 = vrot.slane %v1283, 6
      %v1375 = vrot.slane %v1286, 2
      %v1376 = vrot.slane %v1286, 4
      %v1377 = vrot.slane %v1286, 6
      %v1378 = vrot.slane %v1288, 2
      %v1379 = vrot.slane %v1288, 4
      %v1380 = vrot.slane %v1288, 6
      %v1381 = vrot.slane %v1291, 2
      %v1382 = vrot.slane %v1291, 4
      %v1383 = vrot.slane %v1291, 6
      %v1384 = vrot.slane %v1293, 2
      %v1385 = vrot.slane %v1293, 4
      %v1386 = vrot.slane %v1293, 6
      %v1387 = vrot.slane %v1296, 2
      %v1388 = vrot.slane %v1296, 4
      %v1389 = vrot.slane %v1296, 6
      %v1390 = vrot.slane %v1298, 2
      %v1391 = vrot.slane %v1298, 4
      %v1392 = vrot.slane %v1298, 6
      %v1393 = vrot.slane %v1301, 2
      %v1394 = vrot.slane %v1301, 4
      %v1395 = vrot.slane %v1301, 6
      %v1396 = vrot.slane %v1303, 2
      %v1397 = vrot.slane %v1303, 4
      %v1398 = vrot.slane %v1303, 6
      %v1399 = vrot.slane %v1306, 2
      %v1400 = vrot.slane %v1306, 4
      %v1401 = vrot.slane %v1306, 6
      %v1402 = vrot.slane %v1308, 2
      %v1403 = vrot.slane %v1308, 4
      %v1404 = vrot.slane %v1308, 6
      %v1405 = vrot.slane %v1311, 2
      %v1406 = vrot.slane %v1311, 4
      %v1407 = vrot.slane %v1311, 6
      %v1408 = vrot.slane %v1313, 2
      %v1409 = vrot.slane %v1313, 4
      %v1410 = vrot.slane %v1313, 6
      %v1411 = vrot.slane %v1316, 2
      %v1412 = vrot.slane %v1316, 4
      %v1413 = vrot.slane %v1316, 6
      %v1414 = vrot.slane %v1318, 2
      %v1415 = vrot.slane %v1318, 4
      %v1416 = vrot.slane %v1318, 6
      %v1417 = vrot.slane %v1321, 2
      %v1418 = vrot.slane %v1321, 4
      %v1419 = vrot.slane %v1321, 6
      %v1420 = vrot.slane %v1323, 2
      %v1421 = vrot.slane %v1323, 4
      %v1422 = vrot.slane %v1323, 6
      %v1423 = vrot.slane %v1326, 2
      %v1424 = vrot.slane %v1326, 4
      %v1425 = vrot.slane %v1326, 6
      %v1426 = vrot.slane %v1328, 2
      %v1427 = vrot.slane %v1328, 4
      %v1428 = vrot.slane %v1328, 6
      %v1429 = vrot.slane %v1331, 2
      %v1430 = vrot.slane %v1331, 4
      %v1431 = vrot.slane %v1331, 6
      %v1432 = vrot.slane %v1333, 2
      %v1433 = vrot.slane %v1333, 4
      %v1434 = vrot.slane %v1333, 6
      %v1435 = vrot.slane %v1336, 2
      %v1436 = vrot.slane %v1336, 4
      %v1437 = vrot.slane %v1336, 6
      %v1438 = vrot.slane %v1338, 2
      %v1439 = vrot.slane %v1338, 4
      %v1440 = vrot.slane %v1338, 6
      %v1441 = vrot.slane %v1341, 2
      %1442 = vst [vmem:[#allocation1] ss:$4 sm:$0xff] %v1281
      %s1443 = scalar_lea.vmem [#allocation1], 1
      %1444 = vst [vmem:[%s1443] ss:$4 sm:$0xff] %v1369
      %s1445 = scalar_lea.vmem [#allocation1], 2
      %1446 = vst [vmem:[%s1445] ss:$4 sm:$0xff] %v1370
      %s1447 = scalar_lea.vmem [#allocation1], 3
      %1448 = vst [vmem:[%s1447] ss:$4 sm:$0xff] %v1371
      %s1449 = scalar_lea.vmem [#allocation1], 32
      %1450 = vst [vmem:[%s1449] ss:$4 sm:$0xff] %v1283
      %s1451 = scalar_lea.vmem [#allocation1], 33
      %1452 = vst [vmem:[%s1451] ss:$4 sm:$0xff] %v1372
      %s1453 = scalar_lea.vmem [#allocation1], 34
      %1454 = vst [vmem:[%s1453] ss:$4 sm:$0xff] %v1373
      %v1455 = vld.sshfl [vmem:[#allocation1] sm:$0xff pattern:$0x73625140]
      %v1456 = vld.sshfl [vmem:[#allocation1 + $0x20] sm:$0xff pattern:$0x73625140]
      %1457 = vst [vmem:[#allocation1] ss:$4 sm:$0xff] %v1374
      %1458 = vst [vmem:[%s1443] ss:$4 sm:$0xff] %v1286
      %1459 = vst [vmem:[%s1445] ss:$4 sm:$0xff] %v1375
      %1460 = vst [vmem:[%s1447] ss:$4 sm:$0xff] %v1376
      %1461 = vst [vmem:[%s1449] ss:$4 sm:$0xff] %v1377
      %1462 = vst [vmem:[%s1451] ss:$4 sm:$0xff] %v1288
      %1463 = vst [vmem:[%s1453] ss:$4 sm:$0xff] %v1378
      %v1464 = vld.sshfl [vmem:[#allocation1] sm:$0xff pattern:$0x73625140]
      %v1465 = vld.sshfl [vmem:[#allocation1 + $0x20] sm:$0xff pattern:$0x73625140]
      %1466 = vst [vmem:[#allocation1] ss:$4 sm:$0xff] %v1379
      %1467 = vst [vmem:[%s1443] ss:$4 sm:$0xff] %v1380
      %1468 = vst [vmem:[%s1445] ss:$4 sm:$0xff] %v1291
      %1469 = vst [vmem:[%s1447] ss:$4 sm:$0xff] %v1381
      %1470 = vst [vmem:[%s1449] ss:$4 sm:$0xff] %v1382
      %1471 = vst [vmem:[%s1451] ss:$4 sm:$0xff] %v1383
      %1472 = vst [vmem:[%s1453] ss:$4 sm:$0xff] %v1293
      %v1473 = vld.sshfl [vmem:[#allocation1] sm:$0xff pattern:$0x73625140]
      %v1474 = vld.sshfl [vmem:[#allocation1 + $0x20] sm:$0xff pattern:$0x73625140]
      %1475 = vst [vmem:[#allocation1] ss:$4 sm:$0xff] %v1384
      %1476 = vst [vmem:[%s1443] ss:$4 sm:$0xff] %v1385
      %1477 = vst [vmem:[%s1445] ss:$4 sm:$0xff] %v1386
      %1478 = vst [vmem:[%s1447] ss:$4 sm:$0xff] %v1296
      %1479 = vst [vmem:[%s1449] ss:$4 sm:$0xff] %v1387
      %1480 = vst [vmem:[%s1451] ss:$4 sm:$0xff] %v1388
      %1481 = vst [vmem:[%s1453] ss:$4 sm:$0xff] %v1389
      %v1482 = vld.sshfl [vmem:[#allocation1] sm:$0xff pattern:$0x73625140]
      %v1483 = vld.sshfl [vmem:[#allocation1 + $0x20] sm:$0xff pattern:$0x73625140]
      %1484 = vst [vmem:[#allocation1] ss:$4 sm:$0xff] %v1298
      %1485 = vst [vmem:[%s1443] ss:$4 sm:$0xff] %v1390
      %1486 = vst [vmem:[%s1445] ss:$4 sm:$0xff] %v1391
      %1487 = vst [vmem:[%s1447] ss:$4 sm:$0xff] %v1392
      %1488 = vst [vmem:[%s1449] ss:$4 sm:$0xff] %v1301
      %1489 = vst [vmem:[%s1451] ss:$4 sm:$0xff] %v1393
      %1490 = vst [vmem:[%s1453] ss:$4 sm:$0xff] %v1394
      %v1491 = vld.sshfl [vmem:[#allocation1] sm:$0xff pattern:$0x73625140]
      %v1492 = vld.sshfl [vmem:[#allocation1 + $0x20] sm:$0xff pattern:$0x73625140]
      %1493 = vst [vmem:[#allocation1] ss:$4 sm:$0xff] %v1395
      %1494 = vst [vmem:[%s1443] ss:$4 sm:$0xff] %v1303
      %1495 = vst [vmem:[%s1445] ss:$4 sm:$0xff] %v1396
      %1496 = vst [vmem:[%s1447] ss:$4 sm:$0xff] %v1397
      %1497 = vst [vmem:[%s1449] ss:$4 sm:$0xff] %v1398
      %1498 = vst [vmem:[%s1451] ss:$4 sm:$0xff] %v1306
      %1499 = vst [vmem:[%s1453] ss:$4 sm:$0xff] %v1399
      %v1500 = vld.sshfl [vmem:[#allocation1] sm:$0xff pattern:$0x73625140]
      %v1501 = vld.sshfl [vmem:[#allocation1 + $0x20] sm:$0xff pattern:$0x73625140]
      %1502 = vst [vmem:[#allocation1] ss:$4 sm:$0xff] %v1400
      %1503 = vst [vmem:[%s1443] ss:$4 sm:$0xff] %v1401
      %1504 = vst [vmem:[%s1445] ss:$4 sm:$0xff] %v1308
      %1505 = vst [vmem:[%s1447] ss:$4 sm:$0xff] %v1402
      %1506 = vst [vmem:[%s1449] ss:$4 sm:$0xff] %v1403
      %1507 = vst [vmem:[%s1451] ss:$4 sm:$0xff] %v1404
      %1508 = vst [vmem:[%s1453] ss:$4 sm:$0xff] %v1311
      %v1509 = vld.sshfl [vmem:[#allocation1] sm:$0xff pattern:$0x73625140]
      %v1510 = vld.sshfl [vmem:[#allocation1 + $0x20] sm:$0xff pattern:$0x73625140]
      %1511 = vst [vmem:[#allocation1] ss:$4 sm:$0xff] %v1405
      %1512 = vst [vmem:[%s1443] ss:$4 sm:$0xff] %v1406
      %1513 = vst [vmem:[%s1445] ss:$4 sm:$0xff] %v1407
      %1514 = vst [vmem:[%s1447] ss:$4 sm:$0xff] %v1313
      %1515 = vst [vmem:[%s1449] ss:$4 sm:$0xff] %v1408
      %1516 = vst [vmem:[%s1451] ss:$4 sm:$0xff] %v1409
      %1517 = vst [vmem:[%s1453] ss:$4 sm:$0xff] %v1410
      %v1518 = vld.sshfl [vmem:[#allocation1] sm:$0xff pattern:$0x73625140]
      %v1519 = vld.sshfl [vmem:[#allocation1 + $0x20] sm:$0xff pattern:$0x73625140]
      %1520 = vst [vmem:[#allocation1] ss:$4 sm:$0xff] %v1316
      %1521 = vst [vmem:[%s1443] ss:$4 sm:$0xff] %v1411
      %1522 = vst [vmem:[%s1445] ss:$4 sm:$0xff] %v1412
      %1523 = vst [vmem:[%s1447] ss:$4 sm:$0xff] %v1413
      %1524 = vst [vmem:[%s1449] ss:$4 sm:$0xff] %v1318
      %1525 = vst [vmem:[%s1451] ss:$4 sm:$0xff] %v1414
      %1526 = vst [vmem:[%s1453] ss:$4 sm:$0xff] %v1415
      %v1527 = vld.sshfl [vmem:[#allocation1] sm:$0xff pattern:$0x73625140]
      %v1528 = vld.sshfl [vmem:[#allocation1 + $0x20] sm:$0xff pattern:$0x73625140]
      %1529 = vst [vmem:[#allocation1] ss:$4 sm:$0xff] %v1416
      %1530 = vst [vmem:[%s1443] ss:$4 sm:$0xff] %v1321
      %1531 = vst [vmem:[%s1445] ss:$4 sm:$0xff] %v1417
      %1532 = vst [vmem:[%s1447] ss:$4 sm:$0xff] %v1418
      %1533 = vst [vmem:[%s1449] ss:$4 sm:$0xff] %v1419
      %1534 = vst [vmem:[%s1451] ss:$4 sm:$0xff] %v1323
      %1535 = vst [vmem:[%s1453] ss:$4 sm:$0xff] %v1420
      %v1536 = vld.sshfl [vmem:[#allocation1] sm:$0xff pattern:$0x73625140]
      %v1537 = vld.sshfl [vmem:[#allocation1 + $0x20] sm:$0xff pattern:$0x73625140]
      %1538 = vst [vmem:[#allocation1] ss:$4 sm:$0xff] %v1421
      %1539 = vst [vmem:[%s1443] ss:$4 sm:$0xff] %v1422
      %1540 = vst [vmem:[%s1445] ss:$4 sm:$0xff] %v1326
      %1541 = vst [vmem:[%s1447] ss:$4 sm:$0xff] %v1423
      %1542 = vst [vmem:[%s1449] ss:$4 sm:$0xff] %v1424
      %1543 = vst [vmem:[%s1451] ss:$4 sm:$0xff] %v1425
      %1544 = vst [vmem:[%s1453] ss:$4 sm:$0xff] %v1328
      %v1545 = vld.sshfl [vmem:[#allocation1] sm:$0xff pattern:$0x73625140]
      %v1546 = vld.sshfl [vmem:[#allocation1 + $0x20] sm:$0xff pattern:$0x73625140]
      %1547 = vst [vmem:[#allocation1] ss:$4 sm:$0xff] %v1426
      %1548 = vst [vmem:[%s1443] ss:$4 sm:$0xff] %v1427
      %1549 = vst [vmem:[%s1445] ss:$4 sm:$0xff] %v1428
      %1550 = vst [vmem:[%s1447] ss:$4 sm:$0xff] %v1331
      %1551 = vst [vmem:[%s1449] ss:$4 sm:$0xff] %v1429
      %1552 = vst [vmem:[%s1451] ss:$4 sm:$0xff] %v1430
      %1553 = vst [vmem:[%s1453] ss:$4 sm:$0xff] %v1431
      %v1554 = vld.sshfl [vmem:[#allocation1] sm:$0xff pattern:$0x73625140]
      %v1555 = vld.sshfl [vmem:[#allocation1 + $0x20] sm:$0xff pattern:$0x73625140]
      %1556 = vst [vmem:[#allocation1] ss:$4 sm:$0xff] %v1333
      %1557 = vst [vmem:[%s1443] ss:$4 sm:$0xff] %v1432
      %1558 = vst [vmem:[%s1445] ss:$4 sm:$0xff] %v1433
      %1559 = vst [vmem:[%s1447] ss:$4 sm:$0xff] %v1434
      %1560 = vst [vmem:[%s1449] ss:$4 sm:$0xff] %v1336
      %1561 = vst [vmem:[%s1451] ss:$4 sm:$0xff] %v1435
      %1562 = vst [vmem:[%s1453] ss:$4 sm:$0xff] %v1436
      %v1563 = vld.sshfl [vmem:[#allocation1] sm:$0xff pattern:$0x73625140]
      %v1564 = vld.sshfl [vmem:[#allocation1 + $0x20] sm:$0xff pattern:$0x73625140]
      %1565 = vst [vmem:[#allocation1] ss:$4 sm:$0xff] %v1437
      %1566 = vst [vmem:[%s1443] ss:$4 sm:$0xff] %v1338
      %1567 = vst [vmem:[%s1445] ss:$4 sm:$0xff] %v1438
      %1568 = vst [vmem:[%s1447] ss:$4 sm:$0xff] %v1439
      %1569 = vst [vmem:[%s1449] ss:$4 sm:$0xff] %v1440
      %1570 = vst [vmem:[%s1451] ss:$4 sm:$0xff] %v1341
      %1571 = vst [vmem:[%s1453] ss:$4 sm:$0xff] %v1441
      %v1572 = vld.sshfl [vmem:[#allocation1] sm:$0xff pattern:$0x73625140]
      %v1573 = vld.sshfl [vmem:[#allocation1 + $0x20] sm:$0xff pattern:$0x73625140]
      %1602 = vst [vmem:[%s177] sm:$0xff] %v1455
      %1603 = vst [vmem:[%s177 + $0x8] sm:$0x3f] %v1456
      %1604 = vst [vmem:[%s177 + $0x10] sm:$0xff] %v1464
      %1605 = vst [vmem:[%s177 + $0x18] sm:$0x3f] %v1465
      %1606 = vst [vmem:[%s177 + $0x20] sm:$0xff] %v1473
      %1607 = vst [vmem:[%s177 + $0x28] sm:$0x3f] %v1474
      %1608 = vst [vmem:[%s177 + $0x30] sm:$0xff] %v1482
      %1609 = vst [vmem:[%s177 + $0x38] sm:$0x3f] %v1483
      %1610 = vst [vmem:[%s177 + $0x40] sm:$0xff] %v1491
      %1611 = vst [vmem:[%s177 + $0x48] sm:$0x3f] %v1492
      %1612 = vst [vmem:[%s177 + $0x50] sm:$0xff] %v1500
      %1613 = vst [vmem:[%s177 + $0x58] sm:$0x3f] %v1501
      %1614 = vst [vmem:[%s177 + $0x60] sm:$0xff] %v1509
      %1615 = vst [vmem:[%s177 + $0x68] sm:$0x3f] %v1510
      %1616 = vst [vmem:[%s177 + $0x70] sm:$0xff] %v1518
      %1617 = vst [vmem:[%s177 + $0x78] sm:$0x3f] %v1519
      %1618 = vst [vmem:[%s177 + $0x80] sm:$0xff] %v1527
      %1619 = vst [vmem:[%s177 + $0x88] sm:$0x3f] %v1528
      %1620 = vst [vmem:[%s177 + $0x90] sm:$0xff] %v1536
      %1621 = vst [vmem:[%s177 + $0x98] sm:$0x3f] %v1537
      %1622 = vst [vmem:[%s177 + $0xa0] sm:$0xff] %v1545
      %1623 = vst [vmem:[%s177 + $0xa8] sm:$0x3f] %v1546
      %1624 = vst [vmem:[%s177 + $0xb0] sm:$0xff] %v1554
      %1625 = vst [vmem:[%s177 + $0xb8] sm:$0x3f] %v1555
      %1626 = vst [vmem:[%s177 + $0xc0] sm:$0xff] %v1563
      %1627 = vst [vmem:[%s177 + $0xc8] sm:$0x3f] %v1564
      %1628 = vst [vmem:[%s177 + $0xd0] sm:$0xff] %v1572
      %1629 = vst [vmem:[%s177 + $0xd8] sm:$0x3f] %v1573
      %v1630 = vadd.f32 %v1281, %v1283
      %v1631 = vadd.f32 %v1630, %v1286
      %v1632 = vadd.f32 %v1631, %v1288
      %v1633 = vadd.f32 %v1632, %v1291
      %v1634 = vadd.f32 %v1633, %v1293
      %v1635 = vadd.f32 %v1634, %v1296
      %v1636 = vadd.f32 %v1635, %v1298
      %v1637 = vadd.f32 %v1636, %v1301
      %v1638 = vadd.f32 %v1637, %v1303
      %v1639 = vadd.f32 %v1638, %v1306
      %v1640 = vadd.f32 %v1639, %v1308
      %v1641 = vadd.f32 %v1640, %v1311
      %v1642 = vadd.f32 %v1641, %v1313
      %v1643 = vadd.f32 %v1642, %v1316
      %v1644 = vadd.f32 %v1643, %v1318
      %v1645 = vadd.f32 %v1644, %v1321
      %v1646 = vadd.f32 %v1645, %v1323
      %v1647 = vadd.f32 %v1646, %v1326
      %v1648 = vadd.f32 %v1647, %v1328
      %v1649 = vadd.f32 %v1648, %v1331
      %v1650 = vadd.f32 %v1649, %v1333
      %v1651 = vadd.f32 %v1650, %v1336
      %v1652 = vadd.f32 %v1651, %v1338
      %vm1653 = vcmask 1043456
      %v1654 = vsel %vm1653, %v1341, 0.0
      %v1655 = vadd.f32 %v1652, %v1654
      %v1656 = vrot.slane %v1655, 4
      %v1657 = vadd.f32 %v1655, %v1656
      %v1658 = vrot.slane %v1657, 2
      %v1659 = vadd.f32 %v1657, %v1658
      %v1660 = vrot.slane %v1659, 1
      %v1661 = vadd.f32 %v1659, %v1660
      %v1662 = vmul.f32 %v1281, %v1281
      %v1663 = vmul.f32 %v1283, %v1283
      %v1664 = vmul.f32 %v1286, %v1286
      %v1665 = vmul.f32 %v1288, %v1288
      %v1666 = vmul.f32 %v1291, %v1291
      %v1667 = vmul.f32 %v1293, %v1293
      %v1668 = vmul.f32 %v1296, %v1296
      %v1669 = vmul.f32 %v1298, %v1298
      %v1670 = vmul.f32 %v1301, %v1301
      %v1671 = vmul.f32 %v1303, %v1303
      %v1672 = vmul.f32 %v1306, %v1306
      %v1673 = vmul.f32 %v1308, %v1308
      %v1674 = vmul.f32 %v1311, %v1311
      %v1675 = vmul.f32 %v1313, %v1313
      %v1676 = vmul.f32 %v1316, %v1316
      %v1677 = vmul.f32 %v1318, %v1318
      %v1678 = vmul.f32 %v1321, %v1321
      %v1679 = vmul.f32 %v1323, %v1323
      %v1680 = vmul.f32 %v1326, %v1326
      %v1681 = vmul.f32 %v1328, %v1328
      %v1682 = vmul.f32 %v1331, %v1331
      %v1683 = vmul.f32 %v1333, %v1333
      %v1684 = vmul.f32 %v1336, %v1336
      %v1685 = vmul.f32 %v1338, %v1338
      %v1686 = vmul.f32 %v1341, %v1341
      %v1687 = vadd.f32 %v1662, %v1663
      %v1688 = vadd.f32 %v1687, %v1664
      %v1689 = vadd.f32 %v1688, %v1665
      %v1690 = vadd.f32 %v1689, %v1666
      %v1691 = vadd.f32 %v1690, %v1667
      %v1692 = vadd.f32 %v1691, %v1668
      %v1693 = vadd.f32 %v1692, %v1669
      %v1694 = vadd.f32 %v1693, %v1670
      %v1695 = vadd.f32 %v1694, %v1671
      %v1696 = vadd.f32 %v1695, %v1672
      %v1697 = vadd.f32 %v1696, %v1673
      %v1698 = vadd.f32 %v1697, %v1674
      %v1699 = vadd.f32 %v1698, %v1675
      %v1700 = vadd.f32 %v1699, %v1676
      %v1701 = vadd.f32 %v1700, %v1677
      %v1702 = vadd.f32 %v1701, %v1678
      %v1703 = vadd.f32 %v1702, %v1679
      %v1704 = vadd.f32 %v1703, %v1680
      %v1705 = vadd.f32 %v1704, %v1681
      %v1706 = vadd.f32 %v1705, %v1682
      %v1707 = vadd.f32 %v1706, %v1683
      %v1708 = vadd.f32 %v1707, %v1684
      %v1709 = vadd.f32 %v1708, %v1685
      %v1710 = vsel %vm1653, %v1686, 0.0
      %v1711 = vadd.f32 %v1709, %v1710
      %v1712 = vrot.slane %v1711, 4
      %v1713 = vadd.f32 %v1711, %v1712
      %v1714 = vrot.slane %v1713, 2
      %v1715 = vadd.f32 %v1713, %v1714
      %v1716 = vrot.slane %v1715, 1
      %v1717 = vadd.f32 %v1715, %v1716
      %vm1718 = vcmask 1040384
      %v1719 = vsel %vm1718, %v1661, %v1717
      %1720 = vst [vmem:[%s181] sm:$0x3] %v1719
      %p1721 = scmp.lt.s32.totalorder %s15, 1
      %s1722 = scalar_select %p1721, %s15, 1
      %s1723 = smul.addr %s1722, 28
      %s1724 = smul.addr %s1723, 8
      %s1725 = scalar_lea.vmem %s2, %s1724
      %p1726 = scmp.lt.s32.totalorder %s15, 1
      %s1727 = scalar_select %p1726, %s15, 1
      %s1728 = smul.addr %s1727, 2
      %s1729 = scalar_lea.vmem %s3, %s1728
      // Predicated region
      $region29: #{residual_block_forward.3} parent=27 // pred_check
        %p1730 = pneg %p80
      $region30: #{residual_block_forward.3} parent=27 // pred_check_branch
        %1732 = sbr.rel (%p1730) target = $region32
      $region31: #{residual_block_forward.3} parent=27 // pred_region
        _
      $region32: #{residual_block_forward.3} parent=27 // pred_fallthru
        _
      // Predicated region
      $region33: #{residual_block_forward.3} parent=27 // pred_check
        %p1733 = pneg %p106
      $region34: #{residual_block_forward.3} parent=27 // pred_check_branch
        %1735 = sbr.rel (%p1733) target = $region36
      $region35: #{residual_block_forward.3} parent=27 // pred_region
        _
      $region36: #{residual_block_forward.3} parent=27 // pred_fallthru
        _
    $region28: #{residual_block_forward.3} parent=5 // pred_fallthru
      _
    %p1736 = scmp.le.s32.totalorder 2, %s10
    // Predicated region
    $region37: #{residual_block_forward.3} parent=5 // pred_check
      %p1737 = pneg %p1736
    $region38: #{residual_block_forward.3} parent=5 // pred_check_branch
      %1739 = sbr.rel (%p1737) target = $region40
    $region39: #{residual_block_forward.3} parent=5 // pred_region
      %s1740 = ssub.s32 %s10, 2
      // Predicated region
      $region41: #{residual_block_forward.3} parent=39 // pred_check
        %p1741 = pneg %p86
      $region42: #{residual_block_forward.3} parent=39 // pred_check_branch
        %1743 = sbr.rel (%p1741) target = $region44
      $region43: #{residual_block_forward.3} parent=39 // pred_region
        %p1744 = scmp.lt.s32.totalorder %s16, 1
        %s1745 = scalar_select %p1744, %s16, 1
        %s1746 = smul.addr %s1745, 28
        %s1747 = smul.addr %s1746, 8
        %s1748 = scalar_lea.vmem %s2, %s1747
      $region44: #{residual_block_forward.3} parent=39 // pred_fallthru
        _
      // Predicated region
      $region45: #{residual_block_forward.3} parent=39 // pred_check
        %p1749 = pneg %p112
      $region46: #{residual_block_forward.3} parent=39 // pred_check_branch
        %1751 = sbr.rel (%p1749) target = $region48
      $region47: #{residual_block_forward.3} parent=39 // pred_region
        %p1752 = scmp.lt.s32.totalorder %s16, 1
        %s1753 = scalar_select %p1752, %s16, 1
        %s1754 = smul.addr %s1753, 2
        %s1755 = scalar_lea.vmem %s3, %s1754
      $region48: #{residual_block_forward.3} parent=39 // pred_fallthru
        _
    $region40: #{residual_block_forward.3} parent=5 // pred_fallthru
      _
  $region6: #{residual_block_forward.3} parent=0 // loop_footer
    %s14 = sadd.s32 1, %s10
  $region7: #{residual_block_forward.3} parent=0 // loop_footer_branch
    %9 = sbr.rel target = $region3
  $region8: #{residual_block_forward.3} parent=0 // loop_exit
    _

// kernel: residual_block_forward.5
$region0: #{residual_block_forward.5}
  #allocation0 [shape = 'u32[]', space=smem, size = 0x4, offset = 0x4, fixed_abs, tag = 'smem constant byte address 0x4 - core index']
  #allocation1 [shape = 'u32[72,128]{1,0:T(1,128)}', space=vmem, size = 0x9000, scoped, tag = 'internal scratch']
  %s0 = inlined_call_operand.vmem [shape: bf16[2,16,16,4], index: 0, kind: input, shape index: {}]
  %s1 = inlined_call_operand.vmem [shape: f32[2,12,12,128], index: 1, kind: input, shape index: {}]
  %s2 = inlined_call_operand.vmem [shape: bf16[128,128], index: 2, kind: input, shape index: {}]
  %s3 = inlined_call_operand.vmem [shape: f32[8,128], index: 3, kind: input, shape index: {}]
  %s4 = inlined_call_operand.vmem [shape: f32[2,12,12,128], index: 4, kind: output, shape index: {}]
  %s5 = sld [smem:[#allocation0]]
  $region49: #{residual_block_forward.5} parent=0
    _
  %s7 = ssub.s32 1, %s5
  %s8 = scalar_select 0, %s7, %s5
  loop: start=0, step=1, limit=4
  $region2: #{residual_block_forward.5} parent=0 // loop_pre_header
    _
  $region3: #{residual_block_forward.5} parent=0 // loop_header
    %s10 = sphi 0, %s14
    %p11 = scmp.ge.s32.totalorder %s10, 4
    %s20 = sphi 0, %s22
    %s23 = sphi 0, %s20
    %s24 = sphi 0, %s23
    %s40 = sphi 0, %s24
    %s46 = sphi 0, %s48
    %s49 = sphi 0, %s46
    %s50 = sphi 0, %s49
    %s66 = sphi 0, %s50
    %s70 = sphi 0, %s70
    %s72 = sphi 0, %s70
    %s73 = sphi 0, %s72
    %s87 = sphi 0, %s73
    %s91 = sphi 0, %s91
    %s93 = sphi 0, %s91
    %s94 = sphi 0, %s93
    %s108 = sphi 0, %s94
    %s114 = sphi 0, %s116
    %s117 = sphi 0, %s114
    %s118 = sphi 0, %s117
    %s134 = sphi 0, %s118
  $region4: #{residual_block_forward.5} parent=0 // loop_header_branch
    %13 = sbr.rel (%p11) target = $region8
  $region5: #{residual_block_forward.5} parent=0 // loop_body
    %s15 = ssub.s32 %s10, 1
    %s16 = ssub.s32 %s10, 2
    %s17 = sadd.s32 %s10, 1
    %s18 = ssub.s32 %s10, %s17
    %p19 = scmp.eq.s32.totalorder %s18, 0
    %s21 = sadd.s32 %s20, 1
    %s22 = scalar_select %p19, %s20, %s21
    %p25 = pneg %p19
    %p26 = scmp.eq.s32.totalorder %s10, 1
    %p27 = por %p25, %p26
    %p28 = scmp.ne.s32.totalorder %s20, %s23
    %p29 = scmp.eq.s32.totalorder %s10, 0
    %p30 = por %p28, %p29
    %p31 = scmp.ne.s32.totalorder %s20, %s23
    %p32 = scmp.eq.s32.totalorder %s15, 1
    %p33 = por %p31, %p32
    %p34 = scmp.ne.s32.totalorder %s23, %s24
    %p35 = scmp.eq.s32.totalorder %s15, 0
    %p36 = por %p34, %p35
    %p37 = scmp.ne.s32.totalorder %s23, %s24
    %p38 = scmp.eq.s32.totalorder %s16, 1
    %p39 = por %p37, %p38
    %p41 = scmp.ne.s32.totalorder %s24, %s40
    %p42 = scmp.eq.s32.totalorder %s16, 0
    %p43 = por %p41, %p42
    %s44 = ssub.s32 %s10, %s17
    %p45 = scmp.eq.s32.totalorder %s44, 0
    %s47 = sadd.s32 %s46, 1
    %s48 = scalar_select %p45, %s46, %s47
    %p51 = pneg %p45
    %p52 = scmp.eq.s32.totalorder %s10, 1
    %p53 = por %p51, %p52
    %p54 = scmp.ne.s32.totalorder %s46, %s49
    %p55 = scmp.eq.s32.totalorder %s10, 0
    %p56 = por %p54, %p55
    %p57 = scmp.ne.s32.totalorder %s46, %s49
    %p58 = scmp.eq.s32.totalorder %s15, 1
    %p59 = por %p57, %p58
    %p60 = scmp.ne.s32.totalorder %s49, %s50
    %p61 = scmp.eq.s32.totalorder %s15, 0
    %p62 = por %p60, %p61
    %p63 = scmp.ne.s32.totalorder %s49, %s50
    %p64 = scmp.eq.s32.totalorder %s16, 1
    %p65 = por %p63, %p64
    %p67 = scmp.ne.s32.totalorder %s50, %s66
    %p68 = scmp.eq.s32.totalorder %s16, 0
    %p69 = por %p67, %p68
    %s71 = sadd.s32 %s70, 1
    %p74 = scmp.eq.s32.totalorder %s10, 1
    %p75 = scmp.ne.s32.totalorder %s70, %s72
    %p76 = scmp.eq.s32.totalorder %s10, 0
    %p77 = por %p75, %p76
    %p78 = scmp.ne.s32.totalorder %s70, %s72
    %p79 = scmp.eq.s32.totalorder %s15, 1
    %p80 = por %p78, %p79
    %p81 = scmp.ne.s32.totalorder %s72, %s73
    %p82 = scmp.eq.s32.totalorder %s15, 0
    %p83 = por %p81, %p82
    %p84 = scmp.ne.s32.totalorder %s72, %s73
    %p85 = scmp.eq.s32.totalorder %s16, 1
    %p86 = por %p84, %p85
    %p88 = scmp.ne.s32.totalorder %s73, %s87
    %p89 = scmp.eq.s32.totalorder %s16, 0
    %p90 = por %p88, %p89
    %s92 = sadd.s32 %s91, 1
    %p95 = scmp.eq.s32.totalorder %s10, 1
    %p96 = scmp.ne.s32.totalorder %s91, %s93
    %p97 = scmp.eq.s32.totalorder %s10, 0
    %p98 = por %p96, %p97
    %p99 = scmp.ne.s32.totalorder %s91, %s93
    %p100 = scmp.eq.s32.totalorder %s15, 1
    %p101 = por %p99, %p100
    %p102 = scmp.ne.s32.totalorder %s93, %s94
    %p103 = scmp.eq.s32.totalorder %s15, 0
    %p104 = por %p102, %p103
    %p105 = scmp.ne.s32.totalorder %s93, %s94
    %p106 = scmp.eq.s32.totalorder %s16, 1
    %p107 = por %p105, %p106
    %p109 = scmp.ne.s32.totalorder %s94, %s108
    %p110 = scmp.eq.s32.totalorder %s16, 0
    %p111 = por %p109, %p110
    %s112 = ssub.s32 %s10, %s17
    %p113 = scmp.eq.s32.totalorder %s112, 0
    %s115 = sadd.s32 %s114, 1
    %s116 = scalar_select %p113, %s114, %s115
    %p119 = pneg %p113
    %p120 = scmp.eq.s32.totalorder %s10, 1
    %p121 = por %p119, %p120
    %p122 = scmp.ne.s32.totalorder %s114, %s117
    %p123 = scmp.eq.s32.totalorder %s10, 0
    %p124 = por %p122, %p123
    %p125 = scmp.ne.s32.totalorder %s114, %s117
    %p126 = scmp.eq.s32.totalorder %s15, 1
    %p127 = por %p125, %p126
    %p128 = scmp.ne.s32.totalorder %s117, %s118
    %p129 = scmp.eq.s32.totalorder %s15, 0
    %p130 = por %p128, %p129
    %p131 = scmp.ne.s32.totalorder %s117, %s118
    %p132 = scmp.eq.s32.totalorder %s16, 1
    %p133 = por %p131, %p132
    %p135 = scmp.ne.s32.totalorder %s118, %s134
    %p136 = scmp.eq.s32.totalorder %s16, 0
    %p137 = por %p135, %p136
    %p138 = scmp.le.s32.totalorder 1, %s10
    %p139 = scmp.lt.s32.totalorder %s10, 3
    %p140 = pnand %p138, %p139
    %p141 = pneg %p140
    // Predicated region
    $region9: #{residual_block_forward.5} parent=5 // pred_check
      _
    $region10: #{residual_block_forward.5} parent=5 // pred_check_branch
      %143 = sbr.rel (%p140) target = $region12
    $region11: #{residual_block_forward.5} parent=5 // pred_region
      %s144 = ssub.s32 %s10, 1
      // Predicated region
      $region13: #{residual_block_forward.5} parent=11 // pred_check
        %p145 = pneg %p83
      $region14: #{residual_block_forward.5} parent=11 // pred_check_branch
        %147 = sbr.rel (%p145) target = $region16
      $region15: #{residual_block_forward.5} parent=11 // pred_region
        _
      $region16: #{residual_block_forward.5} parent=11 // pred_fallthru
        _
      // Predicated region
      $region17: #{residual_block_forward.5} parent=11 // pred_check
        %p148 = pneg %p104
      $region18: #{residual_block_forward.5} parent=11 // pred_check_branch
        %150 = sbr.rel (%p148) target = $region20
      $region19: #{residual_block_forward.5} parent=11 // pred_region
        _
      $region20: #{residual_block_forward.5} parent=11 // pred_fallthru
        _
    $region12: #{residual_block_forward.5} parent=5 // pred_fallthru
      _
    %p151 = scmp.lt.s32.totalorder %s10, 2
    // Predicated region
    $region21: #{residual_block_forward.5} parent=5 // pred_check
      %p152 = pneg %p151
    $region22: #{residual_block_forward.5} parent=5 // pred_check_branch
      %154 = sbr.rel (%p152) target = $region24
    $region23: #{residual_block_forward.5} parent=5 // pred_region
      // Predicated region
      $region25: #{residual_block_forward.5} parent=23 // pred_check
        %p155 = pneg %p30
      $region26: #{residual_block_forward.5} parent=23 // pred_check_branch
        %157 = sbr.rel (%p155) target = $region28
      $region27: #{residual_block_forward.5} parent=23 // pred_region
        %p158 = scmp.lt.s32.totalorder %s10, 1
        %s159 = scalar_select %p158, %s10, 1
        %s160 = smul.addr %s159, 32
        %s161 = smul.addr %s160, 4
        %s162 = scalar_lea.vmem %s0, %s161
      $region28: #{residual_block_forward.5} parent=23 // pred_fallthru
        _
      // Predicated region
      $region29: #{residual_block_forward.5} parent=23 // pred_check
        %p163 = pneg %p56
      $region30: #{residual_block_forward.5} parent=23 // pred_check_branch
        %165 = sbr.rel (%p163) target = $region32
      $region31: #{residual_block_forward.5} parent=23 // pred_region
        %p166 = scmp.lt.s32.totalorder %s10, 1
        %s167 = scalar_select %p166, %s10, 1
        %s168 = smul.addr %s167, 24
        %s169 = smul.addr %s168, 8
        %s170 = scalar_lea.vmem %s1, %s169
      $region32: #{residual_block_forward.5} parent=23 // pred_fallthru
        _
    $region24: #{residual_block_forward.5} parent=5 // pred_fallthru
      _
    %p171 = scmp.le.s32.totalorder 1, %s10
    %p172 = scmp.lt.s32.totalorder %s10, 3
    %p173 = pnand %p171, %p172
    %p174 = pneg %p173
    // Predicated region
    $region33: #{residual_block_forward.5} parent=5 // pred_check
      _
    $region34: #{residual_block_forward.5} parent=5 // pred_check_branch
      %176 = sbr.rel (%p173) target = $region36
    $region35: #{residual_block_forward.5} parent=5 // pred_region
      %s177 = ssub.s32 %s10, 1
      %p178 = scmp.lt.s32.totalorder %s15, 1
      %s179 = scalar_select %p178, %s15, 1
      %s180 = smul.addr %s179, 32
      %s181 = smul.addr %s180, 4
      %s182 = scalar_lea.vmem %s0, %s181
      %p183 = pneg %p36
      %p184 = pneg %p33
      %p185 = scmp.lt.s32.totalorder %s15, 1
      %s186 = scalar_select %p185, %s15, 1
      %s187 = smul.addr %s186, 24
      %s188 = smul.addr %s187, 8
      %s189 = scalar_lea.vmem %s1, %s188
      %p190 = pneg %p62
      %p191 = pneg %p59
      %p192 = pneg %p83
      %p193 = pneg %p80
      %p194 = pneg %p104
      %p195 = pneg %p101
      %p196 = pneg %p130
      %p197 = pneg %p127
      %p198 = scmp.lt.s32.totalorder %s15, 1
      %s199 = scalar_select %p198, %s15, 1
      %s200 = smul.addr %s199, 24
      %s201 = smul.addr %s200, 8
      %s202 = scalar_lea.vmem %s4, %s201
      %p203 = scmp.lt.s32.totalorder %s15, 1
      %s204 = scalar_select %p203, %s15, 1
      %s205 = smul.addr %s204, 32
      %s206 = smul.addr %s205, 4
      %s207 = scalar_lea.vmem %s0, %s206
      %p208 = scmp.lt.s32.totalorder %s15, 1
      %s209 = scalar_select %p208, %s15, 1
      %s210 = smul.addr %s209, 24
      %s211 = smul.addr %s210, 8
      %s212 = scalar_lea.vmem %s1, %s211
      %p213 = scmp.lt.s32.totalorder %s15, 1
      %s214 = scalar_select %p213, %s15, 1
      %s215 = smul.addr %s214, 24
      %s216 = smul.addr %s215, 8
      %s217 = scalar_lea.vmem %s4, %s216
      %v219 = vld [vmem:[%s207] sm:$0xf]
      %v220 = vld [vmem:[%s207 + $0x4] sm:$0xf]
      %v221 = vld [vmem:[%s207 + $0x8] sm:$0xf]
      %v222 = vld [vmem:[%s207 + $0xc] sm:$0xf]
      %v223 = vld [vmem:[%s207 + $0x10] sm:$0xf]
      %v224 = vld [vmem:[%s207 + $0x14] sm:$0xf]
      %v225 = vld [vmem:[%s207 + $0x18] sm:$0xf]
      %v226 = vld [vmem:[%s207 + $0x1c] sm:$0xf]
      %v227 = vld [vmem:[%s207 + $0x20] sm:$0xf]
      %v228 = vld [vmem:[%s207 + $0x24] sm:$0xf]
      %v229 = vld [vmem:[%s207 + $0x28] sm:$0xf]
      %v230 = vld [vmem:[%s207 + $0x2c] sm:$0xf]
      %v231 = vld [vmem:[%s207 + $0x30] sm:$0xf]
      %v232 = vld [vmem:[%s207 + $0x34] sm:$0xf]
      %v233 = vld [vmem:[%s207 + $0x38] sm:$0xf]
      %v234 = vld [vmem:[%s207 + $0x3c] sm:$0xf]
      %v235 = vld [vmem:[%s207 + $0x40] sm:$0xf]
      %v236 = vld [vmem:[%s207 + $0x44] sm:$0xf]
      %v237 = vld [vmem:[%s207 + $0x48] sm:$0xf]
      %v238 = vld [vmem:[%s207 + $0x4c] sm:$0xf]
      %v239 = vld [vmem:[%s207 + $0x50] sm:$0xf]
      %v240 = vld [vmem:[%s207 + $0x54] sm:$0xf]
      %v241 = vld [vmem:[%s207 + $0x58] sm:$0xf]
      %v242 = vld [vmem:[%s207 + $0x5c] sm:$0xf]
      %v243 = vld [vmem:[%s207 + $0x60] sm:$0xf]
      %v244 = vld [vmem:[%s207 + $0x64] sm:$0xf]
      %v245 = vld [vmem:[%s207 + $0x68] sm:$0xf]
      %v246 = vld [vmem:[%s207 + $0x6c] sm:$0xf]
      %v247 = vld [vmem:[%s207 + $0x70] sm:$0xf]
      %v248 = vld [vmem:[%s207 + $0x74] sm:$0xf]
      %v249 = vld [vmem:[%s207 + $0x78] sm:$0xf]
      %v250 = vld [vmem:[%s207 + $0x7c] sm:$0xf]
      %v275 = vunpack.c.l.b16 %v219
      %v276 = vunpack.c.l.b16 %v220
      %v277 = vunpack.c.l.b16 %v221
      %v278 = vunpack.c.l.b16 %v222
      %v279 = vunpack.c.l.b16 %v223
      %v280 = vunpack.c.l.b16 %v224
      %v281 = vunpack.c.l.b16 %v225
      %v282 = vunpack.c.l.b16 %v226
      %v283 = vunpack.c.l.b16 %v227
      %v284 = vunpack.c.l.b16 %v228
      %v285 = vunpack.c.l.b16 %v229
      %v286 = vunpack.c.l.b16 %v230
      %v287 = vunpack.c.l.b16 %v231
      %v288 = vunpack.c.l.b16 %v232
      %v289 = vunpack.c.l.b16 %v233
      %v290 = vunpack.c.l.b16 %v234
      %v291 = vunpack.c.l.b16 %v235
      %v292 = vunpack.c.l.b16 %v236
      %v293 = vunpack.c.l.b16 %v237
      %v294 = vunpack.c.l.b16 %v238
      %v295 = vunpack.c.l.b16 %v239
      %v296 = vunpack.c.l.b16 %v240
      %v297 = vunpack.c.l.b16 %v241
      %v298 = vunpack.c.l.b16 %v242
      %v299 = vpack.c.b16 %v276, %v275
      %v300 = vpack.c.b16 %v278, %v277
      %v301 = vpack.c.b16 %v280, %v279
      %v302 = vpack.c.b16 %v282, %v281
      %v303 = vpack.c.b16 %v284, %v283
      %v304 = vpack.c.b16 %v286, %v285
      %v305 = vpack.c.b16 %v288, %v287
      %v306 = vpack.c.b16 %v290, %v289
      %v307 = vpack.c.b16 %v292, %v291
      %v308 = vpack.c.b16 %v294, %v293
      %v309 = vpack.c.b16 %v296, %v295
      %v310 = vpack.c.b16 %v298, %v297
      %v312 = vshrl.u32 %v299, 16
      %v314 = vshll.u32 %v299, 16
      %v316 = vrot.slane %v314, 1
      %v317 = vor.u32 %v312, %v316
      %v319 = vshrl.u32 %v300, 16
      %v321 = vshll.u32 %v300, 16
      %v323 = vrot.slane %v321, 1
      %v324 = vor.u32 %v319, %v323
      %v326 = vshrl.u32 %v301, 16
      %v328 = vshll.u32 %v301, 16
      %v330 = vrot.slane %v328, 1
      %v331 = vor.u32 %v326, %v330
      %v333 = vshrl.u32 %v302, 16
      %v335 = vshll.u32 %v302, 16
      %v337 = vrot.slane %v335, 1
      %v338 = vor.u32 %v333, %v337
      %v340 = vshrl.u32 %v303, 16
      %v342 = vshll.u32 %v303, 16
      %v344 = vrot.slane %v342, 1
      %v345 = vor.u32 %v340, %v344
      %v347 = vshrl.u32 %v304, 16
      %v349 = vshll.u32 %v304, 16
      %v351 = vrot.slane %v349, 1
      %v352 = vor.u32 %v347, %v351
      %v354 = vshrl.u32 %v305, 16
      %v356 = vshll.u32 %v305, 16
      %v358 = vrot.slane %v356, 1
      %v359 = vor.u32 %v354, %v358
      %v361 = vshrl.u32 %v306, 16
      %v363 = vshll.u32 %v306, 16
      %v365 = vrot.slane %v363, 1
      %v366 = vor.u32 %v361, %v365
      %v368 = vshrl.u32 %v307, 16
      %v370 = vshll.u32 %v307, 16
      %v372 = vrot.slane %v370, 1
      %v373 = vor.u32 %v368, %v372
      %v375 = vshrl.u32 %v308, 16
      %v377 = vshll.u32 %v308, 16
      %v379 = vrot.slane %v377, 1
      %v380 = vor.u32 %v375, %v379
      %v382 = vshrl.u32 %v309, 16
      %v384 = vshll.u32 %v309, 16
      %v386 = vrot.slane %v384, 1
      %v387 = vor.u32 %v382, %v386
      %v389 = vshrl.u32 %v310, 16
      %v391 = vshll.u32 %v310, 16
      %v393 = vrot.slane %v391, 1
      %v394 = vor.u32 %v389, %v393
      %395 = vrot.lane.b32.xlu0 %v317, 4
      %v396 = vpop.permute.xlu0 %395
      %397 = vrot.lane.b32.xlu0 %v324, 4
      %v398 = vpop.permute.xlu0 %397
      %399 = vrot.lane.b32.xlu0 %v331, 4
      %v400 = vpop.permute.xlu0 %399
      %401 = vrot.lane.b32.xlu0 %v338, 4
      %v402 = vpop.permute.xlu0 %401
      %403 = vrot.lane.b32.xlu0 %v345, 4
      %v404 = vpop.permute.xlu0 %403
      %405 = vrot.lane.b32.xlu0 %v352, 4
      %v406 = vpop.permute.xlu0 %405
      %407 = vrot.lane.b32.xlu0 %v359, 4
      %v408 = vpop.permute.xlu0 %407
      %409 = vrot.lane.b32.xlu0 %v366, 4
      %v410 = vpop.permute.xlu0 %409
      %411 = vrot.lane.b32.xlu0 %v373, 4
      %v412 = vpop.permute.xlu0 %411
      %413 = vrot.lane.b32.xlu0 %v380, 4
      %v414 = vpop.permute.xlu0 %413
      %415 = vrot.lane.b32.xlu0 %v387, 4
      %v416 = vpop.permute.xlu0 %415
      %417 = vrot.lane.b32.xlu0 %v394, 4
      %v418 = vpop.permute.xlu0 %417
      %v419 = vrot.slane %v299, 1
      %v420 = vrot.slane %v300, 1
      %v421 = vrot.slane %v301, 1
      %v422 = vrot.slane %v302, 1
      %v423 = vrot.slane %v303, 1
      %v424 = vrot.slane %v304, 1
      %v425 = vrot.slane %v305, 1
      %v426 = vrot.slane %v306, 1
      %v427 = vrot.slane %v307, 1
      %v428 = vrot.slane %v308, 1
      %v429 = vrot.slane %v309, 1
      %v430 = vrot.slane %v310, 1
      %431 = vrot.lane.b32.xlu0 %v419, 8
      %v432 = vpop.permute.xlu0 %431
      %433 = vrot.lane.b32.xlu0 %v420, 8
      %v434 = vpop.permute.xlu0 %433
      %435 = vrot.lane.b32.xlu0 %v421, 8
      %v436 = vpop.permute.xlu0 %435
      %437 = vrot.lane.b32.xlu0 %v422, 8
      %v438 = vpop.permute.xlu0 %437
      %439 = vrot.lane.b32.xlu0 %v423, 8
      %v440 = vpop.permute.xlu0 %439
      %441 = vrot.lane.b32.xlu0 %v424, 8
      %v442 = vpop.permute.xlu0 %441
      %443 = vrot.lane.b32.xlu0 %v425, 8
      %v444 = vpop.permute.xlu0 %443
      %445 = vrot.lane.b32.xlu0 %v426, 8
      %v446 = vpop.permute.xlu0 %445
      %447 = vrot.lane.b32.xlu0 %v427, 8
      %v448 = vpop.permute.xlu0 %447
      %449 = vrot.lane.b32.xlu0 %v428, 8
      %v450 = vpop.permute.xlu0 %449
      %451 = vrot.lane.b32.xlu0 %v429, 8
      %v452 = vpop.permute.xlu0 %451
      %453 = vrot.lane.b32.xlu0 %v430, 8
      %v454 = vpop.permute.xlu0 %453
      %v455 = vrot.slane %v312, 1
      %v456 = vrot.slane %v314, 2
      %v457 = vor.u32 %v455, %v456
      %v458 = vrot.slane %v319, 1
      %v459 = vrot.slane %v321, 2
      %v460 = vor.u32 %v458, %v459
      %v461 = vrot.slane %v326, 1
      %v462 = vrot.slane %v328, 2
      %v463 = vor.u32 %v461, %v462
      %v464 = vrot.slane %v333, 1
      %v465 = vrot.slane %v335, 2
      %v466 = vor.u32 %v464, %v465
      %v467 = vrot.slane %v340, 1
      %v468 = vrot.slane %v342, 2
      %v469 = vor.u32 %v467, %v468
      %v470 = vrot.slane %v347, 1
      %v471 = vrot.slane %v349, 2
      %v472 = vor.u32 %v470, %v471
      %v473 = vrot.slane %v354, 1
      %v474 = vrot.slane %v356, 2
      %v475 = vor.u32 %v473, %v474
      %v476 = vrot.slane %v361, 1
      %v477 = vrot.slane %v363, 2
      %v478 = vor.u32 %v476, %v477
      %v479 = vrot.slane %v368, 1
      %v480 = vrot.slane %v370, 2
      %v481 = vor.u32 %v479, %v480
      %v482 = vrot.slane %v375, 1
      %v483 = vrot.slane %v377, 2
      %v484 = vor.u32 %v482, %v483
      %v485 = vrot.slane %v382, 1
      %v486 = vrot.slane %v384, 2
      %v487 = vor.u32 %v485, %v486
      %v488 = vrot.slane %v389, 1
      %v489 = vrot.slane %v391, 2
      %v490 = vor.u32 %v488, %v489
      %491 = vrot.lane.b32.xlu0 %v457, 12
      %v492 = vpop.permute.xlu0 %491
      %493 = vrot.lane.b32.xlu0 %v460, 12
      %v494 = vpop.permute.xlu0 %493
      %495 = vrot.lane.b32.xlu0 %v463, 12
      %v496 = vpop.permute.xlu0 %495
      %497 = vrot.lane.b32.xlu0 %v466, 12
      %v498 = vpop.permute.xlu0 %497
      %499 = vrot.lane.b32.xlu0 %v469, 12
      %v500 = vpop.permute.xlu0 %499
      %501 = vrot.lane.b32.xlu0 %v472, 12
      %v502 = vpop.permute.xlu0 %501
      %503 = vrot.lane.b32.xlu0 %v475, 12
      %v504 = vpop.permute.xlu0 %503
      %505 = vrot.lane.b32.xlu0 %v478, 12
      %v506 = vpop.permute.xlu0 %505
      %507 = vrot.lane.b32.xlu0 %v481, 12
      %v508 = vpop.permute.xlu0 %507
      %509 = vrot.lane.b32.xlu0 %v484, 12
      %v510 = vpop.permute.xlu0 %509
      %511 = vrot.lane.b32.xlu0 %v487, 12
      %v512 = vpop.permute.xlu0 %511
      %513 = vrot.lane.b32.xlu0 %v490, 12
      %v514 = vpop.permute.xlu0 %513
      %v515 = vrot.slane %v299, 2
      %v516 = vrot.slane %v300, 2
      %v517 = vrot.slane %v301, 2
      %v518 = vrot.slane %v302, 2
      %v519 = vrot.slane %v303, 2
      %v520 = vrot.slane %v304, 2
      %v521 = vrot.slane %v305, 2
      %v522 = vrot.slane %v306, 2
      %v523 = vrot.slane %v307, 2
      %v524 = vrot.slane %v308, 2
      %v525 = vrot.slane %v309, 2
      %v526 = vrot.slane %v310, 2
      %527 = vrot.lane.b32.xlu0 %v515, 16
      %v528 = vpop.permute.xlu0 %527
      %529 = vrot.lane.b32.xlu0 %v516, 16
      %v530 = vpop.permute.xlu0 %529
      %531 = vrot.lane.b32.xlu0 %v517, 16
      %v532 = vpop.permute.xlu0 %531
      %533 = vrot.lane.b32.xlu0 %v518, 16
      %v534 = vpop.permute.xlu0 %533
      %535 = vrot.lane.b32.xlu0 %v519, 16
      %v536 = vpop.permute.xlu0 %535
      %537 = vrot.lane.b32.xlu0 %v520, 16
      %v538 = vpop.permute.xlu0 %537
      %539 = vrot.lane.b32.xlu0 %v521, 16
      %v540 = vpop.permute.xlu0 %539
      %541 = vrot.lane.b32.xlu0 %v522, 16
      %v542 = vpop.permute.xlu0 %541
      %543 = vrot.lane.b32.xlu0 %v523, 16
      %v544 = vpop.permute.xlu0 %543
      %545 = vrot.lane.b32.xlu0 %v524, 16
      %v546 = vpop.permute.xlu0 %545
      %547 = vrot.lane.b32.xlu0 %v525, 16
      %v548 = vpop.permute.xlu0 %547
      %549 = vrot.lane.b32.xlu0 %v526, 16
      %v550 = vpop.permute.xlu0 %549
      %v553 = vunpack.c.l.b16 %v243
      %v554 = vunpack.c.l.b16 %v244
      %v555 = vpack.c.b16 %v554, %v553
      %556 = vrot.lane.b32.xlu0 %v300, 20
      %v557 = vpop.permute.xlu0 %556
      %558 = vrot.lane.b32.xlu0 %v301, 20
      %v559 = vpop.permute.xlu0 %558
      %560 = vrot.lane.b32.xlu0 %v302, 20
      %v561 = vpop.permute.xlu0 %560
      %562 = vrot.lane.b32.xlu0 %v303, 20
      %v563 = vpop.permute.xlu0 %562
      %564 = vrot.lane.b32.xlu0 %v304, 20
      %v565 = vpop.permute.xlu0 %564
      %566 = vrot.lane.b32.xlu0 %v305, 20
      %v567 = vpop.permute.xlu0 %566
      %568 = vrot.lane.b32.xlu0 %v306, 20
      %v569 = vpop.permute.xlu0 %568
      %570 = vrot.lane.b32.xlu0 %v307, 20
      %v571 = vpop.permute.xlu0 %570
      %572 = vrot.lane.b32.xlu0 %v308, 20
      %v573 = vpop.permute.xlu0 %572
      %574 = vrot.lane.b32.xlu0 %v309, 20
      %v575 = vpop.permute.xlu0 %574
      %576 = vrot.lane.b32.xlu0 %v310, 20
      %v577 = vpop.permute.xlu0 %576
      %578 = vrot.lane.b32.xlu0 %v555, 20
      %v579 = vpop.permute.xlu0 %578
      %v581 = vshrl.u32 %v555, 16
      %v583 = vshll.u32 %v555, 16
      %v585 = vrot.slane %v583, 1
      %v586 = vor.u32 %v581, %v585
      %587 = vrot.lane.b32.xlu0 %v324, 24
      %v588 = vpop.permute.xlu0 %587
      %589 = vrot.lane.b32.xlu0 %v331, 24
      %v590 = vpop.permute.xlu0 %589
      %591 = vrot.lane.b32.xlu0 %v338, 24
      %v592 = vpop.permute.xlu0 %591
      %593 = vrot.lane.b32.xlu0 %v345, 24
      %v594 = vpop.permute.xlu0 %593
      %595 = vrot.lane.b32.xlu0 %v352, 24
      %v596 = vpop.permute.xlu0 %595
      %597 = vrot.lane.b32.xlu0 %v359, 24
      %v598 = vpop.permute.xlu0 %597
      %599 = vrot.lane.b32.xlu0 %v366, 24
      %v600 = vpop.permute.xlu0 %599
      %601 = vrot.lane.b32.xlu0 %v373, 24
      %v602 = vpop.permute.xlu0 %601
      %603 = vrot.lane.b32.xlu0 %v380, 24
      %v604 = vpop.permute.xlu0 %603
      %605 = vrot.lane.b32.xlu0 %v387, 24
      %v606 = vpop.permute.xlu0 %605
      %607 = vrot.lane.b32.xlu0 %v394, 24
      %v608 = vpop.permute.xlu0 %607
      %609 = vrot.lane.b32.xlu0 %v586, 24
      %v610 = vpop.permute.xlu0 %609
      %v611 = vrot.slane %v555, 1
      %612 = vrot.lane.b32.xlu0 %v420, 28
      %v613 = vpop.permute.xlu0 %612
      %614 = vrot.lane.b32.xlu0 %v421, 28
      %v615 = vpop.permute.xlu0 %614
      %616 = vrot.lane.b32.xlu0 %v422, 28
      %v617 = vpop.permute.xlu0 %616
      %618 = vrot.lane.b32.xlu0 %v423, 28
      %v619 = vpop.permute.xlu0 %618
      %620 = vrot.lane.b32.xlu0 %v424, 28
      %v621 = vpop.permute.xlu0 %620
      %622 = vrot.lane.b32.xlu0 %v425, 28
      %v623 = vpop.permute.xlu0 %622
      %624 = vrot.lane.b32.xlu0 %v426, 28
      %v625 = vpop.permute.xlu0 %624
      %626 = vrot.lane.b32.xlu0 %v427, 28
      %v627 = vpop.permute.xlu0 %626
      %628 = vrot.lane.b32.xlu0 %v428, 28
      %v629 = vpop.permute.xlu0 %628
      %630 = vrot.lane.b32.xlu0 %v429, 28
      %v631 = vpop.permute.xlu0 %630
      %632 = vrot.lane.b32.xlu0 %v430, 28
      %v633 = vpop.permute.xlu0 %632
      %634 = vrot.lane.b32.xlu0 %v611, 28
      %v635 = vpop.permute.xlu0 %634
      %v636 = vrot.slane %v581, 1
      %v637 = vrot.slane %v583, 2
      %v638 = vor.u32 %v636, %v637
      %639 = vrot.lane.b32.xlu0 %v460, 32
      %v640 = vpop.permute.xlu0 %639
      %641 = vrot.lane.b32.xlu0 %v463, 32
      %v642 = vpop.permute.xlu0 %641
      %643 = vrot.lane.b32.xlu0 %v466, 32
      %v644 = vpop.permute.xlu0 %643
      %645 = vrot.lane.b32.xlu0 %v469, 32
      %v646 = vpop.permute.xlu0 %645
      %647 = vrot.lane.b32.xlu0 %v472, 32
      %v648 = vpop.permute.xlu0 %647
      %649 = vrot.lane.b32.xlu0 %v475, 32
      %v650 = vpop.permute.xlu0 %649
      %651 = vrot.lane.b32.xlu0 %v478, 32
      %v652 = vpop.permute.xlu0 %651
      %653 = vrot.lane.b32.xlu0 %v481, 32
      %v654 = vpop.permute.xlu0 %653
      %655 = vrot.lane.b32.xlu0 %v484, 32
      %v656 = vpop.permute.xlu0 %655
      %657 = vrot.lane.b32.xlu0 %v487, 32
      %v658 = vpop.permute.xlu0 %657
      %659 = vrot.lane.b32.xlu0 %v490, 32
      %v660 = vpop.permute.xlu0 %659
      %661 = vrot.lane.b32.xlu0 %v638, 32
      %v662 = vpop.permute.xlu0 %661
      %v663 = vrot.slane %v555, 2
      %664 = vrot.lane.b32.xlu0 %v516, 36
      %v665 = vpop.permute.xlu0 %664
      %666 = vrot.lane.b32.xlu0 %v517, 36
      %v667 = vpop.permute.xlu0 %666
      %668 = vrot.lane.b32.xlu0 %v518, 36
      %v669 = vpop.permute.xlu0 %668
      %670 = vrot.lane.b32.xlu0 %v519, 36
      %v671 = vpop.permute.xlu0 %670
      %672 = vrot.lane.b32.xlu0 %v520, 36
      %v673 = vpop.permute.xlu0 %672
      %674 = vrot.lane.b32.xlu0 %v521, 36
      %v675 = vpop.permute.xlu0 %674
      %676 = vrot.lane.b32.xlu0 %v522, 36
      %v677 = vpop.permute.xlu0 %676
      %678 = vrot.lane.b32.xlu0 %v523, 36
      %v679 = vpop.permute.xlu0 %678
      %680 = vrot.lane.b32.xlu0 %v524, 36
      %v681 = vpop.permute.xlu0 %680
      %682 = vrot.lane.b32.xlu0 %v525, 36
      %v683 = vpop.permute.xlu0 %682
      %684 = vrot.lane.b32.xlu0 %v526, 36
      %v685 = vpop.permute.xlu0 %684
      %686 = vrot.lane.b32.xlu0 %v663, 36
      %v687 = vpop.permute.xlu0 %686
      %v690 = vunpack.c.l.b16 %v245
      %v691 = vunpack.c.l.b16 %v246
      %v692 = vpack.c.b16 %v691, %v690
      %693 = vrot.lane.b32.xlu0 %v301, 40
      %v694 = vpop.permute.xlu0 %693
      %695 = vrot.lane.b32.xlu0 %v302, 40
      %v696 = vpop.permute.xlu0 %695
      %697 = vrot.lane.b32.xlu0 %v303, 40
      %v698 = vpop.permute.xlu0 %697
      %699 = vrot.lane.b32.xlu0 %v304, 40
      %v700 = vpop.permute.xlu0 %699
      %701 = vrot.lane.b32.xlu0 %v305, 40
      %v702 = vpop.permute.xlu0 %701
      %703 = vrot.lane.b32.xlu0 %v306, 40
      %v704 = vpop.permute.xlu0 %703
      %705 = vrot.lane.b32.xlu0 %v307, 40
      %v706 = vpop.permute.xlu0 %705
      %707 = vrot.lane.b32.xlu0 %v308, 40
      %v708 = vpop.permute.xlu0 %707
      %709 = vrot.lane.b32.xlu0 %v309, 40
      %v710 = vpop.permute.xlu0 %709
      %711 = vrot.lane.b32.xlu0 %v310, 40
      %v712 = vpop.permute.xlu0 %711
      %713 = vrot.lane.b32.xlu0 %v555, 40
      %v714 = vpop.permute.xlu0 %713
      %715 = vrot.lane.b32.xlu0 %v692, 40
      %v716 = vpop.permute.xlu0 %715
      %v718 = vshrl.u32 %v692, 16
      %v720 = vshll.u32 %v692, 16
      %v722 = vrot.slane %v720, 1
      %v723 = vor.u32 %v718, %v722
      %724 = vrot.lane.b32.xlu0 %v331, 44
      %v725 = vpop.permute.xlu0 %724
      %726 = vrot.lane.b32.xlu0 %v338, 44
      %v727 = vpop.permute.xlu0 %726
      %728 = vrot.lane.b32.xlu0 %v345, 44
      %v729 = vpop.permute.xlu0 %728
      %730 = vrot.lane.b32.xlu0 %v352, 44
      %v731 = vpop.permute.xlu0 %730
      %732 = vrot.lane.b32.xlu0 %v359, 44
      %v733 = vpop.permute.xlu0 %732
      %734 = vrot.lane.b32.xlu0 %v366, 44
      %v735 = vpop.permute.xlu0 %734
      %736 = vrot.lane.b32.xlu0 %v373, 44
      %v737 = vpop.permute.xlu0 %736
      %738 = vrot.lane.b32.xlu0 %v380, 44
      %v739 = vpop.permute.xlu0 %738
      %740 = vrot.lane.b32.xlu0 %v387, 44
      %v741 = vpop.permute.xlu0 %740
      %742 = vrot.lane.b32.xlu0 %v394, 44
      %v743 = vpop.permute.xlu0 %742
      %744 = vrot.lane.b32.xlu0 %v586, 44
      %v745 = vpop.permute.xlu0 %744
      %746 = vrot.lane.b32.xlu0 %v723, 44
      %v747 = vpop.permute.xlu0 %746
      %v748 = vrot.slane %v692, 1
      %749 = vrot.lane.b32.xlu0 %v421, 48
      %v750 = vpop.permute.xlu0 %749
      %751 = vrot.lane.b32.xlu0 %v422, 48
      %v752 = vpop.permute.xlu0 %751
      %753 = vrot.lane.b32.xlu0 %v423, 48
      %v754 = vpop.permute.xlu0 %753
      %755 = vrot.lane.b32.xlu0 %v424, 48
      %v756 = vpop.permute.xlu0 %755
      %757 = vrot.lane.b32.xlu0 %v425, 48
      %v758 = vpop.permute.xlu0 %757
      %759 = vrot.lane.b32.xlu0 %v426, 48
      %v760 = vpop.permute.xlu0 %759
      %761 = vrot.lane.b32.xlu0 %v427, 48
      %v762 = vpop.permute.xlu0 %761
      %763 = vrot.lane.b32.xlu0 %v428, 48
      %v764 = vpop.permute.xlu0 %763
      %765 = vrot.lane.b32.xlu0 %v429, 48
      %v766 = vpop.permute.xlu0 %765
      %767 = vrot.lane.b32.xlu0 %v430, 48
      %v768 = vpop.permute.xlu0 %767
      %769 = vrot.lane.b32.xlu0 %v611, 48
      %v770 = vpop.permute.xlu0 %769
      %771 = vrot.lane.b32.xlu0 %v748, 48
      %v772 = vpop.permute.xlu0 %771
      %v773 = vrot.slane %v718, 1
      %v774 = vrot.slane %v720, 2
      %v775 = vor.u32 %v773, %v774
      %776 = vrot.lane.b32.xlu0 %v463, 52
      %v777 = vpop.permute.xlu0 %776
      %778 = vrot.lane.b32.xlu0 %v466, 52
      %v779 = vpop.permute.xlu0 %778
      %780 = vrot.lane.b32.xlu0 %v469, 52
      %v781 = vpop.permute.xlu0 %780
      %782 = vrot.lane.b32.xlu0 %v472, 52
      %v783 = vpop.permute.xlu0 %782
      %784 = vrot.lane.b32.xlu0 %v475, 52
      %v785 = vpop.permute.xlu0 %784
      %786 = vrot.lane.b32.xlu0 %v478, 52
      %v787 = vpop.permute.xlu0 %786
      %788 = vrot.lane.b32.xlu0 %v481, 52
      %v789 = vpop.permute.xlu0 %788
      %790 = vrot.lane.b32.xlu0 %v484, 52
      %v791 = vpop.permute.xlu0 %790
      %792 = vrot.lane.b32.xlu0 %v487, 52
      %v793 = vpop.permute.xlu0 %792
      %794 = vrot.lane.b32.xlu0 %v490, 52
      %v795 = vpop.permute.xlu0 %794
      %796 = vrot.lane.b32.xlu0 %v638, 52
      %v797 = vpop.permute.xlu0 %796
      %798 = vrot.lane.b32.xlu0 %v775, 52
      %v799 = vpop.permute.xlu0 %798
      %v800 = vrot.slane %v692, 2
      %801 = vrot.lane.b32.xlu0 %v517, 56
      %v802 = vpop.permute.xlu0 %801
      %803 = vrot.lane.b32.xlu0 %v518, 56
      %v804 = vpop.permute.xlu0 %803
      %805 = vrot.lane.b32.xlu0 %v519, 56
      %v806 = vpop.permute.xlu0 %805
      %807 = vrot.lane.b32.xlu0 %v520, 56
      %v808 = vpop.permute.xlu0 %807
      %809 = vrot.lane.b32.xlu0 %v521, 56
      %v810 = vpop.permute.xlu0 %809
      %811 = vrot.lane.b32.xlu0 %v522, 56
      %v812 = vpop.permute.xlu0 %811
      %813 = vrot.lane.b32.xlu0 %v523, 56
      %v814 = vpop.permute.xlu0 %813
      %815 = vrot.lane.b32.xlu0 %v524, 56
      %v816 = vpop.permute.xlu0 %815
      %817 = vrot.lane.b32.xlu0 %v525, 56
      %v818 = vpop.permute.xlu0 %817
      %819 = vrot.lane.b32.xlu0 %v526, 56
      %v820 = vpop.permute.xlu0 %819
      %821 = vrot.lane.b32.xlu0 %v663, 56
      %v822 = vpop.permute.xlu0 %821
      %823 = vrot.lane.b32.xlu0 %v800, 56
      %v824 = vpop.permute.xlu0 %823
      %v827 = vunpack.c.l.b16 %v247
      %v828 = vunpack.c.l.b16 %v248
      %v829 = vpack.c.b16 %v828, %v827
      %830 = vrot.lane.b32.xlu0 %v302, 60
      %v831 = vpop.permute.xlu0 %830
      %832 = vrot.lane.b32.xlu0 %v303, 60
      %v833 = vpop.permute.xlu0 %832
      %834 = vrot.lane.b32.xlu0 %v304, 60
      %v835 = vpop.permute.xlu0 %834
      %836 = vrot.lane.b32.xlu0 %v305, 60
      %v837 = vpop.permute.xlu0 %836
      %838 = vrot.lane.b32.xlu0 %v306, 60
      %v839 = vpop.permute.xlu0 %838
      %840 = vrot.lane.b32.xlu0 %v307, 60
      %v841 = vpop.permute.xlu0 %840
      %842 = vrot.lane.b32.xlu0 %v308, 60
      %v843 = vpop.permute.xlu0 %842
      %844 = vrot.lane.b32.xlu0 %v309, 60
      %v845 = vpop.permute.xlu0 %844
      %846 = vrot.lane.b32.xlu0 %v310, 60
      %v847 = vpop.permute.xlu0 %846
      %848 = vrot.lane.b32.xlu0 %v555, 60
      %v849 = vpop.permute.xlu0 %848
      %850 = vrot.lane.b32.xlu0 %v692, 60
      %v851 = vpop.permute.xlu0 %850
      %852 = vrot.lane.b32.xlu0 %v829, 60
      %v853 = vpop.permute.xlu0 %852
      %vm854 = vcmask 31744
      %v856 = vsel %vm854, %v299, %v396
      %v858 = vsel %vm854, %v300, %v398
      %v860 = vsel %vm854, %v301, %v400
      %v862 = vsel %vm854, %v302, %v402
      %v864 = vsel %vm854, %v303, %v404
      %v866 = vsel %vm854, %v304, %v406
      %v868 = vsel %vm854, %v305, %v408
      %v870 = vsel %vm854, %v306, %v410
      %v872 = vsel %vm854, %v307, %v412
      %v874 = vsel %vm854, %v308, %v414
      %v876 = vsel %vm854, %v309, %v416
      %v878 = vsel %vm854, %v310, %v418
      %vm879 = vcmask 64512
      %v881 = vsel %vm879, %v856, %v432
      %v883 = vsel %vm879, %v858, %v434
      %v885 = vsel %vm879, %v860, %v436
      %v887 = vsel %vm879, %v862, %v438
      %v889 = vsel %vm879, %v864, %v440
      %v891 = vsel %vm879, %v866, %v442
      %v893 = vsel %vm879, %v868, %v444
      %v895 = vsel %vm879, %v870, %v446
      %v897 = vsel %vm879, %v872, %v448
      %v899 = vsel %vm879, %v874, %v450
      %v901 = vsel %vm879, %v876, %v452
      %v903 = vsel %vm879, %v878, %v454
      %vm904 = vcmask 97280
      %v906 = vsel %vm904, %v881, %v492
      %v908 = vsel %vm904, %v883, %v494
      %v910 = vsel %vm904, %v885, %v496
      %v912 = vsel %vm904, %v887, %v498
      %v914 = vsel %vm904, %v889, %v500
      %v916 = vsel %vm904, %v891, %v502
      %v918 = vsel %vm904, %v893, %v504
      %v920 = vsel %vm904, %v895, %v506
      %v922 = vsel %vm904, %v897, %v508
      %v924 = vsel %vm904, %v899, %v510
      %v926 = vsel %vm904, %v901, %v512
      %v928 = vsel %vm904, %v903, %v514
      %vm929 = vcmask 130048
      %v931 = vsel %vm929, %v906, %v528
      %v933 = vsel %vm929, %v908, %v530
      %v935 = vsel %vm929, %v910, %v532
      %v937 = vsel %vm929, %v912, %v534
      %v939 = vsel %vm929, %v914, %v536
      %v941 = vsel %vm929, %v916, %v538
      %v943 = vsel %vm929, %v918, %v540
      %v945 = vsel %vm929, %v920, %v542
      %v947 = vsel %vm929, %v922, %v544
      %v949 = vsel %vm929, %v924, %v546
      %v951 = vsel %vm929, %v926, %v548
      %v953 = vsel %vm929, %v928, %v550
      %vm954 = vcmask 162816
      %v956 = vsel %vm954, %v931, %v557
      %v958 = vsel %vm954, %v933, %v559
      %v960 = vsel %vm954, %v935, %v561
      %v962 = vsel %vm954, %v937, %v563
      %v964 = vsel %vm954, %v939, %v565
      %v966 = vsel %vm954, %v941, %v567
      %v968 = vsel %vm954, %v943, %v569
      %v970 = vsel %vm954, %v945, %v571
      %v972 = vsel %vm954, %v947, %v573
      %v974 = vsel %vm954, %v949, %v575
      %v976 = vsel %vm954, %v951, %v577
      %v978 = vsel %vm954, %v953, %v579
      %vm979 = vcmask 195584
      %v981 = vsel %vm979, %v956, %v588
      %v983 = vsel %vm979, %v958, %v590
      %v985 = vsel %vm979, %v960, %v592
      %v987 = vsel %vm979, %v962, %v594
      %v989 = vsel %vm979, %v964, %v596
      %v991 = vsel %vm979, %v966, %v598
      %v993 = vsel %vm979, %v968, %v600
      %v995 = vsel %vm979, %v970, %v602
      %v997 = vsel %vm979, %v972, %v604
      %v999 = vsel %vm979, %v974, %v606
      %v1001 = vsel %vm979, %v976, %v608
      %v1003 = vsel %vm979, %v978, %v610
      %vm1004 = vcmask 228352
      %v1006 = vsel %vm1004, %v981, %v613
      %v1008 = vsel %vm1004, %v983, %v615
      %v1010 = vsel %vm1004, %v985, %v617
      %v1012 = vsel %vm1004, %v987, %v619
      %v1014 = vsel %vm1004, %v989, %v621
      %v1016 = vsel %vm1004, %v991, %v623
      %v1018 = vsel %vm1004, %v993, %v625
      %v1020 = vsel %vm1004, %v995, %v627
      %v1022 = vsel %vm1004, %v997, %v629
      %v1024 = vsel %vm1004, %v999, %v631
      %v1026 = vsel %vm1004, %v1001, %v633
      %v1028 = vsel %vm1004, %v1003, %v635
      %vm1029 = vcmask 261120
      %v1031 = vsel %vm1029, %v1006, %v640
      %v1033 = vsel %vm1029, %v1008, %v642
      %v1035 = vsel %vm1029, %v1010, %v644
      %v1037 = vsel %vm1029, %v1012, %v646
      %v1039 = vsel %vm1029, %v1014, %v648
      %v1041 = vsel %vm1029, %v1016, %v650
      %v1043 = vsel %vm1029, %v1018, %v652
      %v1045 = vsel %vm1029, %v1020, %v654
      %v1047 = vsel %vm1029, %v1022, %v656
      %v1049 = vsel %vm1029, %v1024, %v658
      %v1051 = vsel %vm1029, %v1026, %v660
      %v1053 = vsel %vm1029, %v1028, %v662
      %vm1054 = vcmask 293888
      %v1056 = vsel %vm1054, %v1031, %v665
      %v1058 = vsel %vm1054, %v1033, %v667
      %v1060 = vsel %vm1054, %v1035, %v669
      %v1062 = vsel %vm1054, %v1037, %v671
      %v1064 = vsel %vm1054, %v1039, %v673
      %v1066 = vsel %vm1054, %v1041, %v675
      %v1068 = vsel %vm1054, %v1043, %v677
      %v1070 = vsel %vm1054, %v1045, %v679
      %v1072 = vsel %vm1054, %v1047, %v681
      %v1074 = vsel %vm1054, %v1049, %v683
      %v1076 = vsel %vm1054, %v1051, %v685
      %v1078 = vsel %vm1054, %v1053, %v687
      %vm1079 = vcmask 326656
      %v1081 = vsel %vm1079, %v1056, %v694
      %v1083 = vsel %vm1079, %v1058, %v696
      %v1085 = vsel %vm1079, %v1060, %v698
      %v1087 = vsel %vm1079, %v1062, %v700
      %v1089 = vsel %vm1079, %v1064, %v702
      %v1091 = vsel %vm1079, %v1066, %v704
      %v1093 = vsel %vm1079, %v1068, %v706
      %v1095 = vsel %vm1079, %v1070, %v708
      %v1097 = vsel %vm1079, %v1072, %v710
      %v1099 = vsel %vm1079, %v1074, %v712
      %v1101 = vsel %vm1079, %v1076, %v714
      %v1103 = vsel %vm1079, %v1078, %v716
      %vm1104 = vcmask 359424
      %v1106 = vsel %vm1104, %v1081, %v725
      %v1108 = vsel %vm1104, %v1083, %v727
      %v1110 = vsel %vm1104, %v1085, %v729
      %v1112 = vsel %vm1104, %v1087, %v731
      %v1114 = vsel %vm1104, %v1089, %v733
      %v1116 = vsel %vm1104, %v1091, %v735
      %v1118 = vsel %vm1104, %v1093, %v737
      %v1120 = vsel %vm1104, %v1095, %v739
      %v1122 = vsel %vm1104, %v1097, %v741
      %v1124 = vsel %vm1104, %v1099, %v743
      %v1126 = vsel %vm1104, %v1101, %v745
      %v1128 = vsel %vm1104, %v1103, %v747
      %vm1129 = vcmask 392192
      %v1131 = vsel %vm1129, %v1106, %v750
      %v1133 = vsel %vm1129, %v1108, %v752
      %v1135 = vsel %vm1129, %v1110, %v754
      %v1137 = vsel %vm1129, %v1112, %v756
      %v1139 = vsel %vm1129, %v1114, %v758
      %v1141 = vsel %vm1129, %v1116, %v760
      %v1143 = vsel %vm1129, %v1118, %v762
      %v1145 = vsel %vm1129, %v1120, %v764
      %v1147 = vsel %vm1129, %v1122, %v766
      %v1149 = vsel %vm1129, %v1124, %v768
      %v1151 = vsel %vm1129, %v1126, %v770
      %v1153 = vsel %vm1129, %v1128, %v772
      %vm1154 = vcmask 424960
      %v1156 = vsel %vm1154, %v1131, %v777
      %v1158 = vsel %vm1154, %v1133, %v779
      %v1160 = vsel %vm1154, %v1135, %v781
      %v1162 = vsel %vm1154, %v1137, %v783
      %v1164 = vsel %vm1154, %v1139, %v785
      %v1166 = vsel %vm1154, %v1141, %v787
      %v1168 = vsel %vm1154, %v1143, %v789
      %v1170 = vsel %vm1154, %v1145, %v791
      %v1172 = vsel %vm1154, %v1147, %v793
      %v1174 = vsel %vm1154, %v1149, %v795
      %v1176 = vsel %vm1154, %v1151, %v797
      %v1178 = vsel %vm1154, %v1153, %v799
      %vm1179 = vcmask 457728
      %v1181 = vsel %vm1179, %v1156, %v802
      %v1183 = vsel %vm1179, %v1158, %v804
      %v1185 = vsel %vm1179, %v1160, %v806
      %v1187 = vsel %vm1179, %v1162, %v808
      %v1189 = vsel %vm1179, %v1164, %v810
      %v1191 = vsel %vm1179, %v1166, %v812
      %v1193 = vsel %vm1179, %v1168, %v814
      %v1195 = vsel %vm1179, %v1170, %v816
      %v1197 = vsel %vm1179, %v1172, %v818
      %v1199 = vsel %vm1179, %v1174, %v820
      %v1201 = vsel %vm1179, %v1176, %v822
      %v1203 = vsel %vm1179, %v1178, %v824
      %vm1204 = vcmask 490496
      %v1206 = vsel %vm1204, %v1181, %v831
      %v1208 = vsel %vm1204, %v1183, %v833
      %v1210 = vsel %vm1204, %v1185, %v835
      %v1212 = vsel %vm1204, %v1187, %v837
      %v1214 = vsel %vm1204, %v1189, %v839
      %v1216 = vsel %vm1204, %v1191, %v841
      %v1218 = vsel %vm1204, %v1193, %v843
      %v1220 = vsel %vm1204, %v1195, %v845
      %v1222 = vsel %vm1204, %v1197, %v847
      %v1224 = vsel %vm1204, %v1199, %v849
      %v1226 = vsel %vm1204, %v1201, %v851
      %v1228 = vsel %vm1204, %v1203, %v853
      %v1230 = vshrl.u32 %v829, 16
      %v1232 = vshll.u32 %v829, 16
      %v1234 = vrot.slane %v1232, 1
      %v1235 = vor.u32 %v1230, %v1234
      %1236 = vrot.lane.b32.xlu0 %v586, 4
      %v1237 = vpop.permute.xlu0 %1236
      %1238 = vrot.lane.b32.xlu0 %v723, 4
      %v1239 = vpop.permute.xlu0 %1238
      %1240 = vrot.lane.b32.xlu0 %v1235, 4
      %v1241 = vpop.permute.xlu0 %1240
      %v1242 = vrot.slane %v829, 1
      %1243 = vrot.lane.b32.xlu0 %v611, 8
      %v1244 = vpop.permute.xlu0 %1243
      %1245 = vrot.lane.b32.xlu0 %v748, 8
      %v1246 = vpop.permute.xlu0 %1245
      %1247 = vrot.lane.b32.xlu0 %v1242, 8
      %v1248 = vpop.permute.xlu0 %1247
      %v1249 = vrot.slane %v1230, 1
      %v1250 = vrot.slane %v1232, 2
      %v1251 = vor.u32 %v1249, %v1250
      %1252 = vrot.lane.b32.xlu0 %v638, 12
      %v1253 = vpop.permute.xlu0 %1252
      %1254 = vrot.lane.b32.xlu0 %v775, 12
      %v1255 = vpop.permute.xlu0 %1254
      %1256 = vrot.lane.b32.xlu0 %v1251, 12
      %v1257 = vpop.permute.xlu0 %1256
      %v1260 = vunpack.c.l.b16 %v249
      %v1261 = vunpack.c.l.b16 %v250
      %v1262 = vpack.c.b16 %v1261, %v1260
      %v1263 = vrot.slane %v340, 7
      %v1264 = vor.u32 %v1263, %v342
      %v1265 = vrot.slane %v347, 7
      %v1266 = vor.u32 %v1265, %v349
      %v1267 = vrot.slane %v354, 7
      %v1268 = vor.u32 %v1267, %v356
      %v1269 = vrot.slane %v361, 7
      %v1270 = vor.u32 %v1269, %v363
      %v1271 = vrot.slane %v368, 7
      %v1272 = vor.u32 %v1271, %v370
      %v1273 = vrot.slane %v375, 7
      %v1274 = vor.u32 %v1273, %v377
      %v1275 = vrot.slane %v382, 7
      %v1276 = vor.u32 %v1275, %v384
      %v1277 = vrot.slane %v389, 7
      %v1278 = vor.u32 %v1277, %v391
      %v1279 = vrot.slane %v581, 7
      %v1280 = vor.u32 %v1279, %v583
      %v1281 = vrot.slane %v718, 7
      %v1282 = vor.u32 %v1281, %v720
      %v1283 = vrot.slane %v1230, 7
      %v1284 = vor.u32 %v1283, %v1232
      %v1286 = vshrl.u32 %v1262, 16
      %v1288 = vrot.slane %v1286, 7
      %v1289 = vshll.u32 %v1262, 16
      %v1291 = vor.u32 %v1288, %v1289
      %1292 = vrot.lane.b32.xlu0 %v1264, 16
      %v1293 = vpop.permute.xlu0 %1292
      %1294 = vrot.lane.b32.xlu0 %v1266, 16
      %v1295 = vpop.permute.xlu0 %1294
      %1296 = vrot.lane.b32.xlu0 %v1268, 16
      %v1297 = vpop.permute.xlu0 %1296
      %1298 = vrot.lane.b32.xlu0 %v1270, 16
      %v1299 = vpop.permute.xlu0 %1298
      %1300 = vrot.lane.b32.xlu0 %v1272, 16
      %v1301 = vpop.permute.xlu0 %1300
      %1302 = vrot.lane.b32.xlu0 %v1274, 16
      %v1303 = vpop.permute.xlu0 %1302
      %1304 = vrot.lane.b32.xlu0 %v1276, 16
      %v1305 = vpop.permute.xlu0 %1304
      %1306 = vrot.lane.b32.xlu0 %v1278, 16
      %v1307 = vpop.permute.xlu0 %1306
      %1308 = vrot.lane.b32.xlu0 %v1280, 16
      %v1309 = vpop.permute.xlu0 %1308
      %1310 = vrot.lane.b32.xlu0 %v1282, 16
      %v1311 = vpop.permute.xlu0 %1310
      %1312 = vrot.lane.b32.xlu0 %v1284, 16
      %v1313 = vpop.permute.xlu0 %1312
      %1314 = vrot.lane.b32.xlu0 %v1291, 16
      %v1315 = vpop.permute.xlu0 %1314
      %1316 = vrot.lane.b32.xlu0 %v692, 20
      %v1317 = vpop.permute.xlu0 %1316
      %1318 = vrot.lane.b32.xlu0 %v829, 20
      %v1319 = vpop.permute.xlu0 %1318
      %1320 = vrot.lane.b32.xlu0 %v1262, 20
      %v1321 = vpop.permute.xlu0 %1320
      %v1322 = vrot.slane %v1289, 1
      %v1323 = vor.u32 %v1286, %v1322
      %1324 = vrot.lane.b32.xlu0 %v723, 24
      %v1325 = vpop.permute.xlu0 %1324
      %1326 = vrot.lane.b32.xlu0 %v1235, 24
      %v1327 = vpop.permute.xlu0 %1326
      %1328 = vrot.lane.b32.xlu0 %v1323, 24
      %v1329 = vpop.permute.xlu0 %1328
      %v1330 = vrot.slane %v1262, 1
      %1331 = vrot.lane.b32.xlu0 %v748, 28
      %v1332 = vpop.permute.xlu0 %1331
      %1333 = vrot.lane.b32.xlu0 %v1242, 28
      %v1334 = vpop.permute.xlu0 %1333
      %1335 = vrot.lane.b32.xlu0 %v1330, 28
      %v1336 = vpop.permute.xlu0 %1335
      %v1337 = vrot.slane %v1286, 1
      %v1338 = vrot.slane %v1289, 2
      %v1339 = vor.u32 %v1337, %v1338
      %1340 = vrot.lane.b32.xlu0 %v775, 32
      %v1341 = vpop.permute.xlu0 %1340
      %1342 = vrot.lane.b32.xlu0 %v1251, 32
      %v1343 = vpop.permute.xlu0 %1342
      %1344 = vrot.lane.b32.xlu0 %v1339, 32
      %v1345 = vpop.permute.xlu0 %1344
      %v1347 = vsel %vm854, %v555, %v1237
      %v1349 = vsel %vm854, %v692, %v1239
      %v1351 = vsel %vm854, %v829, %v1241
      %v1353 = vsel %vm879, %v1347, %v1244
      %v1355 = vsel %vm879, %v1349, %v1246
      %v1357 = vsel %vm879, %v1351, %v1248
      %v1359 = vsel %vm904, %v1353, %v1253
      %v1361 = vsel %vm904, %v1355, %v1255
      %v1363 = vsel %vm904, %v1357, %v1257
      %v1365 = vsel %vm929, %v912, %v1293
      %v1367 = vsel %vm929, %v914, %v1295
      %v1369 = vsel %vm929, %v916, %v1297
      %v1371 = vsel %vm929, %v918, %v1299
      %v1373 = vsel %vm929, %v920, %v1301
      %v1375 = vsel %vm929, %v922, %v1303
      %v1377 = vsel %vm929, %v924, %v1305
      %v1379 = vsel %vm929, %v926, %v1307
      %v1381 = vsel %vm929, %v928, %v1309
      %v1383 = vsel %vm929, %v1359, %v1311
      %v1385 = vsel %vm929, %v1361, %v1313
      %v1387 = vsel %vm929, %v1363, %v1315
      %v1388 = vsel %vm954, %v1365, %v563
      %v1389 = vsel %vm954, %v1367, %v565
      %v1390 = vsel %vm954, %v1369, %v567
      %v1391 = vsel %vm954, %v1371, %v569
      %v1392 = vsel %vm954, %v1373, %v571
      %v1393 = vsel %vm954, %v1375, %v573
      %v1394 = vsel %vm954, %v1377, %v575
      %v1395 = vsel %vm954, %v1379, %v577
      %v1396 = vsel %vm954, %v1381, %v579
      %v1398 = vsel %vm954, %v1383, %v1317
      %v1400 = vsel %vm954, %v1385, %v1319
      %v1402 = vsel %vm954, %v1387, %v1321
      %v1403 = vsel %vm979, %v1388, %v594
      %v1404 = vsel %vm979, %v1389, %v596
      %v1405 = vsel %vm979, %v1390, %v598
      %v1406 = vsel %vm979, %v1391, %v600
      %v1407 = vsel %vm979, %v1392, %v602
      %v1408 = vsel %vm979, %v1393, %v604
      %v1409 = vsel %vm979, %v1394, %v606
      %v1410 = vsel %vm979, %v1395, %v608
      %v1411 = vsel %vm979, %v1396, %v610
      %v1413 = vsel %vm979, %v1398, %v1325
      %v1415 = vsel %vm979, %v1400, %v1327
      %v1417 = vsel %vm979, %v1402, %v1329
      %v1418 = vsel %vm1004, %v1403, %v619
      %v1419 = vsel %vm1004, %v1404, %v621
      %v1420 = vsel %vm1004, %v1405, %v623
      %v1421 = vsel %vm1004, %v1406, %v625
      %v1422 = vsel %vm1004, %v1407, %v627
      %v1423 = vsel %vm1004, %v1408, %v629
      %v1424 = vsel %vm1004, %v1409, %v631
      %v1425 = vsel %vm1004, %v1410, %v633
      %v1426 = vsel %vm1004, %v1411, %v635
      %v1428 = vsel %vm1004, %v1413, %v1332
      %v1430 = vsel %vm1004, %v1415, %v1334
      %v1432 = vsel %vm1004, %v1417, %v1336
      %v1433 = vsel %vm1029, %v1418, %v646
      %v1434 = vsel %vm1029, %v1419, %v648
      %v1435 = vsel %vm1029, %v1420, %v650
      %v1436 = vsel %vm1029, %v1421, %v652
      %v1437 = vsel %vm1029, %v1422, %v654
      %v1438 = vsel %vm1029, %v1423, %v656
      %v1439 = vsel %vm1029, %v1424, %v658
      %v1440 = vsel %vm1029, %v1425, %v660
      %v1441 = vsel %vm1029, %v1426, %v662
      %v1443 = vsel %vm1029, %v1428, %v1341
      %v1445 = vsel %vm1029, %v1430, %v1343
      %v1447 = vsel %vm1029, %v1432, %v1345
      %v1448 = vshrl.u32 %v1433, 16
      %v1450 = vshll.u32 %v1433, 16
      %v1452 = vrot.slane %v1450, 1
      %v1453 = vor.u32 %v1448, %v1452
      %v1454 = vshrl.u32 %v1434, 16
      %v1456 = vshll.u32 %v1434, 16
      %v1458 = vrot.slane %v1456, 1
      %v1459 = vor.u32 %v1454, %v1458
      %v1460 = vshrl.u32 %v1435, 16
      %v1462 = vshll.u32 %v1435, 16
      %v1464 = vrot.slane %v1462, 1
      %v1465 = vor.u32 %v1460, %v1464
      %v1466 = vshrl.u32 %v1436, 16
      %v1468 = vshll.u32 %v1436, 16
      %v1470 = vrot.slane %v1468, 1
      %v1471 = vor.u32 %v1466, %v1470
      %v1472 = vshrl.u32 %v1437, 16
      %v1474 = vshll.u32 %v1437, 16
      %v1476 = vrot.slane %v1474, 1
      %v1477 = vor.u32 %v1472, %v1476
      %v1478 = vshrl.u32 %v1438, 16
      %v1480 = vshll.u32 %v1438, 16
      %v1482 = vrot.slane %v1480, 1
      %v1483 = vor.u32 %v1478, %v1482
      %v1484 = vshrl.u32 %v1439, 16
      %v1486 = vshll.u32 %v1439, 16
      %v1488 = vrot.slane %v1486, 1
      %v1489 = vor.u32 %v1484, %v1488
      %v1490 = vshrl.u32 %v1440, 16
      %v1492 = vshll.u32 %v1440, 16
      %v1494 = vrot.slane %v1492, 1
      %v1495 = vor.u32 %v1490, %v1494
      %v1496 = vshrl.u32 %v1441, 16
      %v1498 = vshll.u32 %v1441, 16
      %v1500 = vrot.slane %v1498, 1
      %v1501 = vor.u32 %v1496, %v1500
      %v1502 = vshrl.u32 %v1443, 16
      %v1504 = vshll.u32 %v1443, 16
      %v1506 = vrot.slane %v1504, 1
      %v1507 = vor.u32 %v1502, %v1506
      %v1508 = vshrl.u32 %v1445, 16
      %v1510 = vshll.u32 %v1445, 16
      %v1512 = vrot.slane %v1510, 1
      %v1513 = vor.u32 %v1508, %v1512
      %v1514 = vshrl.u32 %v1447, 16
      %v1516 = vshll.u32 %v1447, 16
      %v1518 = vrot.slane %v1516, 1
      %v1519 = vor.u32 %v1514, %v1518
      %1520 = vrot.lane.b32.xlu0 %v1453, 64
      %v1521 = vpop.permute.xlu0 %1520
      %1522 = vrot.lane.b32.xlu0 %v1459, 64
      %v1523 = vpop.permute.xlu0 %1522
      %1524 = vrot.lane.b32.xlu0 %v1465, 64
      %v1525 = vpop.permute.xlu0 %1524
      %1526 = vrot.lane.b32.xlu0 %v1471, 64
      %v1527 = vpop.permute.xlu0 %1526
      %1528 = vrot.lane.b32.xlu0 %v1477, 64
      %v1529 = vpop.permute.xlu0 %1528
      %1530 = vrot.lane.b32.xlu0 %v1483, 64
      %v1531 = vpop.permute.xlu0 %1530
      %1532 = vrot.lane.b32.xlu0 %v1489, 64
      %v1533 = vpop.permute.xlu0 %1532
      %1534 = vrot.lane.b32.xlu0 %v1495, 64
      %v1535 = vpop.permute.xlu0 %1534
      %1536 = vrot.lane.b32.xlu0 %v1501, 64
      %v1537 = vpop.permute.xlu0 %1536
      %1538 = vrot.lane.b32.xlu0 %v1507, 64
      %v1539 = vpop.permute.xlu0 %1538
      %1540 = vrot.lane.b32.xlu0 %v1513, 64
      %v1541 = vpop.permute.xlu0 %1540
      %1542 = vrot.lane.b32.xlu0 %v1519, 64
      %v1543 = vpop.permute.xlu0 %1542
      %vm1544 = vcmask 523264
      %v1546 = vsel %vm1544, %v1206, %v1521
      %v1548 = vsel %vm1544, %v1208, %v1523
      %v1550 = vsel %vm1544, %v1210, %v1525
      %v1552 = vsel %vm1544, %v1212, %v1527
      %v1554 = vsel %vm1544, %v1214, %v1529
      %v1556 = vsel %vm1544, %v1216, %v1531
      %v1558 = vsel %vm1544, %v1218, %v1533
      %v1560 = vsel %vm1544, %v1220, %v1535
      %v1562 = vsel %vm1544, %v1222, %v1537
      %v1564 = vsel %vm1544, %v1224, %v1539
      %v1566 = vsel %vm1544, %v1226, %v1541
      %v1568 = vsel %vm1544, %v1228, %v1543
      %v1581 = vrot.slane %v1546, 2
      %v1582 = vrot.slane %v1546, 4
      %v1583 = vrot.slane %v1548, 2
      %v1584 = vrot.slane %v1548, 4
      %v1585 = vrot.slane %v1550, 2
      %v1586 = vrot.slane %v1550, 4
      %v1587 = vrot.slane %v1552, 2
      %v1588 = vrot.slane %v1552, 4
      %v1589 = vrot.slane %v1554, 2
      %v1590 = vrot.slane %v1554, 4
      %v1591 = vrot.slane %v1556, 2
      %v1592 = vrot.slane %v1556, 4
      %v1593 = vrot.slane %v1558, 2
      %v1594 = vrot.slane %v1558, 4
      %v1595 = vrot.slane %v1560, 2
      %v1596 = vrot.slane %v1560, 4
      %v1597 = vrot.slane %v1562, 2
      %v1598 = vrot.slane %v1562, 4
      %v1599 = vrot.slane %v1564, 2
      %v1600 = vrot.slane %v1564, 4
      %v1601 = vrot.slane %v1566, 2
      %v1602 = vrot.slane %v1566, 4
      %v1603 = vrot.slane %v1568, 2
      %v1604 = vrot.slane %v1568, 4
      %1605 = vst [vmem:[#allocation1] ss:$4 sm:$0xff] %v1546
      %s1607 = scalar_lea.vmem [#allocation1], 1
      %1608 = vst [vmem:[%s1607] ss:$4 sm:$0xff] %v1581
      %s1610 = scalar_lea.vmem [#allocation1], 2
      %1611 = vst [vmem:[%s1610] ss:$4 sm:$0xff] %v1582
      %s1612 = scalar_lea.vmem [#allocation1], 3
      %1613 = vst [vmem:[%s1612] ss:$4 sm:$0xff] %v1548
      %s1615 = scalar_lea.vmem [#allocation1], 32
      %1616 = vst [vmem:[%s1615] ss:$4 sm:$0xff] %v1583
      %s1618 = scalar_lea.vmem [#allocation1], 33
      %1619 = vst [vmem:[%s1618] ss:$4 sm:$0xff] %v1584
      %s1620 = scalar_lea.vmem [#allocation1], 34
      %1621 = vst [vmem:[%s1620] ss:$4 sm:$0xff] %v1550
      %s1623 = scalar_lea.vmem [#allocation1], 35
      %1624 = vst [vmem:[%s1623] ss:$4 sm:$0xff] %v1585
      %v1625 = vld.sshfl [vmem:[#allocation1] sm:$0xff pattern:$0x73625140]
      %v1626 = vld.sshfl [vmem:[#allocation1 + $0x20] sm:$0xff pattern:$0x73625140]
      %1628 = vst [vmem:[#allocation1] ss:$4 sm:$0xff] %v1586
      %1629 = vst [vmem:[%s1607] ss:$4 sm:$0xff] %v1552
      %1631 = vst [vmem:[%s1610] ss:$4 sm:$0xff] %v1587
      %1633 = vst [vmem:[%s1612] ss:$4 sm:$0xff] %v1588
      %1634 = vst [vmem:[%s1615] ss:$4 sm:$0xff] %v1554
      %1636 = vst [vmem:[%s1618] ss:$4 sm:$0xff] %v1589
      %1638 = vst [vmem:[%s1620] ss:$4 sm:$0xff] %v1590
      %1639 = vst [vmem:[%s1623] ss:$4 sm:$0xff] %v1556
      %v1640 = vld.sshfl [vmem:[#allocation1] sm:$0xff pattern:$0x73625140]
      %v1641 = vld.sshfl [vmem:[#allocation1 + $0x20] sm:$0xff pattern:$0x73625140]
      %1643 = vst [vmem:[#allocation1] ss:$4 sm:$0xff] %v1591
      %1645 = vst [vmem:[%s1607] ss:$4 sm:$0xff] %v1592
      %1646 = vst [vmem:[%s1610] ss:$4 sm:$0xff] %v1558
      %1648 = vst [vmem:[%s1612] ss:$4 sm:$0xff] %v1593
      %1650 = vst [vmem:[%s1615] ss:$4 sm:$0xff] %v1594
      %1651 = vst [vmem:[%s1618] ss:$4 sm:$0xff] %v1560
      %1653 = vst [vmem:[%s1620] ss:$4 sm:$0xff] %v1595
      %1655 = vst [vmem:[%s1623] ss:$4 sm:$0xff] %v1596
      %v1656 = vld.sshfl [vmem:[#allocation1] sm:$0xff pattern:$0x73625140]
      %v1657 = vld.sshfl [vmem:[#allocation1 + $0x20] sm:$0xff pattern:$0x73625140]
      %1658 = vst [vmem:[#allocation1] ss:$4 sm:$0xff] %v1562
      %1660 = vst [vmem:[%s1607] ss:$4 sm:$0xff] %v1597
      %1662 = vst [vmem:[%s1610] ss:$4 sm:$0xff] %v1598
      %1663 = vst [vmem:[%s1612] ss:$4 sm:$0xff] %v1564
      %1665 = vst [vmem:[%s1615] ss:$4 sm:$0xff] %v1599
      %1667 = vst [vmem:[%s1618] ss:$4 sm:$0xff] %v1600
      %1668 = vst [vmem:[%s1620] ss:$4 sm:$0xff] %v1566
      %1670 = vst [vmem:[%s1623] ss:$4 sm:$0xff] %v1601
      %v1671 = vld.sshfl [vmem:[#allocation1] sm:$0xff pattern:$0x73625140]
      %v1672 = vld.sshfl [vmem:[#allocation1 + $0x20] sm:$0xff pattern:$0x73625140]
      %1674 = vst [vmem:[#allocation1] ss:$4 sm:$0xff] %v1602
      %1675 = vst [vmem:[%s1607] ss:$4 sm:$0xff] %v1568
      %1677 = vst [vmem:[%s1610] ss:$4 sm:$0xff] %v1603
      %1679 = vst [vmem:[%s1612] ss:$4 sm:$0xff] %v1604
      %v1680 = vld.sshfl [vmem:[#allocation1] sm:$0xff pattern:$0x73625140]
      %vm1681 = vcmask 818176
      %v1683 = vsel %vm1681, %v1625, 0
      %v1685 = vsel %vm1681, %v1626, 0
      %v1687 = vsel %vm1681, %v1640, 0
      %v1689 = vsel %vm1681, %v1641, 0
      %v1691 = vsel %vm1681, %v1656, 0
      %v1693 = vsel %vm1681, %v1657, 0
      %v1695 = vsel %vm1681, %v1671, 0
      %v1697 = vsel %vm1681, %v1672, 0
      %v1699 = vsel %vm1681, %v1680, 0
      %v1701 = vld [vmem:[%s2] sm:$0xf]
      %v1702 = vld [vmem:[%s2 + $0x4] sm:$0xf]
      %v1703 = vld [vmem:[%s2 + $0x8] sm:$0xf]
      %v1704 = vld [vmem:[%s2 + $0xc] sm:$0xf]
      %v1705 = vld [vmem:[%s2 + $0x10] sm:$0xf]
      %v1706 = vld [vmem:[%s2 + $0x14] sm:$0xf]
      %v1707 = vld [vmem:[%s2 + $0x18] sm:$0xf]
      %v1708 = vld [vmem:[%s2 + $0x1c] sm:$0xf]
      %v1709 = vld [vmem:[%s2 + $0x20] sm:$0xf]
      %v1710 = vld [vmem:[%s2 + $0x24] sm:$0xf]
      %v1711 = vld [vmem:[%s2 + $0x28] sm:$0xf]
      %v1712 = vld [vmem:[%s2 + $0x2c] sm:$0xf]
      %v1713 = vld [vmem:[%s2 + $0x30] sm:$0xf]
      %v1714 = vld [vmem:[%s2 + $0x34] sm:$0xf]
      %v1715 = vld [vmem:[%s2 + $0x38] sm:$0xf]
      %v1716 = vld [vmem:[%s2 + $0x3c] sm:$0xf]
      %v1717 = vld [vmem:[%s3 + $0x2] sm:$0x1]
      %v1718 = vperm.slane %v1717, 0
      %v1735 = vunpack.c.l.b16 %v1701
      %v1736 = vunpack.c.l.b16 %v1702
      %v1737 = vunpack.c.l.b16 %v1703
      %v1738 = vunpack.c.l.b16 %v1704
      %v1739 = vunpack.c.l.b16 %v1705
      %v1740 = vunpack.c.l.b16 %v1706
      %v1741 = vunpack.c.l.b16 %v1707
      %v1742 = vunpack.c.l.b16 %v1708
      %v1743 = vunpack.c.l.b16 %v1709
      %v1744 = vunpack.c.l.b16 %v1710
      %v1745 = vunpack.c.l.b16 %v1711
      %v1746 = vunpack.c.l.b16 %v1712
      %v1747 = vunpack.c.l.b16 %v1713
      %v1748 = vunpack.c.l.b16 %v1714
      %v1749 = vunpack.c.l.b16 %v1715
      %v1750 = vunpack.c.l.b16 %v1716
      %v1751 = vpack.c.b16 %v1736, %v1735
      %v1752 = vpack.c.b16 %v1738, %v1737
      %v1753 = vpack.c.b16 %v1740, %v1739
      %v1754 = vpack.c.b16 %v1742, %v1741
      %v1755 = vpack.c.b16 %v1744, %v1743
      %v1756 = vpack.c.b16 %v1746, %v1745
      %v1757 = vpack.c.b16 %v1748, %v1747
      %v1758 = vpack.c.b16 %v1750, %v1749
      %1767 = vmatpush.bf16.msra.mxu0 %v1758
      %1768 = vmatpush.bf16.msra.mxu0 %v1757
      %1769 = vmatpush.bf16.msra.mxu0 %v1756
      %1770 = vmatpush.bf16.msra.mxu0 %v1755
      %1771 = vmatpush.bf16.msra.mxu0 %v1754
      %1772 = vmatpush.bf16.msra.mxu0 %v1753
      %1773 = vmatpush.bf16.msra.mxu0 %v1752
      %1774 = vmatpush.bf16.msra.mxu0 %v1751
      %1775 = vmatmul.bf16.gmra.mxu0 %v1683
      %v1776 = vpop.f32.mrf.mxu0
      %v1777 = vadd.f32 %v1718, %v1776
      %v1778 = vpop.f32.mrf.mxu0
      %v1779 = vadd.f32 %v1718, %v1778
      %1780 = vmatmul.bf16.gmra.mxu0 %v1685
      %v1781 = vpop.f32.mrf.mxu0
      %v1782 = vadd.f32 %v1718, %v1781
      %v1783 = vpop.f32.mrf.mxu0
      %v1784 = vadd.f32 %v1718, %v1783
      %1785 = vmatmul.bf16.gmra.mxu0 %v1687
      %v1786 = vpop.f32.mrf.mxu0
      %v1787 = vadd.f32 %v1718, %v1786
      %v1788 = vpop.f32.mrf.mxu0
      %v1789 = vadd.f32 %v1718, %v1788
      %1790 = vmatmul.bf16.gmra.mxu0 %v1689
      %v1791 = vpop.f32.mrf.mxu0
      %v1792 = vadd.f32 %v1718, %v1791
      %v1793 = vpop.f32.mrf.mxu0
      %v1794 = vadd.f32 %v1718, %v1793
      %1795 = vmatmul.bf16.gmra.mxu0 %v1691
      %v1796 = vpop.f32.mrf.mxu0
      %v1797 = vadd.f32 %v1718, %v1796
      %v1798 = vpop.f32.mrf.mxu0
      %v1799 = vadd.f32 %v1718, %v1798
      %1800 = vmatmul.bf16.gmra.mxu0 %v1693
      %v1801 = vpop.f32.mrf.mxu0
      %v1802 = vadd.f32 %v1718, %v1801
      %v1803 = vpop.f32.mrf.mxu0
      %v1804 = vadd.f32 %v1718, %v1803
      %1805 = vmatmul.bf16.gmra.mxu0 %v1695
      %v1806 = vpop.f32.mrf.mxu0
      %v1807 = vadd.f32 %v1718, %v1806
      %v1808 = vpop.f32.mrf.mxu0
      %v1809 = vadd.f32 %v1718, %v1808
      %1810 = vmatmul.bf16.gmra.mxu0 %v1697
      %v1811 = vpop.f32.mrf.mxu0
      %v1812 = vadd.f32 %v1718, %v1811
      %v1813 = vpop.f32.mrf.mxu0
      %v1814 = vadd.f32 %v1718, %v1813
      %1815 = vmatmul.bf16.gmra.mxu0 %v1699
      %v1816 = vpop.f32.mrf.mxu0
      %v1817 = vadd.f32 %v1718, %v1816
      %v1818 = vpop.f32.mrf.mxu0
      %v1819 = vadd.f32 %v1718, %v1818
      %1820 = vdwg.mxu0
      %v1821 = vld [vmem:[%s212] sm:$0xff]
      %v1822 = vld [vmem:[%s212 + $0x8] sm:$0xf]
      %v1823 = vld [vmem:[%s212 + $0x10] sm:$0xff]
      %v1824 = vld [vmem:[%s212 + $0x18] sm:$0xf]
      %v1825 = vld [vmem:[%s212 + $0x20] sm:$0xff]
      %v1826 = vld [vmem:[%s212 + $0x28] sm:$0xf]
      %v1827 = vld [vmem:[%s212 + $0x30] sm:$0xff]
      %v1828 = vld [vmem:[%s212 + $0x38] sm:$0xf]
      %v1829 = vld [vmem:[%s212 + $0x40] sm:$0xff]
      %v1830 = vld [vmem:[%s212 + $0x48] sm:$0xf]
      %v1831 = vld [vmem:[%s212 + $0x50] sm:$0xff]
      %v1832 = vld [vmem:[%s212 + $0x58] sm:$0xf]
      %v1833 = vld [vmem:[%s212 + $0x60] sm:$0xff]
      %v1834 = vld [vmem:[%s212 + $0x68] sm:$0xf]
      %v1835 = vld [vmem:[%s212 + $0x70] sm:$0xff]
      %v1836 = vld [vmem:[%s212 + $0x78] sm:$0xf]
      %v1837 = vld [vmem:[%s212 + $0x80] sm:$0xff]
      %v1838 = vld [vmem:[%s212 + $0x88] sm:$0xf]
      %v1839 = vld [vmem:[%s212 + $0x90] sm:$0xff]
      %v1840 = vld [vmem:[%s212 + $0x98] sm:$0xf]
      %v1841 = vld [vmem:[%s212 + $0xa0] sm:$0xff]
      %v1842 = vld [vmem:[%s212 + $0xa8] sm:$0xf]
      %v1843 = vld [vmem:[%s212 + $0xb0] sm:$0xff]
      %v1844 = vld [vmem:[%s212 + $0xb8] sm:$0xf]
      %v1857 = vrot.slane %v1821, 4
      %v1858 = vrot.slane %v1823, 4
      %v1859 = vrot.slane %v1825, 4
      %v1860 = vrot.slane %v1827, 4
      %v1861 = vrot.slane %v1829, 4
      %v1862 = vrot.slane %v1831, 4
      %v1863 = vrot.slane %v1833, 4
      %v1864 = vrot.slane %v1835, 4
      %v1865 = vrot.slane %v1837, 4
      %v1866 = vrot.slane %v1839, 4
      %v1867 = vrot.slane %v1841, 4
      %v1868 = vrot.slane %v1843, 4
      %v1881 = vld [vmem:[%s3] sm:$0x1]
      %v1882 = vperm.slane %v1881, 0
      %v1884 = vrot.slane %v1882, 4
      %v1886 = vmul.f32 %v1821, %v1882
      %v1887 = vmul.f32 %v1857, %v1884
      %v1888 = vmul.f32 %v1822, %v1882
      %v1889 = vmul.f32 %v1823, %v1884
      %v1890 = vmul.f32 %v1858, %v1882
      %v1891 = vmul.f32 %v1824, %v1884
      %v1892 = vmul.f32 %v1825, %v1882
      %v1893 = vmul.f32 %v1859, %v1884
      %v1894 = vmul.f32 %v1826, %v1882
      %v1895 = vmul.f32 %v1827, %v1884
      %v1896 = vmul.f32 %v1860, %v1882
      %v1897 = vmul.f32 %v1828, %v1884
      %v1898 = vmul.f32 %v1829, %v1882
      %v1899 = vmul.f32 %v1861, %v1884
      %v1900 = vmul.f32 %v1830, %v1882
      %v1901 = vmul.f32 %v1831, %v1884
      %v1902 = vmul.f32 %v1862, %v1882
      %v1903 = vmul.f32 %v1832, %v1884
      %v1904 = vmul.f32 %v1833, %v1882
      %v1905 = vmul.f32 %v1863, %v1884
      %v1906 = vmul.f32 %v1834, %v1882
      %v1907 = vmul.f32 %v1835, %v1884
      %v1908 = vmul.f32 %v1864, %v1882
      %v1909 = vmul.f32 %v1836, %v1884
      %v1910 = vmul.f32 %v1837, %v1882
      %v1911 = vmul.f32 %v1865, %v1884
      %v1912 = vmul.f32 %v1838, %v1882
      %v1913 = vmul.f32 %v1839, %v1884
      %v1914 = vmul.f32 %v1866, %v1882
      %v1915 = vmul.f32 %v1840, %v1884
      %v1916 = vmul.f32 %v1841, %v1882
      %v1917 = vmul.f32 %v1867, %v1884
      %v1918 = vmul.f32 %v1842, %v1882
      %v1919 = vmul.f32 %v1843, %v1884
      %v1920 = vmul.f32 %v1868, %v1882
      %v1921 = vmul.f32 %v1844, %v1884
      %v1922 = vld [vmem:[%s3 + $0x1] sm:$0x1]
      %v1923 = vperm.slane %v1922, 0
      %v1925 = vrot.slane %v1923, 4
      %v1927 = vadd.f32 %v1886, %v1923
      %v1928 = vadd.f32 %v1887, %v1925
      %v1929 = vadd.f32 %v1888, %v1923
      %v1930 = vadd.f32 %v1889, %v1925
      %v1931 = vadd.f32 %v1890, %v1923
      %v1932 = vadd.f32 %v1891, %v1925
      %v1933 = vadd.f32 %v1892, %v1923
      %v1934 = vadd.f32 %v1893, %v1925
      %v1935 = vadd.f32 %v1894, %v1923
      %v1936 = vadd.f32 %v1895, %v1925
      %v1937 = vadd.f32 %v1896, %v1923
      %v1938 = vadd.f32 %v1897, %v1925
      %v1939 = vadd.f32 %v1898, %v1923
      %v1940 = vadd.f32 %v1899, %v1925
      %v1941 = vadd.f32 %v1900, %v1923
      %v1942 = vadd.f32 %v1901, %v1925
      %v1943 = vadd.f32 %v1902, %v1923
      %v1944 = vadd.f32 %v1903, %v1925
      %v1945 = vadd.f32 %v1904, %v1923
      %v1946 = vadd.f32 %v1905, %v1925
      %v1947 = vadd.f32 %v1906, %v1923
      %v1948 = vadd.f32 %v1907, %v1925
      %v1949 = vadd.f32 %v1908, %v1923
      %v1950 = vadd.f32 %v1909, %v1925
      %v1951 = vadd.f32 %v1910, %v1923
      %v1952 = vadd.f32 %v1911, %v1925
      %v1953 = vadd.f32 %v1912, %v1923
      %v1954 = vadd.f32 %v1913, %v1925
      %v1955 = vadd.f32 %v1914, %v1923
      %v1956 = vadd.f32 %v1915, %v1925
      %v1957 = vadd.f32 %v1916, %v1923
      %v1958 = vadd.f32 %v1917, %v1925
      %v1959 = vadd.f32 %v1918, %v1923
      %v1960 = vadd.f32 %v1919, %v1925
      %v1961 = vadd.f32 %v1920, %v1923
      %v1962 = vadd.f32 %v1921, %v1925
      %v1981 = vrot.slane %v1777, 4
      %v1982 = vrot.slane %v1779, 4
      %v1983 = vrot.slane %v1782, 4
      %v1984 = vrot.slane %v1784, 4
      %v1985 = vrot.slane %v1787, 4
      %v1986 = vrot.slane %v1789, 4
      %v1987 = vrot.slane %v1792, 4
      %v1988 = vrot.slane %v1794, 4
      %v1989 = vrot.slane %v1797, 4
      %v1990 = vrot.slane %v1799, 4
      %v1991 = vrot.slane %v1802, 4
      %v1992 = vrot.slane %v1804, 4
      %v1993 = vrot.slane %v1807, 4
      %v1994 = vrot.slane %v1809, 4
      %v1995 = vrot.slane %v1812, 4
      %v1996 = vrot.slane %v1814, 4
      %v1997 = vrot.slane %v1817, 4
      %v1998 = vrot.slane %v1819, 4
      %v2017 = vadd.f32 %v1927, %v1777
      %v2018 = vadd.f32 %v1928, %v1981
      %v2019 = vadd.f32 %v1929, %v1779
      %v2020 = vadd.f32 %v1930, %v1982
      %v2021 = vadd.f32 %v1931, %v1782
      %v2022 = vadd.f32 %v1932, %v1983
      %v2023 = vadd.f32 %v1933, %v1784
      %v2024 = vadd.f32 %v1934, %v1984
      %v2025 = vadd.f32 %v1935, %v1787
      %v2026 = vadd.f32 %v1936, %v1985
      %v2027 = vadd.f32 %v1937, %v1789
      %v2028 = vadd.f32 %v1938, %v1986
      %v2029 = vadd.f32 %v1939, %v1792
      %v2030 = vadd.f32 %v1940, %v1987
      %v2031 = vadd.f32 %v1941, %v1794
      %v2032 = vadd.f32 %v1942, %v1988
      %v2033 = vadd.f32 %v1943, %v1797
      %v2034 = vadd.f32 %v1944, %v1989
      %v2035 = vadd.f32 %v1945, %v1799
      %v2036 = vadd.f32 %v1946, %v1990
      %v2037 = vadd.f32 %v1947, %v1802
      %v2038 = vadd.f32 %v1948, %v1991
      %v2039 = vadd.f32 %v1949, %v1804
      %v2040 = vadd.f32 %v1950, %v1992
      %v2041 = vadd.f32 %v1951, %v1807
      %v2042 = vadd.f32 %v1952, %v1993
      %v2043 = vadd.f32 %v1953, %v1809
      %v2044 = vadd.f32 %v1954, %v1994
      %v2045 = vadd.f32 %v1955, %v1812
      %v2046 = vadd.f32 %v1956, %v1995
      %v2047 = vadd.f32 %v1957, %v1814
      %v2048 = vadd.f32 %v1958, %v1996
      %v2049 = vadd.f32 %v1959, %v1817
      %v2050 = vadd.f32 %v1960, %v1997
      %v2051 = vadd.f32 %v1961, %v1819
      %v2052 = vadd.f32 %v1962, %v1998
      %v2053 = vmax.f32 %v2017, 0.0
      %v2054 = vmax.f32 %v2018, 0.0
      %v2055 = vmax.f32 %v2019, 0.0
      %v2056 = vmax.f32 %v2020, 0.0
      %v2057 = vmax.f32 %v2021, 0.0
      %v2058 = vmax.f32 %v2022, 0.0
      %v2059 = vmax.f32 %v2023, 0.0
      %v2060 = vmax.f32 %v2024, 0.0
      %v2061 = vmax.f32 %v2025, 0.0
      %v2062 = vmax.f32 %v2026, 0.0
      %v2063 = vmax.f32 %v2027, 0.0
      %v2064 = vmax.f32 %v2028, 0.0
      %v2065 = vmax.f32 %v2029, 0.0
      %v2066 = vmax.f32 %v2030, 0.0
      %v2067 = vmax.f32 %v2031, 0.0
      %v2068 = vmax.f32 %v2032, 0.0
      %v2069 = vmax.f32 %v2033, 0.0
      %v2070 = vmax.f32 %v2034, 0.0
      %v2071 = vmax.f32 %v2035, 0.0
      %v2072 = vmax.f32 %v2036, 0.0
      %v2073 = vmax.f32 %v2037, 0.0
      %v2074 = vmax.f32 %v2038, 0.0
      %v2075 = vmax.f32 %v2039, 0.0
      %v2076 = vmax.f32 %v2040, 0.0
      %v2077 = vmax.f32 %v2041, 0.0
      %v2078 = vmax.f32 %v2042, 0.0
      %v2079 = vmax.f32 %v2043, 0.0
      %v2080 = vmax.f32 %v2044, 0.0
      %v2081 = vmax.f32 %v2045, 0.0
      %v2082 = vmax.f32 %v2046, 0.0
      %v2083 = vmax.f32 %v2047, 0.0
      %v2084 = vmax.f32 %v2048, 0.0
      %v2085 = vmax.f32 %v2049, 0.0
      %v2086 = vmax.f32 %v2050, 0.0
      %v2087 = vmax.f32 %v2051, 0.0
      %v2088 = vmax.f32 %v2052, 0.0
      %2125 = vst [vmem:[#allocation1] ss:$2 sm:$0xff] %v2053
      %s2126 = scalar_lea.vmem [#allocation1], 1
      %2127 = vst [vmem:[%s2126] ss:$2 sm:$0xff] %v2054
      %s2128 = scalar_lea.vmem [#allocation1], 16
      %2129 = vst [vmem:[%s2128] ss:$2 sm:$0xff] %v2055
      %v2130 = vld.sshfl [vmem:[#allocation1] sm:$0xff pattern:$0x75316420]
      %v2131 = vld.sshfl [vmem:[#allocation1 + $0x10] sm:$0xff pattern:$0x75316420]
      %s2132 = scalar_lea.vmem [#allocation1], 32
      %2133 = vst [vmem:[%s2132] ss:$2 sm:$0xff] %v2056
      %s2134 = scalar_lea.vmem [#allocation1], 33
      %2135 = vst [vmem:[%s2134] ss:$2 sm:$0xff] %v2057
      %s2136 = scalar_lea.vmem [#allocation1], 48
      %2137 = vst [vmem:[%s2136] ss:$2 sm:$0xff] %v2058
      %v2138 = vld.sshfl [vmem:[#allocation1 + $0x20] sm:$0xff pattern:$0x75316420]
      %v2139 = vld.sshfl [vmem:[#allocation1 + $0x30] sm:$0xff pattern:$0x75316420]
      %2140 = vst [vmem:[#allocation1] ss:$2 sm:$0xff] %v2059
      %2141 = vst [vmem:[%s2126] ss:$2 sm:$0xff] %v2060
      %2142 = vst [vmem:[%s2128] ss:$2 sm:$0xff] %v2061
      %v2143 = vld.sshfl [vmem:[#allocation1] sm:$0xff pattern:$0x75316420]
      %v2144 = vld.sshfl [vmem:[#allocation1 + $0x10] sm:$0xff pattern:$0x75316420]
      %2145 = vst [vmem:[%s2132] ss:$2 sm:$0xff] %v2062
      %2146 = vst [vmem:[%s2134] ss:$2 sm:$0xff] %v2063
      %2147 = vst [vmem:[%s2136] ss:$2 sm:$0xff] %v2064
      %v2148 = vld.sshfl [vmem:[#allocation1 + $0x20] sm:$0xff pattern:$0x75316420]
      %v2149 = vld.sshfl [vmem:[#allocation1 + $0x30] sm:$0xff pattern:$0x75316420]
      %2150 = vst [vmem:[#allocation1] ss:$2 sm:$0xff] %v2065
      %2151 = vst [vmem:[%s2126] ss:$2 sm:$0xff] %v2066
      %2152 = vst [vmem:[%s2128] ss:$2 sm:$0xff] %v2067
      %v2153 = vld.sshfl [vmem:[#allocation1] sm:$0xff pattern:$0x75316420]
      %v2154 = vld.sshfl [vmem:[#allocation1 + $0x10] sm:$0xff pattern:$0x75316420]
      %2155 = vst [vmem:[%s2132] ss:$2 sm:$0xff] %v2068
      %2156 = vst [vmem:[%s2134] ss:$2 sm:$0xff] %v2069
      %2157 = vst [vmem:[%s2136] ss:$2 sm:$0xff] %v2070
      %v2158 = vld.sshfl [vmem:[#allocation1 + $0x20] sm:$0xff pattern:$0x75316420]
      %v2159 = vld.sshfl [vmem:[#allocation1 + $0x30] sm:$0xff pattern:$0x75316420]
      %2160 = vst [vmem:[#allocation1] ss:$2 sm:$0xff] %v2071
      %2161 = vst [vmem:[%s2126] ss:$2 sm:$0xff] %v2072
      %2162 = vst [vmem:[%s2128] ss:$2 sm:$0xff] %v2073
      %v2163 = vld.sshfl [vmem:[#allocation1] sm:$0xff pattern:$0x75316420]
      %v2164 = vld.sshfl [vmem:[#allocation1 + $0x10] sm:$0xff pattern:$0x75316420]
      %2165 = vst [vmem:[%s2132] ss:$2 sm:$0xff] %v2074
      %2166 = vst [vmem:[%s2134] ss:$2 sm:$0xff] %v2075
      %2167 = vst [vmem:[%s2136] ss:$2 sm:$0xff] %v2076
      %v2168 = vld.sshfl [vmem:[#allocation1 + $0x20] sm:$0xff pattern:$0x75316420]
      %v2169 = vld.sshfl [vmem:[#allocation1 + $0x30] sm:$0xff pattern:$0x75316420]
      %2170 = vst [vmem:[#allocation1] ss:$2 sm:$0xff] %v2077
      %2171 = vst [vmem:[%s2126] ss:$2 sm:$0xff] %v2078
      %2172 = vst [vmem:[%s2128] ss:$2 sm:$0xff] %v2079
      %v2173 = vld.sshfl [vmem:[#allocation1] sm:$0xff pattern:$0x75316420]
      %v2174 = vld.sshfl [vmem:[#allocation1 + $0x10] sm:$0xff pattern:$0x75316420]
      %2175 = vst [vmem:[%s2132] ss:$2 sm:$0xff] %v2080
      %2176 = vst [vmem:[%s2134] ss:$2 sm:$0xff] %v2081
      %2177 = vst [vmem:[%s2136] ss:$2 sm:$0xff] %v2082
      %v2178 = vld.sshfl [vmem:[#allocation1 + $0x20] sm:$0xff pattern:$0x75316420]
      %v2179 = vld.sshfl [vmem:[#allocation1 + $0x30] sm:$0xff pattern:$0x75316420]
      %2180 = vst [vmem:[#allocation1] ss:$2 sm:$0xff] %v2083
      %2181 = vst [vmem:[%s2126] ss:$2 sm:$0xff] %v2084
      %2182 = vst [vmem:[%s2128] ss:$2 sm:$0xff] %v2085
      %v2183 = vld.sshfl [vmem:[#allocation1] sm:$0xff pattern:$0x75316420]
      %v2184 = vld.sshfl [vmem:[#allocation1 + $0x10] sm:$0xff pattern:$0x75316420]
      %2185 = vst [vmem:[%s2132] ss:$2 sm:$0xff] %v2086
      %2186 = vst [vmem:[%s2134] ss:$2 sm:$0xff] %v2087
      %2187 = vst [vmem:[%s2136] ss:$2 sm:$0xff] %v2088
      %v2188 = vld.sshfl [vmem:[#allocation1 + $0x20] sm:$0xff pattern:$0x75316420]
      %v2189 = vld.sshfl [vmem:[#allocation1 + $0x30] sm:$0xff pattern:$0x75316420]
      %2214 = vst [vmem:[%s217] sm:$0xff] %v2130
      %2215 = vst [vmem:[%s217 + $0x8] sm:$0xf] %v2131
      %2216 = vst [vmem:[%s217 + $0x10] sm:$0xff] %v2138
      %2217 = vst [vmem:[%s217 + $0x18] sm:$0xf] %v2139
      %2218 = vst [vmem:[%s217 + $0x20] sm:$0xff] %v2143
      %2219 = vst [vmem:[%s217 + $0x28] sm:$0xf] %v2144
      %2220 = vst [vmem:[%s217 + $0x30] sm:$0xff] %v2148
      %2221 = vst [vmem:[%s217 + $0x38] sm:$0xf] %v2149
      %2222 = vst [vmem:[%s217 + $0x40] sm:$0xff] %v2153
      %2223 = vst [vmem:[%s217 + $0x48] sm:$0xf] %v2154
      %2224 = vst [vmem:[%s217 + $0x50] sm:$0xff] %v2158
      %2225 = vst [vmem:[%s217 + $0x58] sm:$0xf] %v2159
      %2226 = vst [vmem:[%s217 + $0x60] sm:$0xff] %v2163
      %2227 = vst [vmem:[%s217 + $0x68] sm:$0xf] %v2164
      %2228 = vst [vmem:[%s217 + $0x70] sm:$0xff] %v2168
      %2229 = vst [vmem:[%s217 + $0x78] sm:$0xf] %v2169
      %2230 = vst [vmem:[%s217 + $0x80] sm:$0xff] %v2173
      %2231 = vst [vmem:[%s217 + $0x88] sm:$0xf] %v2174
      %2232 = vst [vmem:[%s217 + $0x90] sm:$0xff] %v2178
      %2233 = vst [vmem:[%s217 + $0x98] sm:$0xf] %v2179
      %2234 = vst [vmem:[%s217 + $0xa0] sm:$0xff] %v2183
      %2235 = vst [vmem:[%s217 + $0xa8] sm:$0xf] %v2184
      %2236 = vst [vmem:[%s217 + $0xb0] sm:$0xff] %v2188
      %2237 = vst [vmem:[%s217 + $0xb8] sm:$0xf] %v2189
      %p2238 = scmp.lt.s32.totalorder %s15, 1
      %s2239 = scalar_select %p2238, %s15, 1
      %s2240 = smul.addr %s2239, 24
      %s2241 = smul.addr %s2240, 8
      %s2242 = scalar_lea.vmem %s4, %s2241
      // Predicated region
      $region37: #{residual_block_forward.5} parent=35 // pred_check
        %p2243 = pneg %p127
      $region38: #{residual_block_forward.5} parent=35 // pred_check_branch
        %2245 = sbr.rel (%p2243) target = $region40
      $region39: #{residual_block_forward.5} parent=35 // pred_region
        _
      $region40: #{residual_block_forward.5} parent=35 // pred_fallthru
        _
    $region36: #{residual_block_forward.5} parent=5 // pred_fallthru
      _
    %p2246 = scmp.le.s32.totalorder 2, %s10
    // Predicated region
    $region41: #{residual_block_forward.5} parent=5 // pred_check
      %p2247 = pneg %p2246
    $region42: #{residual_block_forward.5} parent=5 // pred_check_branch
      %2249 = sbr.rel (%p2247) target = $region44
    $region43: #{residual_block_forward.5} parent=5 // pred_region
      %s2250 = ssub.s32 %s10, 2
      // Predicated region
      $region45: #{residual_block_forward.5} parent=43 // pred_check
        %p2251 = pneg %p133
      $region46: #{residual_block_forward.5} parent=43 // pred_check_branch
        %2253 = sbr.rel (%p2251) target = $region48
      $region47: #{residual_block_forward.5} parent=43 // pred_region
        %p2254 = scmp.lt.s32.totalorder %s16, 1
        %s2255 = scalar_select %p2254, %s16, 1
        %s2256 = smul.addr %s2255, 24
        %s2257 = smul.addr %s2256, 8
        %s2258 = scalar_lea.vmem %s4, %s2257
      $region48: #{residual_block_forward.5} parent=43 // pred_fallthru
        _
    $region44: #{residual_block_forward.5} parent=5 // pred_fallthru
      _
  $region6: #{residual_block_forward.5} parent=0 // loop_footer
    %s14 = sadd.s32 1, %s10
  $region7: #{residual_block_forward.5} parent=0 // loop_footer_branch
    %9 = sbr.rel target = $region3
  $region8: #{residual_block_forward.5} parent=0 // loop_exit
    _

// kernel: residual_block_forward.4
$region0: #{residual_block_forward.4}
  #allocation0 [shape = 'u32[]', space=smem, size = 0x4, offset = 0x4, fixed_abs, tag = 'smem constant byte address 0x4 - core index']
  #allocation1 [shape = 'u32[72,128]{1,0:T(1,128)}', space=vmem, size = 0x9000, scoped, tag = 'internal scratch']
  %s0 = inlined_call_operand.vmem [shape: f32[2,14,14,128], index: 0, kind: input, shape index: {}]
  %s1 = inlined_call_operand.vmem [shape: f32[8,128], index: 1, kind: input, shape index: {}]
  %s2 = inlined_call_operand.vmem [shape: bf16[9,128,128], index: 2, kind: input, shape index: {}]
  %s3 = inlined_call_operand.vmem [shape: f32[2,12,12,128], index: 3, kind: output, shape index: {0}]
  %s4 = inlined_call_operand.vmem [shape: f32[2,2,128], index: 4, kind: output, shape index: {1}]
  %5 = xla_tuple %s3, %s4
  %s6 = sld [smem:[#allocation0]]
  $region53: #{residual_block_forward.4} parent=0
    _
  %s8 = ssub.s32 1, %s6
  %s9 = scalar_select 0, %s8, %s6
  loop: start=0, step=1, limit=4
  $region2: #{residual_block_forward.4} parent=0 // loop_pre_header
    _
  $region3: #{residual_block_forward.4} parent=0 // loop_header
    %s11 = sphi 0, %s15
    %p12 = scmp.ge.s32.totalorder %s11, 4
    %s21 = sphi 0, %s23
    %s24 = sphi 0, %s21
    %s25 = sphi 0, %s24
    %s41 = sphi 0, %s25
    %s45 = sphi 0, %s45
    %s47 = sphi 0, %s45
    %s48 = sphi 0, %s47
    %s62 = sphi 0, %s48
    %s66 = sphi 0, %s66
    %s68 = sphi 0, %s66
    %s69 = sphi 0, %s68
    %s83 = sphi 0, %s69
    %s89 = sphi 0, %s91
    %s92 = sphi 0, %s89
    %s93 = sphi 0, %s92
    %s109 = sphi 0, %s93
    %s115 = sphi 0, %s117
    %s118 = sphi 0, %s115
    %s119 = sphi 0, %s118
    %s135 = sphi 0, %s119
  $region4: #{residual_block_forward.4} parent=0 // loop_header_branch
    %14 = sbr.rel (%p12) target = $region8
  $region5: #{residual_block_forward.4} parent=0 // loop_body
    %s16 = ssub.s32 %s11, 1
    %s17 = ssub.s32 %s11, 2
    %s18 = sadd.s32 %s11, 1
    %s19 = ssub.s32 %s11, %s18
    %p20 = scmp.eq.s32.totalorder %s19, 0
    %s22 = sadd.s32 %s21, 1
    %s23 = scalar_select %p20, %s21, %s22
    %p26 = pneg %p20
    %p27 = scmp.eq.s32.totalorder %s11, 1
    %p28 = por %p26, %p27
    %p29 = scmp.ne.s32.totalorder %s21, %s24
    %p30 = scmp.eq.s32.totalorder %s11, 0
    %p31 = por %p29, %p30
    %p32 = scmp.ne.s32.totalorder %s21, %s24
    %p33 = scmp.eq.s32.totalorder %s16, 1
    %p34 = por %p32, %p33
    %p35 = scmp.ne.s32.totalorder %s24, %s25
    %p36 = scmp.eq.s32.totalorder %s16, 0
    %p37 = por %p35, %p36
    %p38 = scmp.ne.s32.totalorder %s24, %s25
    %p39 = scmp.eq.s32.totalorder %s17, 1
    %p40 = por %p38, %p39
    %p42 = scmp.ne.s32.totalorder %s25, %s41
    %p43 = scmp.eq.s32.totalorder %s17, 0
    %p44 = por %p42, %p43
    %s46 = sadd.s32 %s45, 1
    %p49 = scmp.eq.s32.totalorder %s11, 1
    %p50 = scmp.ne.s32.totalorder %s45, %s47
    %p51 = scmp.eq.s32.totalorder %s11, 0
    %p52 = por %p50, %p51
    %p53 = scmp.ne.s32.totalorder %s45, %s47
    %p54 = scmp.eq.s32.totalorder %s16, 1
    %p55 = por %p53, %p54
    %p56 = scmp.ne.s32.totalorder %s47, %s48
    %p57 = scmp.eq.s32.totalorder %s16, 0
    %p58 = por %p56, %p57
    %p59 = scmp.ne.s32.totalorder %s47, %s48
    %p60 = scmp.eq.s32.totalorder %s17, 1
    %p61 = por %p59, %p60
    %p63 = scmp.ne.s32.totalorder %s48, %s62
    %p64 = scmp.eq.s32.totalorder %s17, 0
    %p65 = por %p63, %p64
    %s67 = sadd.s32 %s66, 1
    %p70 = scmp.eq.s32.totalorder %s11, 1
    %p71 = scmp.ne.s32.totalorder %s66, %s68
    %p72 = scmp.eq.s32.totalorder %s11, 0
    %p73 = por %p71, %p72
    %p74 = scmp.ne.s32.totalorder %s66, %s68
    %p75 = scmp.eq.s32.totalorder %s16, 1
    %p76 = por %p74, %p75
    %p77 = scmp.ne.s32.totalorder %s68, %s69
    %p78 = scmp.eq.s32.totalorder %s16, 0
    %p79 = por %p77, %p78
    %p80 = scmp.ne.s32.totalorder %s68, %s69
    %p81 = scmp.eq.s32.totalorder %s17, 1
    %p82 = por %p80, %p81
    %p84 = scmp.ne.s32.totalorder %s69, %s83
    %p85 = scmp.eq.s32.totalorder %s17, 0
    %p86 = por %p84, %p85
    %s87 = ssub.s32 %s11, %s18
    %p88 = scmp.eq.s32.totalorder %s87, 0
    %s90 = sadd.s32 %s89, 1
    %s91 = scalar_select %p88, %s89, %s90
    %p94 = pneg %p88
    %p95 = scmp.eq.s32.totalorder %s11, 1
    %p96 = por %p94, %p95
    %p97 = scmp.ne.s32.totalorder %s89, %s92
    %p98 = scmp.eq.s32.totalorder %s11, 0
    %p99 = por %p97, %p98
    %p100 = scmp.ne.s32.totalorder %s89, %s92
    %p101 = scmp.eq.s32.totalorder %s16, 1
    %p102 = por %p100, %p101
    %p103 = scmp.ne.s32.totalorder %s92, %s93
    %p104 = scmp.eq.s32.totalorder %s16, 0
    %p105 = por %p103, %p104
    %p106 = scmp.ne.s32.totalorder %s92, %s93
    %p107 = scmp.eq.s32.totalorder %s17, 1
    %p108 = por %p106, %p107
    %p110 = scmp.ne.s32.totalorder %s93, %s109
    %p111 = scmp.eq.s32.totalorder %s17, 0
    %p112 = por %p110, %p111
    %s113 = ssub.s32 %s11, %s18
    %p114 = scmp.eq.s32.totalorder %s113, 0
    %s116 = sadd.s32 %s115, 1
    %s117 = scalar_select %p114, %s115, %s116
    %p120 = pneg %p114
    %p121 = scmp.eq.s32.totalorder %s11, 1
    %p122 = por %p120, %p121
    %p123 = scmp.ne.s32.totalorder %s115, %s118
    %p124 = scmp.eq.s32.totalorder %s11, 0
    %p125 = por %p123, %p124
    %p126 = scmp.ne.s32.totalorder %s115, %s118
    %p127 = scmp.eq.s32.totalorder %s16, 1
    %p128 = por %p126, %p127
    %p129 = scmp.ne.s32.totalorder %s118, %s119
    %p130 = scmp.eq.s32.totalorder %s16, 0
    %p131 = por %p129, %p130
    %p132 = scmp.ne.s32.totalorder %s118, %s119
    %p133 = scmp.eq.s32.totalorder %s17, 1
    %p134 = por %p132, %p133
    %p136 = scmp.ne.s32.totalorder %s119, %s135
    %p137 = scmp.eq.s32.totalorder %s17, 0
    %p138 = por %p136, %p137
    %p139 = scmp.le.s32.totalorder 1, %s11
    %p140 = scmp.lt.s32.totalorder %s11, 3
    %p141 = pnand %p139, %p140
    %p142 = pneg %p141
    // Predicated region
    $region9: #{residual_block_forward.4} parent=5 // pred_check
      _
    $region10: #{residual_block_forward.4} parent=5 // pred_check_branch
      %144 = sbr.rel (%p141) target = $region12
    $region11: #{residual_block_forward.4} parent=5 // pred_region
      %s145 = ssub.s32 %s11, 1
      // Predicated region
      $region13: #{residual_block_forward.4} parent=11 // pred_check
        %p146 = pneg %p58
      $region14: #{residual_block_forward.4} parent=11 // pred_check_branch
        %148 = sbr.rel (%p146) target = $region16
      $region15: #{residual_block_forward.4} parent=11 // pred_region
        _
      $region16: #{residual_block_forward.4} parent=11 // pred_fallthru
        _
      // Predicated region
      $region17: #{residual_block_forward.4} parent=11 // pred_check
        %p149 = pneg %p79
      $region18: #{residual_block_forward.4} parent=11 // pred_check_branch
        %151 = sbr.rel (%p149) target = $region20
      $region19: #{residual_block_forward.4} parent=11 // pred_region
        _
      $region20: #{residual_block_forward.4} parent=11 // pred_fallthru
        _
    $region12: #{residual_block_forward.4} parent=5 // pred_fallthru
      _
    %p152 = scmp.lt.s32.totalorder %s11, 2
    // Predicated region
    $region21: #{residual_block_forward.4} parent=5 // pred_check
      %p153 = pneg %p152
    $region22: #{residual_block_forward.4} parent=5 // pred_check_branch
      %155 = sbr.rel (%p153) target = $region24
    $region23: #{residual_block_forward.4} parent=5 // pred_region
      // Predicated region
      $region25: #{residual_block_forward.4} parent=23 // pred_check
        %p156 = pneg %p31
      $region26: #{residual_block_forward.4} parent=23 // pred_check_branch
        %158 = sbr.rel (%p156) target = $region28
      $region27: #{residual_block_forward.4} parent=23 // pred_region
        %p159 = scmp.lt.s32.totalorder %s11, 1
        %s160 = scalar_select %p159, %s11, 1
        %s161 = smul.addr %s160, 28
        %s162 = smul.addr %s161, 8
        %s163 = scalar_lea.vmem %s0, %s162
      $region28: #{residual_block_forward.4} parent=23 // pred_fallthru
        _
    $region24: #{residual_block_forward.4} parent=5 // pred_fallthru
      _
    %p164 = scmp.le.s32.totalorder 1, %s11
    %p165 = scmp.lt.s32.totalorder %s11, 3
    %p166 = pnand %p164, %p165
    %p167 = pneg %p166
    // Predicated region
    $region29: #{residual_block_forward.4} parent=5 // pred_check
      _
    $region30: #{residual_block_forward.4} parent=5 // pred_check_branch
      %169 = sbr.rel (%p166) target = $region32
    $region31: #{residual_block_forward.4} parent=5 // pred_region
      %s170 = ssub.s32 %s11, 1
      %p171 = scmp.lt.s32.totalorder %s16, 1
      %s172 = scalar_select %p171, %s16, 1
      %s173 = smul.addr %s172, 28
      %s174 = smul.addr %s173, 8
      %s175 = scalar_lea.vmem %s0, %s174
      %p176 = pneg %p37
      %p177 = pneg %p34
      %p178 = pneg %p58
      %p179 = pneg %p55
      %p180 = pneg %p79
      %p181 = pneg %p76
      %p182 = pneg %p105
      %p183 = pneg %p102
      %p184 = scmp.lt.s32.totalorder %s16, 1
      %s185 = scalar_select %p184, %s16, 1
      %s186 = smul.addr %s185, 24
      %s187 = smul.addr %s186, 8
      %s188 = scalar_lea.vmem %s3, %s187
      %p189 = pneg %p131
      %p190 = pneg %p128
      %p191 = scmp.lt.s32.totalorder %s16, 1
      %s192 = scalar_select %p191, %s16, 1
      %s193 = smul.addr %s192, 2
      %s194 = scalar_lea.vmem %s4, %s193
      %p195 = scmp.lt.s32.totalorder %s16, 1
      %s196 = scalar_select %p195, %s16, 1
      %s197 = smul.addr %s196, 28
      %s198 = smul.addr %s197, 8
      %s199 = scalar_lea.vmem %s0, %s198
      %p200 = scmp.lt.s32.totalorder %s16, 1
      %s201 = scalar_select %p200, %s16, 1
      %s202 = smul.addr %s201, 24
      %s203 = smul.addr %s202, 8
      %s204 = scalar_lea.vmem %s3, %s203
      %p205 = scmp.lt.s32.totalorder %s16, 1
      %s206 = scalar_select %p205, %s16, 1
      %s207 = smul.addr %s206, 2
      %s208 = scalar_lea.vmem %s4, %s207
      %v209 = vld [vmem:[%s1] sm:$0x1]
      %v210 = vld [vmem:[%s1 + $0x1] sm:$0x1]
      %v211 = vld [vmem:[%s199] sm:$0xff]
      %v212 = vld [vmem:[%s199 + $0x8] sm:$0x3f]
      %v213 = vld [vmem:[%s199 + $0x10] sm:$0xff]
      %v214 = vld [vmem:[%s199 + $0x18] sm:$0x3f]
      %v215 = vld [vmem:[%s199 + $0x20] sm:$0xff]
      %v216 = vld [vmem:[%s199 + $0x28] sm:$0x3f]
      %v217 = vld [vmem:[%s199 + $0x30] sm:$0xff]
      %v218 = vld [vmem:[%s199 + $0x38] sm:$0x3f]
      %v219 = vld [vmem:[%s199 + $0x40] sm:$0xff]
      %v220 = vld [vmem:[%s199 + $0x48] sm:$0x3f]
      %v221 = vld [vmem:[%s199 + $0x50] sm:$0xff]
      %v222 = vld [vmem:[%s199 + $0x58] sm:$0x3f]
      %v223 = vld [vmem:[%s199 + $0x60] sm:$0xff]
      %v224 = vld [vmem:[%s199 + $0x68] sm:$0x3f]
      %v225 = vld [vmem:[%s199 + $0x70] sm:$0xff]
      %v226 = vld [vmem:[%s199 + $0x78] sm:$0x3f]
      %v227 = vld [vmem:[%s199 + $0x80] sm:$0xff]
      %v228 = vld [vmem:[%s199 + $0x88] sm:$0x3f]
      %v229 = vld [vmem:[%s199 + $0x90] sm:$0xff]
      %v230 = vld [vmem:[%s199 + $0x98] sm:$0x3f]
      %v231 = vld [vmem:[%s199 + $0xa0] sm:$0xff]
      %v232 = vld [vmem:[%s199 + $0xa8] sm:$0x3f]
      %v233 = vld [vmem:[%s199 + $0xb0] sm:$0xff]
      %v234 = vld [vmem:[%s199 + $0xb8] sm:$0x3f]
      %v235 = vld [vmem:[%s199 + $0xc0] sm:$0xff]
      %v236 = vld [vmem:[%s199 + $0xc8] sm:$0x3f]
      %v237 = vld [vmem:[%s199 + $0xd0] sm:$0xff]
      %v238 = vld [vmem:[%s199 + $0xd8] sm:$0x3f]
      %v239 = vperm.slane %v209, 0
      %v240 = vmul.f32 %v211, %v239
      %v241 = vmul.f32 %v212, %v239
      %v242 = vmul.f32 %v213, %v239
      %v243 = vmul.f32 %v214, %v239
      %v244 = vmul.f32 %v215, %v239
      %v245 = vmul.f32 %v216, %v239
      %v246 = vmul.f32 %v217, %v239
      %v247 = vmul.f32 %v218, %v239
      %v248 = vmul.f32 %v219, %v239
      %v249 = vmul.f32 %v220, %v239
      %v250 = vmul.f32 %v221, %v239
      %v251 = vmul.f32 %v222, %v239
      %v252 = vmul.f32 %v223, %v239
      %v253 = vmul.f32 %v224, %v239
      %v254 = vmul.f32 %v225, %v239
      %v255 = vmul.f32 %v226, %v239
      %v256 = vmul.f32 %v227, %v239
      %v257 = vmul.f32 %v228, %v239
      %v258 = vmul.f32 %v229, %v239
      %v259 = vmul.f32 %v230, %v239
      %v260 = vmul.f32 %v231, %v239
      %v261 = vmul.f32 %v232, %v239
      %v262 = vmul.f32 %v233, %v239
      %v263 = vmul.f32 %v234, %v239
      %v264 = vmul.f32 %v235, %v239
      %v265 = vmul.f32 %v236, %v239
      %v266 = vmul.f32 %v237, %v239
      %v267 = vmul.f32 %v238, %v239
      %v268 = vperm.slane %v210, 0
      %v269 = vadd.f32 %v240, %v268
      %v270 = vadd.f32 %v241, %v268
      %v271 = vadd.f32 %v242, %v268
      %v272 = vadd.f32 %v243, %v268
      %v273 = vadd.f32 %v244, %v268
      %v274 = vadd.f32 %v245, %v268
      %v275 = vadd.f32 %v246, %v268
      %v276 = vadd.f32 %v247, %v268
      %v277 = vadd.f32 %v248, %v268
      %v278 = vadd.f32 %v249, %v268
      %v279 = vadd.f32 %v250, %v268
      %v280 = vadd.f32 %v251, %v268
      %v281 = vadd.f32 %v252, %v268
      %v282 = vadd.f32 %v253, %v268
      %v283 = vadd.f32 %v254, %v268
      %v284 = vadd.f32 %v255, %v268
      %v285 = vadd.f32 %v256, %v268
      %v286 = vadd.f32 %v257, %v268
      %v287 = vadd.f32 %v258, %v268
      %v288 = vadd.f32 %v259, %v268
      %v289 = vadd.f32 %v260, %v268
      %v290 = vadd.f32 %v261, %v268
      %v291 = vadd.f32 %v262, %v268
      %v292 = vadd.f32 %v263, %v268
      %v293 = vadd.f32 %v264, %v268
      %v294 = vadd.f32 %v265, %v268
      %v295 = vadd.f32 %v266, %v268
      %v296 = vadd.f32 %v267, %v268
      %v297 = vmax.f32 %v269, 0.0
      %v298 = vmax.f32 %v270, 0.0
      %v299 = vmax.f32 %v271, 0.0
      %v300 = vmax.f32 %v272, 0.0
      %v301 = vmax.f32 %v273, 0.0
      %v302 = vmax.f32 %v274, 0.0
      %v303 = vmax.f32 %v275, 0.0
      %v304 = vmax.f32 %v276, 0.0
      %v305 = vmax.f32 %v277, 0.0
      %v306 = vmax.f32 %v278, 0.0
      %v307 = vmax.f32 %v279, 0.0
      %v308 = vmax.f32 %v280, 0.0
      %v309 = vmax.f32 %v281, 0.0
      %v310 = vmax.f32 %v282, 0.0
      %v311 = vmax.f32 %v283, 0.0
      %v312 = vmax.f32 %v284, 0.0
      %v313 = vmax.f32 %v285, 0.0
      %v314 = vmax.f32 %v286, 0.0
      %v315 = vmax.f32 %v287, 0.0
      %v316 = vmax.f32 %v288, 0.0
      %v317 = vmax.f32 %v289, 0.0
      %v318 = vmax.f32 %v290, 0.0
      %v319 = vmax.f32 %v291, 0.0
      %v320 = vmax.f32 %v292, 0.0
      %v321 = vmax.f32 %v293, 0.0
      %v322 = vmax.f32 %v294, 0.0
      %v323 = vmax.f32 %v295, 0.0
      %v324 = vmax.f32 %v296, 0.0
      %v325 = vpack.c.bf16 %v297, %v297
      %v326 = vpack.c.bf16 %v298, %v298
      %v327 = vpack.c.bf16 %v299, %v299
      %v328 = vpack.c.bf16 %v300, %v300
      %v329 = vpack.c.bf16 %v301, %v301
      %v330 = vpack.c.bf16 %v302, %v302
      %v331 = vpack.c.bf16 %v303, %v303
      %v332 = vpack.c.bf16 %v304, %v304
      %v333 = vpack.c.bf16 %v305, %v305
      %v334 = vpack.c.bf16 %v306, %v306
      %v335 = vpack.c.bf16 %v307, %v307
      %v336 = vpack.c.bf16 %v308, %v308
      %v337 = vpack.c.bf16 %v309, %v309
      %v338 = vpack.c.bf16 %v310, %v310
      %v339 = vpack.c.bf16 %v311, %v311
      %v340 = vpack.c.bf16 %v312, %v312
      %v341 = vpack.c.bf16 %v313, %v313
      %v342 = vpack.c.bf16 %v314, %v314
      %v343 = vpack.c.bf16 %v315, %v315
      %v344 = vpack.c.bf16 %v316, %v316
      %v345 = vpack.c.bf16 %v317, %v317
      %v346 = vpack.c.bf16 %v318, %v318
      %v347 = vpack.c.bf16 %v319, %v319
      %v348 = vpack.c.bf16 %v320, %v320
      %v349 = vpack.c.bf16 %v321, %v321
      %v350 = vpack.c.bf16 %v322, %v322
      %v351 = vpack.c.bf16 %v323, %v323
      %v352 = vpack.c.bf16 %v324, %v324
      %v377 = vrot.slane %v325, 2
      %v378 = vrot.slane %v326, 2
      %v379 = vrot.slane %v327, 2
      %v380 = vrot.slane %v328, 2
      %v381 = vrot.slane %v329, 2
      %v382 = vrot.slane %v330, 2
      %v383 = vrot.slane %v331, 2
      %v384 = vrot.slane %v332, 2
      %v385 = vrot.slane %v333, 2
      %v386 = vrot.slane %v334, 2
      %v387 = vrot.slane %v335, 2
      %v388 = vrot.slane %v336, 2
      %v389 = vrot.slane %v337, 2
      %v390 = vrot.slane %v338, 2
      %v391 = vrot.slane %v339, 2
      %v392 = vrot.slane %v340, 2
      %v393 = vrot.slane %v341, 2
      %v394 = vrot.slane %v342, 2
      %v395 = vrot.slane %v343, 2
      %v396 = vrot.slane %v344, 2
      %v397 = vrot.slane %v345, 2
      %v398 = vrot.slane %v346, 2
      %v399 = vrot.slane %v347, 2
      %v400 = vrot.slane %v348, 2
      %vm401 = vcmask 1041408
      %v404 = vsel %vm401, %v325, %v377
      %vm405 = vcmask 1043458
      %v406 = vsel %vm405, %v325, %v377
      %v408 = vrot.slane %v406, 2
      %v411 = vsel %vm401, %v326, %v378
      %v414 = vsel %vm401, %v327, %v379
      %v415 = vsel %vm405, %v327, %v379
      %v417 = vrot.slane %v415, 2
      %v420 = vsel %vm401, %v328, %v380
      %v423 = vsel %vm401, %v329, %v381
      %v424 = vsel %vm405, %v329, %v381
      %v426 = vrot.slane %v424, 2
      %v429 = vsel %vm401, %v330, %v382
      %v432 = vsel %vm401, %v331, %v383
      %v433 = vsel %vm405, %v331, %v383
      %v435 = vrot.slane %v433, 2
      %v438 = vsel %vm401, %v332, %v384
      %v441 = vsel %vm401, %v333, %v385
      %v442 = vsel %vm405, %v333, %v385
      %v444 = vrot.slane %v442, 2
      %v447 = vsel %vm401, %v334, %v386
      %v450 = vsel %vm401, %v335, %v387
      %v451 = vsel %vm405, %v335, %v387
      %v453 = vrot.slane %v451, 2
      %v456 = vsel %vm401, %v336, %v388
      %v459 = vsel %vm401, %v337, %v389
      %v460 = vsel %vm405, %v337, %v389
      %v462 = vrot.slane %v460, 2
      %v465 = vsel %vm401, %v338, %v390
      %v468 = vsel %vm401, %v339, %v391
      %v469 = vsel %vm405, %v339, %v391
      %v471 = vrot.slane %v469, 2
      %v474 = vsel %vm401, %v340, %v392
      %v477 = vsel %vm401, %v341, %v393
      %v478 = vsel %vm405, %v341, %v393
      %v480 = vrot.slane %v478, 2
      %v483 = vsel %vm401, %v342, %v394
      %v486 = vsel %vm401, %v343, %v395
      %v487 = vsel %vm405, %v343, %v395
      %v489 = vrot.slane %v487, 2
      %v492 = vsel %vm401, %v344, %v396
      %v495 = vsel %vm401, %v345, %v397
      %v496 = vsel %vm405, %v345, %v397
      %v498 = vrot.slane %v496, 2
      %v501 = vsel %vm401, %v346, %v398
      %v504 = vsel %vm401, %v347, %v399
      %v505 = vsel %vm405, %v347, %v399
      %v507 = vrot.slane %v505, 2
      %v510 = vsel %vm401, %v348, %v400
      %v511 = vld [vmem:[%s2] sm:$0xf]
      %v512 = vld [vmem:[%s2 + $0x4] sm:$0xf]
      %v513 = vld [vmem:[%s2 + $0x8] sm:$0xf]
      %v514 = vld [vmem:[%s2 + $0xc] sm:$0xf]
      %v515 = vld [vmem:[%s2 + $0x10] sm:$0xf]
      %v516 = vld [vmem:[%s2 + $0x14] sm:$0xf]
      %v517 = vld [vmem:[%s2 + $0x18] sm:$0xf]
      %v518 = vld [vmem:[%s2 + $0x1c] sm:$0xf]
      %v519 = vld [vmem:[%s2 + $0x20] sm:$0xf]
      %v520 = vld [vmem:[%s2 + $0x24] sm:$0xf]
      %v521 = vld [vmem:[%s2 + $0x28] sm:$0xf]
      %v522 = vld [vmem:[%s2 + $0x2c] sm:$0xf]
      %v523 = vld [vmem:[%s2 + $0x30] sm:$0xf]
      %v524 = vld [vmem:[%s2 + $0x34] sm:$0xf]
      %v525 = vld [vmem:[%s2 + $0x38] sm:$0xf]
      %v526 = vld [vmem:[%s2 + $0x3c] sm:$0xf]
      %v527 = vsel %vm405, %v326, %v378
      %v529 = vrot.slane %v527, 2
      %v530 = vsel %vm405, %v328, %v380
      %v532 = vrot.slane %v530, 2
      %v533 = vsel %vm405, %v330, %v382
      %v535 = vrot.slane %v533, 2
      %v536 = vsel %vm405, %v332, %v384
      %v538 = vrot.slane %v536, 2
      %v539 = vsel %vm405, %v334, %v386
      %v541 = vrot.slane %v539, 2
      %v542 = vsel %vm405, %v336, %v388
      %v544 = vrot.slane %v542, 2
      %v545 = vsel %vm405, %v338, %v390
      %v547 = vrot.slane %v545, 2
      %v548 = vsel %vm405, %v340, %v392
      %v550 = vrot.slane %v548, 2
      %v551 = vsel %vm405, %v342, %v394
      %v553 = vrot.slane %v551, 2
      %v554 = vsel %vm405, %v344, %v396
      %v556 = vrot.slane %v554, 2
      %v557 = vsel %vm405, %v346, %v398
      %v559 = vrot.slane %v557, 2
      %v560 = vsel %vm405, %v348, %v400
      %v562 = vrot.slane %v560, 2
      %vm563 = vsmask.f32 1280
      %vm564 = vsmask.f32 3336
      %vm565 = vmor %vm563, %vm564
      %vm566 = vsmask.f32 5392
      %vm567 = vmor %vm565, %vm566
      %vm568 = vsmask.f32 7448
      %vm569 = vmor %vm567, %vm568
      %v570 = vshrl.u32 %v404, 16
      %v572 = vrot.slane %v570, 6
      %v573 = vshll.u32 %v404, 16
      %v575 = vrot.slane %v573, 7
      %v576 = vor.u32 %v572, %v575
      %v577 = vrot.slane %v576, 2
      %v579 = vshll.u32 %v408, 16
      %v581 = vrot.slane %v579, 7
      %v582 = vsel %vm569, %v577, %v581
      %v583 = vshrl.u32 %v408, 16
      %v585 = vrot.slane %v583, 6
      %v586 = vor.u32 %v585, %v581
      %v587 = vrot.slane %v586, 2
      %v588 = vshll.u32 %v411, 16
      %v590 = vrot.slane %v588, 7
      %v591 = vsel %vm569, %v587, %v590
      %v592 = vshrl.u32 %v411, 16
      %v594 = vrot.slane %v592, 6
      %v595 = vor.u32 %v594, %v590
      %v596 = vrot.slane %v595, 2
      %v598 = vshll.u32 %v529, 16
      %v600 = vrot.slane %v598, 7
      %v601 = vsel %vm569, %v596, %v600
      %v602 = vshrl.u32 %v414, 16
      %v604 = vrot.slane %v602, 6
      %v605 = vshll.u32 %v414, 16
      %v607 = vrot.slane %v605, 7
      %v608 = vor.u32 %v604, %v607
      %v609 = vrot.slane %v608, 2
      %v611 = vshll.u32 %v417, 16
      %v613 = vrot.slane %v611, 7
      %v614 = vsel %vm569, %v609, %v613
      %v615 = vshrl.u32 %v417, 16
      %v617 = vrot.slane %v615, 6
      %v618 = vor.u32 %v617, %v613
      %v619 = vrot.slane %v618, 2
      %v620 = vshll.u32 %v420, 16
      %v622 = vrot.slane %v620, 7
      %v623 = vsel %vm569, %v619, %v622
      %v624 = vshrl.u32 %v420, 16
      %v626 = vrot.slane %v624, 6
      %v627 = vor.u32 %v626, %v622
      %v628 = vrot.slane %v627, 2
      %v630 = vshll.u32 %v532, 16
      %v632 = vrot.slane %v630, 7
      %v633 = vsel %vm569, %v628, %v632
      %v634 = vshrl.u32 %v423, 16
      %v636 = vrot.slane %v634, 6
      %v637 = vshll.u32 %v423, 16
      %v639 = vrot.slane %v637, 7
      %v640 = vor.u32 %v636, %v639
      %v641 = vrot.slane %v640, 2
      %v643 = vshll.u32 %v426, 16
      %v645 = vrot.slane %v643, 7
      %v646 = vsel %vm569, %v641, %v645
      %v647 = vshrl.u32 %v426, 16
      %v649 = vrot.slane %v647, 6
      %v650 = vor.u32 %v649, %v645
      %v651 = vrot.slane %v650, 2
      %v652 = vshll.u32 %v429, 16
      %v654 = vrot.slane %v652, 7
      %v655 = vsel %vm569, %v651, %v654
      %v656 = vshrl.u32 %v429, 16
      %v658 = vrot.slane %v656, 6
      %v659 = vor.u32 %v658, %v654
      %v660 = vrot.slane %v659, 2
      %v662 = vshll.u32 %v535, 16
      %v664 = vrot.slane %v662, 7
      %v665 = vsel %vm569, %v660, %v664
      %v666 = vshrl.u32 %v432, 16
      %v668 = vrot.slane %v666, 6
      %v669 = vshll.u32 %v432, 16
      %v671 = vrot.slane %v669, 7
      %v672 = vor.u32 %v668, %v671
      %v673 = vrot.slane %v672, 2
      %v675 = vshll.u32 %v435, 16
      %v677 = vrot.slane %v675, 7
      %v678 = vsel %vm569, %v673, %v677
      %v679 = vshrl.u32 %v435, 16
      %v681 = vrot.slane %v679, 6
      %v682 = vor.u32 %v681, %v677
      %v683 = vrot.slane %v682, 2
      %v684 = vshll.u32 %v438, 16
      %v686 = vrot.slane %v684, 7
      %v687 = vsel %vm569, %v683, %v686
      %v688 = vshrl.u32 %v438, 16
      %v690 = vrot.slane %v688, 6
      %v691 = vor.u32 %v690, %v686
      %v692 = vrot.slane %v691, 2
      %v694 = vshll.u32 %v538, 16
      %v696 = vrot.slane %v694, 7
      %v697 = vsel %vm569, %v692, %v696
      %v698 = vshrl.u32 %v441, 16
      %v700 = vrot.slane %v698, 6
      %v701 = vshll.u32 %v441, 16
      %v703 = vrot.slane %v701, 7
      %v704 = vor.u32 %v700, %v703
      %v705 = vrot.slane %v704, 2
      %v707 = vshll.u32 %v444, 16
      %v709 = vrot.slane %v707, 7
      %v710 = vsel %vm569, %v705, %v709
      %v711 = vshrl.u32 %v444, 16
      %v713 = vrot.slane %v711, 6
      %v714 = vor.u32 %v713, %v709
      %v715 = vrot.slane %v714, 2
      %v716 = vshll.u32 %v447, 16
      %v718 = vrot.slane %v716, 7
      %v719 = vsel %vm569, %v715, %v718
      %v720 = vshrl.u32 %v447, 16
      %v722 = vrot.slane %v720, 6
      %v723 = vor.u32 %v722, %v718
      %v724 = vrot.slane %v723, 2
      %v726 = vshll.u32 %v541, 16
      %v728 = vrot.slane %v726, 7
      %v729 = vsel %vm569, %v724, %v728
      %v730 = vshrl.u32 %v450, 16
      %v732 = vrot.slane %v730, 6
      %v733 = vshll.u32 %v450, 16
      %v735 = vrot.slane %v733, 7
      %v736 = vor.u32 %v732, %v735
      %v737 = vrot.slane %v736, 2
      %v739 = vshll.u32 %v453, 16
      %v741 = vrot.slane %v739, 7
      %v742 = vsel %vm569, %v737, %v741
      %v743 = vshrl.u32 %v453, 16
      %v745 = vrot.slane %v743, 6
      %v746 = vor.u32 %v745, %v741
      %v747 = vrot.slane %v746, 2
      %v748 = vshll.u32 %v456, 16
      %v750 = vrot.slane %v748, 7
      %v751 = vsel %vm569, %v747, %v750
      %v752 = vshrl.u32 %v456, 16
      %v754 = vrot.slane %v752, 6
      %v755 = vor.u32 %v754, %v750
      %v756 = vrot.slane %v755, 2
      %v758 = vshll.u32 %v544, 16
      %v760 = vrot.slane %v758, 7
      %v761 = vsel %vm569, %v756, %v760
      %v762 = vshrl.u32 %v459, 16
      %v764 = vrot.slane %v762, 6
      %v765 = vshll.u32 %v459, 16
      %v767 = vrot.slane %v765, 7
      %v768 = vor.u32 %v764, %v767
      %v769 = vrot.slane %v768, 2
      %v771 = vshll.u32 %v462, 16
      %v773 = vrot.slane %v771, 7
      %v774 = vsel %vm569, %v769, %v773
      %v775 = vshrl.u32 %v462, 16
      %v777 = vrot.slane %v775, 6
      %v778 = vor.u32 %v777, %v773
      %v779 = vrot.slane %v778, 2
      %v780 = vshll.u32 %v465, 16
      %v782 = vrot.slane %v780, 7
      %v783 = vsel %vm569, %v779, %v782
      %v784 = vshrl.u32 %v465, 16
      %v786 = vrot.slane %v784, 6
      %v787 = vor.u32 %v786, %v782
      %v788 = vrot.slane %v787, 2
      %v790 = vshll.u32 %v547, 16
      %v792 = vrot.slane %v790, 7
      %v793 = vsel %vm569, %v788, %v792
      %v794 = vshrl.u32 %v468, 16
      %v796 = vrot.slane %v794, 6
      %v797 = vshll.u32 %v468, 16
      %v799 = vrot.slane %v797, 7
      %v800 = vor.u32 %v796, %v799
      %v801 = vrot.slane %v800, 2
      %v803 = vshll.u32 %v471, 16
      %v805 = vrot.slane %v803, 7
      %v806 = vsel %vm569, %v801, %v805
      %v807 = vshrl.u32 %v471, 16
      %v809 = vrot.slane %v807, 6
      %v810 = vor.u32 %v809, %v805
      %v811 = vrot.slane %v810, 2
      %v812 = vshll.u32 %v474, 16
      %v814 = vrot.slane %v812, 7
      %v815 = vsel %vm569, %v811, %v814
      %v816 = vshrl.u32 %v474, 16
      %v818 = vrot.slane %v816, 6
      %v819 = vor.u32 %v818, %v814
      %v820 = vrot.slane %v819, 2
      %v822 = vshll.u32 %v550, 16
      %v824 = vrot.slane %v822, 7
      %v825 = vsel %vm569, %v820, %v824
      %v826 = vshrl.u32 %v477, 16
      %v828 = vrot.slane %v826, 6
      %v829 = vshll.u32 %v477, 16
      %v831 = vrot.slane %v829, 7
      %v832 = vor.u32 %v828, %v831
      %v833 = vrot.slane %v832, 2
      %v835 = vshll.u32 %v480, 16
      %v837 = vrot.slane %v835, 7
      %v838 = vsel %vm569, %v833, %v837
      %v839 = vshrl.u32 %v480, 16
      %v841 = vrot.slane %v839, 6
      %v842 = vor.u32 %v841, %v837
      %v843 = vrot.slane %v842, 2
      %v844 = vshll.u32 %v483, 16
      %v846 = vrot.slane %v844, 7
      %v847 = vsel %vm569, %v843, %v846
      %v848 = vshrl.u32 %v483, 16
      %v850 = vrot.slane %v848, 6
      %v851 = vor.u32 %v850, %v846
      %v852 = vrot.slane %v851, 2
      %v854 = vshll.u32 %v553, 16
      %v856 = vrot.slane %v854, 7
      %v857 = vsel %vm569, %v852, %v856
      %v858 = vshrl.u32 %v486, 16
      %v860 = vrot.slane %v858, 6
      %v861 = vshll.u32 %v486, 16
      %v863 = vrot.slane %v861, 7
      %v864 = vor.u32 %v860, %v863
      %v865 = vrot.slane %v864, 2
      %v867 = vshll.u32 %v489, 16
      %v869 = vrot.slane %v867, 7
      %v870 = vsel %vm569, %v865, %v869
      %v871 = vshrl.u32 %v489, 16
      %v873 = vrot.slane %v871, 6
      %v874 = vor.u32 %v873, %v869
      %v875 = vrot.slane %v874, 2
      %v876 = vshll.u32 %v492, 16
      %v878 = vrot.slane %v876, 7
      %v879 = vsel %vm569, %v875, %v878
      %v880 = vshrl.u32 %v492, 16
      %v882 = vrot.slane %v880, 6
      %v883 = vor.u32 %v882, %v878
      %v884 = vrot.slane %v883, 2
      %v886 = vshll.u32 %v556, 16
      %v888 = vrot.slane %v886, 7
      %v889 = vsel %vm569, %v884, %v888
      %v890 = vshrl.u32 %v495, 16
      %v892 = vrot.slane %v890, 6
      %v893 = vshll.u32 %v495, 16
      %v895 = vrot.slane %v893, 7
      %v896 = vor.u32 %v892, %v895
      %v897 = vrot.slane %v896, 2
      %v899 = vshll.u32 %v498, 16
      %v901 = vrot.slane %v899, 7
      %v902 = vsel %vm569, %v897, %v901
      %v903 = vshrl.u32 %v498, 16
      %v905 = vrot.slane %v903, 6
      %v906 = vor.u32 %v905, %v901
      %v907 = vrot.slane %v906, 2
      %v908 = vshll.u32 %v501, 16
      %v910 = vrot.slane %v908, 7
      %v911 = vsel %vm569, %v907, %v910
      %v912 = vshrl.u32 %v501, 16
      %v914 = vrot.slane %v912, 6
      %v915 = vor.u32 %v914, %v910
      %v916 = vrot.slane %v915, 2
      %v918 = vshll.u32 %v559, 16
      %v920 = vrot.slane %v918, 7
      %v921 = vsel %vm569, %v916, %v920
      %v922 = vshrl.u32 %v504, 16
      %v924 = vrot.slane %v922, 6
      %v925 = vshll.u32 %v504, 16
      %v927 = vrot.slane %v925, 7
      %v928 = vor.u32 %v924, %v927
      %v929 = vrot.slane %v928, 2
      %v931 = vshll.u32 %v507, 16
      %v933 = vrot.slane %v931, 7
      %v934 = vsel %vm569, %v929, %v933
      %v935 = vshrl.u32 %v507, 16
      %v937 = vrot.slane %v935, 6
      %v938 = vor.u32 %v937, %v933
      %v939 = vrot.slane %v938, 2
      %v940 = vshll.u32 %v510, 16
      %v942 = vrot.slane %v940, 7
      %v943 = vsel %vm569, %v939, %v942
      %v944 = vshrl.u32 %v510, 16
      %v946 = vrot.slane %v944, 6
      %v947 = vor.u32 %v946, %v942
      %v948 = vrot.slane %v947, 2
      %v950 = vshll.u32 %v562, 16
      %v952 = vrot.slane %v950, 7
      %v953 = vsel %vm569, %v948, %v952
      %s954 = scalar_lea.vmem %s2, 64
      %v955 = vld [vmem:[%s954] sm:$0xf]
      %v956 = vld [vmem:[%s954 + $0x4] sm:$0xf]
      %v957 = vld [vmem:[%s954 + $0x8] sm:$0xf]
      %v958 = vld [vmem:[%s954 + $0xc] sm:$0xf]
      %v959 = vld [vmem:[%s954 + $0x10] sm:$0xf]
      %v960 = vld [vmem:[%s954 + $0x14] sm:$0xf]
      %v961 = vld [vmem:[%s954 + $0x18] sm:$0xf]
      %v962 = vld [vmem:[%s954 + $0x1c] sm:$0xf]
      %v963 = vld [vmem:[%s954 + $0x20] sm:$0xf]
      %v964 = vld [vmem:[%s954 + $0x24] sm:$0xf]
      %v965 = vld [vmem:[%s954 + $0x28] sm:$0xf]
      %v966 = vld [vmem:[%s954 + $0x2c] sm:$0xf]
      %v967 = vld [vmem:[%s954 + $0x30] sm:$0xf]
      %v968 = vld [vmem:[%s954 + $0x34] sm:$0xf]
      %v969 = vld [vmem:[%s954 + $0x38] sm:$0xf]
      %v970 = vld [vmem:[%s954 + $0x3c] sm:$0xf]
      %972 = vst [vmem:[#allocation1] ss:$4 sm:$0xff] %v582
      %s974 = scalar_lea.vmem [#allocation1], 1
      %975 = vst [vmem:[%s974] ss:$4 sm:$0xff] %v591
      %s977 = scalar_lea.vmem [#allocation1], 2
      %978 = vst [vmem:[%s977] ss:$4 sm:$0xff] %v601
      %s980 = scalar_lea.vmem [#allocation1], 3
      %981 = vst [vmem:[%s980] ss:$4 sm:$0xff] %v614
      %s983 = scalar_lea.vmem [#allocation1], 32
      %984 = vst [vmem:[%s983] ss:$4 sm:$0xff] %v623
      %s986 = scalar_lea.vmem [#allocation1], 33
      %987 = vst [vmem:[%s986] ss:$4 sm:$0xff] %v633
      %s989 = scalar_lea.vmem [#allocation1], 34
      %990 = vst [vmem:[%s989] ss:$4 sm:$0xff] %v646
      %s992 = scalar_lea.vmem [#allocation1], 35
      %993 = vst [vmem:[%s992] ss:$4 sm:$0xff] %v655
      %v994 = vld.sshfl [vmem:[#allocation1] sm:$0xff pattern:$0x73625140]
      %v995 = vld.sshfl [vmem:[#allocation1 + $0x20] sm:$0xff pattern:$0x73625140]
      %997 = vst [vmem:[#allocation1] ss:$4 sm:$0xff] %v665
      %999 = vst [vmem:[%s974] ss:$4 sm:$0xff] %v678
      %1001 = vst [vmem:[%s977] ss:$4 sm:$0xff] %v687
      %1003 = vst [vmem:[%s980] ss:$4 sm:$0xff] %v697
      %1005 = vst [vmem:[%s983] ss:$4 sm:$0xff] %v710
      %1007 = vst [vmem:[%s986] ss:$4 sm:$0xff] %v719
      %1009 = vst [vmem:[%s989] ss:$4 sm:$0xff] %v729
      %1011 = vst [vmem:[%s992] ss:$4 sm:$0xff] %v742
      %v1012 = vld.sshfl [vmem:[#allocation1] sm:$0xff pattern:$0x73625140]
      %v1013 = vld.sshfl [vmem:[#allocation1 + $0x20] sm:$0xff pattern:$0x73625140]
      %1015 = vst [vmem:[#allocation1] ss:$4 sm:$0xff] %v751
      %1017 = vst [vmem:[%s974] ss:$4 sm:$0xff] %v761
      %1019 = vst [vmem:[%s977] ss:$4 sm:$0xff] %v774
      %1021 = vst [vmem:[%s980] ss:$4 sm:$0xff] %v783
      %1023 = vst [vmem:[%s983] ss:$4 sm:$0xff] %v793
      %1025 = vst [vmem:[%s986] ss:$4 sm:$0xff] %v806
      %1027 = vst [vmem:[%s989] ss:$4 sm:$0xff] %v815
      %1029 = vst [vmem:[%s992] ss:$4 sm:$0xff] %v825
      %v1030 = vld.sshfl [vmem:[#allocation1] sm:$0xff pattern:$0x73625140]
      %v1031 = vld.sshfl [vmem:[#allocation1 + $0x20] sm:$0xff pattern:$0x73625140]
      %1033 = vst [vmem:[#allocation1] ss:$4 sm:$0xff] %v838
      %1035 = vst [vmem:[%s974] ss:$4 sm:$0xff] %v847
      %1037 = vst [vmem:[%s977] ss:$4 sm:$0xff] %v857
      %1039 = vst [vmem:[%s980] ss:$4 sm:$0xff] %v870
      %1041 = vst [vmem:[%s983] ss:$4 sm:$0xff] %v879
      %1043 = vst [vmem:[%s986] ss:$4 sm:$0xff] %v889
      %1045 = vst [vmem:[%s989] ss:$4 sm:$0xff] %v902
      %1047 = vst [vmem:[%s992] ss:$4 sm:$0xff] %v911
      %v1048 = vld.sshfl [vmem:[#allocation1] sm:$0xff pattern:$0x73625140]
      %v1049 = vld.sshfl [vmem:[#allocation1 + $0x20] sm:$0xff pattern:$0x73625140]
      %1051 = vst [vmem:[#allocation1] ss:$4 sm:$0xff] %v921
      %1053 = vst [vmem:[%s974] ss:$4 sm:$0xff] %v934
      %1055 = vst [vmem:[%s977] ss:$4 sm:$0xff] %v943
      %1057 = vst [vmem:[%s980] ss:$4 sm:$0xff] %v953
      %v1058 = vld.sshfl [vmem:[#allocation1] sm:$0xff pattern:$0x73625140]
      %v1084 = vunpack.c.l.b16 %v955
      %v1085 = vunpack.c.l.b16 %v956
      %v1086 = vunpack.c.l.b16 %v957
      %v1087 = vunpack.c.l.b16 %v958
      %v1088 = vunpack.c.l.b16 %v959
      %v1089 = vunpack.c.l.b16 %v960
      %v1090 = vunpack.c.l.b16 %v961
      %v1091 = vunpack.c.l.b16 %v962
      %v1092 = vunpack.c.l.b16 %v963
      %v1093 = vunpack.c.l.b16 %v964
      %v1094 = vunpack.c.l.b16 %v965
      %v1095 = vunpack.c.l.b16 %v966
      %v1096 = vunpack.c.l.b16 %v967
      %v1097 = vunpack.c.l.b16 %v968
      %v1098 = vunpack.c.l.b16 %v969
      %v1099 = vunpack.c.l.b16 %v970
      %v1100 = vpack.c.b16 %v1085, %v1084
      %v1101 = vpack.c.b16 %v1087, %v1086
      %v1102 = vpack.c.b16 %v1089, %v1088
      %v1103 = vpack.c.b16 %v1091, %v1090
      %v1104 = vpack.c.b16 %v1093, %v1092
      %v1105 = vpack.c.b16 %v1095, %v1094
      %v1106 = vpack.c.b16 %v1097, %v1096
      %v1107 = vpack.c.b16 %v1099, %v1098
      %1116 = vmatpush.bf16.msra.mxu0 %v1107
      %1117 = vmatpush.bf16.msra.mxu0 %v1106
      %1118 = vmatpush.bf16.msra.mxu0 %v1105
      %1119 = vmatpush.bf16.msra.mxu0 %v1104
      %1120 = vmatpush.bf16.msra.mxu0 %v1103
      %1121 = vmatpush.bf16.msra.mxu0 %v1102
      %1122 = vmatpush.bf16.msra.mxu0 %v1101
      %1123 = vmatpush.bf16.msra.mxu0 %v1100
      %1124 = vmatmul.bf16.gmra.mxu0 %v994
      %v1125 = vpop.f32.mrf.mxu0
      %v1126 = vadd.f32 0.0, %v1125
      %v1127 = vpop.f32.mrf.mxu0
      %v1128 = vadd.f32 0.0, %v1127
      %1129 = vmatmul.bf16.gmra.mxu0 %v995
      %v1130 = vpop.f32.mrf.mxu0
      %v1131 = vadd.f32 0.0, %v1130
      %v1132 = vpop.f32.mrf.mxu0
      %v1133 = vadd.f32 0.0, %v1132
      %1134 = vmatmul.bf16.gmra.mxu0 %v1012
      %v1135 = vpop.f32.mrf.mxu0
      %v1136 = vadd.f32 0.0, %v1135
      %v1137 = vpop.f32.mrf.mxu0
      %v1138 = vadd.f32 0.0, %v1137
      %1139 = vmatmul.bf16.gmra.mxu0 %v1013
      %v1140 = vpop.f32.mrf.mxu0
      %v1141 = vadd.f32 0.0, %v1140
      %v1142 = vpop.f32.mrf.mxu0
      %v1143 = vadd.f32 0.0, %v1142
      %1144 = vmatmul.bf16.gmra.mxu0 %v1030
      %v1145 = vpop.f32.mrf.mxu0
      %v1146 = vadd.f32 0.0, %v1145
      %v1147 = vpop.f32.mrf.mxu0
      %v1148 = vadd.f32 0.0, %v1147
      %1149 = vmatmul.bf16.gmra.mxu0 %v1031
      %v1150 = vpop.f32.mrf.mxu0
      %v1151 = vadd.f32 0.0, %v1150
      %v1152 = vpop.f32.mrf.mxu0
      %v1153 = vadd.f32 0.0, %v1152
      %1154 = vmatmul.bf16.gmra.mxu0 %v1048
      %v1155 = vpop.f32.mrf.mxu0
      %v1156 = vadd.f32 0.0, %v1155
      %v1157 = vpop.f32.mrf.mxu0
      %v1158 = vadd.f32 0.0, %v1157
      %1159 = vmatmul.bf16.gmra.mxu0 %v1049
      %v1160 = vpop.f32.mrf.mxu0
      %v1161 = vadd.f32 0.0, %v1160
      %v1162 = vpop.f32.mrf.mxu0
      %v1163 = vadd.f32 0.0, %v1162
      %1164 = vmatmul.bf16.gmra.mxu0 %v1058
      %v1165 = vpop.f32.mrf.mxu0
      %v1166 = vadd.f32 0.0, %v1165
      %v1167 = vpop.f32.mrf.mxu0
      %v1168 = vadd.f32 0.0, %v1167
      %1169 = vdwg.mxu0
      %1170 = vst [vmem:[#allocation1] ss:$4 sm:$0xff] %v404
      %s1171 = scalar_lea.vmem [#allocation1], 1
      %1172 = vst [vmem:[%s1171] ss:$4 sm:$0xff] %v408
      %s1173 = scalar_lea.vmem [#allocation1], 2
      %1174 = vst [vmem:[%s1173] ss:$4 sm:$0xff] %v411
      %s1175 = scalar_lea.vmem [#allocation1], 3
      %1176 = vst [vmem:[%s1175] ss:$4 sm:$0xff] %v414
      %s1177 = scalar_lea.vmem [#allocation1], 32
      %1178 = vst [vmem:[%s1177] ss:$4 sm:$0xff] %v417
      %s1179 = scalar_lea.vmem [#allocation1], 33
      %1180 = vst [vmem:[%s1179] ss:$4 sm:$0xff] %v420
      %s1181 = scalar_lea.vmem [#allocation1], 34
      %1182 = vst [vmem:[%s1181] ss:$4 sm:$0xff] %v423
      %s1183 = scalar_lea.vmem [#allocation1], 35
      %1184 = vst [vmem:[%s1183] ss:$4 sm:$0xff] %v426
      %v1185 = vld.sshfl [vmem:[#allocation1] sm:$0xff pattern:$0x73625140]
      %v1186 = vld.sshfl [vmem:[#allocation1 + $0x20] sm:$0xff pattern:$0x73625140]
      %1187 = vst [vmem:[#allocation1] ss:$4 sm:$0xff] %v429
      %1188 = vst [vmem:[%s1171] ss:$4 sm:$0xff] %v432
      %1189 = vst [vmem:[%s1173] ss:$4 sm:$0xff] %v435
      %1190 = vst [vmem:[%s1175] ss:$4 sm:$0xff] %v438
      %1191 = vst [vmem:[%s1177] ss:$4 sm:$0xff] %v441
      %1192 = vst [vmem:[%s1179] ss:$4 sm:$0xff] %v444
      %1193 = vst [vmem:[%s1181] ss:$4 sm:$0xff] %v447
      %1194 = vst [vmem:[%s1183] ss:$4 sm:$0xff] %v450
      %v1195 = vld.sshfl [vmem:[#allocation1] sm:$0xff pattern:$0x73625140]
      %v1196 = vld.sshfl [vmem:[#allocation1 + $0x20] sm:$0xff pattern:$0x73625140]
      %1197 = vst [vmem:[#allocation1] ss:$4 sm:$0xff] %v453
      %1198 = vst [vmem:[%s1171] ss:$4 sm:$0xff] %v456
      %1199 = vst [vmem:[%s1173] ss:$4 sm:$0xff] %v459
      %1200 = vst [vmem:[%s1175] ss:$4 sm:$0xff] %v462
      %1201 = vst [vmem:[%s1177] ss:$4 sm:$0xff] %v465
      %1202 = vst [vmem:[%s1179] ss:$4 sm:$0xff] %v468
      %1203 = vst [vmem:[%s1181] ss:$4 sm:$0xff] %v471
      %1204 = vst [vmem:[%s1183] ss:$4 sm:$0xff] %v474
      %v1205 = vld.sshfl [vmem:[#allocation1] sm:$0xff pattern:$0x73625140]
      %v1206 = vld.sshfl [vmem:[#allocation1 + $0x20] sm:$0xff pattern:$0x73625140]
      %1207 = vst [vmem:[#allocation1] ss:$4 sm:$0xff] %v477
      %1208 = vst [vmem:[%s1171] ss:$4 sm:$0xff] %v480
      %1209 = vst [vmem:[%s1173] ss:$4 sm:$0xff] %v483
      %1210 = vst [vmem:[%s1175] ss:$4 sm:$0xff] %v486
      %1211 = vst [vmem:[%s1177] ss:$4 sm:$0xff] %v489
      %1212 = vst [vmem:[%s1179] ss:$4 sm:$0xff] %v492
      %1213 = vst [vmem:[%s1181] ss:$4 sm:$0xff] %v495
      %1214 = vst [vmem:[%s1183] ss:$4 sm:$0xff] %v498
      %v1215 = vld.sshfl [vmem:[#allocation1] sm:$0xff pattern:$0x73625140]
      %v1216 = vld.sshfl [vmem:[#allocation1 + $0x20] sm:$0xff pattern:$0x73625140]
      %1217 = vst [vmem:[#allocation1] ss:$4 sm:$0xff] %v501
      %1218 = vst [vmem:[%s1171] ss:$4 sm:$0xff] %v504
      %1219 = vst [vmem:[%s1173] ss:$4 sm:$0xff] %v507
      %1220 = vst [vmem:[%s1175] ss:$4 sm:$0xff] %v510
      %v1221 = vld.sshfl [vmem:[#allocation1] sm:$0xff pattern:$0x73625140]
      %v1247 = vunpack.c.l.b16 %v511
      %v1248 = vunpack.c.l.b16 %v512
      %v1249 = vunpack.c.l.b16 %v513
      %v1250 = vunpack.c.l.b16 %v514
      %v1251 = vunpack.c.l.b16 %v515
      %v1252 = vunpack.c.l.b16 %v516
      %v1253 = vunpack.c.l.b16 %v517
      %v1254 = vunpack.c.l.b16 %v518
      %v1255 = vunpack.c.l.b16 %v519
      %v1256 = vunpack.c.l.b16 %v520
      %v1257 = vunpack.c.l.b16 %v521
      %v1258 = vunpack.c.l.b16 %v522
      %v1259 = vunpack.c.l.b16 %v523
      %v1260 = vunpack.c.l.b16 %v524
      %v1261 = vunpack.c.l.b16 %v525
      %v1262 = vunpack.c.l.b16 %v526
      %v1263 = vpack.c.b16 %v1248, %v1247
      %v1264 = vpack.c.b16 %v1250, %v1249
      %v1265 = vpack.c.b16 %v1252, %v1251
      %v1266 = vpack.c.b16 %v1254, %v1253
      %v1267 = vpack.c.b16 %v1256, %v1255
      %v1268 = vpack.c.b16 %v1258, %v1257
      %v1269 = vpack.c.b16 %v1260, %v1259
      %v1270 = vpack.c.b16 %v1262, %v1261
      %1279 = vmatpush.bf16.msra.mxu0 %v1270
      %1280 = vmatpush.bf16.msra.mxu0 %v1269
      %1281 = vmatpush.bf16.msra.mxu0 %v1268
      %1282 = vmatpush.bf16.msra.mxu0 %v1267
      %1283 = vmatpush.bf16.msra.mxu0 %v1266
      %1284 = vmatpush.bf16.msra.mxu0 %v1265
      %1285 = vmatpush.bf16.msra.mxu0 %v1264
      %1286 = vmatpush.bf16.msra.mxu0 %v1263
      %1287 = vmatmul.bf16.gmra.mxu0 %v1185
      %v1288 = vpop.f32.mrf.mxu0
      %v1289 = vadd.f32 %v1126, %v1288
      %v1290 = vpop.f32.mrf.mxu0
      %v1291 = vadd.f32 %v1128, %v1290
      %1292 = vmatmul.bf16.gmra.mxu0 %v1186
      %v1293 = vpop.f32.mrf.mxu0
      %v1294 = vadd.f32 %v1131, %v1293
      %v1295 = vpop.f32.mrf.mxu0
      %v1296 = vadd.f32 %v1133, %v1295
      %1297 = vmatmul.bf16.gmra.mxu0 %v1195
      %v1298 = vpop.f32.mrf.mxu0
      %v1299 = vadd.f32 %v1136, %v1298
      %v1300 = vpop.f32.mrf.mxu0
      %v1301 = vadd.f32 %v1138, %v1300
      %1302 = vmatmul.bf16.gmra.mxu0 %v1196
      %v1303 = vpop.f32.mrf.mxu0
      %v1304 = vadd.f32 %v1141, %v1303
      %v1305 = vpop.f32.mrf.mxu0
      %v1306 = vadd.f32 %v1143, %v1305
      %1307 = vmatmul.bf16.gmra.mxu0 %v1205
      %v1308 = vpop.f32.mrf.mxu0
      %v1309 = vadd.f32 %v1146, %v1308
      %v1310 = vpop.f32.mrf.mxu0
      %v1311 = vadd.f32 %v1148, %v1310
      %1312 = vmatmul.bf16.gmra.mxu0 %v1206
      %v1313 = vpop.f32.mrf.mxu0
      %v1314 = vadd.f32 %v1151, %v1313
      %v1315 = vpop.f32.mrf.mxu0
      %v1316 = vadd.f32 %v1153, %v1315
      %1317 = vmatmul.bf16.gmra.mxu0 %v1215
      %v1318 = vpop.f32.mrf.mxu0
      %v1319 = vadd.f32 %v1156, %v1318
      %v1320 = vpop.f32.mrf.mxu0
      %v1321 = vadd.f32 %v1158, %v1320
      %1322 = vmatmul.bf16.gmra.mxu0 %v1216
      %v1323 = vpop.f32.mrf.mxu0
      %v1324 = vadd.f32 %v1161, %v1323
      %v1325 = vpop.f32.mrf.mxu0
      %v1326 = vadd.f32 %v1163, %v1325
      %1327 = vmatmul.bf16.gmra.mxu0 %v1221
      %v1328 = vpop.f32.mrf.mxu0
      %v1329 = vadd.f32 %v1166, %v1328
      %v1330 = vpop.f32.mrf.mxu0
      %v1331 = vadd.f32 %v1168, %v1330
      %1332 = vdwg.mxu0
      %vm1357 = vcmask 1040384
      %vm1358 = vcmask 1042434
      %vm1359 = vmor %vm1357, %vm1358
      %vm1360 = vcmask 1044484
      %vm1361 = vmor %vm1359, %vm1360
      %vm1362 = vcmask 1046534
      %vm1363 = vmor %vm1361, %vm1362
      %v1364 = vrot.slane %v404, 7
      %v1365 = vrot.slane %v1364, 2
      %v1366 = vrot.slane %v408, 7
      %v1367 = vsel %vm1363, %v1365, %v1366
      %v1368 = vrot.slane %v1366, 2
      %v1369 = vrot.slane %v411, 7
      %v1370 = vsel %vm1363, %v1368, %v1369
      %v1371 = vrot.slane %v1369, 2
      %v1372 = vrot.slane %v529, 7
      %v1373 = vsel %vm1363, %v1371, %v1372
      %v1374 = vrot.slane %v414, 7
      %v1375 = vrot.slane %v1374, 2
      %v1376 = vrot.slane %v417, 7
      %v1377 = vsel %vm1363, %v1375, %v1376
      %v1378 = vrot.slane %v1376, 2
      %v1379 = vrot.slane %v420, 7
      %v1380 = vsel %vm1363, %v1378, %v1379
      %v1381 = vrot.slane %v1379, 2
      %v1382 = vrot.slane %v532, 7
      %v1383 = vsel %vm1363, %v1381, %v1382
      %v1384 = vrot.slane %v423, 7
      %v1385 = vrot.slane %v1384, 2
      %v1386 = vrot.slane %v426, 7
      %v1387 = vsel %vm1363, %v1385, %v1386
      %v1388 = vrot.slane %v1386, 2
      %v1389 = vrot.slane %v429, 7
      %v1390 = vsel %vm1363, %v1388, %v1389
      %v1391 = vrot.slane %v1389, 2
      %v1392 = vrot.slane %v535, 7
      %v1393 = vsel %vm1363, %v1391, %v1392
      %v1394 = vrot.slane %v432, 7
      %v1395 = vrot.slane %v1394, 2
      %v1396 = vrot.slane %v435, 7
      %v1397 = vsel %vm1363, %v1395, %v1396
      %v1398 = vrot.slane %v1396, 2
      %v1399 = vrot.slane %v438, 7
      %v1400 = vsel %vm1363, %v1398, %v1399
      %v1401 = vrot.slane %v1399, 2
      %v1402 = vrot.slane %v538, 7
      %v1403 = vsel %vm1363, %v1401, %v1402
      %v1404 = vrot.slane %v441, 7
      %v1405 = vrot.slane %v1404, 2
      %v1406 = vrot.slane %v444, 7
      %v1407 = vsel %vm1363, %v1405, %v1406
      %v1408 = vrot.slane %v1406, 2
      %v1409 = vrot.slane %v447, 7
      %v1410 = vsel %vm1363, %v1408, %v1409
      %v1411 = vrot.slane %v1409, 2
      %v1412 = vrot.slane %v541, 7
      %v1413 = vsel %vm1363, %v1411, %v1412
      %v1414 = vrot.slane %v450, 7
      %v1415 = vrot.slane %v1414, 2
      %v1416 = vrot.slane %v453, 7
      %v1417 = vsel %vm1363, %v1415, %v1416
      %v1418 = vrot.slane %v1416, 2
      %v1419 = vrot.slane %v456, 7
      %v1420 = vsel %vm1363, %v1418, %v1419
      %v1421 = vrot.slane %v1419, 2
      %v1422 = vrot.slane %v544, 7
      %v1423 = vsel %vm1363, %v1421, %v1422
      %v1424 = vrot.slane %v459, 7
      %v1425 = vrot.slane %v1424, 2
      %v1426 = vrot.slane %v462, 7
      %v1427 = vsel %vm1363, %v1425, %v1426
      %v1428 = vrot.slane %v1426, 2
      %v1429 = vrot.slane %v465, 7
      %v1430 = vsel %vm1363, %v1428, %v1429
      %v1431 = vrot.slane %v1429, 2
      %v1432 = vrot.slane %v547, 7
      %v1433 = vsel %vm1363, %v1431, %v1432
      %v1434 = vrot.slane %v468, 7
      %v1435 = vrot.slane %v1434, 2
      %v1436 = vrot.slane %v471, 7
      %v1437 = vsel %vm1363, %v1435, %v1436
      %v1438 = vrot.slane %v1436, 2
      %v1439 = vrot.slane %v474, 7
      %v1440 = vsel %vm1363, %v1438, %v1439
      %v1441 = vrot.slane %v1439, 2
      %v1442 = vrot.slane %v550, 7
      %v1443 = vsel %vm1363, %v1441, %v1442
      %v1444 = vrot.slane %v477, 7
      %v1445 = vrot.slane %v1444, 2
      %v1446 = vrot.slane %v480, 7
      %v1447 = vsel %vm1363, %v1445, %v1446
      %v1448 = vrot.slane %v1446, 2
      %v1449 = vrot.slane %v483, 7
      %v1450 = vsel %vm1363, %v1448, %v1449
      %v1451 = vrot.slane %v1449, 2
      %v1452 = vrot.slane %v553, 7
      %v1453 = vsel %vm1363, %v1451, %v1452
      %v1454 = vrot.slane %v486, 7
      %v1455 = vrot.slane %v1454, 2
      %v1456 = vrot.slane %v489, 7
      %v1457 = vsel %vm1363, %v1455, %v1456
      %v1458 = vrot.slane %v1456, 2
      %v1459 = vrot.slane %v492, 7
      %v1460 = vsel %vm1363, %v1458, %v1459
      %v1461 = vrot.slane %v1459, 2
      %v1462 = vrot.slane %v556, 7
      %v1463 = vsel %vm1363, %v1461, %v1462
      %v1464 = vrot.slane %v495, 7
      %v1465 = vrot.slane %v1464, 2
      %v1466 = vrot.slane %v498, 7
      %v1467 = vsel %vm1363, %v1465, %v1466
      %v1468 = vrot.slane %v1466, 2
      %v1469 = vrot.slane %v501, 7
      %v1470 = vsel %vm1363, %v1468, %v1469
      %v1471 = vrot.slane %v1469, 2
      %v1472 = vrot.slane %v559, 7
      %v1473 = vsel %vm1363, %v1471, %v1472
      %v1474 = vrot.slane %v504, 7
      %v1475 = vrot.slane %v1474, 2
      %v1476 = vrot.slane %v507, 7
      %v1477 = vsel %vm1363, %v1475, %v1476
      %v1478 = vrot.slane %v1476, 2
      %v1479 = vrot.slane %v510, 7
      %v1480 = vsel %vm1363, %v1478, %v1479
      %v1481 = vrot.slane %v1479, 2
      %v1482 = vrot.slane %v562, 7
      %v1483 = vsel %vm1363, %v1481, %v1482
      %s1484 = scalar_lea.vmem %s2, 128
      %v1485 = vld [vmem:[%s1484] sm:$0xf]
      %v1486 = vld [vmem:[%s1484 + $0x4] sm:$0xf]
      %v1487 = vld [vmem:[%s1484 + $0x8] sm:$0xf]
      %v1488 = vld [vmem:[%s1484 + $0xc] sm:$0xf]
      %v1489 = vld [vmem:[%s1484 + $0x10] sm:$0xf]
      %v1490 = vld [vmem:[%s1484 + $0x14] sm:$0xf]
      %v1491 = vld [vmem:[%s1484 + $0x18] sm:$0xf]
      %v1492 = vld [vmem:[%s1484 + $0x1c] sm:$0xf]
      %v1493 = vld [vmem:[%s1484 + $0x20] sm:$0xf]
      %v1494 = vld [vmem:[%s1484 + $0x24] sm:$0xf]
      %v1495 = vld [vmem:[%s1484 + $0x28] sm:$0xf]
      %v1496 = vld [vmem:[%s1484 + $0x2c] sm:$0xf]
      %v1497 = vld [vmem:[%s1484 + $0x30] sm:$0xf]
      %v1498 = vld [vmem:[%s1484 + $0x34] sm:$0xf]
      %v1499 = vld [vmem:[%s1484 + $0x38] sm:$0xf]
      %v1500 = vld [vmem:[%s1484 + $0x3c] sm:$0xf]
      %1502 = vst [vmem:[#allocation1] ss:$4 sm:$0xff] %v1367
      %s1504 = scalar_lea.vmem [#allocation1], 1
      %1505 = vst [vmem:[%s1504] ss:$4 sm:$0xff] %v1370
      %s1507 = scalar_lea.vmem [#allocation1], 2
      %1508 = vst [vmem:[%s1507] ss:$4 sm:$0xff] %v1373
      %s1510 = scalar_lea.vmem [#allocation1], 3
      %1511 = vst [vmem:[%s1510] ss:$4 sm:$0xff] %v1377
      %s1513 = scalar_lea.vmem [#allocation1], 32
      %1514 = vst [vmem:[%s1513] ss:$4 sm:$0xff] %v1380
      %s1516 = scalar_lea.vmem [#allocation1], 33
      %1517 = vst [vmem:[%s1516] ss:$4 sm:$0xff] %v1383
      %s1519 = scalar_lea.vmem [#allocation1], 34
      %1520 = vst [vmem:[%s1519] ss:$4 sm:$0xff] %v1387
      %s1522 = scalar_lea.vmem [#allocation1], 35
      %1523 = vst [vmem:[%s1522] ss:$4 sm:$0xff] %v1390
      %v1524 = vld.sshfl [vmem:[#allocation1] sm:$0xff pattern:$0x73625140]
      %v1525 = vld.sshfl [vmem:[#allocation1 + $0x20] sm:$0xff pattern:$0x73625140]
      %1527 = vst [vmem:[#allocation1] ss:$4 sm:$0xff] %v1393
      %1529 = vst [vmem:[%s1504] ss:$4 sm:$0xff] %v1397
      %1531 = vst [vmem:[%s1507] ss:$4 sm:$0xff] %v1400
      %1533 = vst [vmem:[%s1510] ss:$4 sm:$0xff] %v1403
      %1535 = vst [vmem:[%s1513] ss:$4 sm:$0xff] %v1407
      %1537 = vst [vmem:[%s1516] ss:$4 sm:$0xff] %v1410
      %1539 = vst [vmem:[%s1519] ss:$4 sm:$0xff] %v1413
      %1541 = vst [vmem:[%s1522] ss:$4 sm:$0xff] %v1417
      %v1542 = vld.sshfl [vmem:[#allocation1] sm:$0xff pattern:$0x73625140]
      %v1543 = vld.sshfl [vmem:[#allocation1 + $0x20] sm:$0xff pattern:$0x73625140]
      %1545 = vst [vmem:[#allocation1] ss:$4 sm:$0xff] %v1420
      %1547 = vst [vmem:[%s1504] ss:$4 sm:$0xff] %v1423
      %1549 = vst [vmem:[%s1507] ss:$4 sm:$0xff] %v1427
      %1551 = vst [vmem:[%s1510] ss:$4 sm:$0xff] %v1430
      %1553 = vst [vmem:[%s1513] ss:$4 sm:$0xff] %v1433
      %1555 = vst [vmem:[%s1516] ss:$4 sm:$0xff] %v1437
      %1557 = vst [vmem:[%s1519] ss:$4 sm:$0xff] %v1440
      %1559 = vst [vmem:[%s1522] ss:$4 sm:$0xff] %v1443
      %v1560 = vld.sshfl [vmem:[#allocation1] sm:$0xff pattern:$0x73625140]
      %v1561 = vld.sshfl [vmem:[#allocation1 + $0x20] sm:$0xff pattern:$0x73625140]
      %1563 = vst [vmem:[#allocation1] ss:$4 sm:$0xff] %v1447
      %1565 = vst [vmem:[%s1504] ss:$4 sm:$0xff] %v1450
      %1567 = vst [vmem:[%s1507] ss:$4 sm:$0xff] %v1453
      %1569 = vst [vmem:[%s1510] ss:$4 sm:$0xff] %v1457
      %1571 = vst [vmem:[%s1513] ss:$4 sm:$0xff] %v1460
      %1573 = vst [vmem:[%s1516] ss:$4 sm:$0xff] %v1463
      %1575 = vst [vmem:[%s1519] ss:$4 sm:$0xff] %v1467
      %1577 = vst [vmem:[%s1522] ss:$4 sm:$0xff] %v1470
      %v1578 = vld.sshfl [vmem:[#allocation1] sm:$0xff pattern:$0x73625140]
      %v1579 = vld.sshfl [vmem:[#allocation1 + $0x20] sm:$0xff pattern:$0x73625140]
      %1581 = vst [vmem:[#allocation1] ss:$4 sm:$0xff] %v1473
      %1583 = vst [vmem:[%s1504] ss:$4 sm:$0xff] %v1477
      %1585 = vst [vmem:[%s1507] ss:$4 sm:$0xff] %v1480
      %1587 = vst [vmem:[%s1510] ss:$4 sm:$0xff] %v1483
      %v1588 = vld.sshfl [vmem:[#allocation1] sm:$0xff pattern:$0x73625140]
      %v1614 = vunpack.c.l.b16 %v1485
      %v1615 = vunpack.c.l.b16 %v1486
      %v1616 = vunpack.c.l.b16 %v1487
      %v1617 = vunpack.c.l.b16 %v1488
      %v1618 = vunpack.c.l.b16 %v1489
      %v1619 = vunpack.c.l.b16 %v1490
      %v1620 = vunpack.c.l.b16 %v1491
      %v1621 = vunpack.c.l.b16 %v1492
      %v1622 = vunpack.c.l.b16 %v1493
      %v1623 = vunpack.c.l.b16 %v1494
      %v1624 = vunpack.c.l.b16 %v1495
      %v1625 = vunpack.c.l.b16 %v1496
      %v1626 = vunpack.c.l.b16 %v1497
      %v1627 = vunpack.c.l.b16 %v1498
      %v1628 = vunpack.c.l.b16 %v1499
      %v1629 = vunpack.c.l.b16 %v1500
      %v1630 = vpack.c.b16 %v1615, %v1614
      %v1631 = vpack.c.b16 %v1617, %v1616
      %v1632 = vpack.c.b16 %v1619, %v1618
      %v1633 = vpack.c.b16 %v1621, %v1620
      %v1634 = vpack.c.b16 %v1623, %v1622
      %v1635 = vpack.c.b16 %v1625, %v1624
      %v1636 = vpack.c.b16 %v1627, %v1626
      %v1637 = vpack.c.b16 %v1629, %v1628
      %1646 = vmatpush.bf16.msra.mxu0 %v1637
      %1647 = vmatpush.bf16.msra.mxu0 %v1636
      %1648 = vmatpush.bf16.msra.mxu0 %v1635
      %1649 = vmatpush.bf16.msra.mxu0 %v1634
      %1650 = vmatpush.bf16.msra.mxu0 %v1633
      %1651 = vmatpush.bf16.msra.mxu0 %v1632
      %1652 = vmatpush.bf16.msra.mxu0 %v1631
      %1653 = vmatpush.bf16.msra.mxu0 %v1630
      %1654 = vmatmul.bf16.gmra.mxu0 %v1524
      %v1655 = vpop.f32.mrf.mxu0
      %v1656 = vadd.f32 0.0, %v1655
      %v1657 = vpop.f32.mrf.mxu0
      %v1658 = vadd.f32 0.0, %v1657
      %1659 = vmatmul.bf16.gmra.mxu0 %v1525
      %v1660 = vpop.f32.mrf.mxu0
      %v1661 = vadd.f32 0.0, %v1660
      %v1662 = vpop.f32.mrf.mxu0
      %v1663 = vadd.f32 0.0, %v1662
      %1664 = vmatmul.bf16.gmra.mxu0 %v1542
      %v1665 = vpop.f32.mrf.mxu0
      %v1666 = vadd.f32 0.0, %v1665
      %v1667 = vpop.f32.mrf.mxu0
      %v1668 = vadd.f32 0.0, %v1667
      %1669 = vmatmul.bf16.gmra.mxu0 %v1543
      %v1670 = vpop.f32.mrf.mxu0
      %v1671 = vadd.f32 0.0, %v1670
      %v1672 = vpop.f32.mrf.mxu0
      %v1673 = vadd.f32 0.0, %v1672
      %1674 = vmatmul.bf16.gmra.mxu0 %v1560
      %v1675 = vpop.f32.mrf.mxu0
      %v1676 = vadd.f32 0.0, %v1675
      %v1677 = vpop.f32.mrf.mxu0
      %v1678 = vadd.f32 0.0, %v1677
      %1679 = vmatmul.bf16.gmra.mxu0 %v1561
      %v1680 = vpop.f32.mrf.mxu0
      %v1681 = vadd.f32 0.0, %v1680
      %v1682 = vpop.f32.mrf.mxu0
      %v1683 = vadd.f32 0.0, %v1682
      %1684 = vmatmul.bf16.gmra.mxu0 %v1578
      %v1685 = vpop.f32.mrf.mxu0
      %v1686 = vadd.f32 0.0, %v1685
      %v1687 = vpop.f32.mrf.mxu0
      %v1688 = vadd.f32 0.0, %v1687
      %1689 = vmatmul.bf16.gmra.mxu0 %v1579
      %v1690 = vpop.f32.mrf.mxu0
      %v1691 = vadd.f32 0.0, %v1690
      %v1692 = vpop.f32.mrf.mxu0
      %v1693 = vadd.f32 0.0, %v1692
      %1694 = vmatmul.bf16.gmra.mxu0 %v1588
      %v1695 = vpop.f32.mrf.mxu0
      %v1696 = vadd.f32 0.0, %v1695
      %v1697 = vpop.f32.mrf.mxu0
      %v1698 = vadd.f32 0.0, %v1697
      %1699 = vdwg.mxu0
      %v1700 = vadd.f32 %v1289, %v1656
      %v1701 = vadd.f32 %v1291, %v1658
      %v1702 = vadd.f32 %v1294, %v1661
      %v1703 = vadd.f32 %v1296, %v1663
      %v1704 = vadd.f32 %v1299, %v1666
      %v1705 = vadd.f32 %v1301, %v1668
      %v1706 = vadd.f32 %v1304, %v1671
      %v1707 = vadd.f32 %v1306, %v1673
      %v1708 = vadd.f32 %v1309, %v1676
      %v1709 = vadd.f32 %v1311, %v1678
      %v1710 = vadd.f32 %v1314, %v1681
      %v1711 = vadd.f32 %v1316, %v1683
      %v1712 = vadd.f32 %v1319, %v1686
      %v1713 = vadd.f32 %v1321, %v1688
      %v1714 = vadd.f32 %v1324, %v1691
      %v1715 = vadd.f32 %v1326, %v1693
      %v1716 = vadd.f32 %v1329, %v1696
      %v1717 = vadd.f32 %v1331, %v1698
      %v1720 = vrot.slane %v349, 2
      %v1721 = vrot.slane %v350, 2
      %v1724 = vsel %vm401, %v349, %v1720
      %v1725 = vsel %vm405, %v349, %v1720
      %v1727 = vrot.slane %v1725, 2
      %v1730 = vsel %vm401, %v350, %v1721
      %s1731 = scalar_lea.vmem %s2, 192
      %v1732 = vld [vmem:[%s1731] sm:$0xf]
      %v1733 = vld [vmem:[%s1731 + $0x4] sm:$0xf]
      %v1734 = vld [vmem:[%s1731 + $0x8] sm:$0xf]
      %v1735 = vld [vmem:[%s1731 + $0xc] sm:$0xf]
      %v1736 = vld [vmem:[%s1731 + $0x10] sm:$0xf]
      %v1737 = vld [vmem:[%s1731 + $0x14] sm:$0xf]
      %v1738 = vld [vmem:[%s1731 + $0x18] sm:$0xf]
      %v1739 = vld [vmem:[%s1731 + $0x1c] sm:$0xf]
      %v1740 = vld [vmem:[%s1731 + $0x20] sm:$0xf]
      %v1741 = vld [vmem:[%s1731 + $0x24] sm:$0xf]
      %v1742 = vld [vmem:[%s1731 + $0x28] sm:$0xf]
      %v1743 = vld [vmem:[%s1731 + $0x2c] sm:$0xf]
      %v1744 = vld [vmem:[%s1731 + $0x30] sm:$0xf]
      %v1745 = vld [vmem:[%s1731 + $0x34] sm:$0xf]
      %v1746 = vld [vmem:[%s1731 + $0x38] sm:$0xf]
      %v1747 = vld [vmem:[%s1731 + $0x3c] sm:$0xf]
      %1748 = vst [vmem:[#allocation1] ss:$4 sm:$0xff] %v414
      %s1749 = scalar_lea.vmem [#allocation1], 1
      %1750 = vst [vmem:[%s1749] ss:$4 sm:$0xff] %v417
      %s1751 = scalar_lea.vmem [#allocation1], 2
      %1752 = vst [vmem:[%s1751] ss:$4 sm:$0xff] %v420
      %s1753 = scalar_lea.vmem [#allocation1], 3
      %1754 = vst [vmem:[%s1753] ss:$4 sm:$0xff] %v423
      %s1755 = scalar_lea.vmem [#allocation1], 32
      %1756 = vst [vmem:[%s1755] ss:$4 sm:$0xff] %v426
      %s1757 = scalar_lea.vmem [#allocation1], 33
      %1758 = vst [vmem:[%s1757] ss:$4 sm:$0xff] %v429
      %s1759 = scalar_lea.vmem [#allocation1], 34
      %1760 = vst [vmem:[%s1759] ss:$4 sm:$0xff] %v432
      %s1761 = scalar_lea.vmem [#allocation1], 35
      %1762 = vst [vmem:[%s1761] ss:$4 sm:$0xff] %v435
      %v1763 = vld.sshfl [vmem:[#allocation1] sm:$0xff pattern:$0x73625140]
      %v1764 = vld.sshfl [vmem:[#allocation1 + $0x20] sm:$0xff pattern:$0x73625140]
      %1765 = vst [vmem:[#allocation1] ss:$4 sm:$0xff] %v438
      %1766 = vst [vmem:[%s1749] ss:$4 sm:$0xff] %v441
      %1767 = vst [vmem:[%s1751] ss:$4 sm:$0xff] %v444
      %1768 = vst [vmem:[%s1753] ss:$4 sm:$0xff] %v447
      %1769 = vst [vmem:[%s1755] ss:$4 sm:$0xff] %v450
      %1770 = vst [vmem:[%s1757] ss:$4 sm:$0xff] %v453
      %1771 = vst [vmem:[%s1759] ss:$4 sm:$0xff] %v456
      %1772 = vst [vmem:[%s1761] ss:$4 sm:$0xff] %v459
      %v1773 = vld.sshfl [vmem:[#allocation1] sm:$0xff pattern:$0x73625140]
      %v1774 = vld.sshfl [vmem:[#allocation1 + $0x20] sm:$0xff pattern:$0x73625140]
      %1775 = vst [vmem:[#allocation1] ss:$4 sm:$0xff] %v462
      %1776 = vst [vmem:[%s1749] ss:$4 sm:$0xff] %v465
      %1777 = vst [vmem:[%s1751] ss:$4 sm:$0xff] %v468
      %1778 = vst [vmem:[%s1753] ss:$4 sm:$0xff] %v471
      %1779 = vst [vmem:[%s1755] ss:$4 sm:$0xff] %v474
      %1780 = vst [vmem:[%s1757] ss:$4 sm:$0xff] %v477
      %1781 = vst [vmem:[%s1759] ss:$4 sm:$0xff] %v480
      %1782 = vst [vmem:[%s1761] ss:$4 sm:$0xff] %v483
      %v1783 = vld.sshfl [vmem:[#allocation1] sm:$0xff pattern:$0x73625140]
      %v1784 = vld.sshfl [vmem:[#allocation1 + $0x20] sm:$0xff pattern:$0x73625140]
      %1785 = vst [vmem:[#allocation1] ss:$4 sm:$0xff] %v486
      %1786 = vst [vmem:[%s1749] ss:$4 sm:$0xff] %v489
      %1787 = vst [vmem:[%s1751] ss:$4 sm:$0xff] %v492
      %1788 = vst [vmem:[%s1753] ss:$4 sm:$0xff] %v495
      %1789 = vst [vmem:[%s1755] ss:$4 sm:$0xff] %v498
      %1790 = vst [vmem:[%s1757] ss:$4 sm:$0xff] %v501
      %1791 = vst [vmem:[%s1759] ss:$4 sm:$0xff] %v504
      %1792 = vst [vmem:[%s1761] ss:$4 sm:$0xff] %v507
      %v1793 = vld.sshfl [vmem:[#allocation1] sm:$0xff pattern:$0x73625140]
      %v1794 = vld.sshfl [vmem:[#allocation1 + $0x20] sm:$0xff pattern:$0x73625140]
      %1795 = vst [vmem:[#allocation1] ss:$4 sm:$0xff] %v510
      %1796 = vst [vmem:[%s1749] ss:$4 sm:$0xff] %v1724
      %1798 = vst [vmem:[%s1751] ss:$4 sm:$0xff] %v1727
      %1799 = vst [vmem:[%s1753] ss:$4 sm:$0xff] %v1730
      %v1800 = vld.sshfl [vmem:[#allocation1] sm:$0xff pattern:$0x73625140]
      %v1826 = vunpack.c.l.b16 %v1732
      %v1827 = vunpack.c.l.b16 %v1733
      %v1828 = vunpack.c.l.b16 %v1734
      %v1829 = vunpack.c.l.b16 %v1735
      %v1830 = vunpack.c.l.b16 %v1736
      %v1831 = vunpack.c.l.b16 %v1737
      %v1832 = vunpack.c.l.b16 %v1738
      %v1833 = vunpack.c.l.b16 %v1739
      %v1834 = vunpack.c.l.b16 %v1740
      %v1835 = vunpack.c.l.b16 %v1741
      %v1836 = vunpack.c.l.b16 %v1742
      %v1837 = vunpack.c.l.b16 %v1743
      %v1838 = vunpack.c.l.b16 %v1744
      %v1839 = vunpack.c.l.b16 %v1745
      %v1840 = vunpack.c.l.b16 %v1746
      %v1841 = vunpack.c.l.b16 %v1747
      %v1842 = vpack.c.b16 %v1827, %v1826
      %v1843 = vpack.c.b16 %v1829, %v1828
      %v1844 = vpack.c.b16 %v1831, %v1830
      %v1845 = vpack.c.b16 %v1833, %v1832
      %v1846 = vpack.c.b16 %v1835, %v1834
      %v1847 = vpack.c.b16 %v1837, %v1836
      %v1848 = vpack.c.b16 %v1839, %v1838
      %v1849 = vpack.c.b16 %v1841, %v1840
      %1858 = vmatpush.bf16.msra.mxu0 %v1849
      %1859 = vmatpush.bf16.msra.mxu0 %v1848
      %1860 = vmatpush.bf16.msra.mxu0 %v1847
      %1861 = vmatpush.bf16.msra.mxu0 %v1846
      %1862 = vmatpush.bf16.msra.mxu0 %v1845
      %1863 = vmatpush.bf16.msra.mxu0 %v1844
      %1864 = vmatpush.bf16.msra.mxu0 %v1843
      %1865 = vmatpush.bf16.msra.mxu0 %v1842
      %1866 = vmatmul.bf16.gmra.mxu0 %v1763
      %v1867 = vpop.f32.mrf.mxu0
      %v1868 = vadd.f32 0.0, %v1867
      %v1869 = vpop.f32.mrf.mxu0
      %v1870 = vadd.f32 0.0, %v1869
      %1871 = vmatmul.bf16.gmra.mxu0 %v1764
      %v1872 = vpop.f32.mrf.mxu0
      %v1873 = vadd.f32 0.0, %v1872
      %v1874 = vpop.f32.mrf.mxu0
      %v1875 = vadd.f32 0.0, %v1874
      %1876 = vmatmul.bf16.gmra.mxu0 %v1773
      %v1877 = vpop.f32.mrf.mxu0
      %v1878 = vadd.f32 0.0, %v1877
      %v1879 = vpop.f32.mrf.mxu0
      %v1880 = vadd.f32 0.0, %v1879
      %1881 = vmatmul.bf16.gmra.mxu0 %v1774
      %v1882 = vpop.f32.mrf.mxu0
      %v1883 = vadd.f32 0.0, %v1882
      %v1884 = vpop.f32.mrf.mxu0
      %v1885 = vadd.f32 0.0, %v1884
      %1886 = vmatmul.bf16.gmra.mxu0 %v1783
      %v1887 = vpop.f32.mrf.mxu0
      %v1888 = vadd.f32 0.0, %v1887
      %v1889 = vpop.f32.mrf.mxu0
      %v1890 = vadd.f32 0.0, %v1889
      %1891 = vmatmul.bf16.gmra.mxu0 %v1784
      %v1892 = vpop.f32.mrf.mxu0
      %v1893 = vadd.f32 0.0, %v1892
      %v1894 = vpop.f32.mrf.mxu0
      %v1895 = vadd.f32 0.0, %v1894
      %1896 = vmatmul.bf16.gmra.mxu0 %v1793
      %v1897 = vpop.f32.mrf.mxu0
      %v1898 = vadd.f32 0.0, %v1897
      %v1899 = vpop.f32.mrf.mxu0
      %v1900 = vadd.f32 0.0, %v1899
      %1901 = vmatmul.bf16.gmra.mxu0 %v1794
      %v1902 = vpop.f32.mrf.mxu0
      %v1903 = vadd.f32 0.0, %v1902
      %v1904 = vpop.f32.mrf.mxu0
      %v1905 = vadd.f32 0.0, %v1904
      %1906 = vmatmul.bf16.gmra.mxu0 %v1800
      %v1907 = vpop.f32.mrf.mxu0
      %v1908 = vadd.f32 0.0, %v1907
      %v1909 = vpop.f32.mrf.mxu0
      %v1910 = vadd.f32 0.0, %v1909
      %1911 = vdwg.mxu0
      %v1912 = vadd.f32 %v1700, %v1868
      %v1913 = vadd.f32 %v1701, %v1870
      %v1914 = vadd.f32 %v1702, %v1873
      %v1915 = vadd.f32 %v1703, %v1875
      %v1916 = vadd.f32 %v1704, %v1878
      %v1917 = vadd.f32 %v1705, %v1880
      %v1918 = vadd.f32 %v1706, %v1883
      %v1919 = vadd.f32 %v1707, %v1885
      %v1920 = vadd.f32 %v1708, %v1888
      %v1921 = vadd.f32 %v1709, %v1890
      %v1922 = vadd.f32 %v1710, %v1893
      %v1923 = vadd.f32 %v1711, %v1895
      %v1924 = vadd.f32 %v1712, %v1898
      %v1925 = vadd.f32 %v1713, %v1900
      %v1926 = vadd.f32 %v1714, %v1903
      %v1927 = vadd.f32 %v1715, %v1905
      %v1928 = vadd.f32 %v1716, %v1908
      %v1929 = vadd.f32 %v1717, %v1910
      %v1930 = vsel %vm405, %v350, %v1721
      %v1932 = vrot.slane %v1930, 2
      %v1933 = vshrl.u32 %v1724, 16
      %v1935 = vrot.slane %v1933, 6
      %v1936 = vshll.u32 %v1724, 16
      %v1938 = vrot.slane %v1936, 7
      %v1939 = vor.u32 %v1935, %v1938
      %v1940 = vrot.slane %v1939, 2
      %v1941 = vshll.u32 %v1727, 16
      %v1943 = vrot.slane %v1941, 7
      %v1944 = vsel %vm569, %v1940, %v1943
      %v1945 = vshrl.u32 %v1727, 16
      %v1947 = vrot.slane %v1945, 6
      %v1948 = vor.u32 %v1947, %v1943
      %v1949 = vrot.slane %v1948, 2
      %v1950 = vshll.u32 %v1730, 16
      %v1952 = vrot.slane %v1950, 7
      %v1953 = vsel %vm569, %v1949, %v1952
      %v1954 = vshrl.u32 %v1730, 16
      %v1956 = vrot.slane %v1954, 6
      %v1957 = vor.u32 %v1956, %v1952
      %v1958 = vrot.slane %v1957, 2
      %v1960 = vshll.u32 %v1932, 16
      %v1962 = vrot.slane %v1960, 7
      %v1963 = vsel %vm569, %v1958, %v1962
      %s1964 = scalar_lea.vmem %s2, 256
      %v1965 = vld [vmem:[%s1964] sm:$0xf]
      %v1966 = vld [vmem:[%s1964 + $0x4] sm:$0xf]
      %v1967 = vld [vmem:[%s1964 + $0x8] sm:$0xf]
      %v1968 = vld [vmem:[%s1964 + $0xc] sm:$0xf]
      %v1969 = vld [vmem:[%s1964 + $0x10] sm:$0xf]
      %v1970 = vld [vmem:[%s1964 + $0x14] sm:$0xf]
      %v1971 = vld [vmem:[%s1964 + $0x18] sm:$0xf]
      %v1972 = vld [vmem:[%s1964 + $0x1c] sm:$0xf]
      %v1973 = vld [vmem:[%s1964 + $0x20] sm:$0xf]
      %v1974 = vld [vmem:[%s1964 + $0x24] sm:$0xf]
      %v1975 = vld [vmem:[%s1964 + $0x28] sm:$0xf]
      %v1976 = vld [vmem:[%s1964 + $0x2c] sm:$0xf]
      %v1977 = vld [vmem:[%s1964 + $0x30] sm:$0xf]
      %v1978 = vld [vmem:[%s1964 + $0x34] sm:$0xf]
      %v1979 = vld [vmem:[%s1964 + $0x38] sm:$0xf]
      %v1980 = vld [vmem:[%s1964 + $0x3c] sm:$0xf]
      %1981 = vst [vmem:[#allocation1] ss:$4 sm:$0xff] %v614
      %s1982 = scalar_lea.vmem [#allocation1], 1
      %1983 = vst [vmem:[%s1982] ss:$4 sm:$0xff] %v623
      %s1984 = scalar_lea.vmem [#allocation1], 2
      %1985 = vst [vmem:[%s1984] ss:$4 sm:$0xff] %v633
      %s1986 = scalar_lea.vmem [#allocation1], 3
      %1987 = vst [vmem:[%s1986] ss:$4 sm:$0xff] %v646
      %s1988 = scalar_lea.vmem [#allocation1], 32
      %1989 = vst [vmem:[%s1988] ss:$4 sm:$0xff] %v655
      %s1990 = scalar_lea.vmem [#allocation1], 33
      %1991 = vst [vmem:[%s1990] ss:$4 sm:$0xff] %v665
      %s1992 = scalar_lea.vmem [#allocation1], 34
      %1993 = vst [vmem:[%s1992] ss:$4 sm:$0xff] %v678
      %s1994 = scalar_lea.vmem [#allocation1], 35
      %1995 = vst [vmem:[%s1994] ss:$4 sm:$0xff] %v687
      %v1996 = vld.sshfl [vmem:[#allocation1] sm:$0xff pattern:$0x73625140]
      %v1997 = vld.sshfl [vmem:[#allocation1 + $0x20] sm:$0xff pattern:$0x73625140]
      %1998 = vst [vmem:[#allocation1] ss:$4 sm:$0xff] %v697
      %1999 = vst [vmem:[%s1982] ss:$4 sm:$0xff] %v710
      %2000 = vst [vmem:[%s1984] ss:$4 sm:$0xff] %v719
      %2001 = vst [vmem:[%s1986] ss:$4 sm:$0xff] %v729
      %2002 = vst [vmem:[%s1988] ss:$4 sm:$0xff] %v742
      %2003 = vst [vmem:[%s1990] ss:$4 sm:$0xff] %v751
      %2004 = vst [vmem:[%s1992] ss:$4 sm:$0xff] %v761
      %2005 = vst [vmem:[%s1994] ss:$4 sm:$0xff] %v774
      %v2006 = vld.sshfl [vmem:[#allocation1] sm:$0xff pattern:$0x73625140]
      %v2007 = vld.sshfl [vmem:[#allocation1 + $0x20] sm:$0xff pattern:$0x73625140]
      %2008 = vst [vmem:[#allocation1] ss:$4 sm:$0xff] %v783
      %2009 = vst [vmem:[%s1982] ss:$4 sm:$0xff] %v793
      %2010 = vst [vmem:[%s1984] ss:$4 sm:$0xff] %v806
      %2011 = vst [vmem:[%s1986] ss:$4 sm:$0xff] %v815
      %2012 = vst [vmem:[%s1988] ss:$4 sm:$0xff] %v825
      %2013 = vst [vmem:[%s1990] ss:$4 sm:$0xff] %v838
      %2014 = vst [vmem:[%s1992] ss:$4 sm:$0xff] %v847
      %2015 = vst [vmem:[%s1994] ss:$4 sm:$0xff] %v857
      %v2016 = vld.sshfl [vmem:[#allocation1] sm:$0xff pattern:$0x73625140]
      %v2017 = vld.sshfl [vmem:[#allocation1 + $0x20] sm:$0xff pattern:$0x73625140]
      %2018 = vst [vmem:[#allocation1] ss:$4 sm:$0xff] %v870
      %2019 = vst [vmem:[%s1982] ss:$4 sm:$0xff] %v879
      %2020 = vst [vmem:[%s1984] ss:$4 sm:$0xff] %v889
      %2021 = vst [vmem:[%s1986] ss:$4 sm:$0xff] %v902
      %2022 = vst [vmem:[%s1988] ss:$4 sm:$0xff] %v911
      %2023 = vst [vmem:[%s1990] ss:$4 sm:$0xff] %v921
      %2024 = vst [vmem:[%s1992] ss:$4 sm:$0xff] %v934
      %2025 = vst [vmem:[%s1994] ss:$4 sm:$0xff] %v943
      %v2026 = vld.sshfl [vmem:[#allocation1] sm:$0xff pattern:$0x73625140]
      %v2027 = vld.sshfl [vmem:[#allocation1 + $0x20] sm:$0xff pattern:$0x73625140]
      %2028 = vst [vmem:[#allocation1] ss:$4 sm:$0xff] %v953
      %2030 = vst [vmem:[%s1982] ss:$4 sm:$0xff] %v1944
      %2032 = vst [vmem:[%s1984] ss:$4 sm:$0xff] %v1953
      %2034 = vst [vmem:[%s1986] ss:$4 sm:$0xff] %v1963
      %v2035 = vld.sshfl [vmem:[#allocation1] sm:$0xff pattern:$0x73625140]
      %v2061 = vunpack.c.l.b16 %v1965
      %v2062 = vunpack.c.l.b16 %v1966
      %v2063 = vunpack.c.l.b16 %v1967
      %v2064 = vunpack.c.l.b16 %v1968
      %v2065 = vunpack.c.l.b16 %v1969
      %v2066 = vunpack.c.l.b16 %v1970
      %v2067 = vunpack.c.l.b16 %v1971
      %v2068 = vunpack.c.l.b16 %v1972
      %v2069 = vunpack.c.l.b16 %v1973
      %v2070 = vunpack.c.l.b16 %v1974
      %v2071 = vunpack.c.l.b16 %v1975
      %v2072 = vunpack.c.l.b16 %v1976
      %v2073 = vunpack.c.l.b16 %v1977
      %v2074 = vunpack.c.l.b16 %v1978
      %v2075 = vunpack.c.l.b16 %v1979
      %v2076 = vunpack.c.l.b16 %v1980
      %v2077 = vpack.c.b16 %v2062, %v2061
      %v2078 = vpack.c.b16 %v2064, %v2063
      %v2079 = vpack.c.b16 %v2066, %v2065
      %v2080 = vpack.c.b16 %v2068, %v2067
      %v2081 = vpack.c.b16 %v2070, %v2069
      %v2082 = vpack.c.b16 %v2072, %v2071
      %v2083 = vpack.c.b16 %v2074, %v2073
      %v2084 = vpack.c.b16 %v2076, %v2075
      %2093 = vmatpush.bf16.msra.mxu0 %v2084
      %2094 = vmatpush.bf16.msra.mxu0 %v2083
      %2095 = vmatpush.bf16.msra.mxu0 %v2082
      %2096 = vmatpush.bf16.msra.mxu0 %v2081
      %2097 = vmatpush.bf16.msra.mxu0 %v2080
      %2098 = vmatpush.bf16.msra.mxu0 %v2079
      %2099 = vmatpush.bf16.msra.mxu0 %v2078
      %2100 = vmatpush.bf16.msra.mxu0 %v2077
      %2101 = vmatmul.bf16.gmra.mxu0 %v1996
      %v2102 = vpop.f32.mrf.mxu0
      %v2103 = vadd.f32 0.0, %v2102
      %v2104 = vpop.f32.mrf.mxu0
      %v2105 = vadd.f32 0.0, %v2104
      %2106 = vmatmul.bf16.gmra.mxu0 %v1997
      %v2107 = vpop.f32.mrf.mxu0
      %v2108 = vadd.f32 0.0, %v2107
      %v2109 = vpop.f32.mrf.mxu0
      %v2110 = vadd.f32 0.0, %v2109
      %2111 = vmatmul.bf16.gmra.mxu0 %v2006
      %v2112 = vpop.f32.mrf.mxu0
      %v2113 = vadd.f32 0.0, %v2112
      %v2114 = vpop.f32.mrf.mxu0
      %v2115 = vadd.f32 0.0, %v2114
      %2116 = vmatmul.bf16.gmra.mxu0 %v2007
      %v2117 = vpop.f32.mrf.mxu0
      %v2118 = vadd.f32 0.0, %v2117
      %v2119 = vpop.f32.mrf.mxu0
      %v2120 = vadd.f32 0.0, %v2119
      %2121 = vmatmul.bf16.gmra.mxu0 %v2016
      %v2122 = vpop.f32.mrf.mxu0
      %v2123 = vadd.f32 0.0, %v2122
      %v2124 = vpop.f32.mrf.mxu0
      %v2125 = vadd.f32 0.0, %v2124
      %2126 = vmatmul.bf16.gmra.mxu0 %v2017
      %v2127 = vpop.f32.mrf.mxu0
      %v2128 = vadd.f32 0.0, %v2127
      %v2129 = vpop.f32.mrf.mxu0
      %v2130 = vadd.f32 0.0, %v2129
      %2131 = vmatmul.bf16.gmra.mxu0 %v2026
      %v2132 = vpop.f32.mrf.mxu0
      %v2133 = vadd.f32 0.0, %v2132
      %v2134 = vpop.f32.mrf.mxu0
      %v2135 = vadd.f32 0.0, %v2134
      %2136 = vmatmul.bf16.gmra.mxu0 %v2027
      %v2137 = vpop.f32.mrf.mxu0
      %v2138 = vadd.f32 0.0, %v2137
      %v2139 = vpop.f32.mrf.mxu0
      %v2140 = vadd.f32 0.0, %v2139
      %2141 = vmatmul.bf16.gmra.mxu0 %v2035
      %v2142 = vpop.f32.mrf.mxu0
      %v2143 = vadd.f32 0.0, %v2142
      %v2144 = vpop.f32.mrf.mxu0
      %v2145 = vadd.f32 0.0, %v2144
      %2146 = vdwg.mxu0
      %v2147 = vadd.f32 %v1912, %v2103
      %v2148 = vadd.f32 %v1913, %v2105
      %v2149 = vadd.f32 %v1914, %v2108
      %v2150 = vadd.f32 %v1915, %v2110
      %v2151 = vadd.f32 %v1916, %v2113
      %v2152 = vadd.f32 %v1917, %v2115
      %v2153 = vadd.f32 %v1918, %v2118
      %v2154 = vadd.f32 %v1919, %v2120
      %v2155 = vadd.f32 %v1920, %v2123
      %v2156 = vadd.f32 %v1921, %v2125
      %v2157 = vadd.f32 %v1922, %v2128
      %v2158 = vadd.f32 %v1923, %v2130
      %v2159 = vadd.f32 %v1924, %v2133
      %v2160 = vadd.f32 %v1925, %v2135
      %v2161 = vadd.f32 %v1926, %v2138
      %v2162 = vadd.f32 %v1927, %v2140
      %v2163 = vadd.f32 %v1928, %v2143
      %v2164 = vadd.f32 %v1929, %v2145
      %v2167 = vrot.slane %v1724, 7
      %v2168 = vrot.slane %v2167, 2
      %v2169 = vrot.slane %v1727, 7
      %v2170 = vsel %vm1363, %v2168, %v2169
      %v2171 = vrot.slane %v2169, 2
      %v2172 = vrot.slane %v1730, 7
      %v2173 = vsel %vm1363, %v2171, %v2172
      %v2174 = vrot.slane %v2172, 2
      %v2175 = vrot.slane %v1932, 7
      %v2176 = vsel %vm1363, %v2174, %v2175
      %s2177 = scalar_lea.vmem %s2, 320
      %v2178 = vld [vmem:[%s2177] sm:$0xf]
      %v2179 = vld [vmem:[%s2177 + $0x4] sm:$0xf]
      %v2180 = vld [vmem:[%s2177 + $0x8] sm:$0xf]
      %v2181 = vld [vmem:[%s2177 + $0xc] sm:$0xf]
      %v2182 = vld [vmem:[%s2177 + $0x10] sm:$0xf]
      %v2183 = vld [vmem:[%s2177 + $0x14] sm:$0xf]
      %v2184 = vld [vmem:[%s2177 + $0x18] sm:$0xf]
      %v2185 = vld [vmem:[%s2177 + $0x1c] sm:$0xf]
      %v2186 = vld [vmem:[%s2177 + $0x20] sm:$0xf]
      %v2187 = vld [vmem:[%s2177 + $0x24] sm:$0xf]
      %v2188 = vld [vmem:[%s2177 + $0x28] sm:$0xf]
      %v2189 = vld [vmem:[%s2177 + $0x2c] sm:$0xf]
      %v2190 = vld [vmem:[%s2177 + $0x30] sm:$0xf]
      %v2191 = vld [vmem:[%s2177 + $0x34] sm:$0xf]
      %v2192 = vld [vmem:[%s2177 + $0x38] sm:$0xf]
      %v2193 = vld [vmem:[%s2177 + $0x3c] sm:$0xf]
      %2194 = vst [vmem:[#allocation1] ss:$4 sm:$0xff] %v1377
      %s2195 = scalar_lea.vmem [#allocation1], 1
      %2196 = vst [vmem:[%s2195] ss:$4 sm:$0xff] %v1380
      %s2197 = scalar_lea.vmem [#allocation1], 2
      %2198 = vst [vmem:[%s2197] ss:$4 sm:$0xff] %v1383
      %s2199 = scalar_lea.vmem [#allocation1], 3
      %2200 = vst [vmem:[%s2199] ss:$4 sm:$0xff] %v1387
      %s2201 = scalar_lea.vmem [#allocation1], 32
      %2202 = vst [vmem:[%s2201] ss:$4 sm:$0xff] %v1390
      %s2203 = scalar_lea.vmem [#allocation1], 33
      %2204 = vst [vmem:[%s2203] ss:$4 sm:$0xff] %v1393
      %s2205 = scalar_lea.vmem [#allocation1], 34
      %2206 = vst [vmem:[%s2205] ss:$4 sm:$0xff] %v1397
      %s2207 = scalar_lea.vmem [#allocation1], 35
      %2208 = vst [vmem:[%s2207] ss:$4 sm:$0xff] %v1400
      %v2209 = vld.sshfl [vmem:[#allocation1] sm:$0xff pattern:$0x73625140]
      %v2210 = vld.sshfl [vmem:[#allocation1 + $0x20] sm:$0xff pattern:$0x73625140]
      %2211 = vst [vmem:[#allocation1] ss:$4 sm:$0xff] %v1403
      %2212 = vst [vmem:[%s2195] ss:$4 sm:$0xff] %v1407
      %2213 = vst [vmem:[%s2197] ss:$4 sm:$0xff] %v1410
      %2214 = vst [vmem:[%s2199] ss:$4 sm:$0xff] %v1413
      %2215 = vst [vmem:[%s2201] ss:$4 sm:$0xff] %v1417
      %2216 = vst [vmem:[%s2203] ss:$4 sm:$0xff] %v1420
      %2217 = vst [vmem:[%s2205] ss:$4 sm:$0xff] %v1423
      %2218 = vst [vmem:[%s2207] ss:$4 sm:$0xff] %v1427
      %v2219 = vld.sshfl [vmem:[#allocation1] sm:$0xff pattern:$0x73625140]
      %v2220 = vld.sshfl [vmem:[#allocation1 + $0x20] sm:$0xff pattern:$0x73625140]
      %2221 = vst [vmem:[#allocation1] ss:$4 sm:$0xff] %v1430
      %2222 = vst [vmem:[%s2195] ss:$4 sm:$0xff] %v1433
      %2223 = vst [vmem:[%s2197] ss:$4 sm:$0xff] %v1437
      %2224 = vst [vmem:[%s2199] ss:$4 sm:$0xff] %v1440
      %2225 = vst [vmem:[%s2201] ss:$4 sm:$0xff] %v1443
      %2226 = vst [vmem:[%s2203] ss:$4 sm:$0xff] %v1447
      %2227 = vst [vmem:[%s2205] ss:$4 sm:$0xff] %v1450
      %2228 = vst [vmem:[%s2207] ss:$4 sm:$0xff] %v1453
      %v2229 = vld.sshfl [vmem:[#allocation1] sm:$0xff pattern:$0x73625140]
      %v2230 = vld.sshfl [vmem:[#allocation1 + $0x20] sm:$0xff pattern:$0x73625140]
      %2231 = vst [vmem:[#allocation1] ss:$4 sm:$0xff] %v1457
      %2232 = vst [vmem:[%s2195] ss:$4 sm:$0xff] %v1460
      %2233 = vst [vmem:[%s2197] ss:$4 sm:$0xff] %v1463
      %2234 = vst [vmem:[%s2199] ss:$4 sm:$0xff] %v1467
      %2235 = vst [vmem:[%s2201] ss:$4 sm:$0xff] %v1470
      %2236 = vst [vmem:[%s2203] ss:$4 sm:$0xff] %v1473
      %2237 = vst [vmem:[%s2205] ss:$4 sm:$0xff] %v1477
      %2238 = vst [vmem:[%s2207] ss:$4 sm:$0xff] %v1480
      %v2239 = vld.sshfl [vmem:[#allocation1] sm:$0xff pattern:$0x73625140]
      %v2240 = vld.sshfl [vmem:[#allocation1 + $0x20] sm:$0xff pattern:$0x73625140]
      %2241 = vst [vmem:[#allocation1] ss:$4 sm:$0xff] %v1483
      %2243 = vst [vmem:[%s2195] ss:$4 sm:$0xff] %v2170
      %2245 = vst [vmem:[%s2197] ss:$4 sm:$0xff] %v2173
      %2247 = vst [vmem:[%s2199] ss:$4 sm:$0xff] %v2176
      %v2248 = vld.sshfl [vmem:[#allocation1] sm:$0xff pattern:$0x73625140]
      %v2274 = vunpack.c.l.b16 %v2178
      %v2275 = vunpack.c.l.b16 %v2179
      %v2276 = vunpack.c.l.b16 %v2180
      %v2277 = vunpack.c.l.b16 %v2181
      %v2278 = vunpack.c.l.b16 %v2182
      %v2279 = vunpack.c.l.b16 %v2183
      %v2280 = vunpack.c.l.b16 %v2184
      %v2281 = vunpack.c.l.b16 %v2185
      %v2282 = vunpack.c.l.b16 %v2186
      %v2283 = vunpack.c.l.b16 %v2187
      %v2284 = vunpack.c.l.b16 %v2188
      %v2285 = vunpack.c.l.b16 %v2189
      %v2286 = vunpack.c.l.b16 %v2190
      %v2287 = vunpack.c.l.b16 %v2191
      %v2288 = vunpack.c.l.b16 %v2192
      %v2289 = vunpack.c.l.b16 %v2193
      %v2290 = vpack.c.b16 %v2275, %v2274
      %v2291 = vpack.c.b16 %v2277, %v2276
      %v2292 = vpack.c.b16 %v2279, %v2278
      %v2293 = vpack.c.b16 %v2281, %v2280
      %v2294 = vpack.c.b16 %v2283, %v2282
      %v2295 = vpack.c.b16 %v2285, %v2284
      %v2296 = vpack.c.b16 %v2287, %v2286
      %v2297 = vpack.c.b16 %v2289, %v2288
      %2306 = vmatpush.bf16.msra.mxu0 %v2297
      %2307 = vmatpush.bf16.msra.mxu0 %v2296
      %2308 = vmatpush.bf16.msra.mxu0 %v2295
      %2309 = vmatpush.bf16.msra.mxu0 %v2294
      %2310 = vmatpush.bf16.msra.mxu0 %v2293
      %2311 = vmatpush.bf16.msra.mxu0 %v2292
      %2312 = vmatpush.bf16.msra.mxu0 %v2291
      %2313 = vmatpush.bf16.msra.mxu0 %v2290
      %2314 = vmatmul.bf16.gmra.mxu0 %v2209
      %v2315 = vpop.f32.mrf.mxu0
      %v2316 = vadd.f32 0.0, %v2315
      %v2317 = vpop.f32.mrf.mxu0
      %v2318 = vadd.f32 0.0, %v2317
      %2319 = vmatmul.bf16.gmra.mxu0 %v2210
      %v2320 = vpop.f32.mrf.mxu0
      %v2321 = vadd.f32 0.0, %v2320
      %v2322 = vpop.f32.mrf.mxu0
      %v2323 = vadd.f32 0.0, %v2322
      %2324 = vmatmul.bf16.gmra.mxu0 %v2219
      %v2325 = vpop.f32.mrf.mxu0
      %v2326 = vadd.f32 0.0, %v2325
      %v2327 = vpop.f32.mrf.mxu0
      %v2328 = vadd.f32 0.0, %v2327
      %2329 = vmatmul.bf16.gmra.mxu0 %v2220
      %v2330 = vpop.f32.mrf.mxu0
      %v2331 = vadd.f32 0.0, %v2330
      %v2332 = vpop.f32.mrf.mxu0
      %v2333 = vadd.f32 0.0, %v2332
      %2334 = vmatmul.bf16.gmra.mxu0 %v2229
      %v2335 = vpop.f32.mrf.mxu0
      %v2336 = vadd.f32 0.0, %v2335
      %v2337 = vpop.f32.mrf.mxu0
      %v2338 = vadd.f32 0.0, %v2337
      %2339 = vmatmul.bf16.gmra.mxu0 %v2230
      %v2340 = vpop.f32.mrf.mxu0
      %v2341 = vadd.f32 0.0, %v2340
      %v2342 = vpop.f32.mrf.mxu0
      %v2343 = vadd.f32 0.0, %v2342
      %2344 = vmatmul.bf16.gmra.mxu0 %v2239
      %v2345 = vpop.f32.mrf.mxu0
      %v2346 = vadd.f32 0.0, %v2345
      %v2347 = vpop.f32.mrf.mxu0
      %v2348 = vadd.f32 0.0, %v2347
      %2349 = vmatmul.bf16.gmra.mxu0 %v2240
      %v2350 = vpop.f32.mrf.mxu0
      %v2351 = vadd.f32 0.0, %v2350
      %v2352 = vpop.f32.mrf.mxu0
      %v2353 = vadd.f32 0.0, %v2352
      %2354 = vmatmul.bf16.gmra.mxu0 %v2248
      %v2355 = vpop.f32.mrf.mxu0
      %v2356 = vadd.f32 0.0, %v2355
      %v2357 = vpop.f32.mrf.mxu0
      %v2358 = vadd.f32 0.0, %v2357
      %2359 = vdwg.mxu0
      %v2360 = vadd.f32 %v2147, %v2316
      %v2361 = vadd.f32 %v2148, %v2318
      %v2362 = vadd.f32 %v2149, %v2321
      %v2363 = vadd.f32 %v2150, %v2323
      %v2364 = vadd.f32 %v2151, %v2326
      %v2365 = vadd.f32 %v2152, %v2328
      %v2366 = vadd.f32 %v2153, %v2331
      %v2367 = vadd.f32 %v2154, %v2333
      %v2368 = vadd.f32 %v2155, %v2336
      %v2369 = vadd.f32 %v2156, %v2338
      %v2370 = vadd.f32 %v2157, %v2341
      %v2371 = vadd.f32 %v2158, %v2343
      %v2372 = vadd.f32 %v2159, %v2346
      %v2373 = vadd.f32 %v2160, %v2348
      %v2374 = vadd.f32 %v2161, %v2351
      %v2375 = vadd.f32 %v2162, %v2353
      %v2376 = vadd.f32 %v2163, %v2356
      %v2377 = vadd.f32 %v2164, %v2358
      %v2380 = vrot.slane %v351, 2
      %v2381 = vrot.slane %v352, 2
      %v2384 = vsel %vm401, %v351, %v2380
      %v2385 = vsel %vm405, %v351, %v2380
      %v2387 = vrot.slane %v2385, 2
      %v2390 = vsel %vm401, %v352, %v2381
      %s2391 = scalar_lea.vmem %s2, 384
      %v2392 = vld [vmem:[%s2391] sm:$0xf]
      %v2393 = vld [vmem:[%s2391 + $0x4] sm:$0xf]
      %v2394 = vld [vmem:[%s2391 + $0x8] sm:$0xf]
      %v2395 = vld [vmem:[%s2391 + $0xc] sm:$0xf]
      %v2396 = vld [vmem:[%s2391 + $0x10] sm:$0xf]
      %v2397 = vld [vmem:[%s2391 + $0x14] sm:$0xf]
      %v2398 = vld [vmem:[%s2391 + $0x18] sm:$0xf]
      %v2399 = vld [vmem:[%s2391 + $0x1c] sm:$0xf]
      %v2400 = vld [vmem:[%s2391 + $0x20] sm:$0xf]
      %v2401 = vld [vmem:[%s2391 + $0x24] sm:$0xf]
      %v2402 = vld [vmem:[%s2391 + $0x28] sm:$0xf]
      %v2403 = vld [vmem:[%s2391 + $0x2c] sm:$0xf]
      %v2404 = vld [vmem:[%s2391 + $0x30] sm:$0xf]
      %v2405 = vld [vmem:[%s2391 + $0x34] sm:$0xf]
      %v2406 = vld [vmem:[%s2391 + $0x38] sm:$0xf]
      %v2407 = vld [vmem:[%s2391 + $0x3c] sm:$0xf]
      %2408 = vst [vmem:[#allocation1] ss:$4 sm:$0xff] %v423
      %s2409 = scalar_lea.vmem [#allocation1], 1
      %2410 = vst [vmem:[%s2409] ss:$4 sm:$0xff] %v426
      %s2411 = scalar_lea.vmem [#allocation1], 2
      %2412 = vst [vmem:[%s2411] ss:$4 sm:$0xff] %v429
      %s2413 = scalar_lea.vmem [#allocation1], 3
      %2414 = vst [vmem:[%s2413] ss:$4 sm:$0xff] %v432
      %s2415 = scalar_lea.vmem [#allocation1], 32
      %2416 = vst [vmem:[%s2415] ss:$4 sm:$0xff] %v435
      %s2417 = scalar_lea.vmem [#allocation1], 33
      %2418 = vst [vmem:[%s2417] ss:$4 sm:$0xff] %v438
      %s2419 = scalar_lea.vmem [#allocation1], 34
      %2420 = vst [vmem:[%s2419] ss:$4 sm:$0xff] %v441
      %s2421 = scalar_lea.vmem [#allocation1], 35
      %2422 = vst [vmem:[%s2421] ss:$4 sm:$0xff] %v444
      %v2423 = vld.sshfl [vmem:[#allocation1] sm:$0xff pattern:$0x73625140]
      %v2424 = vld.sshfl [vmem:[#allocation1 + $0x20] sm:$0xff pattern:$0x73625140]
      %2425 = vst [vmem:[#allocation1] ss:$4 sm:$0xff] %v447
      %2426 = vst [vmem:[%s2409] ss:$4 sm:$0xff] %v450
      %2427 = vst [vmem:[%s2411] ss:$4 sm:$0xff] %v453
      %2428 = vst [vmem:[%s2413] ss:$4 sm:$0xff] %v456
      %2429 = vst [vmem:[%s2415] ss:$4 sm:$0xff] %v459
      %2430 = vst [vmem:[%s2417] ss:$4 sm:$0xff] %v462
      %2431 = vst [vmem:[%s2419] ss:$4 sm:$0xff] %v465
      %2432 = vst [vmem:[%s2421] ss:$4 sm:$0xff] %v468
      %v2433 = vld.sshfl [vmem:[#allocation1] sm:$0xff pattern:$0x73625140]
      %v2434 = vld.sshfl [vmem:[#allocation1 + $0x20] sm:$0xff pattern:$0x73625140]
      %2435 = vst [vmem:[#allocation1] ss:$4 sm:$0xff] %v471
      %2436 = vst [vmem:[%s2409] ss:$4 sm:$0xff] %v474
      %2437 = vst [vmem:[%s2411] ss:$4 sm:$0xff] %v477
      %2438 = vst [vmem:[%s2413] ss:$4 sm:$0xff] %v480
      %2439 = vst [vmem:[%s2415] ss:$4 sm:$0xff] %v483
      %2440 = vst [vmem:[%s2417] ss:$4 sm:$0xff] %v486
      %2441 = vst [vmem:[%s2419] ss:$4 sm:$0xff] %v489
      %2442 = vst [vmem:[%s2421] ss:$4 sm:$0xff] %v492
      %v2443 = vld.sshfl [vmem:[#allocation1] sm:$0xff pattern:$0x73625140]
      %v2444 = vld.sshfl [vmem:[#allocation1 + $0x20] sm:$0xff pattern:$0x73625140]
      %2445 = vst [vmem:[#allocation1] ss:$4 sm:$0xff] %v495
      %2446 = vst [vmem:[%s2409] ss:$4 sm:$0xff] %v498
      %2447 = vst [vmem:[%s2411] ss:$4 sm:$0xff] %v501
      %2448 = vst [vmem:[%s2413] ss:$4 sm:$0xff] %v504
      %2449 = vst [vmem:[%s2415] ss:$4 sm:$0xff] %v507
      %2450 = vst [vmem:[%s2417] ss:$4 sm:$0xff] %v510
      %2451 = vst [vmem:[%s2419] ss:$4 sm:$0xff] %v1724
      %2452 = vst [vmem:[%s2421] ss:$4 sm:$0xff] %v1727
      %v2453 = vld.sshfl [vmem:[#allocation1] sm:$0xff pattern:$0x73625140]
      %v2454 = vld.sshfl [vmem:[#allocation1 + $0x20] sm:$0xff pattern:$0x73625140]
      %2455 = vst [vmem:[#allocation1] ss:$4 sm:$0xff] %v1730
      %2456 = vst [vmem:[%s2409] ss:$4 sm:$0xff] %v2384
      %2458 = vst [vmem:[%s2411] ss:$4 sm:$0xff] %v2387
      %2459 = vst [vmem:[%s2413] ss:$4 sm:$0xff] %v2390
      %v2460 = vld.sshfl [vmem:[#allocation1] sm:$0xff pattern:$0x73625140]
      %v2486 = vunpack.c.l.b16 %v2392
      %v2487 = vunpack.c.l.b16 %v2393
      %v2488 = vunpack.c.l.b16 %v2394
      %v2489 = vunpack.c.l.b16 %v2395
      %v2490 = vunpack.c.l.b16 %v2396
      %v2491 = vunpack.c.l.b16 %v2397
      %v2492 = vunpack.c.l.b16 %v2398
      %v2493 = vunpack.c.l.b16 %v2399
      %v2494 = vunpack.c.l.b16 %v2400
      %v2495 = vunpack.c.l.b16 %v2401
      %v2496 = vunpack.c.l.b16 %v2402
      %v2497 = vunpack.c.l.b16 %v2403
      %v2498 = vunpack.c.l.b16 %v2404
      %v2499 = vunpack.c.l.b16 %v2405
      %v2500 = vunpack.c.l.b16 %v2406
      %v2501 = vunpack.c.l.b16 %v2407
      %v2502 = vpack.c.b16 %v2487, %v2486
      %v2503 = vpack.c.b16 %v2489, %v2488
      %v2504 = vpack.c.b16 %v2491, %v2490
      %v2505 = vpack.c.b16 %v2493, %v2492
      %v2506 = vpack.c.b16 %v2495, %v2494
      %v2507 = vpack.c.b16 %v2497, %v2496
      %v2508 = vpack.c.b16 %v2499, %v2498
      %v2509 = vpack.c.b16 %v2501, %v2500
      %2518 = vmatpush.bf16.msra.mxu0 %v2509
      %2519 = vmatpush.bf16.msra.mxu0 %v2508
      %2520 = vmatpush.bf16.msra.mxu0 %v2507
      %2521 = vmatpush.bf16.msra.mxu0 %v2506
      %2522 = vmatpush.bf16.msra.mxu0 %v2505
      %2523 = vmatpush.bf16.msra.mxu0 %v2504
      %2524 = vmatpush.bf16.msra.mxu0 %v2503
      %2525 = vmatpush.bf16.msra.mxu0 %v2502
      %2526 = vmatmul.bf16.gmra.mxu0 %v2423
      %v2527 = vpop.f32.mrf.mxu0
      %v2528 = vadd.f32 0.0, %v2527
      %v2529 = vpop.f32.mrf.mxu0
      %v2530 = vadd.f32 0.0, %v2529
      %2531 = vmatmul.bf16.gmra.mxu0 %v2424
      %v2532 = vpop.f32.mrf.mxu0
      %v2533 = vadd.f32 0.0, %v2532
      %v2534 = vpop.f32.mrf.mxu0
      %v2535 = vadd.f32 0.0, %v2534
      %2536 = vmatmul.bf16.gmra.mxu0 %v2433
      %v2537 = vpop.f32.mrf.mxu0
      %v2538 = vadd.f32 0.0, %v2537
      %v2539 = vpop.f32.mrf.mxu0
      %v2540 = vadd.f32 0.0, %v2539
      %2541 = vmatmul.bf16.gmra.mxu0 %v2434
      %v2542 = vpop.f32.mrf.mxu0
      %v2543 = vadd.f32 0.0, %v2542
      %v2544 = vpop.f32.mrf.mxu0
      %v2545 = vadd.f32 0.0, %v2544
      %2546 = vmatmul.bf16.gmra.mxu0 %v2443
      %v2547 = vpop.f32.mrf.mxu0
      %v2548 = vadd.f32 0.0, %v2547
      %v2549 = vpop.f32.mrf.mxu0
      %v2550 = vadd.f32 0.0, %v2549
      %2551 = vmatmul.bf16.gmra.mxu0 %v2444
      %v2552 = vpop.f32.mrf.mxu0
      %v2553 = vadd.f32 0.0, %v2552
      %v2554 = vpop.f32.mrf.mxu0
      %v2555 = vadd.f32 0.0, %v2554
      %2556 = vmatmul.bf16.gmra.mxu0 %v2453
      %v2557 = vpop.f32.mrf.mxu0
      %v2558 = vadd.f32 0.0, %v2557
      %v2559 = vpop.f32.mrf.mxu0
      %v2560 = vadd.f32 0.0, %v2559
      %2561 = vmatmul.bf16.gmra.mxu0 %v2454
      %v2562 = vpop.f32.mrf.mxu0
      %v2563 = vadd.f32 0.0, %v2562
      %v2564 = vpop.f32.mrf.mxu0
      %v2565 = vadd.f32 0.0, %v2564
      %2566 = vmatmul.bf16.gmra.mxu0 %v2460
      %v2567 = vpop.f32.mrf.mxu0
      %v2568 = vadd.f32 0.0, %v2567
      %v2569 = vpop.f32.mrf.mxu0
      %v2570 = vadd.f32 0.0, %v2569
      %2571 = vdwg.mxu0
      %v2572 = vadd.f32 %v2360, %v2528
      %v2573 = vadd.f32 %v2361, %v2530
      %v2574 = vadd.f32 %v2362, %v2533
      %v2575 = vadd.f32 %v2363, %v2535
      %v2576 = vadd.f32 %v2364, %v2538
      %v2577 = vadd.f32 %v2365, %v2540
      %v2578 = vadd.f32 %v2366, %v2543
      %v2579 = vadd.f32 %v2367, %v2545
      %v2580 = vadd.f32 %v2368, %v2548
      %v2581 = vadd.f32 %v2369, %v2550
      %v2582 = vadd.f32 %v2370, %v2553
      %v2583 = vadd.f32 %v2371, %v2555
      %v2584 = vadd.f32 %v2372, %v2558
      %v2585 = vadd.f32 %v2373, %v2560
      %v2586 = vadd.f32 %v2374, %v2563
      %v2587 = vadd.f32 %v2375, %v2565
      %v2588 = vadd.f32 %v2376, %v2568
      %v2589 = vadd.f32 %v2377, %v2570
      %v2590 = vsel %vm405, %v352, %v2381
      %v2592 = vrot.slane %v2590, 2
      %v2593 = vshrl.u32 %v2384, 16
      %v2595 = vrot.slane %v2593, 6
      %v2596 = vshll.u32 %v2384, 16
      %v2598 = vrot.slane %v2596, 7
      %v2599 = vor.u32 %v2595, %v2598
      %v2600 = vrot.slane %v2599, 2
      %v2601 = vshll.u32 %v2387, 16
      %v2603 = vrot.slane %v2601, 7
      %v2604 = vsel %vm569, %v2600, %v2603
      %v2605 = vshrl.u32 %v2387, 16
      %v2607 = vrot.slane %v2605, 6
      %v2608 = vor.u32 %v2607, %v2603
      %v2609 = vrot.slane %v2608, 2
      %v2610 = vshll.u32 %v2390, 16
      %v2612 = vrot.slane %v2610, 7
      %v2613 = vsel %vm569, %v2609, %v2612
      %v2614 = vshrl.u32 %v2390, 16
      %v2616 = vrot.slane %v2614, 6
      %v2617 = vor.u32 %v2616, %v2612
      %v2618 = vrot.slane %v2617, 2
      %v2620 = vshll.u32 %v2592, 16
      %v2622 = vrot.slane %v2620, 7
      %v2623 = vsel %vm569, %v2618, %v2622
      %s2624 = scalar_lea.vmem %s2, 448
      %v2625 = vld [vmem:[%s2624] sm:$0xf]
      %v2626 = vld [vmem:[%s2624 + $0x4] sm:$0xf]
      %v2627 = vld [vmem:[%s2624 + $0x8] sm:$0xf]
      %v2628 = vld [vmem:[%s2624 + $0xc] sm:$0xf]
      %v2629 = vld [vmem:[%s2624 + $0x10] sm:$0xf]
      %v2630 = vld [vmem:[%s2624 + $0x14] sm:$0xf]
      %v2631 = vld [vmem:[%s2624 + $0x18] sm:$0xf]
      %v2632 = vld [vmem:[%s2624 + $0x1c] sm:$0xf]
      %v2633 = vld [vmem:[%s2624 + $0x20] sm:$0xf]
      %v2634 = vld [vmem:[%s2624 + $0x24] sm:$0xf]
      %v2635 = vld [vmem:[%s2624 + $0x28] sm:$0xf]
      %v2636 = vld [vmem:[%s2624 + $0x2c] sm:$0xf]
      %v2637 = vld [vmem:[%s2624 + $0x30] sm:$0xf]
      %v2638 = vld [vmem:[%s2624 + $0x34] sm:$0xf]
      %v2639 = vld [vmem:[%s2624 + $0x38] sm:$0xf]
      %v2640 = vld [vmem:[%s2624 + $0x3c] sm:$0xf]
      %2641 = vst [vmem:[#allocation1] ss:$4 sm:$0xff] %v646
      %s2642 = scalar_lea.vmem [#allocation1], 1
      %2643 = vst [vmem:[%s2642] ss:$4 sm:$0xff] %v655
      %s2644 = scalar_lea.vmem [#allocation1], 2
      %2645 = vst [vmem:[%s2644] ss:$4 sm:$0xff] %v665
      %s2646 = scalar_lea.vmem [#allocation1], 3
      %2647 = vst [vmem:[%s2646] ss:$4 sm:$0xff] %v678
      %s2648 = scalar_lea.vmem [#allocation1], 32
      %2649 = vst [vmem:[%s2648] ss:$4 sm:$0xff] %v687
      %s2650 = scalar_lea.vmem [#allocation1], 33
      %2651 = vst [vmem:[%s2650] ss:$4 sm:$0xff] %v697
      %s2652 = scalar_lea.vmem [#allocation1], 34
      %2653 = vst [vmem:[%s2652] ss:$4 sm:$0xff] %v710
      %s2654 = scalar_lea.vmem [#allocation1], 35
      %2655 = vst [vmem:[%s2654] ss:$4 sm:$0xff] %v719
      %v2656 = vld.sshfl [vmem:[#allocation1] sm:$0xff pattern:$0x73625140]
      %v2657 = vld.sshfl [vmem:[#allocation1 + $0x20] sm:$0xff pattern:$0x73625140]
      %2658 = vst [vmem:[#allocation1] ss:$4 sm:$0xff] %v729
      %2659 = vst [vmem:[%s2642] ss:$4 sm:$0xff] %v742
      %2660 = vst [vmem:[%s2644] ss:$4 sm:$0xff] %v751
      %2661 = vst [vmem:[%s2646] ss:$4 sm:$0xff] %v761
      %2662 = vst [vmem:[%s2648] ss:$4 sm:$0xff] %v774
      %2663 = vst [vmem:[%s2650] ss:$4 sm:$0xff] %v783
      %2664 = vst [vmem:[%s2652] ss:$4 sm:$0xff] %v793
      %2665 = vst [vmem:[%s2654] ss:$4 sm:$0xff] %v806
      %v2666 = vld.sshfl [vmem:[#allocation1] sm:$0xff pattern:$0x73625140]
      %v2667 = vld.sshfl [vmem:[#allocation1 + $0x20] sm:$0xff pattern:$0x73625140]
      %2668 = vst [vmem:[#allocation1] ss:$4 sm:$0xff] %v815
      %2669 = vst [vmem:[%s2642] ss:$4 sm:$0xff] %v825
      %2670 = vst [vmem:[%s2644] ss:$4 sm:$0xff] %v838
      %2671 = vst [vmem:[%s2646] ss:$4 sm:$0xff] %v847
      %2672 = vst [vmem:[%s2648] ss:$4 sm:$0xff] %v857
      %2673 = vst [vmem:[%s2650] ss:$4 sm:$0xff] %v870
      %2674 = vst [vmem:[%s2652] ss:$4 sm:$0xff] %v879
      %2675 = vst [vmem:[%s2654] ss:$4 sm:$0xff] %v889
      %v2676 = vld.sshfl [vmem:[#allocation1] sm:$0xff pattern:$0x73625140]
      %v2677 = vld.sshfl [vmem:[#allocation1 + $0x20] sm:$0xff pattern:$0x73625140]
      %2678 = vst [vmem:[#allocation1] ss:$4 sm:$0xff] %v902
      %2679 = vst [vmem:[%s2642] ss:$4 sm:$0xff] %v911
      %2680 = vst [vmem:[%s2644] ss:$4 sm:$0xff] %v921
      %2681 = vst [vmem:[%s2646] ss:$4 sm:$0xff] %v934
      %2682 = vst [vmem:[%s2648] ss:$4 sm:$0xff] %v943
      %2683 = vst [vmem:[%s2650] ss:$4 sm:$0xff] %v953
      %2684 = vst [vmem:[%s2652] ss:$4 sm:$0xff] %v1944
      %2685 = vst [vmem:[%s2654] ss:$4 sm:$0xff] %v1953
      %v2686 = vld.sshfl [vmem:[#allocation1] sm:$0xff pattern:$0x73625140]
      %v2687 = vld.sshfl [vmem:[#allocation1 + $0x20] sm:$0xff pattern:$0x73625140]
      %2688 = vst [vmem:[#allocation1] ss:$4 sm:$0xff] %v1963
      %2690 = vst [vmem:[%s2642] ss:$4 sm:$0xff] %v2604
      %2692 = vst [vmem:[%s2644] ss:$4 sm:$0xff] %v2613
      %2694 = vst [vmem:[%s2646] ss:$4 sm:$0xff] %v2623
      %v2695 = vld.sshfl [vmem:[#allocation1] sm:$0xff pattern:$0x73625140]
      %v2721 = vunpack.c.l.b16 %v2625
      %v2722 = vunpack.c.l.b16 %v2626
      %v2723 = vunpack.c.l.b16 %v2627
      %v2724 = vunpack.c.l.b16 %v2628
      %v2725 = vunpack.c.l.b16 %v2629
      %v2726 = vunpack.c.l.b16 %v2630
      %v2727 = vunpack.c.l.b16 %v2631
      %v2728 = vunpack.c.l.b16 %v2632
      %v2729 = vunpack.c.l.b16 %v2633
      %v2730 = vunpack.c.l.b16 %v2634
      %v2731 = vunpack.c.l.b16 %v2635
      %v2732 = vunpack.c.l.b16 %v2636
      %v2733 = vunpack.c.l.b16 %v2637
      %v2734 = vunpack.c.l.b16 %v2638
      %v2735 = vunpack.c.l.b16 %v2639
      %v2736 = vunpack.c.l.b16 %v2640
      %v2737 = vpack.c.b16 %v2722, %v2721
      %v2738 = vpack.c.b16 %v2724, %v2723
      %v2739 = vpack.c.b16 %v2726, %v2725
      %v2740 = vpack.c.b16 %v2728, %v2727
      %v2741 = vpack.c.b16 %v2730, %v2729
      %v2742 = vpack.c.b16 %v2732, %v2731
      %v2743 = vpack.c.b16 %v2734, %v2733
      %v2744 = vpack.c.b16 %v2736, %v2735
      %2753 = vmatpush.bf16.msra.mxu0 %v2744
      %2754 = vmatpush.bf16.msra.mxu0 %v2743
      %2755 = vmatpush.bf16.msra.mxu0 %v2742
      %2756 = vmatpush.bf16.msra.mxu0 %v2741
      %2757 = vmatpush.bf16.msra.mxu0 %v2740
      %2758 = vmatpush.bf16.msra.mxu0 %v2739
      %2759 = vmatpush.bf16.msra.mxu0 %v2738
      %2760 = vmatpush.bf16.msra.mxu0 %v2737
      %2761 = vmatmul.bf16.gmra.mxu0 %v2656
      %v2762 = vpop.f32.mrf.mxu0
      %v2763 = vadd.f32 0.0, %v2762
      %v2764 = vpop.f32.mrf.mxu0
      %v2765 = vadd.f32 0.0, %v2764
      %2766 = vmatmul.bf16.gmra.mxu0 %v2657
      %v2767 = vpop.f32.mrf.mxu0
      %v2768 = vadd.f32 0.0, %v2767
      %v2769 = vpop.f32.mrf.mxu0
      %v2770 = vadd.f32 0.0, %v2769
      %2771 = vmatmul.bf16.gmra.mxu0 %v2666
      %v2772 = vpop.f32.mrf.mxu0
      %v2773 = vadd.f32 0.0, %v2772
      %v2774 = vpop.f32.mrf.mxu0
      %v2775 = vadd.f32 0.0, %v2774
      %2776 = vmatmul.bf16.gmra.mxu0 %v2667
      %v2777 = vpop.f32.mrf.mxu0
      %v2778 = vadd.f32 0.0, %v2777
      %v2779 = vpop.f32.mrf.mxu0
      %v2780 = vadd.f32 0.0, %v2779
      %2781 = vmatmul.bf16.gmra.mxu0 %v2676
      %v2782 = vpop.f32.mrf.mxu0
      %v2783 = vadd.f32 0.0, %v2782
      %v2784 = vpop.f32.mrf.mxu0
      %v2785 = vadd.f32 0.0, %v2784
      %2786 = vmatmul.bf16.gmra.mxu0 %v2677
      %v2787 = vpop.f32.mrf.mxu0
      %v2788 = vadd.f32 0.0, %v2787
      %v2789 = vpop.f32.mrf.mxu0
      %v2790 = vadd.f32 0.0, %v2789
      %2791 = vmatmul.bf16.gmra.mxu0 %v2686
      %v2792 = vpop.f32.mrf.mxu0
      %v2793 = vadd.f32 0.0, %v2792
      %v2794 = vpop.f32.mrf.mxu0
      %v2795 = vadd.f32 0.0, %v2794
      %2796 = vmatmul.bf16.gmra.mxu0 %v2687
      %v2797 = vpop.f32.mrf.mxu0
      %v2798 = vadd.f32 0.0, %v2797
      %v2799 = vpop.f32.mrf.mxu0
      %v2800 = vadd.f32 0.0, %v2799
      %2801 = vmatmul.bf16.gmra.mxu0 %v2695
      %v2802 = vpop.f32.mrf.mxu0
      %v2803 = vadd.f32 0.0, %v2802
      %v2804 = vpop.f32.mrf.mxu0
      %v2805 = vadd.f32 0.0, %v2804
      %2806 = vdwg.mxu0
      %v2807 = vadd.f32 %v2572, %v2763
      %v2808 = vadd.f32 %v2573, %v2765
      %v2809 = vadd.f32 %v2574, %v2768
      %v2810 = vadd.f32 %v2575, %v2770
      %v2811 = vadd.f32 %v2576, %v2773
      %v2812 = vadd.f32 %v2577, %v2775
      %v2813 = vadd.f32 %v2578, %v2778
      %v2814 = vadd.f32 %v2579, %v2780
      %v2815 = vadd.f32 %v2580, %v2783
      %v2816 = vadd.f32 %v2581, %v2785
      %v2817 = vadd.f32 %v2582, %v2788
      %v2818 = vadd.f32 %v2583, %v2790
      %v2819 = vadd.f32 %v2584, %v2793
      %v2820 = vadd.f32 %v2585, %v2795
      %v2821 = vadd.f32 %v2586, %v2798
      %v2822 = vadd.f32 %v2587, %v2800
      %v2823 = vadd.f32 %v2588, %v2803
      %v2824 = vadd.f32 %v2589, %v2805
      %v2827 = vrot.slane %v2384, 7
      %v2828 = vrot.slane %v2827, 2
      %v2829 = vrot.slane %v2387, 7
      %v2830 = vsel %vm1363, %v2828, %v2829
      %v2831 = vrot.slane %v2829, 2
      %v2832 = vrot.slane %v2390, 7
      %v2833 = vsel %vm1363, %v2831, %v2832
      %v2834 = vrot.slane %v2832, 2
      %v2835 = vrot.slane %v2592, 7
      %v2836 = vsel %vm1363, %v2834, %v2835
      %s2837 = scalar_lea.vmem %s2, 512
      %v2838 = vld [vmem:[%s2837] sm:$0xf]
      %v2839 = vld [vmem:[%s2837 + $0x4] sm:$0xf]
      %v2840 = vld [vmem:[%s2837 + $0x8] sm:$0xf]
      %v2841 = vld [vmem:[%s2837 + $0xc] sm:$0xf]
      %v2842 = vld [vmem:[%s2837 + $0x10] sm:$0xf]
      %v2843 = vld [vmem:[%s2837 + $0x14] sm:$0xf]
      %v2844 = vld [vmem:[%s2837 + $0x18] sm:$0xf]
      %v2845 = vld [vmem:[%s2837 + $0x1c] sm:$0xf]
      %v2846 = vld [vmem:[%s2837 + $0x20] sm:$0xf]
      %v2847 = vld [vmem:[%s2837 + $0x24] sm:$0xf]
      %v2848 = vld [vmem:[%s2837 + $0x28] sm:$0xf]
      %v2849 = vld [vmem:[%s2837 + $0x2c] sm:$0xf]
      %v2850 = vld [vmem:[%s2837 + $0x30] sm:$0xf]
      %v2851 = vld [vmem:[%s2837 + $0x34] sm:$0xf]
      %v2852 = vld [vmem:[%s2837 + $0x38] sm:$0xf]
      %v2853 = vld [vmem:[%s2837 + $0x3c] sm:$0xf]
      %2854 = vst [vmem:[#allocation1] ss:$4 sm:$0xff] %v1387
      %s2855 = scalar_lea.vmem [#allocation1], 1
      %2856 = vst [vmem:[%s2855] ss:$4 sm:$0xff] %v1390
      %s2857 = scalar_lea.vmem [#allocation1], 2
      %2858 = vst [vmem:[%s2857] ss:$4 sm:$0xff] %v1393
      %s2859 = scalar_lea.vmem [#allocation1], 3
      %2860 = vst [vmem:[%s2859] ss:$4 sm:$0xff] %v1397
      %s2861 = scalar_lea.vmem [#allocation1], 32
      %2862 = vst [vmem:[%s2861] ss:$4 sm:$0xff] %v1400
      %s2863 = scalar_lea.vmem [#allocation1], 33
      %2864 = vst [vmem:[%s2863] ss:$4 sm:$0xff] %v1403
      %s2865 = scalar_lea.vmem [#allocation1], 34
      %2866 = vst [vmem:[%s2865] ss:$4 sm:$0xff] %v1407
      %s2867 = scalar_lea.vmem [#allocation1], 35
      %2868 = vst [vmem:[%s2867] ss:$4 sm:$0xff] %v1410
      %v2869 = vld.sshfl [vmem:[#allocation1] sm:$0xff pattern:$0x73625140]
      %v2870 = vld.sshfl [vmem:[#allocation1 + $0x20] sm:$0xff pattern:$0x73625140]
      %2871 = vst [vmem:[#allocation1] ss:$4 sm:$0xff] %v1413
      %2872 = vst [vmem:[%s2855] ss:$4 sm:$0xff] %v1417
      %2873 = vst [vmem:[%s2857] ss:$4 sm:$0xff] %v1420
      %2874 = vst [vmem:[%s2859] ss:$4 sm:$0xff] %v1423
      %2875 = vst [vmem:[%s2861] ss:$4 sm:$0xff] %v1427
      %2876 = vst [vmem:[%s2863] ss:$4 sm:$0xff] %v1430
      %2877 = vst [vmem:[%s2865] ss:$4 sm:$0xff] %v1433
      %2878 = vst [vmem:[%s2867] ss:$4 sm:$0xff] %v1437
      %v2879 = vld.sshfl [vmem:[#allocation1] sm:$0xff pattern:$0x73625140]
      %v2880 = vld.sshfl [vmem:[#allocation1 + $0x20] sm:$0xff pattern:$0x73625140]
      %2881 = vst [vmem:[#allocation1] ss:$4 sm:$0xff] %v1440
      %2882 = vst [vmem:[%s2855] ss:$4 sm:$0xff] %v1443
      %2883 = vst [vmem:[%s2857] ss:$4 sm:$0xff] %v1447
      %2884 = vst [vmem:[%s2859] ss:$4 sm:$0xff] %v1450
      %2885 = vst [vmem:[%s2861] ss:$4 sm:$0xff] %v1453
      %2886 = vst [vmem:[%s2863] ss:$4 sm:$0xff] %v1457
      %2887 = vst [vmem:[%s2865] ss:$4 sm:$0xff] %v1460
      %2888 = vst [vmem:[%s2867] ss:$4 sm:$0xff] %v1463
      %v2889 = vld.sshfl [vmem:[#allocation1] sm:$0xff pattern:$0x73625140]
      %v2890 = vld.sshfl [vmem:[#allocation1 + $0x20] sm:$0xff pattern:$0x73625140]
      %2891 = vst [vmem:[#allocation1] ss:$4 sm:$0xff] %v1467
      %2892 = vst [vmem:[%s2855] ss:$4 sm:$0xff] %v1470
      %2893 = vst [vmem:[%s2857] ss:$4 sm:$0xff] %v1473
      %2894 = vst [vmem:[%s2859] ss:$4 sm:$0xff] %v1477
      %2895 = vst [vmem:[%s2861] ss:$4 sm:$0xff] %v1480
      %2896 = vst [vmem:[%s2863] ss:$4 sm:$0xff] %v1483
      %2897 = vst [vmem:[%s2865] ss:$4 sm:$0xff] %v2170
      %2898 = vst [vmem:[%s2867] ss:$4 sm:$0xff] %v2173
      %v2899 = vld.sshfl [vmem:[#allocation1] sm:$0xff pattern:$0x73625140]
      %v2900 = vld.sshfl [vmem:[#allocation1 + $0x20] sm:$0xff pattern:$0x73625140]
      %2901 = vst [vmem:[#allocation1] ss:$4 sm:$0xff] %v2176
      %2903 = vst [vmem:[%s2855] ss:$4 sm:$0xff] %v2830
      %2905 = vst [vmem:[%s2857] ss:$4 sm:$0xff] %v2833
      %2907 = vst [vmem:[%s2859] ss:$4 sm:$0xff] %v2836
      %v2908 = vld.sshfl [vmem:[#allocation1] sm:$0xff pattern:$0x73625140]
      %v2934 = vunpack.c.l.b16 %v2838
      %v2935 = vunpack.c.l.b16 %v2839
      %v2936 = vunpack.c.l.b16 %v2840
      %v2937 = vunpack.c.l.b16 %v2841
      %v2938 = vunpack.c.l.b16 %v2842
      %v2939 = vunpack.c.l.b16 %v2843
      %v2940 = vunpack.c.l.b16 %v2844
      %v2941 = vunpack.c.l.b16 %v2845
      %v2942 = vunpack.c.l.b16 %v2846
      %v2943 = vunpack.c.l.b16 %v2847
      %v2944 = vunpack.c.l.b16 %v2848
      %v2945 = vunpack.c.l.b16 %v2849
      %v2946 = vunpack.c.l.b16 %v2850
      %v2947 = vunpack.c.l.b16 %v2851
      %v2948 = vunpack.c.l.b16 %v2852
      %v2949 = vunpack.c.l.b16 %v2853
      %v2950 = vpack.c.b16 %v2935, %v2934
      %v2951 = vpack.c.b16 %v2937, %v2936
      %v2952 = vpack.c.b16 %v2939, %v2938
      %v2953 = vpack.c.b16 %v2941, %v2940
      %v2954 = vpack.c.b16 %v2943, %v2942
      %v2955 = vpack.c.b16 %v2945, %v2944
      %v2956 = vpack.c.b16 %v2947, %v2946
      %v2957 = vpack.c.b16 %v2949, %v2948
      %2966 = vmatpush.bf16.msra.mxu0 %v2957
      %2967 = vmatpush.bf16.msra.mxu0 %v2956
      %2968 = vmatpush.bf16.msra.mxu0 %v2955
      %2969 = vmatpush.bf16.msra.mxu0 %v2954
      %2970 = vmatpush.bf16.msra.mxu0 %v2953
      %2971 = vmatpush.bf16.msra.mxu0 %v2952
      %2972 = vmatpush.bf16.msra.mxu0 %v2951
      %2973 = vmatpush.bf16.msra.mxu0 %v2950
      %2974 = vmatmul.bf16.gmra.mxu0 %v2869
      %v2975 = vpop.f32.mrf.mxu0
      %v2976 = vadd.f32 0.0, %v2975
      %v2977 = vpop.f32.mrf.mxu0
      %v2978 = vadd.f32 0.0, %v2977
      %2979 = vmatmul.bf16.gmra.mxu0 %v2870
      %v2980 = vpop.f32.mrf.mxu0
      %v2981 = vadd.f32 0.0, %v2980
      %v2982 = vpop.f32.mrf.mxu0
      %v2983 = vadd.f32 0.0, %v2982
      %2984 = vmatmul.bf16.gmra.mxu0 %v2879
      %v2985 = vpop.f32.mrf.mxu0
      %v2986 = vadd.f32 0.0, %v2985
      %v2987 = vpop.f32.mrf.mxu0
      %v2988 = vadd.f32 0.0, %v2987
      %2989 = vmatmul.bf16.gmra.mxu0 %v2880
      %v2990 = vpop.f32.mrf.mxu0
      %v2991 = vadd.f32 0.0, %v2990
      %v2992 = vpop.f32.mrf.mxu0
      %v2993 = vadd.f32 0.0, %v2992
      %2994 = vmatmul.bf16.gmra.mxu0 %v2889
      %v2995 = vpop.f32.mrf.mxu0
      %v2996 = vadd.f32 0.0, %v2995
      %v2997 = vpop.f32.mrf.mxu0
      %v2998 = vadd.f32 0.0, %v2997
      %2999 = vmatmul.bf16.gmra.mxu0 %v2890
      %v3000 = vpop.f32.mrf.mxu0
      %v3001 = vadd.f32 0.0, %v3000
      %v3002 = vpop.f32.mrf.mxu0
      %v3003 = vadd.f32 0.0, %v3002
      %3004 = vmatmul.bf16.gmra.mxu0 %v2899
      %v3005 = vpop.f32.mrf.mxu0
      %v3006 = vadd.f32 0.0, %v3005
      %v3007 = vpop.f32.mrf.mxu0
      %v3008 = vadd.f32 0.0, %v3007
      %3009 = vmatmul.bf16.gmra.mxu0 %v2900
      %v3010 = vpop.f32.mrf.mxu0
      %v3011 = vadd.f32 0.0, %v3010
      %v3012 = vpop.f32.mrf.mxu0
      %v3013 = vadd.f32 0.0, %v3012
      %3014 = vmatmul.bf16.gmra.mxu0 %v2908
      %v3015 = vpop.f32.mrf.mxu0
      %v3016 = vadd.f32 0.0, %v3015
      %v3017 = vpop.f32.mrf.mxu0
      %v3018 = vadd.f32 0.0, %v3017
      %3019 = vdwg.mxu0
      %v3020 = vadd.f32 %v2807, %v2976
      %v3021 = vadd.f32 %v2808, %v2978
      %v3022 = vadd.f32 %v2809, %v2981
      %v3023 = vadd.f32 %v2810, %v2983
      %v3024 = vadd.f32 %v2811, %v2986
      %v3025 = vadd.f32 %v2812, %v2988
      %v3026 = vadd.f32 %v2813, %v2991
      %v3027 = vadd.f32 %v2814, %v2993
      %v3028 = vadd.f32 %v2815, %v2996
      %v3029 = vadd.f32 %v2816, %v2998
      %v3030 = vadd.f32 %v2817, %v3001
      %v3031 = vadd.f32 %v2818, %v3003
      %v3032 = vadd.f32 %v2819, %v3006
      %v3033 = vadd.f32 %v2820, %v3008
      %v3034 = vadd.f32 %v2821, %v3011
      %v3035 = vadd.f32 %v2822, %v3013
      %v3036 = vadd.f32 %v2823, %v3016
      %v3037 = vadd.f32 %v2824, %v3018
      %v3056 = vrot.slane %v3020, 4
      %v3057 = vrot.slane %v3021, 4
      %v3058 = vrot.slane %v3022, 4
      %v3059 = vrot.slane %v3023, 4
      %v3060 = vrot.slane %v3024, 4
      %v3061 = vrot.slane %v3025, 4
      %v3062 = vrot.slane %v3026, 4
      %v3063 = vrot.slane %v3027, 4
      %v3064 = vrot.slane %v3028, 4
      %v3065 = vrot.slane %v3029, 4
      %v3066 = vrot.slane %v3030, 4
      %v3067 = vrot.slane %v3031, 4
      %v3068 = vrot.slane %v3032, 4
      %v3069 = vrot.slane %v3033, 4
      %v3070 = vrot.slane %v3034, 4
      %v3071 = vrot.slane %v3035, 4
      %v3072 = vrot.slane %v3036, 4
      %v3073 = vrot.slane %v3037, 4
      %3074 = vst [vmem:[#allocation1] ss:$2 sm:$0xff] %v3020
      %s3075 = scalar_lea.vmem [#allocation1], 1
      %3076 = vst [vmem:[%s3075] ss:$2 sm:$0xff] %v3056
      %s3077 = scalar_lea.vmem [#allocation1], 16
      %3078 = vst [vmem:[%s3077] ss:$2 sm:$0xff] %v3021
      %v3079 = vld.sshfl [vmem:[#allocation1] sm:$0xff pattern:$0x75316420]
      %v3080 = vld.sshfl [vmem:[#allocation1 + $0x10] sm:$0xff pattern:$0x75316420]
      %s3081 = scalar_lea.vmem [#allocation1], 32
      %3082 = vst [vmem:[%s3081] ss:$2 sm:$0xff] %v3057
      %s3083 = scalar_lea.vmem [#allocation1], 33
      %3084 = vst [vmem:[%s3083] ss:$2 sm:$0xff] %v3022
      %s3085 = scalar_lea.vmem [#allocation1], 48
      %3086 = vst [vmem:[%s3085] ss:$2 sm:$0xff] %v3058
      %v3087 = vld.sshfl [vmem:[#allocation1 + $0x20] sm:$0xff pattern:$0x75316420]
      %v3088 = vld.sshfl [vmem:[#allocation1 + $0x30] sm:$0xff pattern:$0x75316420]
      %3089 = vst [vmem:[#allocation1] ss:$2 sm:$0xff] %v3023
      %3090 = vst [vmem:[%s3075] ss:$2 sm:$0xff] %v3059
      %3091 = vst [vmem:[%s3077] ss:$2 sm:$0xff] %v3024
      %v3092 = vld.sshfl [vmem:[#allocation1] sm:$0xff pattern:$0x75316420]
      %v3093 = vld.sshfl [vmem:[#allocation1 + $0x10] sm:$0xff pattern:$0x75316420]
      %3094 = vst [vmem:[%s3081] ss:$2 sm:$0xff] %v3060
      %3095 = vst [vmem:[%s3083] ss:$2 sm:$0xff] %v3025
      %3096 = vst [vmem:[%s3085] ss:$2 sm:$0xff] %v3061
      %v3097 = vld.sshfl [vmem:[#allocation1 + $0x20] sm:$0xff pattern:$0x75316420]
      %v3098 = vld.sshfl [vmem:[#allocation1 + $0x30] sm:$0xff pattern:$0x75316420]
      %3099 = vst [vmem:[#allocation1] ss:$2 sm:$0xff] %v3026
      %3100 = vst [vmem:[%s3075] ss:$2 sm:$0xff] %v3062
      %3101 = vst [vmem:[%s3077] ss:$2 sm:$0xff] %v3027
      %v3102 = vld.sshfl [vmem:[#allocation1] sm:$0xff pattern:$0x75316420]
      %v3103 = vld.sshfl [vmem:[#allocation1 + $0x10] sm:$0xff pattern:$0x75316420]
      %3104 = vst [vmem:[%s3081] ss:$2 sm:$0xff] %v3063
      %3105 = vst [vmem:[%s3083] ss:$2 sm:$0xff] %v3028
      %3106 = vst [vmem:[%s3085] ss:$2 sm:$0xff] %v3064
      %v3107 = vld.sshfl [vmem:[#allocation1 + $0x20] sm:$0xff pattern:$0x75316420]
      %v3108 = vld.sshfl [vmem:[#allocation1 + $0x30] sm:$0xff pattern:$0x75316420]
      %3109 = vst [vmem:[#allocation1] ss:$2 sm:$0xff] %v3029
      %3110 = vst [vmem:[%s3075] ss:$2 sm:$0xff] %v3065
      %3111 = vst [vmem:[%s3077] ss:$2 sm:$0xff] %v3030
      %v3112 = vld.sshfl [vmem:[#allocation1] sm:$0xff pattern:$0x75316420]
      %v3113 = vld.sshfl [vmem:[#allocation1 + $0x10] sm:$0xff pattern:$0x75316420]
      %3114 = vst [vmem:[%s3081] ss:$2 sm:$0xff] %v3066
      %3115 = vst [vmem:[%s3083] ss:$2 sm:$0xff] %v3031
      %3116 = vst [vmem:[%s3085] ss:$2 sm:$0xff] %v3067
      %v3117 = vld.sshfl [vmem:[#allocation1 + $0x20] sm:$0xff pattern:$0x75316420]
      %v3118 = vld.sshfl [vmem:[#allocation1 + $0x30] sm:$0xff pattern:$0x75316420]
      %3119 = vst [vmem:[#allocation1] ss:$2 sm:$0xff] %v3032
      %3120 = vst [vmem:[%s3075] ss:$2 sm:$0xff] %v3068
      %3121 = vst [vmem:[%s3077] ss:$2 sm:$0xff] %v3033
      %v3122 = vld.sshfl [vmem:[#allocation1] sm:$0xff pattern:$0x75316420]
      %v3123 = vld.sshfl [vmem:[#allocation1 + $0x10] sm:$0xff pattern:$0x75316420]
      %3124 = vst [vmem:[%s3081] ss:$2 sm:$0xff] %v3069
      %3125 = vst [vmem:[%s3083] ss:$2 sm:$0xff] %v3034
      %3126 = vst [vmem:[%s3085] ss:$2 sm:$0xff] %v3070
      %v3127 = vld.sshfl [vmem:[#allocation1 + $0x20] sm:$0xff pattern:$0x75316420]
      %v3128 = vld.sshfl [vmem:[#allocation1 + $0x30] sm:$0xff pattern:$0x75316420]
      %3129 = vst [vmem:[#allocation1] ss:$2 sm:$0xff] %v3035
      %3130 = vst [vmem:[%s3075] ss:$2 sm:$0xff] %v3071
      %3131 = vst [vmem:[%s3077] ss:$2 sm:$0xff] %v3036
      %v3132 = vld.sshfl [vmem:[#allocation1] sm:$0xff pattern:$0x75316420]
      %v3133 = vld.sshfl [vmem:[#allocation1 + $0x10] sm:$0xff pattern:$0x75316420]
      %3134 = vst [vmem:[%s3081] ss:$2 sm:$0xff] %v3072
      %3135 = vst [vmem:[%s3083] ss:$2 sm:$0xff] %v3037
      %3136 = vst [vmem:[%s3085] ss:$2 sm:$0xff] %v3073
      %v3137 = vld.sshfl [vmem:[#allocation1 + $0x20] sm:$0xff pattern:$0x75316420]
      %v3138 = vld.sshfl [vmem:[#allocation1 + $0x30] sm:$0xff pattern:$0x75316420]
      %3163 = vst [vmem:[%s204] sm:$0xff] %v3079
      %3164 = vst [vmem:[%s204 + $0x8] sm:$0xf] %v3080
      %3165 = vst [vmem:[%s204 + $0x10] sm:$0xff] %v3087
      %3166 = vst [vmem:[%s204 + $0x18] sm:$0xf] %v3088
      %3167 = vst [vmem:[%s204 + $0x20] sm:$0xff] %v3092
      %3168 = vst [vmem:[%s204 + $0x28] sm:$0xf] %v3093
      %3169 = vst [vmem:[%s204 + $0x30] sm:$0xff] %v3097
      %3170 = vst [vmem:[%s204 + $0x38] sm:$0xf] %v3098
      %3171 = vst [vmem:[%s204 + $0x40] sm:$0xff] %v3102
      %3172 = vst [vmem:[%s204 + $0x48] sm:$0xf] %v3103
      %3173 = vst [vmem:[%s204 + $0x50] sm:$0xff] %v3107
      %3174 = vst [vmem:[%s204 + $0x58] sm:$0xf] %v3108
      %3175 = vst [vmem:[%s204 + $0x60] sm:$0xff] %v3112
      %3176 = vst [vmem:[%s204 + $0x68] sm:$0xf] %v3113
      %3177 = vst [vmem:[%s204 + $0x70] sm:$0xff] %v3117
      %3178 = vst [vmem:[%s204 + $0x78] sm:$0xf] %v3118
      %3179 = vst [vmem:[%s204 + $0x80] sm:$0xff] %v3122
      %3180 = vst [vmem:[%s204 + $0x88] sm:$0xf] %v3123
      %3181 = vst [vmem:[%s204 + $0x90] sm:$0xff] %v3127
      %3182 = vst [vmem:[%s204 + $0x98] sm:$0xf] %v3128
      %3183 = vst [vmem:[%s204 + $0xa0] sm:$0xff] %v3132
      %3184 = vst [vmem:[%s204 + $0xa8] sm:$0xf] %v3133
      %3185 = vst [vmem:[%s204 + $0xb0] sm:$0xff] %v3137
      %3186 = vst [vmem:[%s204 + $0xb8] sm:$0xf] %v3138
      %v3187 = vadd.f32 %v3020, %v3021
      %v3188 = vadd.f32 %v3187, %v3022
      %v3189 = vadd.f32 %v3188, %v3023
      %v3190 = vadd.f32 %v3189, %v3024
      %v3191 = vadd.f32 %v3190, %v3025
      %v3192 = vadd.f32 %v3191, %v3026
      %v3193 = vadd.f32 %v3192, %v3027
      %v3194 = vadd.f32 %v3193, %v3028
      %v3195 = vadd.f32 %v3194, %v3029
      %v3196 = vadd.f32 %v3195, %v3030
      %v3197 = vadd.f32 %v3196, %v3031
      %v3198 = vadd.f32 %v3197, %v3032
      %v3199 = vadd.f32 %v3198, %v3033
      %v3200 = vadd.f32 %v3199, %v3034
      %v3201 = vadd.f32 %v3200, %v3035
      %v3202 = vadd.f32 %v3201, %v3036
      %v3203 = vadd.f32 %v3202, %v3037
      %v3204 = vrot.slane %v3203, 4
      %v3205 = vadd.f32 %v3203, %v3204
      %v3206 = vrot.slane %v3205, 2
      %v3207 = vadd.f32 %v3205, %v3206
      %v3208 = vrot.slane %v3207, 1
      %v3209 = vadd.f32 %v3207, %v3208
      %v3210 = vmul.f32 %v3020, %v3020
      %v3211 = vmul.f32 %v3021, %v3021
      %v3212 = vmul.f32 %v3022, %v3022
      %v3213 = vmul.f32 %v3023, %v3023
      %v3214 = vmul.f32 %v3024, %v3024
      %v3215 = vmul.f32 %v3025, %v3025
      %v3216 = vmul.f32 %v3026, %v3026
      %v3217 = vmul.f32 %v3027, %v3027
      %v3218 = vmul.f32 %v3028, %v3028
      %v3219 = vmul.f32 %v3029, %v3029
      %v3220 = vmul.f32 %v3030, %v3030
      %v3221 = vmul.f32 %v3031, %v3031
      %v3222 = vmul.f32 %v3032, %v3032
      %v3223 = vmul.f32 %v3033, %v3033
      %v3224 = vmul.f32 %v3034, %v3034
      %v3225 = vmul.f32 %v3035, %v3035
      %v3226 = vmul.f32 %v3036, %v3036
      %v3227 = vmul.f32 %v3037, %v3037
      %v3228 = vadd.f32 %v3210, %v3211
      %v3229 = vadd.f32 %v3228, %v3212
      %v3230 = vadd.f32 %v3229, %v3213
      %v3231 = vadd.f32 %v3230, %v3214
      %v3232 = vadd.f32 %v3231, %v3215
      %v3233 = vadd.f32 %v3232, %v3216
      %v3234 = vadd.f32 %v3233, %v3217
      %v3235 = vadd.f32 %v3234, %v3218
      %v3236 = vadd.f32 %v3235, %v3219
      %v3237 = vadd.f32 %v3236, %v3220
      %v3238 = vadd.f32 %v3237, %v3221
      %v3239 = vadd.f32 %v3238, %v3222
      %v3240 = vadd.f32 %v3239, %v3223
      %v3241 = vadd.f32 %v3240, %v3224
      %v3242 = vadd.f32 %v3241, %v3225
      %v3243 = vadd.f32 %v3242, %v3226
      %v3244 = vadd.f32 %v3243, %v3227
      %v3245 = vrot.slane %v3244, 4
      %v3246 = vadd.f32 %v3244, %v3245
      %v3247 = vrot.slane %v3246, 2
      %v3248 = vadd.f32 %v3246, %v3247
      %v3249 = vrot.slane %v3248, 1
      %v3250 = vadd.f32 %v3248, %v3249
      %vm3251 = vcmask 1040384
      %v3252 = vsel %vm3251, %v3209, %v3250
      %3253 = vst [vmem:[%s208] sm:$0x3] %v3252
      %p3254 = scmp.lt.s32.totalorder %s16, 1
      %s3255 = scalar_select %p3254, %s16, 1
      %s3256 = smul.addr %s3255, 24
      %s3257 = smul.addr %s3256, 8
      %s3258 = scalar_lea.vmem %s3, %s3257
      %p3259 = scmp.lt.s32.totalorder %s16, 1
      %s3260 = scalar_select %p3259, %s16, 1
      %s3261 = smul.addr %s3260, 2
      %s3262 = scalar_lea.vmem %s4, %s3261
      // Predicated region
      $region33: #{residual_block_forward.4} parent=31 // pred_check
        %p3263 = pneg %p102
      $region34: #{residual_block_forward.4} parent=31 // pred_check_branch
        %3265 = sbr.rel (%p3263) target = $region36
      $region35: #{residual_block_forward.4} parent=31 // pred_region
        _
      $region36: #{residual_block_forward.4} parent=31 // pred_fallthru
        _
      // Predicated region
      $region37: #{residual_block_forward.4} parent=31 // pred_check
        %p3266 = pneg %p128
      $region38: #{residual_block_forward.4} parent=31 // pred_check_branch
        %3268 = sbr.rel (%p3266) target = $region40
      $region39: #{residual_block_forward.4} parent=31 // pred_region
        _
      $region40: #{residual_block_forward.4} parent=31 // pred_fallthru
        _
    $region32: #{residual_block_forward.4} parent=5 // pred_fallthru
      _
    %p3269 = scmp.le.s32.totalorder 2, %s11
    // Predicated region
    $region41: #{residual_block_forward.4} parent=5 // pred_check
      %p3270 = pneg %p3269
    $region42: #{residual_block_forward.4} parent=5 // pred_check_branch
      %3272 = sbr.rel (%p3270) target = $region44
    $region43: #{residual_block_forward.4} parent=5 // pred_region
      %s3273 = ssub.s32 %s11, 2
      // Predicated region
      $region45: #{residual_block_forward.4} parent=43 // pred_check
        %p3274 = pneg %p108
      $region46: #{residual_block_forward.4} parent=43 // pred_check_branch
        %3276 = sbr.rel (%p3274) target = $region48
      $region47: #{residual_block_forward.4} parent=43 // pred_region
        %p3277 = scmp.lt.s32.totalorder %s17, 1
        %s3278 = scalar_select %p3277, %s17, 1
        %s3279 = smul.addr %s3278, 24
        %s3280 = smul.addr %s3279, 8
        %s3281 = scalar_lea.vmem %s3, %s3280
      $region48: #{residual_block_forward.4} parent=43 // pred_fallthru
        _
      // Predicated region
      $region49: #{residual_block_forward.4} parent=43 // pred_check
        %p3282 = pneg %p134
      $region50: #{residual_block_forward.4} parent=43 // pred_check_branch
        %3284 = sbr.rel (%p3282) target = $region52
      $region51: #{residual_block_forward.4} parent=43 // pred_region
        %p3285 = scmp.lt.s32.totalorder %s17, 1
        %s3286 = scalar_select %p3285, %s17, 1
        %s3287 = smul.addr %s3286, 2
        %s3288 = scalar_lea.vmem %s4, %s3287
      $region52: #{residual_block_forward.4} parent=43 // pred_fallthru
        _
    $region44: #{residual_block_forward.4} parent=5 // pred_fallthru
      _
  $region6: #{residual_block_forward.4} parent=0 // loop_footer
    %s15 = sadd.s32 1, %s11
  $region7: #{residual_block_forward.4} parent=0 // loop_footer_branch
    %10 = sbr.rel target = $region3
  $region8: #{residual_block_forward.4} parent=0 // loop_exit
    _

</llo_original>
